<compile_context>
chip_gen: v7x
topology: tpu7x:2x2x1
jax: 0.10.0
libtpu: 0.0.40
codegen_flags: <defaults>
</compile_context>

<pallas_src>
import jax
import jax.numpy as jnp
from jax.experimental import pallas as pl
from jax.experimental.pallas import tpu as pltpu


def _mlp_kernel(x_ref,
                w1_ref, b1_ref,
                w2_ref, b2_ref,
                w3_ref, b3_ref,
                w45_ref, b45_ref,
                o_ref):
    # tail: Linear(512 -> 1024)           (bf16 x bf16 -> f32 accumulate)
    h = jnp.dot(x_ref[...], w1_ref[...],
                preferred_element_type=jnp.float32) + b1_ref[...]
    # ReLU -> Linear(1024 -> 1024)
    h = jnp.maximum(h, 0.0)
    h = jnp.dot(h.astype(jnp.bfloat16), w2_ref[...],
                preferred_element_type=jnp.float32) + b2_ref[...]
    # ReLU -> Linear(1024 -> 1024)
    h = jnp.maximum(h, 0.0)
    h = jnp.dot(h.astype(jnp.bfloat16), w3_ref[...],
                preferred_element_type=jnp.float32) + b3_ref[...]
    # ReLU -> fused [Linear(1024->512); Linear(512->4)]  (no ReLU in between)
    h = jnp.maximum(h, 0.0)
    out = jnp.dot(h.astype(jnp.bfloat16), w45_ref[...],
                  preferred_element_type=jnp.float32) + b45_ref[...]
    o_ref[...] = out.astype(o_ref.dtype)


def prepare_params(params):
    """Fuse the last two Linears and cast the streamed weights to bf16.

    Call once and cache the result alongside the model parameters.
    """
    w45 = params["w4"] @ params["w5"]                  # (1024, 4) f32
    b45 = params["b4"] @ params["w5"] + params["b5"]   # (1, 4)    f32
    return {
        "w1": params["w1"].astype(jnp.bfloat16), "b1": params["b1"],
        "w2": params["w2"].astype(jnp.bfloat16), "b2": params["b2"],
        "w3": params["w3"].astype(jnp.bfloat16), "b3": params["b3"],
        "w45": w45.astype(jnp.bfloat16),         "b45": b45,
    }


def location_decoder_capsule(x, fused_params, *, tile_m=256):
    """x: (B, 512) f32. fused_params: output of prepare_params. Returns (B, 4) f32."""
    B = x.shape[0]
    x_bf = x.astype(jnp.bfloat16)

    # Batch tile: multiple of 16 (bf16 sublane pack). Small B -> single tile.
    if B >= tile_m:
        tm = tile_m
    else:
        tm = max(16, ((B + 15) // 16) * 16)
    B_pad = ((B + tm - 1) // tm) * tm
    if B_pad != B:
        x_bf = jnp.pad(x_bf, ((0, B_pad - B), (0, 0)))
    grid = (B_pad // tm,)

    w1, b1 = fused_params["w1"], fused_params["b1"]
    w2, b2 = fused_params["w2"], fused_params["b2"]
    w3, b3 = fused_params["w3"], fused_params["b3"]
    w45, b45 = fused_params["w45"], fused_params["b45"]

    out = pl.pallas_call(
        _mlp_kernel,
        out_shape=jax.ShapeDtypeStruct((B_pad, 4), jnp.float32),
        grid_spec=pltpu.PrefetchScalarGridSpec(
            num_scalar_prefetch=0,
            grid=grid,
            in_specs=[
                # activations: one batch tile per grid step
                pl.BlockSpec((tm, 512), lambda i: (i, 0)),
                # weights/biases: constant index_map -> VMEM-resident
                pl.BlockSpec((512, 1024), lambda i: (0, 0)),
                pl.BlockSpec((1, 1024), lambda i: (0, 0)),
                pl.BlockSpec((1024, 1024), lambda i: (0, 0)),
                pl.BlockSpec((1, 1024), lambda i: (0, 0)),
                pl.BlockSpec((1024, 1024), lambda i: (0, 0)),
                pl.BlockSpec((1, 1024), lambda i: (0, 0)),
                pl.BlockSpec((1024, 4), lambda i: (0, 0)),
                pl.BlockSpec((1, 4), lambda i: (0, 0)),
            ],
            out_specs=pl.BlockSpec((tm, 4), lambda i: (i, 0)),
        ),
        compiler_params=pltpu.CompilerParams(
            dimension_semantics=("parallel",),
            vmem_limit_bytes=32 << 20,
        ),
    )(x_bf, w1, b1, w2, b2, w3, b3, w45, b45)

    return out[:B]


def _init_params(key):
    """Deterministic synthetic parameters (PyTorch-Linear-like scaling)."""
    dims = [(512, 1024), (1024, 1024), (1024, 1024), (1024, 512), (512, 4)]
    params = {}
    for idx, (fan_in, fan_out) in enumerate(dims, start=1):
        key, kw, kb = jax.random.split(key, 3)
        bound = 1.0 / (fan_in ** 0.5)
        params[f"w{idx}"] = jax.random.uniform(
            kw, (fan_in, fan_out), jnp.float32, -bound, bound)
        params[f"b{idx}"] = jax.random.uniform(
            kb, (1, fan_out), jnp.float32, -bound, bound)
    return params


def _reference_f32(x, p):
    """Exact f32 mirror of the PyTorch module (unfused)."""
    h = x @ p["w1"] + p["b1"]
    h = jnp.maximum(h, 0.0)
    h = h @ p["w2"] + p["b2"]
    h = jnp.maximum(h, 0.0)
    h = h @ p["w3"] + p["b3"]
    h = jnp.maximum(h, 0.0)
    h = h @ p["w4"] + p["b4"]
    return h @ p["w5"] + p["b5"]


def _reference_bf16(x, fp):
    """Mirror of what the kernel computes (bf16 operands, f32 accumulate)."""
    h = jnp.dot(x.astype(jnp.bfloat16), fp["w1"],
                preferred_element_type=jnp.float32) + fp["b1"]
    h = jnp.maximum(h, 0.0)
    h = jnp.dot(h.astype(jnp.bfloat16), fp["w2"],
                preferred_element_type=jnp.float32) + fp["b2"]
    h = jnp.maximum(h, 0.0)
    h = jnp.dot(h.astype(jnp.bfloat16), fp["w3"],
                preferred_element_type=jnp.float32) + fp["b3"]
    h = jnp.maximum(h, 0.0)
    return jnp.dot(h.astype(jnp.bfloat16), fp["w45"],
                   preferred_element_type=jnp.float32) + fp["b45"]


if __name__ == "__main__":
    key = jax.random.PRNGKey(0)
    key, kx = jax.random.split(key)

    B = 8
    x = jax.random.normal(kx, (B, 512), jnp.float32)
    params = _init_params(key)
    fused_params = prepare_params(params)

    out = location_decoder_capsule(x, fused_params)
    out = jax.block_until_ready(out)
    assert out.shape == (B, 4), out.shape

    # Strict check against a JAX mirror of the kernel's bf16 computation.
    ref_bf16 = _reference_bf16(x, fused_params)
    assert jnp.allclose(out, ref_bf16, atol=2e-2, rtol=2e-2), \
        "mismatch vs bf16-mirrored reference"

    # Loose sanity check against the full-precision PyTorch-equivalent math
    # (differences are only bf16 rounding of weights/activations).
    ref_f32 = _reference_f32(x, params)
    assert jnp.allclose(out, ref_f32, atol=1e-1, rtol=1e-1), \
        "mismatch vs f32 reference"

    print("KERNEL_OK")
</pallas_src>

<mosaic_0001>
module attributes {stable_mosaic.version = 11 : i64} {
  func.func @_mlp_kernel(%arg0: i32, %arg1: memref<16x512xbf16, #tpu.memory_space<vmem>>, %arg2: memref<512x1024xbf16, #tpu.memory_space<vmem>>, %arg3: memref<1x1024xf32, #tpu.memory_space<vmem>>, %arg4: memref<1024x1024xbf16, #tpu.memory_space<vmem>>, %arg5: memref<1x1024xf32, #tpu.memory_space<vmem>>, %arg6: memref<1024x1024xbf16, #tpu.memory_space<vmem>>, %arg7: memref<1x1024xf32, #tpu.memory_space<vmem>>, %arg8: memref<1024x4xbf16, #tpu.memory_space<vmem>>, %arg9: memref<1x4xf32, #tpu.memory_space<vmem>>, %arg10: memref<16x4xf32, #tpu.memory_space<vmem>>) attributes {dimension_semantics = [#tpu.dimension_semantics<parallel>], iteration_bounds = array<i64: 1>, scalar_prefetch = 0 : i64, scratch_operands = 0 : i64, tpu.core_type = #tpu.core_type<tc>, window_params = [{transform_indices = @transform_0, window_bounds = array<i64: 16, 512>}, {pipeline_mode = #tpu.pipeline_mode<synchronous>, transform_indices = @transform_1, window_bounds = array<i64: 512, 1024>}, {pipeline_mode = #tpu.pipeline_mode<synchronous>, transform_indices = @transform_2, window_bounds = array<i64: 1, 1024>}, {pipeline_mode = #tpu.pipeline_mode<synchronous>, transform_indices = @transform_3, window_bounds = array<i64: 1024, 1024>}, {pipeline_mode = #tpu.pipeline_mode<synchronous>, transform_indices = @transform_4, window_bounds = array<i64: 1, 1024>}, {pipeline_mode = #tpu.pipeline_mode<synchronous>, transform_indices = @transform_5, window_bounds = array<i64: 1024, 1024>}, {pipeline_mode = #tpu.pipeline_mode<synchronous>, transform_indices = @transform_6, window_bounds = array<i64: 1, 1024>}, {pipeline_mode = #tpu.pipeline_mode<synchronous>, transform_indices = @transform_7, window_bounds = array<i64: 1024, 4>}, {pipeline_mode = #tpu.pipeline_mode<synchronous>, transform_indices = @transform_8, window_bounds = array<i64: 1, 4>}, {transform_indices = @transform_9, window_bounds = array<i64: 16, 4>}]} {
    %c0 = arith.constant 0 : index
    %c0_0 = arith.constant 0 : index
    %0 = vector.load %arg1[%c0, %c0_0] : memref<16x512xbf16, #tpu.memory_space<vmem>>, vector<16x512xbf16>
    %c0_1 = arith.constant 0 : index
    %c0_2 = arith.constant 0 : index
    %1 = vector.load %arg2[%c0_1, %c0_2] : memref<512x1024xbf16, #tpu.memory_space<vmem>>, vector<512x1024xbf16>
    %cst = arith.constant dense<0.000000e+00> : vector<16x1024xf32>
    %2 = tpu.matmul %0, %1, %cst {dimension_numbers = #tpu.dot_dimension_numbers<[1], [0], [0], [1], [0, 0, 1, 1], [], []>} : vector<16x512xbf16>, vector<512x1024xbf16>, vector<16x1024xf32> -> vector<16x1024xf32>
    %c0_3 = arith.constant 0 : index
    %c0_4 = arith.constant 0 : index
    %3 = vector.load %arg3[%c0_3, %c0_4] : memref<1x1024xf32, #tpu.memory_space<vmem>>, vector<1x1024xf32>
    %4 = vector.broadcast %3 : vector<1x1024xf32> to vector<16x1024xf32>
    %5 = arith.addf %2, %4 : vector<16x1024xf32>
    %cst_5 = arith.constant 0.000000e+00 : f32
    %6 = vector.broadcast %cst_5 : f32 to vector<16x1024xf32>
    %7 = arith.maximumf %5, %6 : vector<16x1024xf32>
    %8 = arith.truncf %7 : vector<16x1024xf32> to vector<16x1024xbf16>
    %c0_6 = arith.constant 0 : index
    %c0_7 = arith.constant 0 : index
    %9 = vector.load %arg4[%c0_6, %c0_7] : memref<1024x1024xbf16, #tpu.memory_space<vmem>>, vector<1024x1024xbf16>
    %cst_8 = arith.constant dense<0.000000e+00> : vector<16x1024xf32>
    %10 = tpu.matmul %8, %9, %cst_8 {dimension_numbers = #tpu.dot_dimension_numbers<[1], [0], [0], [1], [0, 0, 1, 1], [], []>} : vector<16x1024xbf16>, vector<1024x1024xbf16>, vector<16x1024xf32> -> vector<16x1024xf32>
    %c0_9 = arith.constant 0 : index
    %c0_10 = arith.constant 0 : index
    %11 = vector.load %arg5[%c0_9, %c0_10] : memref<1x1024xf32, #tpu.memory_space<vmem>>, vector<1x1024xf32>
    %12 = vector.broadcast %11 : vector<1x1024xf32> to vector<16x1024xf32>
    %13 = arith.addf %10, %12 : vector<16x1024xf32>
    %cst_11 = arith.constant 0.000000e+00 : f32
    %14 = vector.broadcast %cst_11 : f32 to vector<16x1024xf32>
    %15 = arith.maximumf %13, %14 : vector<16x1024xf32>
    %16 = arith.truncf %15 : vector<16x1024xf32> to vector<16x1024xbf16>
    %c0_12 = arith.constant 0 : index
    %c0_13 = arith.constant 0 : index
    %17 = vector.load %arg6[%c0_12, %c0_13] : memref<1024x1024xbf16, #tpu.memory_space<vmem>>, vector<1024x1024xbf16>
    %cst_14 = arith.constant dense<0.000000e+00> : vector<16x1024xf32>
    %18 = tpu.matmul %16, %17, %cst_14 {dimension_numbers = #tpu.dot_dimension_numbers<[1], [0], [0], [1], [0, 0, 1, 1], [], []>} : vector<16x1024xbf16>, vector<1024x1024xbf16>, vector<16x1024xf32> -> vector<16x1024xf32>
    %c0_15 = arith.constant 0 : index
    %c0_16 = arith.constant 0 : index
    %19 = vector.load %arg7[%c0_15, %c0_16] : memref<1x1024xf32, #tpu.memory_space<vmem>>, vector<1x1024xf32>
    %20 = vector.broadcast %19 : vector<1x1024xf32> to vector<16x1024xf32>
    %21 = arith.addf %18, %20 : vector<16x1024xf32>
    %cst_17 = arith.constant 0.000000e+00 : f32
    %22 = vector.broadcast %cst_17 : f32 to vector<16x1024xf32>
    %23 = arith.maximumf %21, %22 : vector<16x1024xf32>
    %24 = arith.truncf %23 : vector<16x1024xf32> to vector<16x1024xbf16>
    %c0_18 = arith.constant 0 : index
    %c0_19 = arith.constant 0 : index
    %25 = vector.load %arg8[%c0_18, %c0_19] : memref<1024x4xbf16, #tpu.memory_space<vmem>>, vector<1024x4xbf16>
    %cst_20 = arith.constant dense<0.000000e+00> : vector<16x4xf32>
    %26 = tpu.matmul %24, %25, %cst_20 {dimension_numbers = #tpu.dot_dimension_numbers<[1], [0], [0], [1], [0, 0, 1, 1], [], []>} : vector<16x1024xbf16>, vector<1024x4xbf16>, vector<16x4xf32> -> vector<16x4xf32>
    %c0_21 = arith.constant 0 : index
    %c0_22 = arith.constant 0 : index
    %27 = vector.load %arg9[%c0_21, %c0_22] : memref<1x4xf32, #tpu.memory_space<vmem>>, vector<1x4xf32>
    %28 = vector.broadcast %27 : vector<1x4xf32> to vector<16x4xf32>
    %29 = arith.addf %26, %28 : vector<16x4xf32>
    %c0_23 = arith.constant 0 : index
    %c0_24 = arith.constant 0 : index
    %30 = vector.load %arg10[%c0_23, %c0_24] : memref<16x4xf32, #tpu.memory_space<vmem>>, vector<16x4xf32>
    tpu.vector_store %arg10[%c0_23, %c0_24], %29 {strides = array<i32>} : memref<16x4xf32, #tpu.memory_space<vmem>>, vector<16x4xf32>,
    return
  }
  func.func @transform_0(%arg0: i32) -> (i32, i32) {
    %c0_i32 = arith.constant 0 : i32
    %c0_i32_0 = arith.constant 0 : i32
    return %arg0, %c0_i32 : i32, i32
  }
  func.func @transform_1(%arg0: i32) -> (i32, i32) {
    %c0_i32 = arith.constant 0 : i32
    %c0_i32_0 = arith.constant 0 : i32
    %c0_i32_1 = arith.constant 0 : i32
    return %c0_i32, %c0_i32_0 : i32, i32
  }
  func.func @transform_2(%arg0: i32) -> (i32, i32) {
    %c0_i32 = arith.constant 0 : i32
    %c0_i32_0 = arith.constant 0 : i32
    %c0_i32_1 = arith.constant 0 : i32
    return %c0_i32, %c0_i32_0 : i32, i32
  }
  func.func @transform_3(%arg0: i32) -> (i32, i32) {
    %c0_i32 = arith.constant 0 : i32
    %c0_i32_0 = arith.constant 0 : i32
    %c0_i32_1 = arith.constant 0 : i32
    return %c0_i32, %c0_i32_0 : i32, i32
  }
  func.func @transform_4(%arg0: i32) -> (i32, i32) {
    %c0_i32 = arith.constant 0 : i32
    %c0_i32_0 = arith.constant 0 : i32
    %c0_i32_1 = arith.constant 0 : i32
    return %c0_i32, %c0_i32_0 : i32, i32
  }
  func.func @transform_5(%arg0: i32) -> (i32, i32) {
    %c0_i32 = arith.constant 0 : i32
    %c0_i32_0 = arith.constant 0 : i32
    %c0_i32_1 = arith.constant 0 : i32
    return %c0_i32, %c0_i32_0 : i32, i32
  }
  func.func @transform_6(%arg0: i32) -> (i32, i32) {
    %c0_i32 = arith.constant 0 : i32
    %c0_i32_0 = arith.constant 0 : i32
    %c0_i32_1 = arith.constant 0 : i32
    return %c0_i32, %c0_i32_0 : i32, i32
  }
  func.func @transform_7(%arg0: i32) -> (i32, i32) {
    %c0_i32 = arith.constant 0 : i32
    %c0_i32_0 = arith.constant 0 : i32
    %c0_i32_1 = arith.constant 0 : i32
    return %c0_i32, %c0_i32_0 : i32, i32
  }
  func.func @transform_8(%arg0: i32) -> (i32, i32) {
    %c0_i32 = arith.constant 0 : i32
    %c0_i32_0 = arith.constant 0 : i32
    %c0_i32_1 = arith.constant 0 : i32
    return %c0_i32, %c0_i32_0 : i32, i32
  }
  func.func @transform_9(%arg0: i32) -> (i32, i32) {
    %c0_i32 = arith.constant 0 : i32
    %c0_i32_0 = arith.constant 0 : i32
    return %arg0, %c0_i32 : i32, i32
  }
}

</mosaic_0001>

<llo_original>
// kernel: tpu_custom_call.1
$region0: #{tpu_custom_call.1}
  #allocation0 [shape = 'u32[]', space=smem, size = 0x4, offset = 0x4, fixed_abs, tag = 'smem constant byte address 0x4 - core index']
  #allocation1 [shape = 'u32[144,128]{1,0:T(1,128)}', space=vmem, size = 0x12000, scoped, tag = 'internal scratch']
  %s0 = inlined_call_operand.hbm [shape: bf16[16,512], index: 0, kind: input, shape index: {}]
  %s1 = inlined_call_operand.hbm [shape: bf16[512,1024], index: 1, kind: input, shape index: {}]
  %s2 = inlined_call_operand.hbm [shape: f32[1,1024], index: 2, kind: input, shape index: {}]
  %s3 = inlined_call_operand.hbm [shape: bf16[1024,1024], index: 3, kind: input, shape index: {}]
  %s4 = inlined_call_operand.hbm [shape: f32[1,1024], index: 4, kind: input, shape index: {}]
  %s5 = inlined_call_operand.hbm [shape: bf16[1024,1024], index: 5, kind: input, shape index: {}]
  %s6 = inlined_call_operand.hbm [shape: f32[1,1024], index: 6, kind: input, shape index: {}]
  %s7 = inlined_call_operand.vmem [shape: bf16[1024,4], index: 7, kind: input, shape index: {}]
  %s8 = inlined_call_operand.hbm [shape: f32[1,4], index: 8, kind: input, shape index: {}]
  %s9 = inlined_call_operand.vmem [shape: f32[16,4], index: 9, kind: output, shape index: {}]
  %s10 = sld [smem:[#allocation0]]
  $region78: #{tpu_custom_call.1} parent=0
    _
  %s12 = ssub.s32 1, %s10
  %s13 = scalar_select 0, %s12, %s10
  $region1: #{tpu_custom_call.1} parent=0
    #allocation2 [shape = 'u8[16384]{0}', space=vmem, size = 0x4000, scoped, tag = 'input window, operand 0, single buffered']
    #allocation3 [shape = 's32[1]{0}', space=sflag, size = 0x4, scoped, tag = 'scoped memory for tpu_custom_call.1']
    #allocation4 [shape = 'u8[1048576]{0}', space=vmem, size = 0x100000, scoped, tag = 'input window, operand 1, single buffered']
    #allocation5 [shape = 's32[1]{0}', space=sflag, size = 0x4, scoped, tag = 'scoped memory for tpu_custom_call.1']
    #allocation6 [shape = 'u8[4096]{0}', space=vmem, size = 0x1000, scoped, tag = 'input window, operand 2, single buffered']
    #allocation7 [shape = 'u8[2097152]{0}', space=vmem, size = 0x200000, scoped, tag = 'input window, operand 3, single buffered']
    #allocation8 [shape = 's32[1]{0}', space=sflag, size = 0x4, scoped, tag = 'scoped memory for tpu_custom_call.1']
    #allocation9 [shape = 'u8[4096]{0}', space=vmem, size = 0x1000, scoped, tag = 'input window, operand 4, single buffered']
    #allocation10 [shape = 'u8[2097152]{0}', space=vmem, size = 0x200000, scoped, tag = 'input window, operand 5, single buffered']
    #allocation11 [shape = 's32[1]{0}', space=sflag, size = 0x4, scoped, tag = 'scoped memory for tpu_custom_call.1']
    #allocation12 [shape = 'u8[4096]{0}', space=vmem, size = 0x1000, scoped, tag = 'input window, operand 6, single buffered']
    #allocation13 [shape = 'u8[512]{0}', space=vmem, size = 0x400, scoped, tag = 'input window, operand 8, single buffered']
    #allocation14 [shape = 's32[1]{0}', space=sflag, size = 0x4, scoped, tag = 'scoped memory for tpu_custom_call.1']
    %14 = vsyncpa [#allocation3], 0
    %15 = vsyncpa [#allocation5], 0
    %16 = vsyncpa [#allocation8], 0
    %17 = vsyncpa [#allocation11], 0
    %18 = vsyncpa [#allocation14], 0
    // Predicated region
    $region2: #{tpu_custom_call.1} parent=1 // pred_check
      _
    $region3: #{tpu_custom_call.1} parent=1 // pred_check_branch
      %20 = sbr.rel (0) target = $region5
    $region4: #{tpu_custom_call.1} parent=1 // pred_region
      %s22 = ssub.s32 512, 512
      %23 = vsyncadd [#allocation3], %s22
      %s24 = sshll.u32 [#allocation2], 4
      %s25 = int_to_ptr.vmem [resolvable:$true] %s24
      %30 = dma.hbm_to_vmem [thread:$0]  %s0, 512, %s25, [#allocation3], 256, 256, 16
    $region5: #{tpu_custom_call.1} parent=1 // pred_fallthru
      _
    // Predicated region
    $region6: #{tpu_custom_call.1} parent=1 // pred_check
      _
    $region7: #{tpu_custom_call.1} parent=1 // pred_check_branch
      %32 = sbr.rel (0) target = $region9
    $region8: #{tpu_custom_call.1} parent=1 // pred_region
      %s34 = ssub.s32 32768, 32768
      %35 = vsyncadd [#allocation5], %s34
      %s36 = sshll.u32 [#allocation4], 4
      %s37 = int_to_ptr.vmem [resolvable:$true] %s36
      %42 = dma.hbm_to_vmem [thread:$0]  %s1, 32768, %s37, [#allocation5], 512, 512, 32
    $region9: #{tpu_custom_call.1} parent=1 // pred_fallthru
      _
    // Predicated region
    $region10: #{tpu_custom_call.1} parent=1 // pred_check
      _
    $region11: #{tpu_custom_call.1} parent=1 // pred_check_branch
      %44 = sbr.rel (0) target = $region13
    $region12: #{tpu_custom_call.1} parent=1 // pred_region
      %s46 = ssub.s32 128, 128
      %47 = vsyncadd [#allocation5], %s46
      %s49 = sshll.u32 [#allocation6], 4
      %s50 = int_to_ptr.vmem [resolvable:$true] %s49
      %52 = dma.hbm_to_vmem [thread:$0]  %s2, 128, %s50, [#allocation5]
    $region13: #{tpu_custom_call.1} parent=1 // pred_fallthru
      _
    // Predicated region
    $region14: #{tpu_custom_call.1} parent=1 // pred_check
      _
    $region15: #{tpu_custom_call.1} parent=1 // pred_check_branch
      %54 = sbr.rel (0) target = $region17
    $region16: #{tpu_custom_call.1} parent=1 // pred_region
      %s56 = ssub.s32 65536, 65536
      %57 = vsyncadd [#allocation8], %s56
      %s58 = sshll.u32 [#allocation7], 4
      %s59 = int_to_ptr.vmem [resolvable:$true] %s58
      %64 = dma.hbm_to_vmem [thread:$0]  %s3, 65536, %s59, [#allocation8], 512, 512, 32
    $region17: #{tpu_custom_call.1} parent=1 // pred_fallthru
      _
    // Predicated region
    $region18: #{tpu_custom_call.1} parent=1 // pred_check
      _
    $region19: #{tpu_custom_call.1} parent=1 // pred_check_branch
      %66 = sbr.rel (0) target = $region21
    $region20: #{tpu_custom_call.1} parent=1 // pred_region
      %s68 = ssub.s32 128, 128
      %69 = vsyncadd [#allocation8], %s68
      %s71 = sshll.u32 [#allocation9], 4
      %s72 = int_to_ptr.vmem [resolvable:$true] %s71
      %74 = dma.hbm_to_vmem [thread:$0]  %s4, 128, %s72, [#allocation8]
    $region21: #{tpu_custom_call.1} parent=1 // pred_fallthru
      _
    // Predicated region
    $region22: #{tpu_custom_call.1} parent=1 // pred_check
      _
    $region23: #{tpu_custom_call.1} parent=1 // pred_check_branch
      %76 = sbr.rel (0) target = $region25
    $region24: #{tpu_custom_call.1} parent=1 // pred_region
      %s78 = ssub.s32 65536, 65536
      %79 = vsyncadd [#allocation11], %s78
      %s80 = sshll.u32 [#allocation10], 4
      %s81 = int_to_ptr.vmem [resolvable:$true] %s80
      %86 = dma.hbm_to_vmem [thread:$0]  %s5, 65536, %s81, [#allocation11], 512, 512, 32
    $region25: #{tpu_custom_call.1} parent=1 // pred_fallthru
      _
    // Predicated region
    $region26: #{tpu_custom_call.1} parent=1 // pred_check
      _
    $region27: #{tpu_custom_call.1} parent=1 // pred_check_branch
      %88 = sbr.rel (0) target = $region29
    $region28: #{tpu_custom_call.1} parent=1 // pred_region
      %s90 = ssub.s32 128, 128
      %91 = vsyncadd [#allocation11], %s90
      %s93 = sshll.u32 [#allocation12], 4
      %s94 = int_to_ptr.vmem [resolvable:$true] %s93
      %96 = dma.hbm_to_vmem [thread:$0]  %s6, 128, %s94, [#allocation11]
    $region29: #{tpu_custom_call.1} parent=1 // pred_fallthru
      _
    // Predicated region
    $region30: #{tpu_custom_call.1} parent=1 // pred_check
      _
    $region31: #{tpu_custom_call.1} parent=1 // pred_check_branch
      %98 = sbr.rel (0) target = $region33
    $region32: #{tpu_custom_call.1} parent=1 // pred_region
      _
    $region33: #{tpu_custom_call.1} parent=1 // pred_fallthru
      _
    // Predicated region
    $region34: #{tpu_custom_call.1} parent=1 // pred_check
      _
    $region35: #{tpu_custom_call.1} parent=1 // pred_check_branch
      %100 = sbr.rel (0) target = $region37
    $region36: #{tpu_custom_call.1} parent=1 // pred_region
      %s102 = ssub.s32 16, 16
      %103 = vsyncadd [#allocation14], %s102
      %s105 = sshll.u32 [#allocation13], 4
      %s106 = int_to_ptr.vmem [resolvable:$true] %s105
      %108 = dma.hbm_to_vmem [thread:$0]  %s8, 16, %s106, [#allocation14]
    $region37: #{tpu_custom_call.1} parent=1 // pred_fallthru
      _
    // Predicated region
    $region38: #{tpu_custom_call.1} parent=1 // pred_check
      _
    $region39: #{tpu_custom_call.1} parent=1 // pred_check_branch
      %110 = sbr.rel (0) target = $region41
    $region40: #{tpu_custom_call.1} parent=1 // pred_region
      %111 = dma.done [#allocation3], 512
    $region41: #{tpu_custom_call.1} parent=1 // pred_fallthru
      _
    // Predicated region
    $region42: #{tpu_custom_call.1} parent=1 // pred_check
      _
    $region43: #{tpu_custom_call.1} parent=1 // pred_check_branch
      %113 = sbr.rel (0) target = $region45
    $region44: #{tpu_custom_call.1} parent=1 // pred_region
      %114 = dma.done [#allocation5], 32768
    $region45: #{tpu_custom_call.1} parent=1 // pred_fallthru
      _
    // Predicated region
    $region46: #{tpu_custom_call.1} parent=1 // pred_check
      _
    $region47: #{tpu_custom_call.1} parent=1 // pred_check_branch
      %116 = sbr.rel (0) target = $region49
    $region48: #{tpu_custom_call.1} parent=1 // pred_region
      %117 = dma.done [#allocation5], 128
    $region49: #{tpu_custom_call.1} parent=1 // pred_fallthru
      _
    // Predicated region
    $region50: #{tpu_custom_call.1} parent=1 // pred_check
      _
    $region51: #{tpu_custom_call.1} parent=1 // pred_check_branch
      %119 = sbr.rel (0) target = $region53
    $region52: #{tpu_custom_call.1} parent=1 // pred_region
      %120 = dma.done [#allocation8], 65536
    $region53: #{tpu_custom_call.1} parent=1 // pred_fallthru
      _
    // Predicated region
    $region54: #{tpu_custom_call.1} parent=1 // pred_check
      _
    $region55: #{tpu_custom_call.1} parent=1 // pred_check_branch
      %122 = sbr.rel (0) target = $region57
    $region56: #{tpu_custom_call.1} parent=1 // pred_region
      %123 = dma.done [#allocation8], 128
    $region57: #{tpu_custom_call.1} parent=1 // pred_fallthru
      _
    // Predicated region
    $region58: #{tpu_custom_call.1} parent=1 // pred_check
      _
    $region59: #{tpu_custom_call.1} parent=1 // pred_check_branch
      %125 = sbr.rel (0) target = $region61
    $region60: #{tpu_custom_call.1} parent=1 // pred_region
      %126 = dma.done [#allocation11], 65536
    $region61: #{tpu_custom_call.1} parent=1 // pred_fallthru
      _
    // Predicated region
    $region62: #{tpu_custom_call.1} parent=1 // pred_check
      _
    $region63: #{tpu_custom_call.1} parent=1 // pred_check_branch
      %128 = sbr.rel (0) target = $region65
    $region64: #{tpu_custom_call.1} parent=1 // pred_region
      %129 = dma.done [#allocation11], 128
    $region65: #{tpu_custom_call.1} parent=1 // pred_fallthru
      _
    // Predicated region
    $region66: #{tpu_custom_call.1} parent=1 // pred_check
      _
    $region67: #{tpu_custom_call.1} parent=1 // pred_check_branch
      %131 = sbr.rel (0) target = $region69
    $region68: #{tpu_custom_call.1} parent=1 // pred_region
      %132 = dma.done [#allocation14], 16
    $region69: #{tpu_custom_call.1} parent=1 // pred_fallthru
      _
    %v134 = vld [vmem:[#allocation2] sm:$0xff]
    %v135 = vld [vmem:[#allocation2 + $0x8] sm:$0xff]
    %v136 = vld [vmem:[#allocation2 + $0x10] sm:$0xff]
    %v137 = vld [vmem:[#allocation2 + $0x18] sm:$0xff]
    %v138 = vld [vmem:[#allocation4] sm:$0xff]
    %v139 = vld [vmem:[#allocation4 + $0x8] sm:$0xff]
    %v140 = vld [vmem:[#allocation4 + $0x10] sm:$0xff]
    %v141 = vld [vmem:[#allocation4 + $0x18] sm:$0xff]
    %v142 = vld [vmem:[#allocation4 + $0x20] sm:$0xff]
    %v143 = vld [vmem:[#allocation4 + $0x28] sm:$0xff]
    %v144 = vld [vmem:[#allocation4 + $0x30] sm:$0xff]
    %v145 = vld [vmem:[#allocation4 + $0x38] sm:$0xff]
    %v146 = vld [vmem:[#allocation4 + $0x40] sm:$0xff]
    %v147 = vld [vmem:[#allocation4 + $0x48] sm:$0xff]
    %v148 = vld [vmem:[#allocation4 + $0x50] sm:$0xff]
    %v149 = vld [vmem:[#allocation4 + $0x58] sm:$0xff]
    %v150 = vld [vmem:[#allocation4 + $0x60] sm:$0xff]
    %v151 = vld [vmem:[#allocation4 + $0x68] sm:$0xff]
    %v152 = vld [vmem:[#allocation4 + $0x70] sm:$0xff]
    %v153 = vld [vmem:[#allocation4 + $0x78] sm:$0xff]
    %v154 = vld [vmem:[#allocation4 + $0x80] sm:$0xff]
    %v155 = vld [vmem:[#allocation4 + $0x88] sm:$0xff]
    %v156 = vld [vmem:[#allocation4 + $0x90] sm:$0xff]
    %v157 = vld [vmem:[#allocation4 + $0x98] sm:$0xff]
    %v158 = vld [vmem:[#allocation4 + $0xa0] sm:$0xff]
    %v159 = vld [vmem:[#allocation4 + $0xa8] sm:$0xff]
    %v160 = vld [vmem:[#allocation4 + $0xb0] sm:$0xff]
    %v161 = vld [vmem:[#allocation4 + $0xb8] sm:$0xff]
    %v162 = vld [vmem:[#allocation4 + $0xc0] sm:$0xff]
    %v163 = vld [vmem:[#allocation4 + $0xc8] sm:$0xff]
    %v164 = vld [vmem:[#allocation4 + $0xd0] sm:$0xff]
    %v165 = vld [vmem:[#allocation4 + $0xd8] sm:$0xff]
    %v166 = vld [vmem:[#allocation4 + $0xe0] sm:$0xff]
    %v167 = vld [vmem:[#allocation4 + $0xe8] sm:$0xff]
    %v168 = vld [vmem:[#allocation4 + $0xf0] sm:$0xff]
    %v169 = vld [vmem:[#allocation4 + $0xf8] sm:$0xff]
    %v170 = vld [vmem:[#allocation4 + $0x100] sm:$0xff]
    %v171 = vld [vmem:[#allocation4 + $0x108] sm:$0xff]
    %v172 = vld [vmem:[#allocation4 + $0x110] sm:$0xff]
    %v173 = vld [vmem:[#allocation4 + $0x118] sm:$0xff]
    %v174 = vld [vmem:[#allocation4 + $0x120] sm:$0xff]
    %v175 = vld [vmem:[#allocation4 + $0x128] sm:$0xff]
    %v176 = vld [vmem:[#allocation4 + $0x130] sm:$0xff]
    %v177 = vld [vmem:[#allocation4 + $0x138] sm:$0xff]
    %v178 = vld [vmem:[#allocation4 + $0x140] sm:$0xff]
    %v179 = vld [vmem:[#allocation4 + $0x148] sm:$0xff]
    %v180 = vld [vmem:[#allocation4 + $0x150] sm:$0xff]
    %v181 = vld [vmem:[#allocation4 + $0x158] sm:$0xff]
    %v182 = vld [vmem:[#allocation4 + $0x160] sm:$0xff]
    %v183 = vld [vmem:[#allocation4 + $0x168] sm:$0xff]
    %v184 = vld [vmem:[#allocation4 + $0x170] sm:$0xff]
    %v185 = vld [vmem:[#allocation4 + $0x178] sm:$0xff]
    %v186 = vld [vmem:[#allocation4 + $0x180] sm:$0xff]
    %v187 = vld [vmem:[#allocation4 + $0x188] sm:$0xff]
    %v188 = vld [vmem:[#allocation4 + $0x190] sm:$0xff]
    %v189 = vld [vmem:[#allocation4 + $0x198] sm:$0xff]
    %v190 = vld [vmem:[#allocation4 + $0x1a0] sm:$0xff]
    %v191 = vld [vmem:[#allocation4 + $0x1a8] sm:$0xff]
    %v192 = vld [vmem:[#allocation4 + $0x1b0] sm:$0xff]
    %v193 = vld [vmem:[#allocation4 + $0x1b8] sm:$0xff]
    %v194 = vld [vmem:[#allocation4 + $0x1c0] sm:$0xff]
    %v195 = vld [vmem:[#allocation4 + $0x1c8] sm:$0xff]
    %v196 = vld [vmem:[#allocation4 + $0x1d0] sm:$0xff]
    %v197 = vld [vmem:[#allocation4 + $0x1d8] sm:$0xff]
    %v198 = vld [vmem:[#allocation4 + $0x1e0] sm:$0xff]
    %v199 = vld [vmem:[#allocation4 + $0x1e8] sm:$0xff]
    %v200 = vld [vmem:[#allocation4 + $0x1f0] sm:$0xff]
    %v201 = vld [vmem:[#allocation4 + $0x1f8] sm:$0xff]
    %v202 = vld [vmem:[#allocation4 + $0x200] sm:$0xff]
    %v203 = vld [vmem:[#allocation4 + $0x208] sm:$0xff]
    %v204 = vld [vmem:[#allocation4 + $0x210] sm:$0xff]
    %v205 = vld [vmem:[#allocation4 + $0x218] sm:$0xff]
    %v206 = vld [vmem:[#allocation4 + $0x220] sm:$0xff]
    %v207 = vld [vmem:[#allocation4 + $0x228] sm:$0xff]
    %v208 = vld [vmem:[#allocation4 + $0x230] sm:$0xff]
    %v209 = vld [vmem:[#allocation4 + $0x238] sm:$0xff]
    %v210 = vld [vmem:[#allocation4 + $0x240] sm:$0xff]
    %v211 = vld [vmem:[#allocation4 + $0x248] sm:$0xff]
    %v212 = vld [vmem:[#allocation4 + $0x250] sm:$0xff]
    %v213 = vld [vmem:[#allocation4 + $0x258] sm:$0xff]
    %v214 = vld [vmem:[#allocation4 + $0x260] sm:$0xff]
    %v215 = vld [vmem:[#allocation4 + $0x268] sm:$0xff]
    %v216 = vld [vmem:[#allocation4 + $0x270] sm:$0xff]
    %v217 = vld [vmem:[#allocation4 + $0x278] sm:$0xff]
    %v218 = vld [vmem:[#allocation4 + $0x280] sm:$0xff]
    %v219 = vld [vmem:[#allocation4 + $0x288] sm:$0xff]
    %v220 = vld [vmem:[#allocation4 + $0x290] sm:$0xff]
    %v221 = vld [vmem:[#allocation4 + $0x298] sm:$0xff]
    %v222 = vld [vmem:[#allocation4 + $0x2a0] sm:$0xff]
    %v223 = vld [vmem:[#allocation4 + $0x2a8] sm:$0xff]
    %v224 = vld [vmem:[#allocation4 + $0x2b0] sm:$0xff]
    %v225 = vld [vmem:[#allocation4 + $0x2b8] sm:$0xff]
    %v226 = vld [vmem:[#allocation4 + $0x2c0] sm:$0xff]
    %v227 = vld [vmem:[#allocation4 + $0x2c8] sm:$0xff]
    %v228 = vld [vmem:[#allocation4 + $0x2d0] sm:$0xff]
    %v229 = vld [vmem:[#allocation4 + $0x2d8] sm:$0xff]
    %v230 = vld [vmem:[#allocation4 + $0x2e0] sm:$0xff]
    %v231 = vld [vmem:[#allocation4 + $0x2e8] sm:$0xff]
    %v232 = vld [vmem:[#allocation4 + $0x2f0] sm:$0xff]
    %v233 = vld [vmem:[#allocation4 + $0x2f8] sm:$0xff]
    %v234 = vld [vmem:[#allocation4 + $0x300] sm:$0xff]
    %v235 = vld [vmem:[#allocation4 + $0x308] sm:$0xff]
    %v236 = vld [vmem:[#allocation4 + $0x310] sm:$0xff]
    %v237 = vld [vmem:[#allocation4 + $0x318] sm:$0xff]
    %v238 = vld [vmem:[#allocation4 + $0x320] sm:$0xff]
    %v239 = vld [vmem:[#allocation4 + $0x328] sm:$0xff]
    %v240 = vld [vmem:[#allocation4 + $0x330] sm:$0xff]
    %v241 = vld [vmem:[#allocation4 + $0x338] sm:$0xff]
    %v242 = vld [vmem:[#allocation4 + $0x340] sm:$0xff]
    %v243 = vld [vmem:[#allocation4 + $0x348] sm:$0xff]
    %v244 = vld [vmem:[#allocation4 + $0x350] sm:$0xff]
    %v245 = vld [vmem:[#allocation4 + $0x358] sm:$0xff]
    %v246 = vld [vmem:[#allocation4 + $0x360] sm:$0xff]
    %v247 = vld [vmem:[#allocation4 + $0x368] sm:$0xff]
    %v248 = vld [vmem:[#allocation4 + $0x370] sm:$0xff]
    %v249 = vld [vmem:[#allocation4 + $0x378] sm:$0xff]
    %v250 = vld [vmem:[#allocation4 + $0x380] sm:$0xff]
    %v251 = vld [vmem:[#allocation4 + $0x388] sm:$0xff]
    %v252 = vld [vmem:[#allocation4 + $0x390] sm:$0xff]
    %v253 = vld [vmem:[#allocation4 + $0x398] sm:$0xff]
    %v254 = vld [vmem:[#allocation4 + $0x3a0] sm:$0xff]
    %v255 = vld [vmem:[#allocation4 + $0x3a8] sm:$0xff]
    %v256 = vld [vmem:[#allocation4 + $0x3b0] sm:$0xff]
    %v257 = vld [vmem:[#allocation4 + $0x3b8] sm:$0xff]
    %v258 = vld [vmem:[#allocation4 + $0x3c0] sm:$0xff]
    %v259 = vld [vmem:[#allocation4 + $0x3c8] sm:$0xff]
    %v260 = vld [vmem:[#allocation4 + $0x3d0] sm:$0xff]
    %v261 = vld [vmem:[#allocation4 + $0x3d8] sm:$0xff]
    %v262 = vld [vmem:[#allocation4 + $0x3e0] sm:$0xff]
    %v263 = vld [vmem:[#allocation4 + $0x3e8] sm:$0xff]
    %v264 = vld [vmem:[#allocation4 + $0x3f0] sm:$0xff]
    %v265 = vld [vmem:[#allocation4 + $0x3f8] sm:$0xff]
    %v266 = vld [vmem:[#allocation4 + $0x400] sm:$0xff]
    %v267 = vld [vmem:[#allocation4 + $0x408] sm:$0xff]
    %v268 = vld [vmem:[#allocation4 + $0x410] sm:$0xff]
    %v269 = vld [vmem:[#allocation4 + $0x418] sm:$0xff]
    %v270 = vld [vmem:[#allocation4 + $0x420] sm:$0xff]
    %v271 = vld [vmem:[#allocation4 + $0x428] sm:$0xff]
    %v272 = vld [vmem:[#allocation4 + $0x430] sm:$0xff]
    %v273 = vld [vmem:[#allocation4 + $0x438] sm:$0xff]
    %v274 = vld [vmem:[#allocation4 + $0x440] sm:$0xff]
    %v275 = vld [vmem:[#allocation4 + $0x448] sm:$0xff]
    %v276 = vld [vmem:[#allocation4 + $0x450] sm:$0xff]
    %v277 = vld [vmem:[#allocation4 + $0x458] sm:$0xff]
    %v278 = vld [vmem:[#allocation4 + $0x460] sm:$0xff]
    %v279 = vld [vmem:[#allocation4 + $0x468] sm:$0xff]
    %v280 = vld [vmem:[#allocation4 + $0x470] sm:$0xff]
    %v281 = vld [vmem:[#allocation4 + $0x478] sm:$0xff]
    %v282 = vld [vmem:[#allocation4 + $0x480] sm:$0xff]
    %v283 = vld [vmem:[#allocation4 + $0x488] sm:$0xff]
    %v284 = vld [vmem:[#allocation4 + $0x490] sm:$0xff]
    %v285 = vld [vmem:[#allocation4 + $0x498] sm:$0xff]
    %v286 = vld [vmem:[#allocation4 + $0x4a0] sm:$0xff]
    %v287 = vld [vmem:[#allocation4 + $0x4a8] sm:$0xff]
    %v288 = vld [vmem:[#allocation4 + $0x4b0] sm:$0xff]
    %v289 = vld [vmem:[#allocation4 + $0x4b8] sm:$0xff]
    %v290 = vld [vmem:[#allocation4 + $0x4c0] sm:$0xff]
    %v291 = vld [vmem:[#allocation4 + $0x4c8] sm:$0xff]
    %v292 = vld [vmem:[#allocation4 + $0x4d0] sm:$0xff]
    %v293 = vld [vmem:[#allocation4 + $0x4d8] sm:$0xff]
    %v294 = vld [vmem:[#allocation4 + $0x4e0] sm:$0xff]
    %v295 = vld [vmem:[#allocation4 + $0x4e8] sm:$0xff]
    %v296 = vld [vmem:[#allocation4 + $0x4f0] sm:$0xff]
    %v297 = vld [vmem:[#allocation4 + $0x4f8] sm:$0xff]
    %v298 = vld [vmem:[#allocation4 + $0x500] sm:$0xff]
    %v299 = vld [vmem:[#allocation4 + $0x508] sm:$0xff]
    %v300 = vld [vmem:[#allocation4 + $0x510] sm:$0xff]
    %v301 = vld [vmem:[#allocation4 + $0x518] sm:$0xff]
    %v302 = vld [vmem:[#allocation4 + $0x520] sm:$0xff]
    %v303 = vld [vmem:[#allocation4 + $0x528] sm:$0xff]
    %v304 = vld [vmem:[#allocation4 + $0x530] sm:$0xff]
    %v305 = vld [vmem:[#allocation4 + $0x538] sm:$0xff]
    %v306 = vld [vmem:[#allocation4 + $0x540] sm:$0xff]
    %v307 = vld [vmem:[#allocation4 + $0x548] sm:$0xff]
    %v308 = vld [vmem:[#allocation4 + $0x550] sm:$0xff]
    %v309 = vld [vmem:[#allocation4 + $0x558] sm:$0xff]
    %v310 = vld [vmem:[#allocation4 + $0x560] sm:$0xff]
    %v311 = vld [vmem:[#allocation4 + $0x568] sm:$0xff]
    %v312 = vld [vmem:[#allocation4 + $0x570] sm:$0xff]
    %v313 = vld [vmem:[#allocation4 + $0x578] sm:$0xff]
    %v314 = vld [vmem:[#allocation4 + $0x580] sm:$0xff]
    %v315 = vld [vmem:[#allocation4 + $0x588] sm:$0xff]
    %v316 = vld [vmem:[#allocation4 + $0x590] sm:$0xff]
    %v317 = vld [vmem:[#allocation4 + $0x598] sm:$0xff]
    %v318 = vld [vmem:[#allocation4 + $0x5a0] sm:$0xff]
    %v319 = vld [vmem:[#allocation4 + $0x5a8] sm:$0xff]
    %v320 = vld [vmem:[#allocation4 + $0x5b0] sm:$0xff]
    %v321 = vld [vmem:[#allocation4 + $0x5b8] sm:$0xff]
    %v322 = vld [vmem:[#allocation4 + $0x5c0] sm:$0xff]
    %v323 = vld [vmem:[#allocation4 + $0x5c8] sm:$0xff]
    %v324 = vld [vmem:[#allocation4 + $0x5d0] sm:$0xff]
    %v325 = vld [vmem:[#allocation4 + $0x5d8] sm:$0xff]
    %v326 = vld [vmem:[#allocation4 + $0x5e0] sm:$0xff]
    %v327 = vld [vmem:[#allocation4 + $0x5e8] sm:$0xff]
    %v328 = vld [vmem:[#allocation4 + $0x5f0] sm:$0xff]
    %v329 = vld [vmem:[#allocation4 + $0x5f8] sm:$0xff]
    %v330 = vld [vmem:[#allocation4 + $0x600] sm:$0xff]
    %v331 = vld [vmem:[#allocation4 + $0x608] sm:$0xff]
    %v332 = vld [vmem:[#allocation4 + $0x610] sm:$0xff]
    %v333 = vld [vmem:[#allocation4 + $0x618] sm:$0xff]
    %v334 = vld [vmem:[#allocation4 + $0x620] sm:$0xff]
    %v335 = vld [vmem:[#allocation4 + $0x628] sm:$0xff]
    %v336 = vld [vmem:[#allocation4 + $0x630] sm:$0xff]
    %v337 = vld [vmem:[#allocation4 + $0x638] sm:$0xff]
    %v338 = vld [vmem:[#allocation4 + $0x640] sm:$0xff]
    %v339 = vld [vmem:[#allocation4 + $0x648] sm:$0xff]
    %v340 = vld [vmem:[#allocation4 + $0x650] sm:$0xff]
    %v341 = vld [vmem:[#allocation4 + $0x658] sm:$0xff]
    %v342 = vld [vmem:[#allocation4 + $0x660] sm:$0xff]
    %v343 = vld [vmem:[#allocation4 + $0x668] sm:$0xff]
    %v344 = vld [vmem:[#allocation4 + $0x670] sm:$0xff]
    %v345 = vld [vmem:[#allocation4 + $0x678] sm:$0xff]
    %v346 = vld [vmem:[#allocation4 + $0x680] sm:$0xff]
    %v347 = vld [vmem:[#allocation4 + $0x688] sm:$0xff]
    %v348 = vld [vmem:[#allocation4 + $0x690] sm:$0xff]
    %v349 = vld [vmem:[#allocation4 + $0x698] sm:$0xff]
    %v350 = vld [vmem:[#allocation4 + $0x6a0] sm:$0xff]
    %v351 = vld [vmem:[#allocation4 + $0x6a8] sm:$0xff]
    %v352 = vld [vmem:[#allocation4 + $0x6b0] sm:$0xff]
    %v353 = vld [vmem:[#allocation4 + $0x6b8] sm:$0xff]
    %v354 = vld [vmem:[#allocation4 + $0x6c0] sm:$0xff]
    %v355 = vld [vmem:[#allocation4 + $0x6c8] sm:$0xff]
    %v356 = vld [vmem:[#allocation4 + $0x6d0] sm:$0xff]
    %v357 = vld [vmem:[#allocation4 + $0x6d8] sm:$0xff]
    %v358 = vld [vmem:[#allocation4 + $0x6e0] sm:$0xff]
    %v359 = vld [vmem:[#allocation4 + $0x6e8] sm:$0xff]
    %v360 = vld [vmem:[#allocation4 + $0x6f0] sm:$0xff]
    %v361 = vld [vmem:[#allocation4 + $0x6f8] sm:$0xff]
    %v362 = vld [vmem:[#allocation4 + $0x700] sm:$0xff]
    %v363 = vld [vmem:[#allocation4 + $0x708] sm:$0xff]
    %v364 = vld [vmem:[#allocation4 + $0x710] sm:$0xff]
    %v365 = vld [vmem:[#allocation4 + $0x718] sm:$0xff]
    %v366 = vld [vmem:[#allocation4 + $0x720] sm:$0xff]
    %v367 = vld [vmem:[#allocation4 + $0x728] sm:$0xff]
    %v368 = vld [vmem:[#allocation4 + $0x730] sm:$0xff]
    %v369 = vld [vmem:[#allocation4 + $0x738] sm:$0xff]
    %v370 = vld [vmem:[#allocation4 + $0x740] sm:$0xff]
    %v371 = vld [vmem:[#allocation4 + $0x748] sm:$0xff]
    %v372 = vld [vmem:[#allocation4 + $0x750] sm:$0xff]
    %v373 = vld [vmem:[#allocation4 + $0x758] sm:$0xff]
    %v374 = vld [vmem:[#allocation4 + $0x760] sm:$0xff]
    %v375 = vld [vmem:[#allocation4 + $0x768] sm:$0xff]
    %v376 = vld [vmem:[#allocation4 + $0x770] sm:$0xff]
    %v377 = vld [vmem:[#allocation4 + $0x778] sm:$0xff]
    %v378 = vld [vmem:[#allocation4 + $0x780] sm:$0xff]
    %v379 = vld [vmem:[#allocation4 + $0x788] sm:$0xff]
    %v380 = vld [vmem:[#allocation4 + $0x790] sm:$0xff]
    %v381 = vld [vmem:[#allocation4 + $0x798] sm:$0xff]
    %v382 = vld [vmem:[#allocation4 + $0x7a0] sm:$0xff]
    %v383 = vld [vmem:[#allocation4 + $0x7a8] sm:$0xff]
    %v384 = vld [vmem:[#allocation4 + $0x7b0] sm:$0xff]
    %v385 = vld [vmem:[#allocation4 + $0x7b8] sm:$0xff]
    %v386 = vld [vmem:[#allocation4 + $0x7c0] sm:$0xff]
    %v387 = vld [vmem:[#allocation4 + $0x7c8] sm:$0xff]
    %v388 = vld [vmem:[#allocation4 + $0x7d0] sm:$0xff]
    %v389 = vld [vmem:[#allocation4 + $0x7d8] sm:$0xff]
    %v390 = vld [vmem:[#allocation4 + $0x7e0] sm:$0xff]
    %v391 = vld [vmem:[#allocation4 + $0x7e8] sm:$0xff]
    %v392 = vld [vmem:[#allocation4 + $0x7f0] sm:$0xff]
    %v393 = vld [vmem:[#allocation4 + $0x7f8] sm:$0xff]
    %v394 = vld [vmem:[#allocation6] sm:$0xff]
    %v396 = vlaneseq
    %v397 = vshrl.u32 %v396, 7
    %v398 = vsub.s32 0, %v397
    %v399 = vrot.slane %v394, %v398
    %v400 = vlaneseq
    %v401 = vshrl.u32 %v400, 7
    %v402 = vsub.s32 1, %v401
    %v403 = vrot.slane %v394, %v402
    %v404 = vlaneseq
    %v405 = vshrl.u32 %v404, 7
    %v406 = vsub.s32 2, %v405
    %v407 = vrot.slane %v394, %v406
    %v408 = vlaneseq
    %v409 = vshrl.u32 %v408, 7
    %v410 = vsub.s32 3, %v409
    %v411 = vrot.slane %v394, %v410
    %v412 = vlaneseq
    %v413 = vshrl.u32 %v412, 7
    %v414 = vsub.s32 4, %v413
    %v415 = vrot.slane %v394, %v414
    %v416 = vlaneseq
    %v417 = vshrl.u32 %v416, 7
    %v418 = vsub.s32 5, %v417
    %v419 = vrot.slane %v394, %v418
    %v420 = vlaneseq
    %v421 = vshrl.u32 %v420, 7
    %v422 = vsub.s32 6, %v421
    %v423 = vrot.slane %v394, %v422
    %v424 = vlaneseq
    %v425 = vshrl.u32 %v424, 7
    %v426 = vsub.s32 7, %v425
    %v427 = vrot.slane %v394, %v426
    %v440 = vunpack.c.l.b16 %v134
    %v441 = vunpack.c.h.b16 %v134
    %v442 = vunpack.c.l.b16 %v135
    %v443 = vunpack.c.h.b16 %v135
    %v444 = vunpack.c.l.b16 %v136
    %v445 = vunpack.c.h.b16 %v136
    %v446 = vunpack.c.l.b16 %v137
    %v447 = vunpack.c.h.b16 %v137
    %v448 = vpack.c.b16 %v444, %v440
    %v449 = vpack.c.b16 %v445, %v441
    %v450 = vpack.c.b16 %v446, %v442
    %v451 = vpack.c.b16 %v447, %v443
    %v712 = vunpack.c.l.b16 %v138
    %v713 = vunpack.c.h.b16 %v138
    %v714 = vunpack.c.l.b16 %v139
    %v715 = vunpack.c.h.b16 %v139
    %v716 = vunpack.c.l.b16 %v140
    %v717 = vunpack.c.h.b16 %v140
    %v718 = vunpack.c.l.b16 %v141
    %v719 = vunpack.c.h.b16 %v141
    %v720 = vunpack.c.l.b16 %v142
    %v721 = vunpack.c.h.b16 %v142
    %v722 = vunpack.c.l.b16 %v143
    %v723 = vunpack.c.h.b16 %v143
    %v724 = vunpack.c.l.b16 %v144
    %v725 = vunpack.c.h.b16 %v144
    %v726 = vunpack.c.l.b16 %v145
    %v727 = vunpack.c.h.b16 %v145
    %v728 = vunpack.c.l.b16 %v146
    %v729 = vunpack.c.h.b16 %v146
    %v730 = vunpack.c.l.b16 %v147
    %v731 = vunpack.c.h.b16 %v147
    %v732 = vunpack.c.l.b16 %v148
    %v733 = vunpack.c.h.b16 %v148
    %v734 = vunpack.c.l.b16 %v149
    %v735 = vunpack.c.h.b16 %v149
    %v736 = vunpack.c.l.b16 %v150
    %v737 = vunpack.c.h.b16 %v150
    %v738 = vunpack.c.l.b16 %v151
    %v739 = vunpack.c.h.b16 %v151
    %v740 = vunpack.c.l.b16 %v152
    %v741 = vunpack.c.h.b16 %v152
    %v742 = vunpack.c.l.b16 %v153
    %v743 = vunpack.c.h.b16 %v153
    %v744 = vunpack.c.l.b16 %v154
    %v745 = vunpack.c.h.b16 %v154
    %v746 = vunpack.c.l.b16 %v155
    %v747 = vunpack.c.h.b16 %v155
    %v748 = vunpack.c.l.b16 %v156
    %v749 = vunpack.c.h.b16 %v156
    %v750 = vunpack.c.l.b16 %v157
    %v751 = vunpack.c.h.b16 %v157
    %v752 = vunpack.c.l.b16 %v158
    %v753 = vunpack.c.h.b16 %v158
    %v754 = vunpack.c.l.b16 %v159
    %v755 = vunpack.c.h.b16 %v159
    %v756 = vunpack.c.l.b16 %v160
    %v757 = vunpack.c.h.b16 %v160
    %v758 = vunpack.c.l.b16 %v161
    %v759 = vunpack.c.h.b16 %v161
    %v760 = vunpack.c.l.b16 %v162
    %v761 = vunpack.c.h.b16 %v162
    %v762 = vunpack.c.l.b16 %v163
    %v763 = vunpack.c.h.b16 %v163
    %v764 = vunpack.c.l.b16 %v164
    %v765 = vunpack.c.h.b16 %v164
    %v766 = vunpack.c.l.b16 %v165
    %v767 = vunpack.c.h.b16 %v165
    %v768 = vunpack.c.l.b16 %v166
    %v769 = vunpack.c.h.b16 %v166
    %v770 = vunpack.c.l.b16 %v167
    %v771 = vunpack.c.h.b16 %v167
    %v772 = vunpack.c.l.b16 %v168
    %v773 = vunpack.c.h.b16 %v168
    %v774 = vunpack.c.l.b16 %v169
    %v775 = vunpack.c.h.b16 %v169
    %v776 = vunpack.c.l.b16 %v170
    %v777 = vunpack.c.h.b16 %v170
    %v778 = vunpack.c.l.b16 %v171
    %v779 = vunpack.c.h.b16 %v171
    %v780 = vunpack.c.l.b16 %v172
    %v781 = vunpack.c.h.b16 %v172
    %v782 = vunpack.c.l.b16 %v173
    %v783 = vunpack.c.h.b16 %v173
    %v784 = vunpack.c.l.b16 %v174
    %v785 = vunpack.c.h.b16 %v174
    %v786 = vunpack.c.l.b16 %v175
    %v787 = vunpack.c.h.b16 %v175
    %v788 = vunpack.c.l.b16 %v176
    %v789 = vunpack.c.h.b16 %v176
    %v790 = vunpack.c.l.b16 %v177
    %v791 = vunpack.c.h.b16 %v177
    %v792 = vunpack.c.l.b16 %v178
    %v793 = vunpack.c.h.b16 %v178
    %v794 = vunpack.c.l.b16 %v179
    %v795 = vunpack.c.h.b16 %v179
    %v796 = vunpack.c.l.b16 %v180
    %v797 = vunpack.c.h.b16 %v180
    %v798 = vunpack.c.l.b16 %v181
    %v799 = vunpack.c.h.b16 %v181
    %v800 = vunpack.c.l.b16 %v182
    %v801 = vunpack.c.h.b16 %v182
    %v802 = vunpack.c.l.b16 %v183
    %v803 = vunpack.c.h.b16 %v183
    %v804 = vunpack.c.l.b16 %v184
    %v805 = vunpack.c.h.b16 %v184
    %v806 = vunpack.c.l.b16 %v185
    %v807 = vunpack.c.h.b16 %v185
    %v808 = vunpack.c.l.b16 %v186
    %v809 = vunpack.c.h.b16 %v186
    %v810 = vunpack.c.l.b16 %v187
    %v811 = vunpack.c.h.b16 %v187
    %v812 = vunpack.c.l.b16 %v188
    %v813 = vunpack.c.h.b16 %v188
    %v814 = vunpack.c.l.b16 %v189
    %v815 = vunpack.c.h.b16 %v189
    %v816 = vunpack.c.l.b16 %v190
    %v817 = vunpack.c.h.b16 %v190
    %v818 = vunpack.c.l.b16 %v191
    %v819 = vunpack.c.h.b16 %v191
    %v820 = vunpack.c.l.b16 %v192
    %v821 = vunpack.c.h.b16 %v192
    %v822 = vunpack.c.l.b16 %v193
    %v823 = vunpack.c.h.b16 %v193
    %v824 = vunpack.c.l.b16 %v194
    %v825 = vunpack.c.h.b16 %v194
    %v826 = vunpack.c.l.b16 %v195
    %v827 = vunpack.c.h.b16 %v195
    %v828 = vunpack.c.l.b16 %v196
    %v829 = vunpack.c.h.b16 %v196
    %v830 = vunpack.c.l.b16 %v197
    %v831 = vunpack.c.h.b16 %v197
    %v832 = vunpack.c.l.b16 %v198
    %v833 = vunpack.c.h.b16 %v198
    %v834 = vunpack.c.l.b16 %v199
    %v835 = vunpack.c.h.b16 %v199
    %v836 = vunpack.c.l.b16 %v200
    %v837 = vunpack.c.h.b16 %v200
    %v838 = vunpack.c.l.b16 %v201
    %v839 = vunpack.c.h.b16 %v201
    %v840 = vunpack.c.l.b16 %v202
    %v841 = vunpack.c.h.b16 %v202
    %v842 = vunpack.c.l.b16 %v203
    %v843 = vunpack.c.h.b16 %v203
    %v844 = vunpack.c.l.b16 %v204
    %v845 = vunpack.c.h.b16 %v204
    %v846 = vunpack.c.l.b16 %v205
    %v847 = vunpack.c.h.b16 %v205
    %v848 = vunpack.c.l.b16 %v206
    %v849 = vunpack.c.h.b16 %v206
    %v850 = vunpack.c.l.b16 %v207
    %v851 = vunpack.c.h.b16 %v207
    %v852 = vunpack.c.l.b16 %v208
    %v853 = vunpack.c.h.b16 %v208
    %v854 = vunpack.c.l.b16 %v209
    %v855 = vunpack.c.h.b16 %v209
    %v856 = vunpack.c.l.b16 %v210
    %v857 = vunpack.c.h.b16 %v210
    %v858 = vunpack.c.l.b16 %v211
    %v859 = vunpack.c.h.b16 %v211
    %v860 = vunpack.c.l.b16 %v212
    %v861 = vunpack.c.h.b16 %v212
    %v862 = vunpack.c.l.b16 %v213
    %v863 = vunpack.c.h.b16 %v213
    %v864 = vunpack.c.l.b16 %v214
    %v865 = vunpack.c.h.b16 %v214
    %v866 = vunpack.c.l.b16 %v215
    %v867 = vunpack.c.h.b16 %v215
    %v868 = vunpack.c.l.b16 %v216
    %v869 = vunpack.c.h.b16 %v216
    %v870 = vunpack.c.l.b16 %v217
    %v871 = vunpack.c.h.b16 %v217
    %v872 = vunpack.c.l.b16 %v218
    %v873 = vunpack.c.h.b16 %v218
    %v874 = vunpack.c.l.b16 %v219
    %v875 = vunpack.c.h.b16 %v219
    %v876 = vunpack.c.l.b16 %v220
    %v877 = vunpack.c.h.b16 %v220
    %v878 = vunpack.c.l.b16 %v221
    %v879 = vunpack.c.h.b16 %v221
    %v880 = vunpack.c.l.b16 %v222
    %v881 = vunpack.c.h.b16 %v222
    %v882 = vunpack.c.l.b16 %v223
    %v883 = vunpack.c.h.b16 %v223
    %v884 = vunpack.c.l.b16 %v224
    %v885 = vunpack.c.h.b16 %v224
    %v886 = vunpack.c.l.b16 %v225
    %v887 = vunpack.c.h.b16 %v225
    %v888 = vunpack.c.l.b16 %v226
    %v889 = vunpack.c.h.b16 %v226
    %v890 = vunpack.c.l.b16 %v227
    %v891 = vunpack.c.h.b16 %v227
    %v892 = vunpack.c.l.b16 %v228
    %v893 = vunpack.c.h.b16 %v228
    %v894 = vunpack.c.l.b16 %v229
    %v895 = vunpack.c.h.b16 %v229
    %v896 = vunpack.c.l.b16 %v230
    %v897 = vunpack.c.h.b16 %v230
    %v898 = vunpack.c.l.b16 %v231
    %v899 = vunpack.c.h.b16 %v231
    %v900 = vunpack.c.l.b16 %v232
    %v901 = vunpack.c.h.b16 %v232
    %v902 = vunpack.c.l.b16 %v233
    %v903 = vunpack.c.h.b16 %v233
    %v904 = vunpack.c.l.b16 %v234
    %v905 = vunpack.c.h.b16 %v234
    %v906 = vunpack.c.l.b16 %v235
    %v907 = vunpack.c.h.b16 %v235
    %v908 = vunpack.c.l.b16 %v236
    %v909 = vunpack.c.h.b16 %v236
    %v910 = vunpack.c.l.b16 %v237
    %v911 = vunpack.c.h.b16 %v237
    %v912 = vunpack.c.l.b16 %v238
    %v913 = vunpack.c.h.b16 %v238
    %v914 = vunpack.c.l.b16 %v239
    %v915 = vunpack.c.h.b16 %v239
    %v916 = vunpack.c.l.b16 %v240
    %v917 = vunpack.c.h.b16 %v240
    %v918 = vunpack.c.l.b16 %v241
    %v919 = vunpack.c.h.b16 %v241
    %v920 = vunpack.c.l.b16 %v242
    %v921 = vunpack.c.h.b16 %v242
    %v922 = vunpack.c.l.b16 %v243
    %v923 = vunpack.c.h.b16 %v243
    %v924 = vunpack.c.l.b16 %v244
    %v925 = vunpack.c.h.b16 %v244
    %v926 = vunpack.c.l.b16 %v245
    %v927 = vunpack.c.h.b16 %v245
    %v928 = vunpack.c.l.b16 %v246
    %v929 = vunpack.c.h.b16 %v246
    %v930 = vunpack.c.l.b16 %v247
    %v931 = vunpack.c.h.b16 %v247
    %v932 = vunpack.c.l.b16 %v248
    %v933 = vunpack.c.h.b16 %v248
    %v934 = vunpack.c.l.b16 %v249
    %v935 = vunpack.c.h.b16 %v249
    %v936 = vunpack.c.l.b16 %v250
    %v937 = vunpack.c.h.b16 %v250
    %v938 = vunpack.c.l.b16 %v251
    %v939 = vunpack.c.h.b16 %v251
    %v940 = vunpack.c.l.b16 %v252
    %v941 = vunpack.c.h.b16 %v252
    %v942 = vunpack.c.l.b16 %v253
    %v943 = vunpack.c.h.b16 %v253
    %v944 = vunpack.c.l.b16 %v254
    %v945 = vunpack.c.h.b16 %v254
    %v946 = vunpack.c.l.b16 %v255
    %v947 = vunpack.c.h.b16 %v255
    %v948 = vunpack.c.l.b16 %v256
    %v949 = vunpack.c.h.b16 %v256
    %v950 = vunpack.c.l.b16 %v257
    %v951 = vunpack.c.h.b16 %v257
    %v952 = vunpack.c.l.b16 %v258
    %v953 = vunpack.c.h.b16 %v258
    %v954 = vunpack.c.l.b16 %v259
    %v955 = vunpack.c.h.b16 %v259
    %v956 = vunpack.c.l.b16 %v260
    %v957 = vunpack.c.h.b16 %v260
    %v958 = vunpack.c.l.b16 %v261
    %v959 = vunpack.c.h.b16 %v261
    %v960 = vunpack.c.l.b16 %v262
    %v961 = vunpack.c.h.b16 %v262
    %v962 = vunpack.c.l.b16 %v263
    %v963 = vunpack.c.h.b16 %v263
    %v964 = vunpack.c.l.b16 %v264
    %v965 = vunpack.c.h.b16 %v264
    %v966 = vunpack.c.l.b16 %v265
    %v967 = vunpack.c.h.b16 %v265
    %v968 = vunpack.c.l.b16 %v266
    %v969 = vunpack.c.h.b16 %v266
    %v970 = vunpack.c.l.b16 %v267
    %v971 = vunpack.c.h.b16 %v267
    %v972 = vunpack.c.l.b16 %v268
    %v973 = vunpack.c.h.b16 %v268
    %v974 = vunpack.c.l.b16 %v269
    %v975 = vunpack.c.h.b16 %v269
    %v976 = vunpack.c.l.b16 %v270
    %v977 = vunpack.c.h.b16 %v270
    %v978 = vunpack.c.l.b16 %v271
    %v979 = vunpack.c.h.b16 %v271
    %v980 = vunpack.c.l.b16 %v272
    %v981 = vunpack.c.h.b16 %v272
    %v982 = vunpack.c.l.b16 %v273
    %v983 = vunpack.c.h.b16 %v273
    %v984 = vunpack.c.l.b16 %v274
    %v985 = vunpack.c.h.b16 %v274
    %v986 = vunpack.c.l.b16 %v275
    %v987 = vunpack.c.h.b16 %v275
    %v988 = vunpack.c.l.b16 %v276
    %v989 = vunpack.c.h.b16 %v276
    %v990 = vunpack.c.l.b16 %v277
    %v991 = vunpack.c.h.b16 %v277
    %v992 = vunpack.c.l.b16 %v278
    %v993 = vunpack.c.h.b16 %v278
    %v994 = vunpack.c.l.b16 %v279
    %v995 = vunpack.c.h.b16 %v279
    %v996 = vunpack.c.l.b16 %v280
    %v997 = vunpack.c.h.b16 %v280
    %v998 = vunpack.c.l.b16 %v281
    %v999 = vunpack.c.h.b16 %v281
    %v1000 = vunpack.c.l.b16 %v282
    %v1001 = vunpack.c.h.b16 %v282
    %v1002 = vunpack.c.l.b16 %v283
    %v1003 = vunpack.c.h.b16 %v283
    %v1004 = vunpack.c.l.b16 %v284
    %v1005 = vunpack.c.h.b16 %v284
    %v1006 = vunpack.c.l.b16 %v285
    %v1007 = vunpack.c.h.b16 %v285
    %v1008 = vunpack.c.l.b16 %v286
    %v1009 = vunpack.c.h.b16 %v286
    %v1010 = vunpack.c.l.b16 %v287
    %v1011 = vunpack.c.h.b16 %v287
    %v1012 = vunpack.c.l.b16 %v288
    %v1013 = vunpack.c.h.b16 %v288
    %v1014 = vunpack.c.l.b16 %v289
    %v1015 = vunpack.c.h.b16 %v289
    %v1016 = vunpack.c.l.b16 %v290
    %v1017 = vunpack.c.h.b16 %v290
    %v1018 = vunpack.c.l.b16 %v291
    %v1019 = vunpack.c.h.b16 %v291
    %v1020 = vunpack.c.l.b16 %v292
    %v1021 = vunpack.c.h.b16 %v292
    %v1022 = vunpack.c.l.b16 %v293
    %v1023 = vunpack.c.h.b16 %v293
    %v1024 = vunpack.c.l.b16 %v294
    %v1025 = vunpack.c.h.b16 %v294
    %v1026 = vunpack.c.l.b16 %v295
    %v1027 = vunpack.c.h.b16 %v295
    %v1028 = vunpack.c.l.b16 %v296
    %v1029 = vunpack.c.h.b16 %v296
    %v1030 = vunpack.c.l.b16 %v297
    %v1031 = vunpack.c.h.b16 %v297
    %v1032 = vunpack.c.l.b16 %v298
    %v1033 = vunpack.c.h.b16 %v298
    %v1034 = vunpack.c.l.b16 %v299
    %v1035 = vunpack.c.h.b16 %v299
    %v1036 = vunpack.c.l.b16 %v300
    %v1037 = vunpack.c.h.b16 %v300
    %v1038 = vunpack.c.l.b16 %v301
    %v1039 = vunpack.c.h.b16 %v301
    %v1040 = vunpack.c.l.b16 %v302
    %v1041 = vunpack.c.h.b16 %v302
    %v1042 = vunpack.c.l.b16 %v303
    %v1043 = vunpack.c.h.b16 %v303
    %v1044 = vunpack.c.l.b16 %v304
    %v1045 = vunpack.c.h.b16 %v304
    %v1046 = vunpack.c.l.b16 %v305
    %v1047 = vunpack.c.h.b16 %v305
    %v1048 = vunpack.c.l.b16 %v306
    %v1049 = vunpack.c.h.b16 %v306
    %v1050 = vunpack.c.l.b16 %v307
    %v1051 = vunpack.c.h.b16 %v307
    %v1052 = vunpack.c.l.b16 %v308
    %v1053 = vunpack.c.h.b16 %v308
    %v1054 = vunpack.c.l.b16 %v309
    %v1055 = vunpack.c.h.b16 %v309
    %v1056 = vunpack.c.l.b16 %v310
    %v1057 = vunpack.c.h.b16 %v310
    %v1058 = vunpack.c.l.b16 %v311
    %v1059 = vunpack.c.h.b16 %v311
    %v1060 = vunpack.c.l.b16 %v312
    %v1061 = vunpack.c.h.b16 %v312
    %v1062 = vunpack.c.l.b16 %v313
    %v1063 = vunpack.c.h.b16 %v313
    %v1064 = vunpack.c.l.b16 %v314
    %v1065 = vunpack.c.h.b16 %v314
    %v1066 = vunpack.c.l.b16 %v315
    %v1067 = vunpack.c.h.b16 %v315
    %v1068 = vunpack.c.l.b16 %v316
    %v1069 = vunpack.c.h.b16 %v316
    %v1070 = vunpack.c.l.b16 %v317
    %v1071 = vunpack.c.h.b16 %v317
    %v1072 = vunpack.c.l.b16 %v318
    %v1073 = vunpack.c.h.b16 %v318
    %v1074 = vunpack.c.l.b16 %v319
    %v1075 = vunpack.c.h.b16 %v319
    %v1076 = vunpack.c.l.b16 %v320
    %v1077 = vunpack.c.h.b16 %v320
    %v1078 = vunpack.c.l.b16 %v321
    %v1079 = vunpack.c.h.b16 %v321
    %v1080 = vunpack.c.l.b16 %v322
    %v1081 = vunpack.c.h.b16 %v322
    %v1082 = vunpack.c.l.b16 %v323
    %v1083 = vunpack.c.h.b16 %v323
    %v1084 = vunpack.c.l.b16 %v324
    %v1085 = vunpack.c.h.b16 %v324
    %v1086 = vunpack.c.l.b16 %v325
    %v1087 = vunpack.c.h.b16 %v325
    %v1088 = vunpack.c.l.b16 %v326
    %v1089 = vunpack.c.h.b16 %v326
    %v1090 = vunpack.c.l.b16 %v327
    %v1091 = vunpack.c.h.b16 %v327
    %v1092 = vunpack.c.l.b16 %v328
    %v1093 = vunpack.c.h.b16 %v328
    %v1094 = vunpack.c.l.b16 %v329
    %v1095 = vunpack.c.h.b16 %v329
    %v1096 = vunpack.c.l.b16 %v330
    %v1097 = vunpack.c.h.b16 %v330
    %v1098 = vunpack.c.l.b16 %v331
    %v1099 = vunpack.c.h.b16 %v331
    %v1100 = vunpack.c.l.b16 %v332
    %v1101 = vunpack.c.h.b16 %v332
    %v1102 = vunpack.c.l.b16 %v333
    %v1103 = vunpack.c.h.b16 %v333
    %v1104 = vunpack.c.l.b16 %v334
    %v1105 = vunpack.c.h.b16 %v334
    %v1106 = vunpack.c.l.b16 %v335
    %v1107 = vunpack.c.h.b16 %v335
    %v1108 = vunpack.c.l.b16 %v336
    %v1109 = vunpack.c.h.b16 %v336
    %v1110 = vunpack.c.l.b16 %v337
    %v1111 = vunpack.c.h.b16 %v337
    %v1112 = vunpack.c.l.b16 %v338
    %v1113 = vunpack.c.h.b16 %v338
    %v1114 = vunpack.c.l.b16 %v339
    %v1115 = vunpack.c.h.b16 %v339
    %v1116 = vunpack.c.l.b16 %v340
    %v1117 = vunpack.c.h.b16 %v340
    %v1118 = vunpack.c.l.b16 %v341
    %v1119 = vunpack.c.h.b16 %v341
    %v1120 = vunpack.c.l.b16 %v342
    %v1121 = vunpack.c.h.b16 %v342
    %v1122 = vunpack.c.l.b16 %v343
    %v1123 = vunpack.c.h.b16 %v343
    %v1124 = vunpack.c.l.b16 %v344
    %v1125 = vunpack.c.h.b16 %v344
    %v1126 = vunpack.c.l.b16 %v345
    %v1127 = vunpack.c.h.b16 %v345
    %v1128 = vunpack.c.l.b16 %v346
    %v1129 = vunpack.c.h.b16 %v346
    %v1130 = vunpack.c.l.b16 %v347
    %v1131 = vunpack.c.h.b16 %v347
    %v1132 = vunpack.c.l.b16 %v348
    %v1133 = vunpack.c.h.b16 %v348
    %v1134 = vunpack.c.l.b16 %v349
    %v1135 = vunpack.c.h.b16 %v349
    %v1136 = vunpack.c.l.b16 %v350
    %v1137 = vunpack.c.h.b16 %v350
    %v1138 = vunpack.c.l.b16 %v351
    %v1139 = vunpack.c.h.b16 %v351
    %v1140 = vunpack.c.l.b16 %v352
    %v1141 = vunpack.c.h.b16 %v352
    %v1142 = vunpack.c.l.b16 %v353
    %v1143 = vunpack.c.h.b16 %v353
    %v1144 = vunpack.c.l.b16 %v354
    %v1145 = vunpack.c.h.b16 %v354
    %v1146 = vunpack.c.l.b16 %v355
    %v1147 = vunpack.c.h.b16 %v355
    %v1148 = vunpack.c.l.b16 %v356
    %v1149 = vunpack.c.h.b16 %v356
    %v1150 = vunpack.c.l.b16 %v357
    %v1151 = vunpack.c.h.b16 %v357
    %v1152 = vunpack.c.l.b16 %v358
    %v1153 = vunpack.c.h.b16 %v358
    %v1154 = vunpack.c.l.b16 %v359
    %v1155 = vunpack.c.h.b16 %v359
    %v1156 = vunpack.c.l.b16 %v360
    %v1157 = vunpack.c.h.b16 %v360
    %v1158 = vunpack.c.l.b16 %v361
    %v1159 = vunpack.c.h.b16 %v361
    %v1160 = vunpack.c.l.b16 %v362
    %v1161 = vunpack.c.h.b16 %v362
    %v1162 = vunpack.c.l.b16 %v363
    %v1163 = vunpack.c.h.b16 %v363
    %v1164 = vunpack.c.l.b16 %v364
    %v1165 = vunpack.c.h.b16 %v364
    %v1166 = vunpack.c.l.b16 %v365
    %v1167 = vunpack.c.h.b16 %v365
    %v1168 = vunpack.c.l.b16 %v366
    %v1169 = vunpack.c.h.b16 %v366
    %v1170 = vunpack.c.l.b16 %v367
    %v1171 = vunpack.c.h.b16 %v367
    %v1172 = vunpack.c.l.b16 %v368
    %v1173 = vunpack.c.h.b16 %v368
    %v1174 = vunpack.c.l.b16 %v369
    %v1175 = vunpack.c.h.b16 %v369
    %v1176 = vunpack.c.l.b16 %v370
    %v1177 = vunpack.c.h.b16 %v370
    %v1178 = vunpack.c.l.b16 %v371
    %v1179 = vunpack.c.h.b16 %v371
    %v1180 = vunpack.c.l.b16 %v372
    %v1181 = vunpack.c.h.b16 %v372
    %v1182 = vunpack.c.l.b16 %v373
    %v1183 = vunpack.c.h.b16 %v373
    %v1184 = vunpack.c.l.b16 %v374
    %v1185 = vunpack.c.h.b16 %v374
    %v1186 = vunpack.c.l.b16 %v375
    %v1187 = vunpack.c.h.b16 %v375
    %v1188 = vunpack.c.l.b16 %v376
    %v1189 = vunpack.c.h.b16 %v376
    %v1190 = vunpack.c.l.b16 %v377
    %v1191 = vunpack.c.h.b16 %v377
    %v1192 = vunpack.c.l.b16 %v378
    %v1193 = vunpack.c.h.b16 %v378
    %v1194 = vunpack.c.l.b16 %v379
    %v1195 = vunpack.c.h.b16 %v379
    %v1196 = vunpack.c.l.b16 %v380
    %v1197 = vunpack.c.h.b16 %v380
    %v1198 = vunpack.c.l.b16 %v381
    %v1199 = vunpack.c.h.b16 %v381
    %v1200 = vunpack.c.l.b16 %v382
    %v1201 = vunpack.c.h.b16 %v382
    %v1202 = vunpack.c.l.b16 %v383
    %v1203 = vunpack.c.h.b16 %v383
    %v1204 = vunpack.c.l.b16 %v384
    %v1205 = vunpack.c.h.b16 %v384
    %v1206 = vunpack.c.l.b16 %v385
    %v1207 = vunpack.c.h.b16 %v385
    %v1208 = vunpack.c.l.b16 %v386
    %v1209 = vunpack.c.h.b16 %v386
    %v1210 = vunpack.c.l.b16 %v387
    %v1211 = vunpack.c.h.b16 %v387
    %v1212 = vunpack.c.l.b16 %v388
    %v1213 = vunpack.c.h.b16 %v388
    %v1214 = vunpack.c.l.b16 %v389
    %v1215 = vunpack.c.h.b16 %v389
    %v1216 = vunpack.c.l.b16 %v390
    %v1217 = vunpack.c.h.b16 %v390
    %v1218 = vunpack.c.l.b16 %v391
    %v1219 = vunpack.c.h.b16 %v391
    %v1220 = vunpack.c.l.b16 %v392
    %v1221 = vunpack.c.h.b16 %v392
    %v1222 = vunpack.c.l.b16 %v393
    %v1223 = vunpack.c.h.b16 %v393
    %v1224 = vpack.c.b16 %v720, %v712
    %v1225 = vpack.c.b16 %v721, %v713
    %v1226 = vpack.c.b16 %v722, %v714
    %v1227 = vpack.c.b16 %v723, %v715
    %v1228 = vpack.c.b16 %v724, %v716
    %v1229 = vpack.c.b16 %v725, %v717
    %v1230 = vpack.c.b16 %v726, %v718
    %v1231 = vpack.c.b16 %v727, %v719
    %v1232 = vpack.c.b16 %v736, %v728
    %v1233 = vpack.c.b16 %v737, %v729
    %v1234 = vpack.c.b16 %v738, %v730
    %v1235 = vpack.c.b16 %v739, %v731
    %v1236 = vpack.c.b16 %v740, %v732
    %v1237 = vpack.c.b16 %v741, %v733
    %v1238 = vpack.c.b16 %v742, %v734
    %v1239 = vpack.c.b16 %v743, %v735
    %v1240 = vpack.c.b16 %v752, %v744
    %v1241 = vpack.c.b16 %v753, %v745
    %v1242 = vpack.c.b16 %v754, %v746
    %v1243 = vpack.c.b16 %v755, %v747
    %v1244 = vpack.c.b16 %v756, %v748
    %v1245 = vpack.c.b16 %v757, %v749
    %v1246 = vpack.c.b16 %v758, %v750
    %v1247 = vpack.c.b16 %v759, %v751
    %v1248 = vpack.c.b16 %v768, %v760
    %v1249 = vpack.c.b16 %v769, %v761
    %v1250 = vpack.c.b16 %v770, %v762
    %v1251 = vpack.c.b16 %v771, %v763
    %v1252 = vpack.c.b16 %v772, %v764
    %v1253 = vpack.c.b16 %v773, %v765
    %v1254 = vpack.c.b16 %v774, %v766
    %v1255 = vpack.c.b16 %v775, %v767
    %v1256 = vpack.c.b16 %v784, %v776
    %v1257 = vpack.c.b16 %v785, %v777
    %v1258 = vpack.c.b16 %v786, %v778
    %v1259 = vpack.c.b16 %v787, %v779
    %v1260 = vpack.c.b16 %v788, %v780
    %v1261 = vpack.c.b16 %v789, %v781
    %v1262 = vpack.c.b16 %v790, %v782
    %v1263 = vpack.c.b16 %v791, %v783
    %v1264 = vpack.c.b16 %v800, %v792
    %v1265 = vpack.c.b16 %v801, %v793
    %v1266 = vpack.c.b16 %v802, %v794
    %v1267 = vpack.c.b16 %v803, %v795
    %v1268 = vpack.c.b16 %v804, %v796
    %v1269 = vpack.c.b16 %v805, %v797
    %v1270 = vpack.c.b16 %v806, %v798
    %v1271 = vpack.c.b16 %v807, %v799
    %v1272 = vpack.c.b16 %v816, %v808
    %v1273 = vpack.c.b16 %v817, %v809
    %v1274 = vpack.c.b16 %v818, %v810
    %v1275 = vpack.c.b16 %v819, %v811
    %v1276 = vpack.c.b16 %v820, %v812
    %v1277 = vpack.c.b16 %v821, %v813
    %v1278 = vpack.c.b16 %v822, %v814
    %v1279 = vpack.c.b16 %v823, %v815
    %v1280 = vpack.c.b16 %v832, %v824
    %v1281 = vpack.c.b16 %v833, %v825
    %v1282 = vpack.c.b16 %v834, %v826
    %v1283 = vpack.c.b16 %v835, %v827
    %v1284 = vpack.c.b16 %v836, %v828
    %v1285 = vpack.c.b16 %v837, %v829
    %v1286 = vpack.c.b16 %v838, %v830
    %v1287 = vpack.c.b16 %v839, %v831
    %v1288 = vpack.c.b16 %v848, %v840
    %v1289 = vpack.c.b16 %v849, %v841
    %v1290 = vpack.c.b16 %v850, %v842
    %v1291 = vpack.c.b16 %v851, %v843
    %v1292 = vpack.c.b16 %v852, %v844
    %v1293 = vpack.c.b16 %v853, %v845
    %v1294 = vpack.c.b16 %v854, %v846
    %v1295 = vpack.c.b16 %v855, %v847
    %v1296 = vpack.c.b16 %v864, %v856
    %v1297 = vpack.c.b16 %v865, %v857
    %v1298 = vpack.c.b16 %v866, %v858
    %v1299 = vpack.c.b16 %v867, %v859
    %v1300 = vpack.c.b16 %v868, %v860
    %v1301 = vpack.c.b16 %v869, %v861
    %v1302 = vpack.c.b16 %v870, %v862
    %v1303 = vpack.c.b16 %v871, %v863
    %v1304 = vpack.c.b16 %v880, %v872
    %v1305 = vpack.c.b16 %v881, %v873
    %v1306 = vpack.c.b16 %v882, %v874
    %v1307 = vpack.c.b16 %v883, %v875
    %v1308 = vpack.c.b16 %v884, %v876
    %v1309 = vpack.c.b16 %v885, %v877
    %v1310 = vpack.c.b16 %v886, %v878
    %v1311 = vpack.c.b16 %v887, %v879
    %v1312 = vpack.c.b16 %v896, %v888
    %v1313 = vpack.c.b16 %v897, %v889
    %v1314 = vpack.c.b16 %v898, %v890
    %v1315 = vpack.c.b16 %v899, %v891
    %v1316 = vpack.c.b16 %v900, %v892
    %v1317 = vpack.c.b16 %v901, %v893
    %v1318 = vpack.c.b16 %v902, %v894
    %v1319 = vpack.c.b16 %v903, %v895
    %v1320 = vpack.c.b16 %v912, %v904
    %v1321 = vpack.c.b16 %v913, %v905
    %v1322 = vpack.c.b16 %v914, %v906
    %v1323 = vpack.c.b16 %v915, %v907
    %v1324 = vpack.c.b16 %v916, %v908
    %v1325 = vpack.c.b16 %v917, %v909
    %v1326 = vpack.c.b16 %v918, %v910
    %v1327 = vpack.c.b16 %v919, %v911
    %v1328 = vpack.c.b16 %v928, %v920
    %v1329 = vpack.c.b16 %v929, %v921
    %v1330 = vpack.c.b16 %v930, %v922
    %v1331 = vpack.c.b16 %v931, %v923
    %v1332 = vpack.c.b16 %v932, %v924
    %v1333 = vpack.c.b16 %v933, %v925
    %v1334 = vpack.c.b16 %v934, %v926
    %v1335 = vpack.c.b16 %v935, %v927
    %v1336 = vpack.c.b16 %v944, %v936
    %v1337 = vpack.c.b16 %v945, %v937
    %v1338 = vpack.c.b16 %v946, %v938
    %v1339 = vpack.c.b16 %v947, %v939
    %v1340 = vpack.c.b16 %v948, %v940
    %v1341 = vpack.c.b16 %v949, %v941
    %v1342 = vpack.c.b16 %v950, %v942
    %v1343 = vpack.c.b16 %v951, %v943
    %v1344 = vpack.c.b16 %v960, %v952
    %v1345 = vpack.c.b16 %v961, %v953
    %v1346 = vpack.c.b16 %v962, %v954
    %v1347 = vpack.c.b16 %v963, %v955
    %v1348 = vpack.c.b16 %v964, %v956
    %v1349 = vpack.c.b16 %v965, %v957
    %v1350 = vpack.c.b16 %v966, %v958
    %v1351 = vpack.c.b16 %v967, %v959
    %v1352 = vpack.c.b16 %v976, %v968
    %v1353 = vpack.c.b16 %v977, %v969
    %v1354 = vpack.c.b16 %v978, %v970
    %v1355 = vpack.c.b16 %v979, %v971
    %v1356 = vpack.c.b16 %v980, %v972
    %v1357 = vpack.c.b16 %v981, %v973
    %v1358 = vpack.c.b16 %v982, %v974
    %v1359 = vpack.c.b16 %v983, %v975
    %v1360 = vpack.c.b16 %v992, %v984
    %v1361 = vpack.c.b16 %v993, %v985
    %v1362 = vpack.c.b16 %v994, %v986
    %v1363 = vpack.c.b16 %v995, %v987
    %v1364 = vpack.c.b16 %v996, %v988
    %v1365 = vpack.c.b16 %v997, %v989
    %v1366 = vpack.c.b16 %v998, %v990
    %v1367 = vpack.c.b16 %v999, %v991
    %v1368 = vpack.c.b16 %v1008, %v1000
    %v1369 = vpack.c.b16 %v1009, %v1001
    %v1370 = vpack.c.b16 %v1010, %v1002
    %v1371 = vpack.c.b16 %v1011, %v1003
    %v1372 = vpack.c.b16 %v1012, %v1004
    %v1373 = vpack.c.b16 %v1013, %v1005
    %v1374 = vpack.c.b16 %v1014, %v1006
    %v1375 = vpack.c.b16 %v1015, %v1007
    %v1376 = vpack.c.b16 %v1024, %v1016
    %v1377 = vpack.c.b16 %v1025, %v1017
    %v1378 = vpack.c.b16 %v1026, %v1018
    %v1379 = vpack.c.b16 %v1027, %v1019
    %v1380 = vpack.c.b16 %v1028, %v1020
    %v1381 = vpack.c.b16 %v1029, %v1021
    %v1382 = vpack.c.b16 %v1030, %v1022
    %v1383 = vpack.c.b16 %v1031, %v1023
    %v1384 = vpack.c.b16 %v1040, %v1032
    %v1385 = vpack.c.b16 %v1041, %v1033
    %v1386 = vpack.c.b16 %v1042, %v1034
    %v1387 = vpack.c.b16 %v1043, %v1035
    %v1388 = vpack.c.b16 %v1044, %v1036
    %v1389 = vpack.c.b16 %v1045, %v1037
    %v1390 = vpack.c.b16 %v1046, %v1038
    %v1391 = vpack.c.b16 %v1047, %v1039
    %v1392 = vpack.c.b16 %v1056, %v1048
    %v1393 = vpack.c.b16 %v1057, %v1049
    %v1394 = vpack.c.b16 %v1058, %v1050
    %v1395 = vpack.c.b16 %v1059, %v1051
    %v1396 = vpack.c.b16 %v1060, %v1052
    %v1397 = vpack.c.b16 %v1061, %v1053
    %v1398 = vpack.c.b16 %v1062, %v1054
    %v1399 = vpack.c.b16 %v1063, %v1055
    %v1400 = vpack.c.b16 %v1072, %v1064
    %v1401 = vpack.c.b16 %v1073, %v1065
    %v1402 = vpack.c.b16 %v1074, %v1066
    %v1403 = vpack.c.b16 %v1075, %v1067
    %v1404 = vpack.c.b16 %v1076, %v1068
    %v1405 = vpack.c.b16 %v1077, %v1069
    %v1406 = vpack.c.b16 %v1078, %v1070
    %v1407 = vpack.c.b16 %v1079, %v1071
    %v1408 = vpack.c.b16 %v1088, %v1080
    %v1409 = vpack.c.b16 %v1089, %v1081
    %v1410 = vpack.c.b16 %v1090, %v1082
    %v1411 = vpack.c.b16 %v1091, %v1083
    %v1412 = vpack.c.b16 %v1092, %v1084
    %v1413 = vpack.c.b16 %v1093, %v1085
    %v1414 = vpack.c.b16 %v1094, %v1086
    %v1415 = vpack.c.b16 %v1095, %v1087
    %v1416 = vpack.c.b16 %v1104, %v1096
    %v1417 = vpack.c.b16 %v1105, %v1097
    %v1418 = vpack.c.b16 %v1106, %v1098
    %v1419 = vpack.c.b16 %v1107, %v1099
    %v1420 = vpack.c.b16 %v1108, %v1100
    %v1421 = vpack.c.b16 %v1109, %v1101
    %v1422 = vpack.c.b16 %v1110, %v1102
    %v1423 = vpack.c.b16 %v1111, %v1103
    %v1424 = vpack.c.b16 %v1120, %v1112
    %v1425 = vpack.c.b16 %v1121, %v1113
    %v1426 = vpack.c.b16 %v1122, %v1114
    %v1427 = vpack.c.b16 %v1123, %v1115
    %v1428 = vpack.c.b16 %v1124, %v1116
    %v1429 = vpack.c.b16 %v1125, %v1117
    %v1430 = vpack.c.b16 %v1126, %v1118
    %v1431 = vpack.c.b16 %v1127, %v1119
    %v1432 = vpack.c.b16 %v1136, %v1128
    %v1433 = vpack.c.b16 %v1137, %v1129
    %v1434 = vpack.c.b16 %v1138, %v1130
    %v1435 = vpack.c.b16 %v1139, %v1131
    %v1436 = vpack.c.b16 %v1140, %v1132
    %v1437 = vpack.c.b16 %v1141, %v1133
    %v1438 = vpack.c.b16 %v1142, %v1134
    %v1439 = vpack.c.b16 %v1143, %v1135
    %v1440 = vpack.c.b16 %v1152, %v1144
    %v1441 = vpack.c.b16 %v1153, %v1145
    %v1442 = vpack.c.b16 %v1154, %v1146
    %v1443 = vpack.c.b16 %v1155, %v1147
    %v1444 = vpack.c.b16 %v1156, %v1148
    %v1445 = vpack.c.b16 %v1157, %v1149
    %v1446 = vpack.c.b16 %v1158, %v1150
    %v1447 = vpack.c.b16 %v1159, %v1151
    %v1448 = vpack.c.b16 %v1168, %v1160
    %v1449 = vpack.c.b16 %v1169, %v1161
    %v1450 = vpack.c.b16 %v1170, %v1162
    %v1451 = vpack.c.b16 %v1171, %v1163
    %v1452 = vpack.c.b16 %v1172, %v1164
    %v1453 = vpack.c.b16 %v1173, %v1165
    %v1454 = vpack.c.b16 %v1174, %v1166
    %v1455 = vpack.c.b16 %v1175, %v1167
    %v1456 = vpack.c.b16 %v1184, %v1176
    %v1457 = vpack.c.b16 %v1185, %v1177
    %v1458 = vpack.c.b16 %v1186, %v1178
    %v1459 = vpack.c.b16 %v1187, %v1179
    %v1460 = vpack.c.b16 %v1188, %v1180
    %v1461 = vpack.c.b16 %v1189, %v1181
    %v1462 = vpack.c.b16 %v1190, %v1182
    %v1463 = vpack.c.b16 %v1191, %v1183
    %v1464 = vpack.c.b16 %v1200, %v1192
    %v1465 = vpack.c.b16 %v1201, %v1193
    %v1466 = vpack.c.b16 %v1202, %v1194
    %v1467 = vpack.c.b16 %v1203, %v1195
    %v1468 = vpack.c.b16 %v1204, %v1196
    %v1469 = vpack.c.b16 %v1205, %v1197
    %v1470 = vpack.c.b16 %v1206, %v1198
    %v1471 = vpack.c.b16 %v1207, %v1199
    %v1472 = vpack.c.b16 %v1216, %v1208
    %v1473 = vpack.c.b16 %v1217, %v1209
    %v1474 = vpack.c.b16 %v1218, %v1210
    %v1475 = vpack.c.b16 %v1219, %v1211
    %v1476 = vpack.c.b16 %v1220, %v1212
    %v1477 = vpack.c.b16 %v1221, %v1213
    %v1478 = vpack.c.b16 %v1222, %v1214
    %v1479 = vpack.c.b16 %v1223, %v1215
    %1736 = vmatprep.subr.bf16.mxu0 %v1225
    %1737 = vmatpush1.bf16.msra.mxu0 %v1224
    %1738 = vmatprep.subr.bf16.mxu0 %v1233
    %1739 = vmatpush1.bf16.msra.mxu0 %v1232
    %1740 = vmatprep.subr.bf16.mxu0 %v1241
    %1741 = vmatpush1.bf16.msra.mxu0 %v1240
    %1742 = vmatprep.subr.bf16.mxu0 %v1249
    %1743 = vmatpush1.bf16.msra.mxu0 %v1248
    %1744 = vmatprep.subr.bf16.mxu0 %v1257
    %1745 = vmatpush1.bf16.msra.mxu0 %v1256
    %1746 = vmatprep.subr.bf16.mxu0 %v1265
    %1747 = vmatpush1.bf16.msra.mxu0 %v1264
    %1748 = vmatprep.subr.bf16.mxu0 %v1273
    %1749 = vmatpush1.bf16.msra.mxu0 %v1272
    %1750 = vmatprep.subr.bf16.mxu0 %v1281
    %1751 = vmatpush1.bf16.msra.mxu0 %v1280
    %1752 = vmatprep.subr.bf16.mxu0 %v1289
    %1753 = vmatpush1.bf16.msra.mxu0 %v1288
    %1754 = vmatprep.subr.bf16.mxu0 %v1297
    %1755 = vmatpush1.bf16.msra.mxu0 %v1296
    %1756 = vmatprep.subr.bf16.mxu0 %v1305
    %1757 = vmatpush1.bf16.msra.mxu0 %v1304
    %1758 = vmatprep.subr.bf16.mxu0 %v1313
    %1759 = vmatpush1.bf16.msra.mxu0 %v1312
    %1760 = vmatprep.subr.bf16.mxu0 %v1321
    %1761 = vmatpush1.bf16.msra.mxu0 %v1320
    %1762 = vmatprep.subr.bf16.mxu0 %v1329
    %1763 = vmatpush1.bf16.msra.mxu0 %v1328
    %1764 = vmatprep.subr.bf16.mxu0 %v1337
    %1765 = vmatpush1.bf16.msra.mxu0 %v1336
    %1766 = vmatprep.subr.bf16.mxu0 %v1345
    %1767 = vmatpush1.bf16.msra.mxu0 %v1344
    %1768 = vmatprep.mubr.bf16.mxu0 %v449
    %1769 = vmatmul.mubr.bf16.gmra.mrb[0].mxu0 %v448
    %v1770 = vpop.f32.mrb[0].mxu0
    %v1771 = vadd.f32 %v399, %v1770
    %v1772 = vpop.f32.mrb[0].mxu0
    %v1773 = vadd.f32 %v403, %v1772
    %v1774 = vpop.f32.mrb[0].mxu0
    %v1775 = vadd.f32 %v399, %v1774
    %v1776 = vpop.f32.mrb[0].mxu0
    %v1777 = vadd.f32 %v403, %v1776
    %1778 = vdwg.mxu0
    %1779 = vmatprep.subr.bf16.mxu0 %v1353
    %1780 = vmatpush1.bf16.msra.mxu0 %v1352
    %1781 = vmatprep.subr.bf16.mxu0 %v1361
    %1782 = vmatpush1.bf16.msra.mxu0 %v1360
    %1783 = vmatprep.subr.bf16.mxu0 %v1369
    %1784 = vmatpush1.bf16.msra.mxu0 %v1368
    %1785 = vmatprep.subr.bf16.mxu0 %v1377
    %1786 = vmatpush1.bf16.msra.mxu0 %v1376
    %1787 = vmatprep.subr.bf16.mxu0 %v1385
    %1788 = vmatpush1.bf16.msra.mxu0 %v1384
    %1789 = vmatprep.subr.bf16.mxu0 %v1393
    %1790 = vmatpush1.bf16.msra.mxu0 %v1392
    %1791 = vmatprep.subr.bf16.mxu0 %v1401
    %1792 = vmatpush1.bf16.msra.mxu0 %v1400
    %1793 = vmatprep.subr.bf16.mxu0 %v1409
    %1794 = vmatpush1.bf16.msra.mxu0 %v1408
    %1795 = vmatprep.subr.bf16.mxu0 %v1417
    %1796 = vmatpush1.bf16.msra.mxu0 %v1416
    %1797 = vmatprep.subr.bf16.mxu0 %v1425
    %1798 = vmatpush1.bf16.msra.mxu0 %v1424
    %1799 = vmatprep.subr.bf16.mxu0 %v1433
    %1800 = vmatpush1.bf16.msra.mxu0 %v1432
    %1801 = vmatprep.subr.bf16.mxu0 %v1441
    %1802 = vmatpush1.bf16.msra.mxu0 %v1440
    %1803 = vmatprep.subr.bf16.mxu0 %v1449
    %1804 = vmatpush1.bf16.msra.mxu0 %v1448
    %1805 = vmatprep.subr.bf16.mxu0 %v1457
    %1806 = vmatpush1.bf16.msra.mxu0 %v1456
    %1807 = vmatprep.subr.bf16.mxu0 %v1465
    %1808 = vmatpush1.bf16.msra.mxu0 %v1464
    %1809 = vmatprep.subr.bf16.mxu0 %v1473
    %1810 = vmatpush1.bf16.msra.mxu0 %v1472
    %1811 = vmatprep.mubr.bf16.mxu0 %v451
    %1812 = vmatmul.mubr.bf16.gmra.mrb[0].mxu0 %v450
    %v1813 = vpop.f32.mrb[0].mxu0
    %v1814 = vadd.f32 %v1771, %v1813
    %v1815 = vpop.f32.mrb[0].mxu0
    %v1816 = vadd.f32 %v1773, %v1815
    %v1817 = vpop.f32.mrb[0].mxu0
    %v1818 = vadd.f32 %v1775, %v1817
    %v1819 = vpop.f32.mrb[0].mxu0
    %v1820 = vadd.f32 %v1777, %v1819
    %1821 = vdwg.mxu0
    %1822 = vmatprep.subr.bf16.mxu0 %v1227
    %1823 = vmatpush1.bf16.msra.mxu0 %v1226
    %1824 = vmatprep.subr.bf16.mxu0 %v1235
    %1825 = vmatpush1.bf16.msra.mxu0 %v1234
    %1826 = vmatprep.subr.bf16.mxu0 %v1243
    %1827 = vmatpush1.bf16.msra.mxu0 %v1242
    %1828 = vmatprep.subr.bf16.mxu0 %v1251
    %1829 = vmatpush1.bf16.msra.mxu0 %v1250
    %1830 = vmatprep.subr.bf16.mxu0 %v1259
    %1831 = vmatpush1.bf16.msra.mxu0 %v1258
    %1832 = vmatprep.subr.bf16.mxu0 %v1267
    %1833 = vmatpush1.bf16.msra.mxu0 %v1266
    %1834 = vmatprep.subr.bf16.mxu0 %v1275
    %1835 = vmatpush1.bf16.msra.mxu0 %v1274
    %1836 = vmatprep.subr.bf16.mxu0 %v1283
    %1837 = vmatpush1.bf16.msra.mxu0 %v1282
    %1838 = vmatprep.subr.bf16.mxu0 %v1291
    %1839 = vmatpush1.bf16.msra.mxu0 %v1290
    %1840 = vmatprep.subr.bf16.mxu0 %v1299
    %1841 = vmatpush1.bf16.msra.mxu0 %v1298
    %1842 = vmatprep.subr.bf16.mxu0 %v1307
    %1843 = vmatpush1.bf16.msra.mxu0 %v1306
    %1844 = vmatprep.subr.bf16.mxu0 %v1315
    %1845 = vmatpush1.bf16.msra.mxu0 %v1314
    %1846 = vmatprep.subr.bf16.mxu0 %v1323
    %1847 = vmatpush1.bf16.msra.mxu0 %v1322
    %1848 = vmatprep.subr.bf16.mxu0 %v1331
    %1849 = vmatpush1.bf16.msra.mxu0 %v1330
    %1850 = vmatprep.subr.bf16.mxu0 %v1339
    %1851 = vmatpush1.bf16.msra.mxu0 %v1338
    %1852 = vmatprep.subr.bf16.mxu0 %v1347
    %1853 = vmatpush1.bf16.msra.mxu0 %v1346
    %1854 = vmatprep.mubr.bf16.mxu0 %v449
    %1855 = vmatmul.mubr.bf16.gmra.mrb[0].mxu0 %v448
    %v1856 = vpop.f32.mrb[0].mxu0
    %v1857 = vadd.f32 %v407, %v1856
    %v1858 = vpop.f32.mrb[0].mxu0
    %v1859 = vadd.f32 %v411, %v1858
    %v1860 = vpop.f32.mrb[0].mxu0
    %v1861 = vadd.f32 %v407, %v1860
    %v1862 = vpop.f32.mrb[0].mxu0
    %v1863 = vadd.f32 %v411, %v1862
    %1864 = vdwg.mxu0
    %1865 = vmatprep.subr.bf16.mxu0 %v1355
    %1866 = vmatpush1.bf16.msra.mxu0 %v1354
    %1867 = vmatprep.subr.bf16.mxu0 %v1363
    %1868 = vmatpush1.bf16.msra.mxu0 %v1362
    %1869 = vmatprep.subr.bf16.mxu0 %v1371
    %1870 = vmatpush1.bf16.msra.mxu0 %v1370
    %1871 = vmatprep.subr.bf16.mxu0 %v1379
    %1872 = vmatpush1.bf16.msra.mxu0 %v1378
    %1873 = vmatprep.subr.bf16.mxu0 %v1387
    %1874 = vmatpush1.bf16.msra.mxu0 %v1386
    %1875 = vmatprep.subr.bf16.mxu0 %v1395
    %1876 = vmatpush1.bf16.msra.mxu0 %v1394
    %1877 = vmatprep.subr.bf16.mxu0 %v1403
    %1878 = vmatpush1.bf16.msra.mxu0 %v1402
    %1879 = vmatprep.subr.bf16.mxu0 %v1411
    %1880 = vmatpush1.bf16.msra.mxu0 %v1410
    %1881 = vmatprep.subr.bf16.mxu0 %v1419
    %1882 = vmatpush1.bf16.msra.mxu0 %v1418
    %1883 = vmatprep.subr.bf16.mxu0 %v1427
    %1884 = vmatpush1.bf16.msra.mxu0 %v1426
    %1885 = vmatprep.subr.bf16.mxu0 %v1435
    %1886 = vmatpush1.bf16.msra.mxu0 %v1434
    %1887 = vmatprep.subr.bf16.mxu0 %v1443
    %1888 = vmatpush1.bf16.msra.mxu0 %v1442
    %1889 = vmatprep.subr.bf16.mxu0 %v1451
    %1890 = vmatpush1.bf16.msra.mxu0 %v1450
    %1891 = vmatprep.subr.bf16.mxu0 %v1459
    %1892 = vmatpush1.bf16.msra.mxu0 %v1458
    %1893 = vmatprep.subr.bf16.mxu0 %v1467
    %1894 = vmatpush1.bf16.msra.mxu0 %v1466
    %1895 = vmatprep.subr.bf16.mxu0 %v1475
    %1896 = vmatpush1.bf16.msra.mxu0 %v1474
    %1897 = vmatprep.mubr.bf16.mxu0 %v451
    %1898 = vmatmul.mubr.bf16.gmra.mrb[0].mxu0 %v450
    %v1899 = vpop.f32.mrb[0].mxu0
    %v1900 = vadd.f32 %v1857, %v1899
    %v1901 = vpop.f32.mrb[0].mxu0
    %v1902 = vadd.f32 %v1859, %v1901
    %v1903 = vpop.f32.mrb[0].mxu0
    %v1904 = vadd.f32 %v1861, %v1903
    %v1905 = vpop.f32.mrb[0].mxu0
    %v1906 = vadd.f32 %v1863, %v1905
    %1907 = vdwg.mxu0
    %1908 = vmatprep.subr.bf16.mxu0 %v1229
    %1909 = vmatpush1.bf16.msra.mxu0 %v1228
    %1910 = vmatprep.subr.bf16.mxu0 %v1237
    %1911 = vmatpush1.bf16.msra.mxu0 %v1236
    %1912 = vmatprep.subr.bf16.mxu0 %v1245
    %1913 = vmatpush1.bf16.msra.mxu0 %v1244
    %1914 = vmatprep.subr.bf16.mxu0 %v1253
    %1915 = vmatpush1.bf16.msra.mxu0 %v1252
    %1916 = vmatprep.subr.bf16.mxu0 %v1261
    %1917 = vmatpush1.bf16.msra.mxu0 %v1260
    %1918 = vmatprep.subr.bf16.mxu0 %v1269
    %1919 = vmatpush1.bf16.msra.mxu0 %v1268
    %1920 = vmatprep.subr.bf16.mxu0 %v1277
    %1921 = vmatpush1.bf16.msra.mxu0 %v1276
    %1922 = vmatprep.subr.bf16.mxu0 %v1285
    %1923 = vmatpush1.bf16.msra.mxu0 %v1284
    %1924 = vmatprep.subr.bf16.mxu0 %v1293
    %1925 = vmatpush1.bf16.msra.mxu0 %v1292
    %1926 = vmatprep.subr.bf16.mxu0 %v1301
    %1927 = vmatpush1.bf16.msra.mxu0 %v1300
    %1928 = vmatprep.subr.bf16.mxu0 %v1309
    %1929 = vmatpush1.bf16.msra.mxu0 %v1308
    %1930 = vmatprep.subr.bf16.mxu0 %v1317
    %1931 = vmatpush1.bf16.msra.mxu0 %v1316
    %1932 = vmatprep.subr.bf16.mxu0 %v1325
    %1933 = vmatpush1.bf16.msra.mxu0 %v1324
    %1934 = vmatprep.subr.bf16.mxu0 %v1333
    %1935 = vmatpush1.bf16.msra.mxu0 %v1332
    %1936 = vmatprep.subr.bf16.mxu0 %v1341
    %1937 = vmatpush1.bf16.msra.mxu0 %v1340
    %1938 = vmatprep.subr.bf16.mxu0 %v1349
    %1939 = vmatpush1.bf16.msra.mxu0 %v1348
    %1940 = vmatprep.mubr.bf16.mxu0 %v449
    %1941 = vmatmul.mubr.bf16.gmra.mrb[0].mxu0 %v448
    %v1942 = vpop.f32.mrb[0].mxu0
    %v1943 = vadd.f32 %v415, %v1942
    %v1944 = vpop.f32.mrb[0].mxu0
    %v1945 = vadd.f32 %v419, %v1944
    %v1946 = vpop.f32.mrb[0].mxu0
    %v1947 = vadd.f32 %v415, %v1946
    %v1948 = vpop.f32.mrb[0].mxu0
    %v1949 = vadd.f32 %v419, %v1948
    %1950 = vdwg.mxu0
    %1951 = vmatprep.subr.bf16.mxu0 %v1357
    %1952 = vmatpush1.bf16.msra.mxu0 %v1356
    %1953 = vmatprep.subr.bf16.mxu0 %v1365
    %1954 = vmatpush1.bf16.msra.mxu0 %v1364
    %1955 = vmatprep.subr.bf16.mxu0 %v1373
    %1956 = vmatpush1.bf16.msra.mxu0 %v1372
    %1957 = vmatprep.subr.bf16.mxu0 %v1381
    %1958 = vmatpush1.bf16.msra.mxu0 %v1380
    %1959 = vmatprep.subr.bf16.mxu0 %v1389
    %1960 = vmatpush1.bf16.msra.mxu0 %v1388
    %1961 = vmatprep.subr.bf16.mxu0 %v1397
    %1962 = vmatpush1.bf16.msra.mxu0 %v1396
    %1963 = vmatprep.subr.bf16.mxu0 %v1405
    %1964 = vmatpush1.bf16.msra.mxu0 %v1404
    %1965 = vmatprep.subr.bf16.mxu0 %v1413
    %1966 = vmatpush1.bf16.msra.mxu0 %v1412
    %1967 = vmatprep.subr.bf16.mxu0 %v1421
    %1968 = vmatpush1.bf16.msra.mxu0 %v1420
    %1969 = vmatprep.subr.bf16.mxu0 %v1429
    %1970 = vmatpush1.bf16.msra.mxu0 %v1428
    %1971 = vmatprep.subr.bf16.mxu0 %v1437
    %1972 = vmatpush1.bf16.msra.mxu0 %v1436
    %1973 = vmatprep.subr.bf16.mxu0 %v1445
    %1974 = vmatpush1.bf16.msra.mxu0 %v1444
    %1975 = vmatprep.subr.bf16.mxu0 %v1453
    %1976 = vmatpush1.bf16.msra.mxu0 %v1452
    %1977 = vmatprep.subr.bf16.mxu0 %v1461
    %1978 = vmatpush1.bf16.msra.mxu0 %v1460
    %1979 = vmatprep.subr.bf16.mxu0 %v1469
    %1980 = vmatpush1.bf16.msra.mxu0 %v1468
    %1981 = vmatprep.subr.bf16.mxu0 %v1477
    %1982 = vmatpush1.bf16.msra.mxu0 %v1476
    %1983 = vmatprep.mubr.bf16.mxu0 %v451
    %1984 = vmatmul.mubr.bf16.gmra.mrb[0].mxu0 %v450
    %v1985 = vpop.f32.mrb[0].mxu0
    %v1986 = vadd.f32 %v1943, %v1985
    %v1987 = vpop.f32.mrb[0].mxu0
    %v1988 = vadd.f32 %v1945, %v1987
    %v1989 = vpop.f32.mrb[0].mxu0
    %v1990 = vadd.f32 %v1947, %v1989
    %v1991 = vpop.f32.mrb[0].mxu0
    %v1992 = vadd.f32 %v1949, %v1991
    %1993 = vdwg.mxu0
    %1994 = vmatprep.subr.bf16.mxu0 %v1231
    %1995 = vmatpush1.bf16.msra.mxu0 %v1230
    %1996 = vmatprep.subr.bf16.mxu0 %v1239
    %1997 = vmatpush1.bf16.msra.mxu0 %v1238
    %1998 = vmatprep.subr.bf16.mxu0 %v1247
    %1999 = vmatpush1.bf16.msra.mxu0 %v1246
    %2000 = vmatprep.subr.bf16.mxu0 %v1255
    %2001 = vmatpush1.bf16.msra.mxu0 %v1254
    %2002 = vmatprep.subr.bf16.mxu0 %v1263
    %2003 = vmatpush1.bf16.msra.mxu0 %v1262
    %2004 = vmatprep.subr.bf16.mxu0 %v1271
    %2005 = vmatpush1.bf16.msra.mxu0 %v1270
    %2006 = vmatprep.subr.bf16.mxu0 %v1279
    %2007 = vmatpush1.bf16.msra.mxu0 %v1278
    %2008 = vmatprep.subr.bf16.mxu0 %v1287
    %2009 = vmatpush1.bf16.msra.mxu0 %v1286
    %2010 = vmatprep.subr.bf16.mxu0 %v1295
    %2011 = vmatpush1.bf16.msra.mxu0 %v1294
    %2012 = vmatprep.subr.bf16.mxu0 %v1303
    %2013 = vmatpush1.bf16.msra.mxu0 %v1302
    %2014 = vmatprep.subr.bf16.mxu0 %v1311
    %2015 = vmatpush1.bf16.msra.mxu0 %v1310
    %2016 = vmatprep.subr.bf16.mxu0 %v1319
    %2017 = vmatpush1.bf16.msra.mxu0 %v1318
    %2018 = vmatprep.subr.bf16.mxu0 %v1327
    %2019 = vmatpush1.bf16.msra.mxu0 %v1326
    %2020 = vmatprep.subr.bf16.mxu0 %v1335
    %2021 = vmatpush1.bf16.msra.mxu0 %v1334
    %2022 = vmatprep.subr.bf16.mxu0 %v1343
    %2023 = vmatpush1.bf16.msra.mxu0 %v1342
    %2024 = vmatprep.subr.bf16.mxu0 %v1351
    %2025 = vmatpush1.bf16.msra.mxu0 %v1350
    %2026 = vmatprep.mubr.bf16.mxu0 %v449
    %2027 = vmatmul.mubr.bf16.gmra.mrb[0].mxu0 %v448
    %v2028 = vpop.f32.mrb[0].mxu0
    %v2029 = vadd.f32 %v423, %v2028
    %v2030 = vpop.f32.mrb[0].mxu0
    %v2031 = vadd.f32 %v427, %v2030
    %v2032 = vpop.f32.mrb[0].mxu0
    %v2033 = vadd.f32 %v423, %v2032
    %v2034 = vpop.f32.mrb[0].mxu0
    %v2035 = vadd.f32 %v427, %v2034
    %2036 = vdwg.mxu0
    %2037 = vmatprep.subr.bf16.mxu0 %v1359
    %2038 = vmatpush1.bf16.msra.mxu0 %v1358
    %2039 = vmatprep.subr.bf16.mxu0 %v1367
    %2040 = vmatpush1.bf16.msra.mxu0 %v1366
    %2041 = vmatprep.subr.bf16.mxu0 %v1375
    %2042 = vmatpush1.bf16.msra.mxu0 %v1374
    %2043 = vmatprep.subr.bf16.mxu0 %v1383
    %2044 = vmatpush1.bf16.msra.mxu0 %v1382
    %2045 = vmatprep.subr.bf16.mxu0 %v1391
    %2046 = vmatpush1.bf16.msra.mxu0 %v1390
    %2047 = vmatprep.subr.bf16.mxu0 %v1399
    %2048 = vmatpush1.bf16.msra.mxu0 %v1398
    %2049 = vmatprep.subr.bf16.mxu0 %v1407
    %2050 = vmatpush1.bf16.msra.mxu0 %v1406
    %2051 = vmatprep.subr.bf16.mxu0 %v1415
    %2052 = vmatpush1.bf16.msra.mxu0 %v1414
    %2053 = vmatprep.subr.bf16.mxu0 %v1423
    %2054 = vmatpush1.bf16.msra.mxu0 %v1422
    %2055 = vmatprep.subr.bf16.mxu0 %v1431
    %2056 = vmatpush1.bf16.msra.mxu0 %v1430
    %2057 = vmatprep.subr.bf16.mxu0 %v1439
    %2058 = vmatpush1.bf16.msra.mxu0 %v1438
    %2059 = vmatprep.subr.bf16.mxu0 %v1447
    %2060 = vmatpush1.bf16.msra.mxu0 %v1446
    %2061 = vmatprep.subr.bf16.mxu0 %v1455
    %2062 = vmatpush1.bf16.msra.mxu0 %v1454
    %2063 = vmatprep.subr.bf16.mxu0 %v1463
    %2064 = vmatpush1.bf16.msra.mxu0 %v1462
    %2065 = vmatprep.subr.bf16.mxu0 %v1471
    %2066 = vmatpush1.bf16.msra.mxu0 %v1470
    %2067 = vmatprep.subr.bf16.mxu0 %v1479
    %2068 = vmatpush1.bf16.msra.mxu0 %v1478
    %2069 = vmatprep.mubr.bf16.mxu0 %v451
    %2070 = vmatmul.mubr.bf16.gmra.mrb[0].mxu0 %v450
    %v2071 = vpop.f32.mrb[0].mxu0
    %v2072 = vadd.f32 %v2029, %v2071
    %v2073 = vpop.f32.mrb[0].mxu0
    %v2074 = vadd.f32 %v2031, %v2073
    %v2075 = vpop.f32.mrb[0].mxu0
    %v2076 = vadd.f32 %v2033, %v2075
    %v2077 = vpop.f32.mrb[0].mxu0
    %v2078 = vadd.f32 %v2035, %v2077
    %2079 = vdwg.mxu0
    %v2080 = vmax.f32 %v1814, 0.0
    %v2081 = vmax.f32 %v1816, 0.0
    %v2082 = vmax.f32 %v1900, 0.0
    %v2083 = vmax.f32 %v1902, 0.0
    %v2084 = vmax.f32 %v1986, 0.0
    %v2085 = vmax.f32 %v1988, 0.0
    %v2086 = vmax.f32 %v2072, 0.0
    %v2087 = vmax.f32 %v2074, 0.0
    %v2088 = vmax.f32 %v1818, 0.0
    %v2089 = vmax.f32 %v1820, 0.0
    %v2090 = vmax.f32 %v1904, 0.0
    %v2091 = vmax.f32 %v1906, 0.0
    %v2092 = vmax.f32 %v1990, 0.0
    %v2093 = vmax.f32 %v1992, 0.0
    %v2094 = vmax.f32 %v2076, 0.0
    %v2095 = vmax.f32 %v2078, 0.0
    %v2096 = vpack.c.bf16 %v2088, %v2080
    %v2097 = vpack.c.bf16 %v2089, %v2081
    %v2098 = vpack.c.bf16 %v2090, %v2082
    %v2099 = vpack.c.bf16 %v2091, %v2083
    %v2100 = vpack.c.bf16 %v2092, %v2084
    %v2101 = vpack.c.bf16 %v2093, %v2085
    %v2102 = vpack.c.bf16 %v2094, %v2086
    %v2103 = vpack.c.bf16 %v2095, %v2087
    %v2104 = vld [vmem:[#allocation7] sm:$0xff]
    %v2105 = vld [vmem:[#allocation7 + $0x8] sm:$0xff]
    %v2106 = vld [vmem:[#allocation7 + $0x10] sm:$0xff]
    %v2107 = vld [vmem:[#allocation7 + $0x18] sm:$0xff]
    %v2108 = vld [vmem:[#allocation7 + $0x20] sm:$0xff]
    %v2109 = vld [vmem:[#allocation7 + $0x28] sm:$0xff]
    %v2110 = vld [vmem:[#allocation7 + $0x30] sm:$0xff]
    %v2111 = vld [vmem:[#allocation7 + $0x38] sm:$0xff]
    %v2112 = vld [vmem:[#allocation7 + $0x40] sm:$0xff]
    %v2113 = vld [vmem:[#allocation7 + $0x48] sm:$0xff]
    %v2114 = vld [vmem:[#allocation7 + $0x50] sm:$0xff]
    %v2115 = vld [vmem:[#allocation7 + $0x58] sm:$0xff]
    %v2116 = vld [vmem:[#allocation7 + $0x60] sm:$0xff]
    %v2117 = vld [vmem:[#allocation7 + $0x68] sm:$0xff]
    %v2118 = vld [vmem:[#allocation7 + $0x70] sm:$0xff]
    %v2119 = vld [vmem:[#allocation7 + $0x78] sm:$0xff]
    %v2120 = vld [vmem:[#allocation7 + $0x80] sm:$0xff]
    %v2121 = vld [vmem:[#allocation7 + $0x88] sm:$0xff]
    %v2122 = vld [vmem:[#allocation7 + $0x90] sm:$0xff]
    %v2123 = vld [vmem:[#allocation7 + $0x98] sm:$0xff]
    %v2124 = vld [vmem:[#allocation7 + $0xa0] sm:$0xff]
    %v2125 = vld [vmem:[#allocation7 + $0xa8] sm:$0xff]
    %v2126 = vld [vmem:[#allocation7 + $0xb0] sm:$0xff]
    %v2127 = vld [vmem:[#allocation7 + $0xb8] sm:$0xff]
    %v2128 = vld [vmem:[#allocation7 + $0xc0] sm:$0xff]
    %v2129 = vld [vmem:[#allocation7 + $0xc8] sm:$0xff]
    %v2130 = vld [vmem:[#allocation7 + $0xd0] sm:$0xff]
    %v2131 = vld [vmem:[#allocation7 + $0xd8] sm:$0xff]
    %v2132 = vld [vmem:[#allocation7 + $0xe0] sm:$0xff]
    %v2133 = vld [vmem:[#allocation7 + $0xe8] sm:$0xff]
    %v2134 = vld [vmem:[#allocation7 + $0xf0] sm:$0xff]
    %v2135 = vld [vmem:[#allocation7 + $0xf8] sm:$0xff]
    %v2136 = vld [vmem:[#allocation7 + $0x100] sm:$0xff]
    %v2137 = vld [vmem:[#allocation7 + $0x108] sm:$0xff]
    %v2138 = vld [vmem:[#allocation7 + $0x110] sm:$0xff]
    %v2139 = vld [vmem:[#allocation7 + $0x118] sm:$0xff]
    %v2140 = vld [vmem:[#allocation7 + $0x120] sm:$0xff]
    %v2141 = vld [vmem:[#allocation7 + $0x128] sm:$0xff]
    %v2142 = vld [vmem:[#allocation7 + $0x130] sm:$0xff]
    %v2143 = vld [vmem:[#allocation7 + $0x138] sm:$0xff]
    %v2144 = vld [vmem:[#allocation7 + $0x140] sm:$0xff]
    %v2145 = vld [vmem:[#allocation7 + $0x148] sm:$0xff]
    %v2146 = vld [vmem:[#allocation7 + $0x150] sm:$0xff]
    %v2147 = vld [vmem:[#allocation7 + $0x158] sm:$0xff]
    %v2148 = vld [vmem:[#allocation7 + $0x160] sm:$0xff]
    %v2149 = vld [vmem:[#allocation7 + $0x168] sm:$0xff]
    %v2150 = vld [vmem:[#allocation7 + $0x170] sm:$0xff]
    %v2151 = vld [vmem:[#allocation7 + $0x178] sm:$0xff]
    %v2152 = vld [vmem:[#allocation7 + $0x180] sm:$0xff]
    %v2153 = vld [vmem:[#allocation7 + $0x188] sm:$0xff]
    %v2154 = vld [vmem:[#allocation7 + $0x190] sm:$0xff]
    %v2155 = vld [vmem:[#allocation7 + $0x198] sm:$0xff]
    %v2156 = vld [vmem:[#allocation7 + $0x1a0] sm:$0xff]
    %v2157 = vld [vmem:[#allocation7 + $0x1a8] sm:$0xff]
    %v2158 = vld [vmem:[#allocation7 + $0x1b0] sm:$0xff]
    %v2159 = vld [vmem:[#allocation7 + $0x1b8] sm:$0xff]
    %v2160 = vld [vmem:[#allocation7 + $0x1c0] sm:$0xff]
    %v2161 = vld [vmem:[#allocation7 + $0x1c8] sm:$0xff]
    %v2162 = vld [vmem:[#allocation7 + $0x1d0] sm:$0xff]
    %v2163 = vld [vmem:[#allocation7 + $0x1d8] sm:$0xff]
    %v2164 = vld [vmem:[#allocation7 + $0x1e0] sm:$0xff]
    %v2165 = vld [vmem:[#allocation7 + $0x1e8] sm:$0xff]
    %v2166 = vld [vmem:[#allocation7 + $0x1f0] sm:$0xff]
    %v2167 = vld [vmem:[#allocation7 + $0x1f8] sm:$0xff]
    %v2168 = vld [vmem:[#allocation7 + $0x200] sm:$0xff]
    %v2169 = vld [vmem:[#allocation7 + $0x208] sm:$0xff]
    %v2170 = vld [vmem:[#allocation7 + $0x210] sm:$0xff]
    %v2171 = vld [vmem:[#allocation7 + $0x218] sm:$0xff]
    %v2172 = vld [vmem:[#allocation7 + $0x220] sm:$0xff]
    %v2173 = vld [vmem:[#allocation7 + $0x228] sm:$0xff]
    %v2174 = vld [vmem:[#allocation7 + $0x230] sm:$0xff]
    %v2175 = vld [vmem:[#allocation7 + $0x238] sm:$0xff]
    %v2176 = vld [vmem:[#allocation7 + $0x240] sm:$0xff]
    %v2177 = vld [vmem:[#allocation7 + $0x248] sm:$0xff]
    %v2178 = vld [vmem:[#allocation7 + $0x250] sm:$0xff]
    %v2179 = vld [vmem:[#allocation7 + $0x258] sm:$0xff]
    %v2180 = vld [vmem:[#allocation7 + $0x260] sm:$0xff]
    %v2181 = vld [vmem:[#allocation7 + $0x268] sm:$0xff]
    %v2182 = vld [vmem:[#allocation7 + $0x270] sm:$0xff]
    %v2183 = vld [vmem:[#allocation7 + $0x278] sm:$0xff]
    %v2184 = vld [vmem:[#allocation7 + $0x280] sm:$0xff]
    %v2185 = vld [vmem:[#allocation7 + $0x288] sm:$0xff]
    %v2186 = vld [vmem:[#allocation7 + $0x290] sm:$0xff]
    %v2187 = vld [vmem:[#allocation7 + $0x298] sm:$0xff]
    %v2188 = vld [vmem:[#allocation7 + $0x2a0] sm:$0xff]
    %v2189 = vld [vmem:[#allocation7 + $0x2a8] sm:$0xff]
    %v2190 = vld [vmem:[#allocation7 + $0x2b0] sm:$0xff]
    %v2191 = vld [vmem:[#allocation7 + $0x2b8] sm:$0xff]
    %v2192 = vld [vmem:[#allocation7 + $0x2c0] sm:$0xff]
    %v2193 = vld [vmem:[#allocation7 + $0x2c8] sm:$0xff]
    %v2194 = vld [vmem:[#allocation7 + $0x2d0] sm:$0xff]
    %v2195 = vld [vmem:[#allocation7 + $0x2d8] sm:$0xff]
    %v2196 = vld [vmem:[#allocation7 + $0x2e0] sm:$0xff]
    %v2197 = vld [vmem:[#allocation7 + $0x2e8] sm:$0xff]
    %v2198 = vld [vmem:[#allocation7 + $0x2f0] sm:$0xff]
    %v2199 = vld [vmem:[#allocation7 + $0x2f8] sm:$0xff]
    %v2200 = vld [vmem:[#allocation7 + $0x300] sm:$0xff]
    %v2201 = vld [vmem:[#allocation7 + $0x308] sm:$0xff]
    %v2202 = vld [vmem:[#allocation7 + $0x310] sm:$0xff]
    %v2203 = vld [vmem:[#allocation7 + $0x318] sm:$0xff]
    %v2204 = vld [vmem:[#allocation7 + $0x320] sm:$0xff]
    %v2205 = vld [vmem:[#allocation7 + $0x328] sm:$0xff]
    %v2206 = vld [vmem:[#allocation7 + $0x330] sm:$0xff]
    %v2207 = vld [vmem:[#allocation7 + $0x338] sm:$0xff]
    %v2208 = vld [vmem:[#allocation7 + $0x340] sm:$0xff]
    %v2209 = vld [vmem:[#allocation7 + $0x348] sm:$0xff]
    %v2210 = vld [vmem:[#allocation7 + $0x350] sm:$0xff]
    %v2211 = vld [vmem:[#allocation7 + $0x358] sm:$0xff]
    %v2212 = vld [vmem:[#allocation7 + $0x360] sm:$0xff]
    %v2213 = vld [vmem:[#allocation7 + $0x368] sm:$0xff]
    %v2214 = vld [vmem:[#allocation7 + $0x370] sm:$0xff]
    %v2215 = vld [vmem:[#allocation7 + $0x378] sm:$0xff]
    %v2216 = vld [vmem:[#allocation7 + $0x380] sm:$0xff]
    %v2217 = vld [vmem:[#allocation7 + $0x388] sm:$0xff]
    %v2218 = vld [vmem:[#allocation7 + $0x390] sm:$0xff]
    %v2219 = vld [vmem:[#allocation7 + $0x398] sm:$0xff]
    %v2220 = vld [vmem:[#allocation7 + $0x3a0] sm:$0xff]
    %v2221 = vld [vmem:[#allocation7 + $0x3a8] sm:$0xff]
    %v2222 = vld [vmem:[#allocation7 + $0x3b0] sm:$0xff]
    %v2223 = vld [vmem:[#allocation7 + $0x3b8] sm:$0xff]
    %v2224 = vld [vmem:[#allocation7 + $0x3c0] sm:$0xff]
    %v2225 = vld [vmem:[#allocation7 + $0x3c8] sm:$0xff]
    %v2226 = vld [vmem:[#allocation7 + $0x3d0] sm:$0xff]
    %v2227 = vld [vmem:[#allocation7 + $0x3d8] sm:$0xff]
    %v2228 = vld [vmem:[#allocation7 + $0x3e0] sm:$0xff]
    %v2229 = vld [vmem:[#allocation7 + $0x3e8] sm:$0xff]
    %v2230 = vld [vmem:[#allocation7 + $0x3f0] sm:$0xff]
    %v2231 = vld [vmem:[#allocation7 + $0x3f8] sm:$0xff]
    %v2232 = vld [vmem:[#allocation7 + $0x400] sm:$0xff]
    %v2233 = vld [vmem:[#allocation7 + $0x408] sm:$0xff]
    %v2234 = vld [vmem:[#allocation7 + $0x410] sm:$0xff]
    %v2235 = vld [vmem:[#allocation7 + $0x418] sm:$0xff]
    %v2236 = vld [vmem:[#allocation7 + $0x420] sm:$0xff]
    %v2237 = vld [vmem:[#allocation7 + $0x428] sm:$0xff]
    %v2238 = vld [vmem:[#allocation7 + $0x430] sm:$0xff]
    %v2239 = vld [vmem:[#allocation7 + $0x438] sm:$0xff]
    %v2240 = vld [vmem:[#allocation7 + $0x440] sm:$0xff]
    %v2241 = vld [vmem:[#allocation7 + $0x448] sm:$0xff]
    %v2242 = vld [vmem:[#allocation7 + $0x450] sm:$0xff]
    %v2243 = vld [vmem:[#allocation7 + $0x458] sm:$0xff]
    %v2244 = vld [vmem:[#allocation7 + $0x460] sm:$0xff]
    %v2245 = vld [vmem:[#allocation7 + $0x468] sm:$0xff]
    %v2246 = vld [vmem:[#allocation7 + $0x470] sm:$0xff]
    %v2247 = vld [vmem:[#allocation7 + $0x478] sm:$0xff]
    %v2248 = vld [vmem:[#allocation7 + $0x480] sm:$0xff]
    %v2249 = vld [vmem:[#allocation7 + $0x488] sm:$0xff]
    %v2250 = vld [vmem:[#allocation7 + $0x490] sm:$0xff]
    %v2251 = vld [vmem:[#allocation7 + $0x498] sm:$0xff]
    %v2252 = vld [vmem:[#allocation7 + $0x4a0] sm:$0xff]
    %v2253 = vld [vmem:[#allocation7 + $0x4a8] sm:$0xff]
    %v2254 = vld [vmem:[#allocation7 + $0x4b0] sm:$0xff]
    %v2255 = vld [vmem:[#allocation7 + $0x4b8] sm:$0xff]
    %v2256 = vld [vmem:[#allocation7 + $0x4c0] sm:$0xff]
    %v2257 = vld [vmem:[#allocation7 + $0x4c8] sm:$0xff]
    %v2258 = vld [vmem:[#allocation7 + $0x4d0] sm:$0xff]
    %v2259 = vld [vmem:[#allocation7 + $0x4d8] sm:$0xff]
    %v2260 = vld [vmem:[#allocation7 + $0x4e0] sm:$0xff]
    %v2261 = vld [vmem:[#allocation7 + $0x4e8] sm:$0xff]
    %v2262 = vld [vmem:[#allocation7 + $0x4f0] sm:$0xff]
    %v2263 = vld [vmem:[#allocation7 + $0x4f8] sm:$0xff]
    %v2264 = vld [vmem:[#allocation7 + $0x500] sm:$0xff]
    %v2265 = vld [vmem:[#allocation7 + $0x508] sm:$0xff]
    %v2266 = vld [vmem:[#allocation7 + $0x510] sm:$0xff]
    %v2267 = vld [vmem:[#allocation7 + $0x518] sm:$0xff]
    %v2268 = vld [vmem:[#allocation7 + $0x520] sm:$0xff]
    %v2269 = vld [vmem:[#allocation7 + $0x528] sm:$0xff]
    %v2270 = vld [vmem:[#allocation7 + $0x530] sm:$0xff]
    %v2271 = vld [vmem:[#allocation7 + $0x538] sm:$0xff]
    %v2272 = vld [vmem:[#allocation7 + $0x540] sm:$0xff]
    %v2273 = vld [vmem:[#allocation7 + $0x548] sm:$0xff]
    %v2274 = vld [vmem:[#allocation7 + $0x550] sm:$0xff]
    %v2275 = vld [vmem:[#allocation7 + $0x558] sm:$0xff]
    %v2276 = vld [vmem:[#allocation7 + $0x560] sm:$0xff]
    %v2277 = vld [vmem:[#allocation7 + $0x568] sm:$0xff]
    %v2278 = vld [vmem:[#allocation7 + $0x570] sm:$0xff]
    %v2279 = vld [vmem:[#allocation7 + $0x578] sm:$0xff]
    %v2280 = vld [vmem:[#allocation7 + $0x580] sm:$0xff]
    %v2281 = vld [vmem:[#allocation7 + $0x588] sm:$0xff]
    %v2282 = vld [vmem:[#allocation7 + $0x590] sm:$0xff]
    %v2283 = vld [vmem:[#allocation7 + $0x598] sm:$0xff]
    %v2284 = vld [vmem:[#allocation7 + $0x5a0] sm:$0xff]
    %v2285 = vld [vmem:[#allocation7 + $0x5a8] sm:$0xff]
    %v2286 = vld [vmem:[#allocation7 + $0x5b0] sm:$0xff]
    %v2287 = vld [vmem:[#allocation7 + $0x5b8] sm:$0xff]
    %v2288 = vld [vmem:[#allocation7 + $0x5c0] sm:$0xff]
    %v2289 = vld [vmem:[#allocation7 + $0x5c8] sm:$0xff]
    %v2290 = vld [vmem:[#allocation7 + $0x5d0] sm:$0xff]
    %v2291 = vld [vmem:[#allocation7 + $0x5d8] sm:$0xff]
    %v2292 = vld [vmem:[#allocation7 + $0x5e0] sm:$0xff]
    %v2293 = vld [vmem:[#allocation7 + $0x5e8] sm:$0xff]
    %v2294 = vld [vmem:[#allocation7 + $0x5f0] sm:$0xff]
    %v2295 = vld [vmem:[#allocation7 + $0x5f8] sm:$0xff]
    %v2296 = vld [vmem:[#allocation7 + $0x600] sm:$0xff]
    %v2297 = vld [vmem:[#allocation7 + $0x608] sm:$0xff]
    %v2298 = vld [vmem:[#allocation7 + $0x610] sm:$0xff]
    %v2299 = vld [vmem:[#allocation7 + $0x618] sm:$0xff]
    %v2300 = vld [vmem:[#allocation7 + $0x620] sm:$0xff]
    %v2301 = vld [vmem:[#allocation7 + $0x628] sm:$0xff]
    %v2302 = vld [vmem:[#allocation7 + $0x630] sm:$0xff]
    %v2303 = vld [vmem:[#allocation7 + $0x638] sm:$0xff]
    %v2304 = vld [vmem:[#allocation7 + $0x640] sm:$0xff]
    %v2305 = vld [vmem:[#allocation7 + $0x648] sm:$0xff]
    %v2306 = vld [vmem:[#allocation7 + $0x650] sm:$0xff]
    %v2307 = vld [vmem:[#allocation7 + $0x658] sm:$0xff]
    %v2308 = vld [vmem:[#allocation7 + $0x660] sm:$0xff]
    %v2309 = vld [vmem:[#allocation7 + $0x668] sm:$0xff]
    %v2310 = vld [vmem:[#allocation7 + $0x670] sm:$0xff]
    %v2311 = vld [vmem:[#allocation7 + $0x678] sm:$0xff]
    %v2312 = vld [vmem:[#allocation7 + $0x680] sm:$0xff]
    %v2313 = vld [vmem:[#allocation7 + $0x688] sm:$0xff]
    %v2314 = vld [vmem:[#allocation7 + $0x690] sm:$0xff]
    %v2315 = vld [vmem:[#allocation7 + $0x698] sm:$0xff]
    %v2316 = vld [vmem:[#allocation7 + $0x6a0] sm:$0xff]
    %v2317 = vld [vmem:[#allocation7 + $0x6a8] sm:$0xff]
    %v2318 = vld [vmem:[#allocation7 + $0x6b0] sm:$0xff]
    %v2319 = vld [vmem:[#allocation7 + $0x6b8] sm:$0xff]
    %v2320 = vld [vmem:[#allocation7 + $0x6c0] sm:$0xff]
    %v2321 = vld [vmem:[#allocation7 + $0x6c8] sm:$0xff]
    %v2322 = vld [vmem:[#allocation7 + $0x6d0] sm:$0xff]
    %v2323 = vld [vmem:[#allocation7 + $0x6d8] sm:$0xff]
    %v2324 = vld [vmem:[#allocation7 + $0x6e0] sm:$0xff]
    %v2325 = vld [vmem:[#allocation7 + $0x6e8] sm:$0xff]
    %v2326 = vld [vmem:[#allocation7 + $0x6f0] sm:$0xff]
    %v2327 = vld [vmem:[#allocation7 + $0x6f8] sm:$0xff]
    %v2328 = vld [vmem:[#allocation7 + $0x700] sm:$0xff]
    %v2329 = vld [vmem:[#allocation7 + $0x708] sm:$0xff]
    %v2330 = vld [vmem:[#allocation7 + $0x710] sm:$0xff]
    %v2331 = vld [vmem:[#allocation7 + $0x718] sm:$0xff]
    %v2332 = vld [vmem:[#allocation7 + $0x720] sm:$0xff]
    %v2333 = vld [vmem:[#allocation7 + $0x728] sm:$0xff]
    %v2334 = vld [vmem:[#allocation7 + $0x730] sm:$0xff]
    %v2335 = vld [vmem:[#allocation7 + $0x738] sm:$0xff]
    %v2336 = vld [vmem:[#allocation7 + $0x740] sm:$0xff]
    %v2337 = vld [vmem:[#allocation7 + $0x748] sm:$0xff]
    %v2338 = vld [vmem:[#allocation7 + $0x750] sm:$0xff]
    %v2339 = vld [vmem:[#allocation7 + $0x758] sm:$0xff]
    %v2340 = vld [vmem:[#allocation7 + $0x760] sm:$0xff]
    %v2341 = vld [vmem:[#allocation7 + $0x768] sm:$0xff]
    %v2342 = vld [vmem:[#allocation7 + $0x770] sm:$0xff]
    %v2343 = vld [vmem:[#allocation7 + $0x778] sm:$0xff]
    %v2344 = vld [vmem:[#allocation7 + $0x780] sm:$0xff]
    %v2345 = vld [vmem:[#allocation7 + $0x788] sm:$0xff]
    %v2346 = vld [vmem:[#allocation7 + $0x790] sm:$0xff]
    %v2347 = vld [vmem:[#allocation7 + $0x798] sm:$0xff]
    %v2348 = vld [vmem:[#allocation7 + $0x7a0] sm:$0xff]
    %v2349 = vld [vmem:[#allocation7 + $0x7a8] sm:$0xff]
    %v2350 = vld [vmem:[#allocation7 + $0x7b0] sm:$0xff]
    %v2351 = vld [vmem:[#allocation7 + $0x7b8] sm:$0xff]
    %v2352 = vld [vmem:[#allocation7 + $0x7c0] sm:$0xff]
    %v2353 = vld [vmem:[#allocation7 + $0x7c8] sm:$0xff]
    %v2354 = vld [vmem:[#allocation7 + $0x7d0] sm:$0xff]
    %v2355 = vld [vmem:[#allocation7 + $0x7d8] sm:$0xff]
    %v2356 = vld [vmem:[#allocation7 + $0x7e0] sm:$0xff]
    %v2357 = vld [vmem:[#allocation7 + $0x7e8] sm:$0xff]
    %v2358 = vld [vmem:[#allocation7 + $0x7f0] sm:$0xff]
    %v2359 = vld [vmem:[#allocation7 + $0x7f8] sm:$0xff]
    %v2360 = vld [vmem:[#allocation7 + $0x800] sm:$0xff]
    %v2361 = vld [vmem:[#allocation7 + $0x808] sm:$0xff]
    %v2362 = vld [vmem:[#allocation7 + $0x810] sm:$0xff]
    %v2363 = vld [vmem:[#allocation7 + $0x818] sm:$0xff]
    %v2364 = vld [vmem:[#allocation7 + $0x820] sm:$0xff]
    %v2365 = vld [vmem:[#allocation7 + $0x828] sm:$0xff]
    %v2366 = vld [vmem:[#allocation7 + $0x830] sm:$0xff]
    %v2367 = vld [vmem:[#allocation7 + $0x838] sm:$0xff]
    %v2368 = vld [vmem:[#allocation7 + $0x840] sm:$0xff]
    %v2369 = vld [vmem:[#allocation7 + $0x848] sm:$0xff]
    %v2370 = vld [vmem:[#allocation7 + $0x850] sm:$0xff]
    %v2371 = vld [vmem:[#allocation7 + $0x858] sm:$0xff]
    %v2372 = vld [vmem:[#allocation7 + $0x860] sm:$0xff]
    %v2373 = vld [vmem:[#allocation7 + $0x868] sm:$0xff]
    %v2374 = vld [vmem:[#allocation7 + $0x870] sm:$0xff]
    %v2375 = vld [vmem:[#allocation7 + $0x878] sm:$0xff]
    %v2376 = vld [vmem:[#allocation7 + $0x880] sm:$0xff]
    %v2377 = vld [vmem:[#allocation7 + $0x888] sm:$0xff]
    %v2378 = vld [vmem:[#allocation7 + $0x890] sm:$0xff]
    %v2379 = vld [vmem:[#allocation7 + $0x898] sm:$0xff]
    %v2380 = vld [vmem:[#allocation7 + $0x8a0] sm:$0xff]
    %v2381 = vld [vmem:[#allocation7 + $0x8a8] sm:$0xff]
    %v2382 = vld [vmem:[#allocation7 + $0x8b0] sm:$0xff]
    %v2383 = vld [vmem:[#allocation7 + $0x8b8] sm:$0xff]
    %v2384 = vld [vmem:[#allocation7 + $0x8c0] sm:$0xff]
    %v2385 = vld [vmem:[#allocation7 + $0x8c8] sm:$0xff]
    %v2386 = vld [vmem:[#allocation7 + $0x8d0] sm:$0xff]
    %v2387 = vld [vmem:[#allocation7 + $0x8d8] sm:$0xff]
    %v2388 = vld [vmem:[#allocation7 + $0x8e0] sm:$0xff]
    %v2389 = vld [vmem:[#allocation7 + $0x8e8] sm:$0xff]
    %v2390 = vld [vmem:[#allocation7 + $0x8f0] sm:$0xff]
    %v2391 = vld [vmem:[#allocation7 + $0x8f8] sm:$0xff]
    %v2392 = vld [vmem:[#allocation7 + $0x900] sm:$0xff]
    %v2393 = vld [vmem:[#allocation7 + $0x908] sm:$0xff]
    %v2394 = vld [vmem:[#allocation7 + $0x910] sm:$0xff]
    %v2395 = vld [vmem:[#allocation7 + $0x918] sm:$0xff]
    %v2396 = vld [vmem:[#allocation7 + $0x920] sm:$0xff]
    %v2397 = vld [vmem:[#allocation7 + $0x928] sm:$0xff]
    %v2398 = vld [vmem:[#allocation7 + $0x930] sm:$0xff]
    %v2399 = vld [vmem:[#allocation7 + $0x938] sm:$0xff]
    %v2400 = vld [vmem:[#allocation7 + $0x940] sm:$0xff]
    %v2401 = vld [vmem:[#allocation7 + $0x948] sm:$0xff]
    %v2402 = vld [vmem:[#allocation7 + $0x950] sm:$0xff]
    %v2403 = vld [vmem:[#allocation7 + $0x958] sm:$0xff]
    %v2404 = vld [vmem:[#allocation7 + $0x960] sm:$0xff]
    %v2405 = vld [vmem:[#allocation7 + $0x968] sm:$0xff]
    %v2406 = vld [vmem:[#allocation7 + $0x970] sm:$0xff]
    %v2407 = vld [vmem:[#allocation7 + $0x978] sm:$0xff]
    %v2408 = vld [vmem:[#allocation7 + $0x980] sm:$0xff]
    %v2409 = vld [vmem:[#allocation7 + $0x988] sm:$0xff]
    %v2410 = vld [vmem:[#allocation7 + $0x990] sm:$0xff]
    %v2411 = vld [vmem:[#allocation7 + $0x998] sm:$0xff]
    %v2412 = vld [vmem:[#allocation7 + $0x9a0] sm:$0xff]
    %v2413 = vld [vmem:[#allocation7 + $0x9a8] sm:$0xff]
    %v2414 = vld [vmem:[#allocation7 + $0x9b0] sm:$0xff]
    %v2415 = vld [vmem:[#allocation7 + $0x9b8] sm:$0xff]
    %v2416 = vld [vmem:[#allocation7 + $0x9c0] sm:$0xff]
    %v2417 = vld [vmem:[#allocation7 + $0x9c8] sm:$0xff]
    %v2418 = vld [vmem:[#allocation7 + $0x9d0] sm:$0xff]
    %v2419 = vld [vmem:[#allocation7 + $0x9d8] sm:$0xff]
    %v2420 = vld [vmem:[#allocation7 + $0x9e0] sm:$0xff]
    %v2421 = vld [vmem:[#allocation7 + $0x9e8] sm:$0xff]
    %v2422 = vld [vmem:[#allocation7 + $0x9f0] sm:$0xff]
    %v2423 = vld [vmem:[#allocation7 + $0x9f8] sm:$0xff]
    %v2424 = vld [vmem:[#allocation7 + $0xa00] sm:$0xff]
    %v2425 = vld [vmem:[#allocation7 + $0xa08] sm:$0xff]
    %v2426 = vld [vmem:[#allocation7 + $0xa10] sm:$0xff]
    %v2427 = vld [vmem:[#allocation7 + $0xa18] sm:$0xff]
    %v2428 = vld [vmem:[#allocation7 + $0xa20] sm:$0xff]
    %v2429 = vld [vmem:[#allocation7 + $0xa28] sm:$0xff]
    %v2430 = vld [vmem:[#allocation7 + $0xa30] sm:$0xff]
    %v2431 = vld [vmem:[#allocation7 + $0xa38] sm:$0xff]
    %v2432 = vld [vmem:[#allocation7 + $0xa40] sm:$0xff]
    %v2433 = vld [vmem:[#allocation7 + $0xa48] sm:$0xff]
    %v2434 = vld [vmem:[#allocation7 + $0xa50] sm:$0xff]
    %v2435 = vld [vmem:[#allocation7 + $0xa58] sm:$0xff]
    %v2436 = vld [vmem:[#allocation7 + $0xa60] sm:$0xff]
    %v2437 = vld [vmem:[#allocation7 + $0xa68] sm:$0xff]
    %v2438 = vld [vmem:[#allocation7 + $0xa70] sm:$0xff]
    %v2439 = vld [vmem:[#allocation7 + $0xa78] sm:$0xff]
    %v2440 = vld [vmem:[#allocation7 + $0xa80] sm:$0xff]
    %v2441 = vld [vmem:[#allocation7 + $0xa88] sm:$0xff]
    %v2442 = vld [vmem:[#allocation7 + $0xa90] sm:$0xff]
    %v2443 = vld [vmem:[#allocation7 + $0xa98] sm:$0xff]
    %v2444 = vld [vmem:[#allocation7 + $0xaa0] sm:$0xff]
    %v2445 = vld [vmem:[#allocation7 + $0xaa8] sm:$0xff]
    %v2446 = vld [vmem:[#allocation7 + $0xab0] sm:$0xff]
    %v2447 = vld [vmem:[#allocation7 + $0xab8] sm:$0xff]
    %v2448 = vld [vmem:[#allocation7 + $0xac0] sm:$0xff]
    %v2449 = vld [vmem:[#allocation7 + $0xac8] sm:$0xff]
    %v2450 = vld [vmem:[#allocation7 + $0xad0] sm:$0xff]
    %v2451 = vld [vmem:[#allocation7 + $0xad8] sm:$0xff]
    %v2452 = vld [vmem:[#allocation7 + $0xae0] sm:$0xff]
    %v2453 = vld [vmem:[#allocation7 + $0xae8] sm:$0xff]
    %v2454 = vld [vmem:[#allocation7 + $0xaf0] sm:$0xff]
    %v2455 = vld [vmem:[#allocation7 + $0xaf8] sm:$0xff]
    %v2456 = vld [vmem:[#allocation7 + $0xb00] sm:$0xff]
    %v2457 = vld [vmem:[#allocation7 + $0xb08] sm:$0xff]
    %v2458 = vld [vmem:[#allocation7 + $0xb10] sm:$0xff]
    %v2459 = vld [vmem:[#allocation7 + $0xb18] sm:$0xff]
    %v2460 = vld [vmem:[#allocation7 + $0xb20] sm:$0xff]
    %v2461 = vld [vmem:[#allocation7 + $0xb28] sm:$0xff]
    %v2462 = vld [vmem:[#allocation7 + $0xb30] sm:$0xff]
    %v2463 = vld [vmem:[#allocation7 + $0xb38] sm:$0xff]
    %v2464 = vld [vmem:[#allocation7 + $0xb40] sm:$0xff]
    %v2465 = vld [vmem:[#allocation7 + $0xb48] sm:$0xff]
    %v2466 = vld [vmem:[#allocation7 + $0xb50] sm:$0xff]
    %v2467 = vld [vmem:[#allocation7 + $0xb58] sm:$0xff]
    %v2468 = vld [vmem:[#allocation7 + $0xb60] sm:$0xff]
    %v2469 = vld [vmem:[#allocation7 + $0xb68] sm:$0xff]
    %v2470 = vld [vmem:[#allocation7 + $0xb70] sm:$0xff]
    %v2471 = vld [vmem:[#allocation7 + $0xb78] sm:$0xff]
    %v2472 = vld [vmem:[#allocation7 + $0xb80] sm:$0xff]
    %v2473 = vld [vmem:[#allocation7 + $0xb88] sm:$0xff]
    %v2474 = vld [vmem:[#allocation7 + $0xb90] sm:$0xff]
    %v2475 = vld [vmem:[#allocation7 + $0xb98] sm:$0xff]
    %v2476 = vld [vmem:[#allocation7 + $0xba0] sm:$0xff]
    %v2477 = vld [vmem:[#allocation7 + $0xba8] sm:$0xff]
    %v2478 = vld [vmem:[#allocation7 + $0xbb0] sm:$0xff]
    %v2479 = vld [vmem:[#allocation7 + $0xbb8] sm:$0xff]
    %v2480 = vld [vmem:[#allocation7 + $0xbc0] sm:$0xff]
    %v2481 = vld [vmem:[#allocation7 + $0xbc8] sm:$0xff]
    %v2482 = vld [vmem:[#allocation7 + $0xbd0] sm:$0xff]
    %v2483 = vld [vmem:[#allocation7 + $0xbd8] sm:$0xff]
    %v2484 = vld [vmem:[#allocation7 + $0xbe0] sm:$0xff]
    %v2485 = vld [vmem:[#allocation7 + $0xbe8] sm:$0xff]
    %v2486 = vld [vmem:[#allocation7 + $0xbf0] sm:$0xff]
    %v2487 = vld [vmem:[#allocation7 + $0xbf8] sm:$0xff]
    %v2488 = vld [vmem:[#allocation7 + $0xc00] sm:$0xff]
    %v2489 = vld [vmem:[#allocation7 + $0xc08] sm:$0xff]
    %v2490 = vld [vmem:[#allocation7 + $0xc10] sm:$0xff]
    %v2491 = vld [vmem:[#allocation7 + $0xc18] sm:$0xff]
    %v2492 = vld [vmem:[#allocation7 + $0xc20] sm:$0xff]
    %v2493 = vld [vmem:[#allocation7 + $0xc28] sm:$0xff]
    %v2494 = vld [vmem:[#allocation7 + $0xc30] sm:$0xff]
    %v2495 = vld [vmem:[#allocation7 + $0xc38] sm:$0xff]
    %v2496 = vld [vmem:[#allocation7 + $0xc40] sm:$0xff]
    %v2497 = vld [vmem:[#allocation7 + $0xc48] sm:$0xff]
    %v2498 = vld [vmem:[#allocation7 + $0xc50] sm:$0xff]
    %v2499 = vld [vmem:[#allocation7 + $0xc58] sm:$0xff]
    %v2500 = vld [vmem:[#allocation7 + $0xc60] sm:$0xff]
    %v2501 = vld [vmem:[#allocation7 + $0xc68] sm:$0xff]
    %v2502 = vld [vmem:[#allocation7 + $0xc70] sm:$0xff]
    %v2503 = vld [vmem:[#allocation7 + $0xc78] sm:$0xff]
    %v2504 = vld [vmem:[#allocation7 + $0xc80] sm:$0xff]
    %v2505 = vld [vmem:[#allocation7 + $0xc88] sm:$0xff]
    %v2506 = vld [vmem:[#allocation7 + $0xc90] sm:$0xff]
    %v2507 = vld [vmem:[#allocation7 + $0xc98] sm:$0xff]
    %v2508 = vld [vmem:[#allocation7 + $0xca0] sm:$0xff]
    %v2509 = vld [vmem:[#allocation7 + $0xca8] sm:$0xff]
    %v2510 = vld [vmem:[#allocation7 + $0xcb0] sm:$0xff]
    %v2511 = vld [vmem:[#allocation7 + $0xcb8] sm:$0xff]
    %v2512 = vld [vmem:[#allocation7 + $0xcc0] sm:$0xff]
    %v2513 = vld [vmem:[#allocation7 + $0xcc8] sm:$0xff]
    %v2514 = vld [vmem:[#allocation7 + $0xcd0] sm:$0xff]
    %v2515 = vld [vmem:[#allocation7 + $0xcd8] sm:$0xff]
    %v2516 = vld [vmem:[#allocation7 + $0xce0] sm:$0xff]
    %v2517 = vld [vmem:[#allocation7 + $0xce8] sm:$0xff]
    %v2518 = vld [vmem:[#allocation7 + $0xcf0] sm:$0xff]
    %v2519 = vld [vmem:[#allocation7 + $0xcf8] sm:$0xff]
    %v2520 = vld [vmem:[#allocation7 + $0xd00] sm:$0xff]
    %v2521 = vld [vmem:[#allocation7 + $0xd08] sm:$0xff]
    %v2522 = vld [vmem:[#allocation7 + $0xd10] sm:$0xff]
    %v2523 = vld [vmem:[#allocation7 + $0xd18] sm:$0xff]
    %v2524 = vld [vmem:[#allocation7 + $0xd20] sm:$0xff]
    %v2525 = vld [vmem:[#allocation7 + $0xd28] sm:$0xff]
    %v2526 = vld [vmem:[#allocation7 + $0xd30] sm:$0xff]
    %v2527 = vld [vmem:[#allocation7 + $0xd38] sm:$0xff]
    %v2528 = vld [vmem:[#allocation7 + $0xd40] sm:$0xff]
    %v2529 = vld [vmem:[#allocation7 + $0xd48] sm:$0xff]
    %v2530 = vld [vmem:[#allocation7 + $0xd50] sm:$0xff]
    %v2531 = vld [vmem:[#allocation7 + $0xd58] sm:$0xff]
    %v2532 = vld [vmem:[#allocation7 + $0xd60] sm:$0xff]
    %v2533 = vld [vmem:[#allocation7 + $0xd68] sm:$0xff]
    %v2534 = vld [vmem:[#allocation7 + $0xd70] sm:$0xff]
    %v2535 = vld [vmem:[#allocation7 + $0xd78] sm:$0xff]
    %v2536 = vld [vmem:[#allocation7 + $0xd80] sm:$0xff]
    %v2537 = vld [vmem:[#allocation7 + $0xd88] sm:$0xff]
    %v2538 = vld [vmem:[#allocation7 + $0xd90] sm:$0xff]
    %v2539 = vld [vmem:[#allocation7 + $0xd98] sm:$0xff]
    %v2540 = vld [vmem:[#allocation7 + $0xda0] sm:$0xff]
    %v2541 = vld [vmem:[#allocation7 + $0xda8] sm:$0xff]
    %v2542 = vld [vmem:[#allocation7 + $0xdb0] sm:$0xff]
    %v2543 = vld [vmem:[#allocation7 + $0xdb8] sm:$0xff]
    %v2544 = vld [vmem:[#allocation7 + $0xdc0] sm:$0xff]
    %v2545 = vld [vmem:[#allocation7 + $0xdc8] sm:$0xff]
    %v2546 = vld [vmem:[#allocation7 + $0xdd0] sm:$0xff]
    %v2547 = vld [vmem:[#allocation7 + $0xdd8] sm:$0xff]
    %v2548 = vld [vmem:[#allocation7 + $0xde0] sm:$0xff]
    %v2549 = vld [vmem:[#allocation7 + $0xde8] sm:$0xff]
    %v2550 = vld [vmem:[#allocation7 + $0xdf0] sm:$0xff]
    %v2551 = vld [vmem:[#allocation7 + $0xdf8] sm:$0xff]
    %v2552 = vld [vmem:[#allocation7 + $0xe00] sm:$0xff]
    %v2553 = vld [vmem:[#allocation7 + $0xe08] sm:$0xff]
    %v2554 = vld [vmem:[#allocation7 + $0xe10] sm:$0xff]
    %v2555 = vld [vmem:[#allocation7 + $0xe18] sm:$0xff]
    %v2556 = vld [vmem:[#allocation7 + $0xe20] sm:$0xff]
    %v2557 = vld [vmem:[#allocation7 + $0xe28] sm:$0xff]
    %v2558 = vld [vmem:[#allocation7 + $0xe30] sm:$0xff]
    %v2559 = vld [vmem:[#allocation7 + $0xe38] sm:$0xff]
    %v2560 = vld [vmem:[#allocation7 + $0xe40] sm:$0xff]
    %v2561 = vld [vmem:[#allocation7 + $0xe48] sm:$0xff]
    %v2562 = vld [vmem:[#allocation7 + $0xe50] sm:$0xff]
    %v2563 = vld [vmem:[#allocation7 + $0xe58] sm:$0xff]
    %v2564 = vld [vmem:[#allocation7 + $0xe60] sm:$0xff]
    %v2565 = vld [vmem:[#allocation7 + $0xe68] sm:$0xff]
    %v2566 = vld [vmem:[#allocation7 + $0xe70] sm:$0xff]
    %v2567 = vld [vmem:[#allocation7 + $0xe78] sm:$0xff]
    %v2568 = vld [vmem:[#allocation7 + $0xe80] sm:$0xff]
    %v2569 = vld [vmem:[#allocation7 + $0xe88] sm:$0xff]
    %v2570 = vld [vmem:[#allocation7 + $0xe90] sm:$0xff]
    %v2571 = vld [vmem:[#allocation7 + $0xe98] sm:$0xff]
    %v2572 = vld [vmem:[#allocation7 + $0xea0] sm:$0xff]
    %v2573 = vld [vmem:[#allocation7 + $0xea8] sm:$0xff]
    %v2574 = vld [vmem:[#allocation7 + $0xeb0] sm:$0xff]
    %v2575 = vld [vmem:[#allocation7 + $0xeb8] sm:$0xff]
    %v2576 = vld [vmem:[#allocation7 + $0xec0] sm:$0xff]
    %v2577 = vld [vmem:[#allocation7 + $0xec8] sm:$0xff]
    %v2578 = vld [vmem:[#allocation7 + $0xed0] sm:$0xff]
    %v2579 = vld [vmem:[#allocation7 + $0xed8] sm:$0xff]
    %v2580 = vld [vmem:[#allocation7 + $0xee0] sm:$0xff]
    %v2581 = vld [vmem:[#allocation7 + $0xee8] sm:$0xff]
    %v2582 = vld [vmem:[#allocation7 + $0xef0] sm:$0xff]
    %v2583 = vld [vmem:[#allocation7 + $0xef8] sm:$0xff]
    %v2584 = vld [vmem:[#allocation7 + $0xf00] sm:$0xff]
    %v2585 = vld [vmem:[#allocation7 + $0xf08] sm:$0xff]
    %v2586 = vld [vmem:[#allocation7 + $0xf10] sm:$0xff]
    %v2587 = vld [vmem:[#allocation7 + $0xf18] sm:$0xff]
    %v2588 = vld [vmem:[#allocation7 + $0xf20] sm:$0xff]
    %v2589 = vld [vmem:[#allocation7 + $0xf28] sm:$0xff]
    %v2590 = vld [vmem:[#allocation7 + $0xf30] sm:$0xff]
    %v2591 = vld [vmem:[#allocation7 + $0xf38] sm:$0xff]
    %v2592 = vld [vmem:[#allocation7 + $0xf40] sm:$0xff]
    %v2593 = vld [vmem:[#allocation7 + $0xf48] sm:$0xff]
    %v2594 = vld [vmem:[#allocation7 + $0xf50] sm:$0xff]
    %v2595 = vld [vmem:[#allocation7 + $0xf58] sm:$0xff]
    %v2596 = vld [vmem:[#allocation7 + $0xf60] sm:$0xff]
    %v2597 = vld [vmem:[#allocation7 + $0xf68] sm:$0xff]
    %v2598 = vld [vmem:[#allocation7 + $0xf70] sm:$0xff]
    %v2599 = vld [vmem:[#allocation7 + $0xf78] sm:$0xff]
    %v2600 = vld [vmem:[#allocation7 + $0xf80] sm:$0xff]
    %v2601 = vld [vmem:[#allocation7 + $0xf88] sm:$0xff]
    %v2602 = vld [vmem:[#allocation7 + $0xf90] sm:$0xff]
    %v2603 = vld [vmem:[#allocation7 + $0xf98] sm:$0xff]
    %v2604 = vld [vmem:[#allocation7 + $0xfa0] sm:$0xff]
    %v2605 = vld [vmem:[#allocation7 + $0xfa8] sm:$0xff]
    %v2606 = vld [vmem:[#allocation7 + $0xfb0] sm:$0xff]
    %v2607 = vld [vmem:[#allocation7 + $0xfb8] sm:$0xff]
    %v2608 = vld [vmem:[#allocation7 + $0xfc0] sm:$0xff]
    %v2609 = vld [vmem:[#allocation7 + $0xfc8] sm:$0xff]
    %v2610 = vld [vmem:[#allocation7 + $0xfd0] sm:$0xff]
    %v2611 = vld [vmem:[#allocation7 + $0xfd8] sm:$0xff]
    %v2612 = vld [vmem:[#allocation7 + $0xfe0] sm:$0xff]
    %v2613 = vld [vmem:[#allocation7 + $0xfe8] sm:$0xff]
    %v2614 = vld [vmem:[#allocation7 + $0xff0] sm:$0xff]
    %v2615 = vld [vmem:[#allocation7 + $0xff8] sm:$0xff]
    %v2616 = vld [vmem:[#allocation9] sm:$0xff]
    %v2618 = vlaneseq
    %v2619 = vshrl.u32 %v2618, 7
    %v2620 = vsub.s32 0, %v2619
    %v2621 = vrot.slane %v2616, %v2620
    %v2622 = vlaneseq
    %v2623 = vshrl.u32 %v2622, 7
    %v2624 = vsub.s32 1, %v2623
    %v2625 = vrot.slane %v2616, %v2624
    %v2626 = vlaneseq
    %v2627 = vshrl.u32 %v2626, 7
    %v2628 = vsub.s32 2, %v2627
    %v2629 = vrot.slane %v2616, %v2628
    %v2630 = vlaneseq
    %v2631 = vshrl.u32 %v2630, 7
    %v2632 = vsub.s32 3, %v2631
    %v2633 = vrot.slane %v2616, %v2632
    %v2634 = vlaneseq
    %v2635 = vshrl.u32 %v2634, 7
    %v2636 = vsub.s32 4, %v2635
    %v2637 = vrot.slane %v2616, %v2636
    %v2638 = vlaneseq
    %v2639 = vshrl.u32 %v2638, 7
    %v2640 = vsub.s32 5, %v2639
    %v2641 = vrot.slane %v2616, %v2640
    %v2642 = vlaneseq
    %v2643 = vshrl.u32 %v2642, 7
    %v2644 = vsub.s32 6, %v2643
    %v2645 = vrot.slane %v2616, %v2644
    %v2646 = vlaneseq
    %v2647 = vshrl.u32 %v2646, 7
    %v2648 = vsub.s32 7, %v2647
    %v2649 = vrot.slane %v2616, %v2648
    %v3170 = vunpack.c.l.b16 %v2104
    %v3171 = vunpack.c.h.b16 %v2104
    %v3172 = vunpack.c.l.b16 %v2105
    %v3173 = vunpack.c.h.b16 %v2105
    %v3174 = vunpack.c.l.b16 %v2106
    %v3175 = vunpack.c.h.b16 %v2106
    %v3176 = vunpack.c.l.b16 %v2107
    %v3177 = vunpack.c.h.b16 %v2107
    %v3178 = vunpack.c.l.b16 %v2108
    %v3179 = vunpack.c.h.b16 %v2108
    %v3180 = vunpack.c.l.b16 %v2109
    %v3181 = vunpack.c.h.b16 %v2109
    %v3182 = vunpack.c.l.b16 %v2110
    %v3183 = vunpack.c.h.b16 %v2110
    %v3184 = vunpack.c.l.b16 %v2111
    %v3185 = vunpack.c.h.b16 %v2111
    %v3186 = vunpack.c.l.b16 %v2112
    %v3187 = vunpack.c.h.b16 %v2112
    %v3188 = vunpack.c.l.b16 %v2113
    %v3189 = vunpack.c.h.b16 %v2113
    %v3190 = vunpack.c.l.b16 %v2114
    %v3191 = vunpack.c.h.b16 %v2114
    %v3192 = vunpack.c.l.b16 %v2115
    %v3193 = vunpack.c.h.b16 %v2115
    %v3194 = vunpack.c.l.b16 %v2116
    %v3195 = vunpack.c.h.b16 %v2116
    %v3196 = vunpack.c.l.b16 %v2117
    %v3197 = vunpack.c.h.b16 %v2117
    %v3198 = vunpack.c.l.b16 %v2118
    %v3199 = vunpack.c.h.b16 %v2118
    %v3200 = vunpack.c.l.b16 %v2119
    %v3201 = vunpack.c.h.b16 %v2119
    %v3202 = vunpack.c.l.b16 %v2120
    %v3203 = vunpack.c.h.b16 %v2120
    %v3204 = vunpack.c.l.b16 %v2121
    %v3205 = vunpack.c.h.b16 %v2121
    %v3206 = vunpack.c.l.b16 %v2122
    %v3207 = vunpack.c.h.b16 %v2122
    %v3208 = vunpack.c.l.b16 %v2123
    %v3209 = vunpack.c.h.b16 %v2123
    %v3210 = vunpack.c.l.b16 %v2124
    %v3211 = vunpack.c.h.b16 %v2124
    %v3212 = vunpack.c.l.b16 %v2125
    %v3213 = vunpack.c.h.b16 %v2125
    %v3214 = vunpack.c.l.b16 %v2126
    %v3215 = vunpack.c.h.b16 %v2126
    %v3216 = vunpack.c.l.b16 %v2127
    %v3217 = vunpack.c.h.b16 %v2127
    %v3218 = vunpack.c.l.b16 %v2128
    %v3219 = vunpack.c.h.b16 %v2128
    %v3220 = vunpack.c.l.b16 %v2129
    %v3221 = vunpack.c.h.b16 %v2129
    %v3222 = vunpack.c.l.b16 %v2130
    %v3223 = vunpack.c.h.b16 %v2130
    %v3224 = vunpack.c.l.b16 %v2131
    %v3225 = vunpack.c.h.b16 %v2131
    %v3226 = vunpack.c.l.b16 %v2132
    %v3227 = vunpack.c.h.b16 %v2132
    %v3228 = vunpack.c.l.b16 %v2133
    %v3229 = vunpack.c.h.b16 %v2133
    %v3230 = vunpack.c.l.b16 %v2134
    %v3231 = vunpack.c.h.b16 %v2134
    %v3232 = vunpack.c.l.b16 %v2135
    %v3233 = vunpack.c.h.b16 %v2135
    %v3234 = vunpack.c.l.b16 %v2136
    %v3235 = vunpack.c.h.b16 %v2136
    %v3236 = vunpack.c.l.b16 %v2137
    %v3237 = vunpack.c.h.b16 %v2137
    %v3238 = vunpack.c.l.b16 %v2138
    %v3239 = vunpack.c.h.b16 %v2138
    %v3240 = vunpack.c.l.b16 %v2139
    %v3241 = vunpack.c.h.b16 %v2139
    %v3242 = vunpack.c.l.b16 %v2140
    %v3243 = vunpack.c.h.b16 %v2140
    %v3244 = vunpack.c.l.b16 %v2141
    %v3245 = vunpack.c.h.b16 %v2141
    %v3246 = vunpack.c.l.b16 %v2142
    %v3247 = vunpack.c.h.b16 %v2142
    %v3248 = vunpack.c.l.b16 %v2143
    %v3249 = vunpack.c.h.b16 %v2143
    %v3250 = vunpack.c.l.b16 %v2144
    %v3251 = vunpack.c.h.b16 %v2144
    %v3252 = vunpack.c.l.b16 %v2145
    %v3253 = vunpack.c.h.b16 %v2145
    %v3254 = vunpack.c.l.b16 %v2146
    %v3255 = vunpack.c.h.b16 %v2146
    %v3256 = vunpack.c.l.b16 %v2147
    %v3257 = vunpack.c.h.b16 %v2147
    %v3258 = vunpack.c.l.b16 %v2148
    %v3259 = vunpack.c.h.b16 %v2148
    %v3260 = vunpack.c.l.b16 %v2149
    %v3261 = vunpack.c.h.b16 %v2149
    %v3262 = vunpack.c.l.b16 %v2150
    %v3263 = vunpack.c.h.b16 %v2150
    %v3264 = vunpack.c.l.b16 %v2151
    %v3265 = vunpack.c.h.b16 %v2151
    %v3266 = vunpack.c.l.b16 %v2152
    %v3267 = vunpack.c.h.b16 %v2152
    %v3268 = vunpack.c.l.b16 %v2153
    %v3269 = vunpack.c.h.b16 %v2153
    %v3270 = vunpack.c.l.b16 %v2154
    %v3271 = vunpack.c.h.b16 %v2154
    %v3272 = vunpack.c.l.b16 %v2155
    %v3273 = vunpack.c.h.b16 %v2155
    %v3274 = vunpack.c.l.b16 %v2156
    %v3275 = vunpack.c.h.b16 %v2156
    %v3276 = vunpack.c.l.b16 %v2157
    %v3277 = vunpack.c.h.b16 %v2157
    %v3278 = vunpack.c.l.b16 %v2158
    %v3279 = vunpack.c.h.b16 %v2158
    %v3280 = vunpack.c.l.b16 %v2159
    %v3281 = vunpack.c.h.b16 %v2159
    %v3282 = vunpack.c.l.b16 %v2160
    %v3283 = vunpack.c.h.b16 %v2160
    %v3284 = vunpack.c.l.b16 %v2161
    %v3285 = vunpack.c.h.b16 %v2161
    %v3286 = vunpack.c.l.b16 %v2162
    %v3287 = vunpack.c.h.b16 %v2162
    %v3288 = vunpack.c.l.b16 %v2163
    %v3289 = vunpack.c.h.b16 %v2163
    %v3290 = vunpack.c.l.b16 %v2164
    %v3291 = vunpack.c.h.b16 %v2164
    %v3292 = vunpack.c.l.b16 %v2165
    %v3293 = vunpack.c.h.b16 %v2165
    %v3294 = vunpack.c.l.b16 %v2166
    %v3295 = vunpack.c.h.b16 %v2166
    %v3296 = vunpack.c.l.b16 %v2167
    %v3297 = vunpack.c.h.b16 %v2167
    %v3298 = vunpack.c.l.b16 %v2168
    %v3299 = vunpack.c.h.b16 %v2168
    %v3300 = vunpack.c.l.b16 %v2169
    %v3301 = vunpack.c.h.b16 %v2169
    %v3302 = vunpack.c.l.b16 %v2170
    %v3303 = vunpack.c.h.b16 %v2170
    %v3304 = vunpack.c.l.b16 %v2171
    %v3305 = vunpack.c.h.b16 %v2171
    %v3306 = vunpack.c.l.b16 %v2172
    %v3307 = vunpack.c.h.b16 %v2172
    %v3308 = vunpack.c.l.b16 %v2173
    %v3309 = vunpack.c.h.b16 %v2173
    %v3310 = vunpack.c.l.b16 %v2174
    %v3311 = vunpack.c.h.b16 %v2174
    %v3312 = vunpack.c.l.b16 %v2175
    %v3313 = vunpack.c.h.b16 %v2175
    %v3314 = vunpack.c.l.b16 %v2176
    %v3315 = vunpack.c.h.b16 %v2176
    %v3316 = vunpack.c.l.b16 %v2177
    %v3317 = vunpack.c.h.b16 %v2177
    %v3318 = vunpack.c.l.b16 %v2178
    %v3319 = vunpack.c.h.b16 %v2178
    %v3320 = vunpack.c.l.b16 %v2179
    %v3321 = vunpack.c.h.b16 %v2179
    %v3322 = vunpack.c.l.b16 %v2180
    %v3323 = vunpack.c.h.b16 %v2180
    %v3324 = vunpack.c.l.b16 %v2181
    %v3325 = vunpack.c.h.b16 %v2181
    %v3326 = vunpack.c.l.b16 %v2182
    %v3327 = vunpack.c.h.b16 %v2182
    %v3328 = vunpack.c.l.b16 %v2183
    %v3329 = vunpack.c.h.b16 %v2183
    %v3330 = vunpack.c.l.b16 %v2184
    %v3331 = vunpack.c.h.b16 %v2184
    %v3332 = vunpack.c.l.b16 %v2185
    %v3333 = vunpack.c.h.b16 %v2185
    %v3334 = vunpack.c.l.b16 %v2186
    %v3335 = vunpack.c.h.b16 %v2186
    %v3336 = vunpack.c.l.b16 %v2187
    %v3337 = vunpack.c.h.b16 %v2187
    %v3338 = vunpack.c.l.b16 %v2188
    %v3339 = vunpack.c.h.b16 %v2188
    %v3340 = vunpack.c.l.b16 %v2189
    %v3341 = vunpack.c.h.b16 %v2189
    %v3342 = vunpack.c.l.b16 %v2190
    %v3343 = vunpack.c.h.b16 %v2190
    %v3344 = vunpack.c.l.b16 %v2191
    %v3345 = vunpack.c.h.b16 %v2191
    %v3346 = vunpack.c.l.b16 %v2192
    %v3347 = vunpack.c.h.b16 %v2192
    %v3348 = vunpack.c.l.b16 %v2193
    %v3349 = vunpack.c.h.b16 %v2193
    %v3350 = vunpack.c.l.b16 %v2194
    %v3351 = vunpack.c.h.b16 %v2194
    %v3352 = vunpack.c.l.b16 %v2195
    %v3353 = vunpack.c.h.b16 %v2195
    %v3354 = vunpack.c.l.b16 %v2196
    %v3355 = vunpack.c.h.b16 %v2196
    %v3356 = vunpack.c.l.b16 %v2197
    %v3357 = vunpack.c.h.b16 %v2197
    %v3358 = vunpack.c.l.b16 %v2198
    %v3359 = vunpack.c.h.b16 %v2198
    %v3360 = vunpack.c.l.b16 %v2199
    %v3361 = vunpack.c.h.b16 %v2199
    %v3362 = vunpack.c.l.b16 %v2200
    %v3363 = vunpack.c.h.b16 %v2200
    %v3364 = vunpack.c.l.b16 %v2201
    %v3365 = vunpack.c.h.b16 %v2201
    %v3366 = vunpack.c.l.b16 %v2202
    %v3367 = vunpack.c.h.b16 %v2202
    %v3368 = vunpack.c.l.b16 %v2203
    %v3369 = vunpack.c.h.b16 %v2203
    %v3370 = vunpack.c.l.b16 %v2204
    %v3371 = vunpack.c.h.b16 %v2204
    %v3372 = vunpack.c.l.b16 %v2205
    %v3373 = vunpack.c.h.b16 %v2205
    %v3374 = vunpack.c.l.b16 %v2206
    %v3375 = vunpack.c.h.b16 %v2206
    %v3376 = vunpack.c.l.b16 %v2207
    %v3377 = vunpack.c.h.b16 %v2207
    %v3378 = vunpack.c.l.b16 %v2208
    %v3379 = vunpack.c.h.b16 %v2208
    %v3380 = vunpack.c.l.b16 %v2209
    %v3381 = vunpack.c.h.b16 %v2209
    %v3382 = vunpack.c.l.b16 %v2210
    %v3383 = vunpack.c.h.b16 %v2210
    %v3384 = vunpack.c.l.b16 %v2211
    %v3385 = vunpack.c.h.b16 %v2211
    %v3386 = vunpack.c.l.b16 %v2212
    %v3387 = vunpack.c.h.b16 %v2212
    %v3388 = vunpack.c.l.b16 %v2213
    %v3389 = vunpack.c.h.b16 %v2213
    %v3390 = vunpack.c.l.b16 %v2214
    %v3391 = vunpack.c.h.b16 %v2214
    %v3392 = vunpack.c.l.b16 %v2215
    %v3393 = vunpack.c.h.b16 %v2215
    %v3394 = vunpack.c.l.b16 %v2216
    %v3395 = vunpack.c.h.b16 %v2216
    %v3396 = vunpack.c.l.b16 %v2217
    %v3397 = vunpack.c.h.b16 %v2217
    %v3398 = vunpack.c.l.b16 %v2218
    %v3399 = vunpack.c.h.b16 %v2218
    %v3400 = vunpack.c.l.b16 %v2219
    %v3401 = vunpack.c.h.b16 %v2219
    %v3402 = vunpack.c.l.b16 %v2220
    %v3403 = vunpack.c.h.b16 %v2220
    %v3404 = vunpack.c.l.b16 %v2221
    %v3405 = vunpack.c.h.b16 %v2221
    %v3406 = vunpack.c.l.b16 %v2222
    %v3407 = vunpack.c.h.b16 %v2222
    %v3408 = vunpack.c.l.b16 %v2223
    %v3409 = vunpack.c.h.b16 %v2223
    %v3410 = vunpack.c.l.b16 %v2224
    %v3411 = vunpack.c.h.b16 %v2224
    %v3412 = vunpack.c.l.b16 %v2225
    %v3413 = vunpack.c.h.b16 %v2225
    %v3414 = vunpack.c.l.b16 %v2226
    %v3415 = vunpack.c.h.b16 %v2226
    %v3416 = vunpack.c.l.b16 %v2227
    %v3417 = vunpack.c.h.b16 %v2227
    %v3418 = vunpack.c.l.b16 %v2228
    %v3419 = vunpack.c.h.b16 %v2228
    %v3420 = vunpack.c.l.b16 %v2229
    %v3421 = vunpack.c.h.b16 %v2229
    %v3422 = vunpack.c.l.b16 %v2230
    %v3423 = vunpack.c.h.b16 %v2230
    %v3424 = vunpack.c.l.b16 %v2231
    %v3425 = vunpack.c.h.b16 %v2231
    %v3426 = vunpack.c.l.b16 %v2232
    %v3427 = vunpack.c.h.b16 %v2232
    %v3428 = vunpack.c.l.b16 %v2233
    %v3429 = vunpack.c.h.b16 %v2233
    %v3430 = vunpack.c.l.b16 %v2234
    %v3431 = vunpack.c.h.b16 %v2234
    %v3432 = vunpack.c.l.b16 %v2235
    %v3433 = vunpack.c.h.b16 %v2235
    %v3434 = vunpack.c.l.b16 %v2236
    %v3435 = vunpack.c.h.b16 %v2236
    %v3436 = vunpack.c.l.b16 %v2237
    %v3437 = vunpack.c.h.b16 %v2237
    %v3438 = vunpack.c.l.b16 %v2238
    %v3439 = vunpack.c.h.b16 %v2238
    %v3440 = vunpack.c.l.b16 %v2239
    %v3441 = vunpack.c.h.b16 %v2239
    %v3442 = vunpack.c.l.b16 %v2240
    %v3443 = vunpack.c.h.b16 %v2240
    %v3444 = vunpack.c.l.b16 %v2241
    %v3445 = vunpack.c.h.b16 %v2241
    %v3446 = vunpack.c.l.b16 %v2242
    %v3447 = vunpack.c.h.b16 %v2242
    %v3448 = vunpack.c.l.b16 %v2243
    %v3449 = vunpack.c.h.b16 %v2243
    %v3450 = vunpack.c.l.b16 %v2244
    %v3451 = vunpack.c.h.b16 %v2244
    %v3452 = vunpack.c.l.b16 %v2245
    %v3453 = vunpack.c.h.b16 %v2245
    %v3454 = vunpack.c.l.b16 %v2246
    %v3455 = vunpack.c.h.b16 %v2246
    %v3456 = vunpack.c.l.b16 %v2247
    %v3457 = vunpack.c.h.b16 %v2247
    %v3458 = vunpack.c.l.b16 %v2248
    %v3459 = vunpack.c.h.b16 %v2248
    %v3460 = vunpack.c.l.b16 %v2249
    %v3461 = vunpack.c.h.b16 %v2249
    %v3462 = vunpack.c.l.b16 %v2250
    %v3463 = vunpack.c.h.b16 %v2250
    %v3464 = vunpack.c.l.b16 %v2251
    %v3465 = vunpack.c.h.b16 %v2251
    %v3466 = vunpack.c.l.b16 %v2252
    %v3467 = vunpack.c.h.b16 %v2252
    %v3468 = vunpack.c.l.b16 %v2253
    %v3469 = vunpack.c.h.b16 %v2253
    %v3470 = vunpack.c.l.b16 %v2254
    %v3471 = vunpack.c.h.b16 %v2254
    %v3472 = vunpack.c.l.b16 %v2255
    %v3473 = vunpack.c.h.b16 %v2255
    %v3474 = vunpack.c.l.b16 %v2256
    %v3475 = vunpack.c.h.b16 %v2256
    %v3476 = vunpack.c.l.b16 %v2257
    %v3477 = vunpack.c.h.b16 %v2257
    %v3478 = vunpack.c.l.b16 %v2258
    %v3479 = vunpack.c.h.b16 %v2258
    %v3480 = vunpack.c.l.b16 %v2259
    %v3481 = vunpack.c.h.b16 %v2259
    %v3482 = vunpack.c.l.b16 %v2260
    %v3483 = vunpack.c.h.b16 %v2260
    %v3484 = vunpack.c.l.b16 %v2261
    %v3485 = vunpack.c.h.b16 %v2261
    %v3486 = vunpack.c.l.b16 %v2262
    %v3487 = vunpack.c.h.b16 %v2262
    %v3488 = vunpack.c.l.b16 %v2263
    %v3489 = vunpack.c.h.b16 %v2263
    %v3490 = vunpack.c.l.b16 %v2264
    %v3491 = vunpack.c.h.b16 %v2264
    %v3492 = vunpack.c.l.b16 %v2265
    %v3493 = vunpack.c.h.b16 %v2265
    %v3494 = vunpack.c.l.b16 %v2266
    %v3495 = vunpack.c.h.b16 %v2266
    %v3496 = vunpack.c.l.b16 %v2267
    %v3497 = vunpack.c.h.b16 %v2267
    %v3498 = vunpack.c.l.b16 %v2268
    %v3499 = vunpack.c.h.b16 %v2268
    %v3500 = vunpack.c.l.b16 %v2269
    %v3501 = vunpack.c.h.b16 %v2269
    %v3502 = vunpack.c.l.b16 %v2270
    %v3503 = vunpack.c.h.b16 %v2270
    %v3504 = vunpack.c.l.b16 %v2271
    %v3505 = vunpack.c.h.b16 %v2271
    %v3506 = vunpack.c.l.b16 %v2272
    %v3507 = vunpack.c.h.b16 %v2272
    %v3508 = vunpack.c.l.b16 %v2273
    %v3509 = vunpack.c.h.b16 %v2273
    %v3510 = vunpack.c.l.b16 %v2274
    %v3511 = vunpack.c.h.b16 %v2274
    %v3512 = vunpack.c.l.b16 %v2275
    %v3513 = vunpack.c.h.b16 %v2275
    %v3514 = vunpack.c.l.b16 %v2276
    %v3515 = vunpack.c.h.b16 %v2276
    %v3516 = vunpack.c.l.b16 %v2277
    %v3517 = vunpack.c.h.b16 %v2277
    %v3518 = vunpack.c.l.b16 %v2278
    %v3519 = vunpack.c.h.b16 %v2278
    %v3520 = vunpack.c.l.b16 %v2279
    %v3521 = vunpack.c.h.b16 %v2279
    %v3522 = vunpack.c.l.b16 %v2280
    %v3523 = vunpack.c.h.b16 %v2280
    %v3524 = vunpack.c.l.b16 %v2281
    %v3525 = vunpack.c.h.b16 %v2281
    %v3526 = vunpack.c.l.b16 %v2282
    %v3527 = vunpack.c.h.b16 %v2282
    %v3528 = vunpack.c.l.b16 %v2283
    %v3529 = vunpack.c.h.b16 %v2283
    %v3530 = vunpack.c.l.b16 %v2284
    %v3531 = vunpack.c.h.b16 %v2284
    %v3532 = vunpack.c.l.b16 %v2285
    %v3533 = vunpack.c.h.b16 %v2285
    %v3534 = vunpack.c.l.b16 %v2286
    %v3535 = vunpack.c.h.b16 %v2286
    %v3536 = vunpack.c.l.b16 %v2287
    %v3537 = vunpack.c.h.b16 %v2287
    %v3538 = vunpack.c.l.b16 %v2288
    %v3539 = vunpack.c.h.b16 %v2288
    %v3540 = vunpack.c.l.b16 %v2289
    %v3541 = vunpack.c.h.b16 %v2289
    %v3542 = vunpack.c.l.b16 %v2290
    %v3543 = vunpack.c.h.b16 %v2290
    %v3544 = vunpack.c.l.b16 %v2291
    %v3545 = vunpack.c.h.b16 %v2291
    %v3546 = vunpack.c.l.b16 %v2292
    %v3547 = vunpack.c.h.b16 %v2292
    %v3548 = vunpack.c.l.b16 %v2293
    %v3549 = vunpack.c.h.b16 %v2293
    %v3550 = vunpack.c.l.b16 %v2294
    %v3551 = vunpack.c.h.b16 %v2294
    %v3552 = vunpack.c.l.b16 %v2295
    %v3553 = vunpack.c.h.b16 %v2295
    %v3554 = vunpack.c.l.b16 %v2296
    %v3555 = vunpack.c.h.b16 %v2296
    %v3556 = vunpack.c.l.b16 %v2297
    %v3557 = vunpack.c.h.b16 %v2297
    %v3558 = vunpack.c.l.b16 %v2298
    %v3559 = vunpack.c.h.b16 %v2298
    %v3560 = vunpack.c.l.b16 %v2299
    %v3561 = vunpack.c.h.b16 %v2299
    %v3562 = vunpack.c.l.b16 %v2300
    %v3563 = vunpack.c.h.b16 %v2300
    %v3564 = vunpack.c.l.b16 %v2301
    %v3565 = vunpack.c.h.b16 %v2301
    %v3566 = vunpack.c.l.b16 %v2302
    %v3567 = vunpack.c.h.b16 %v2302
    %v3568 = vunpack.c.l.b16 %v2303
    %v3569 = vunpack.c.h.b16 %v2303
    %v3570 = vunpack.c.l.b16 %v2304
    %v3571 = vunpack.c.h.b16 %v2304
    %v3572 = vunpack.c.l.b16 %v2305
    %v3573 = vunpack.c.h.b16 %v2305
    %v3574 = vunpack.c.l.b16 %v2306
    %v3575 = vunpack.c.h.b16 %v2306
    %v3576 = vunpack.c.l.b16 %v2307
    %v3577 = vunpack.c.h.b16 %v2307
    %v3578 = vunpack.c.l.b16 %v2308
    %v3579 = vunpack.c.h.b16 %v2308
    %v3580 = vunpack.c.l.b16 %v2309
    %v3581 = vunpack.c.h.b16 %v2309
    %v3582 = vunpack.c.l.b16 %v2310
    %v3583 = vunpack.c.h.b16 %v2310
    %v3584 = vunpack.c.l.b16 %v2311
    %v3585 = vunpack.c.h.b16 %v2311
    %v3586 = vunpack.c.l.b16 %v2312
    %v3587 = vunpack.c.h.b16 %v2312
    %v3588 = vunpack.c.l.b16 %v2313
    %v3589 = vunpack.c.h.b16 %v2313
    %v3590 = vunpack.c.l.b16 %v2314
    %v3591 = vunpack.c.h.b16 %v2314
    %v3592 = vunpack.c.l.b16 %v2315
    %v3593 = vunpack.c.h.b16 %v2315
    %v3594 = vunpack.c.l.b16 %v2316
    %v3595 = vunpack.c.h.b16 %v2316
    %v3596 = vunpack.c.l.b16 %v2317
    %v3597 = vunpack.c.h.b16 %v2317
    %v3598 = vunpack.c.l.b16 %v2318
    %v3599 = vunpack.c.h.b16 %v2318
    %v3600 = vunpack.c.l.b16 %v2319
    %v3601 = vunpack.c.h.b16 %v2319
    %v3602 = vunpack.c.l.b16 %v2320
    %v3603 = vunpack.c.h.b16 %v2320
    %v3604 = vunpack.c.l.b16 %v2321
    %v3605 = vunpack.c.h.b16 %v2321
    %v3606 = vunpack.c.l.b16 %v2322
    %v3607 = vunpack.c.h.b16 %v2322
    %v3608 = vunpack.c.l.b16 %v2323
    %v3609 = vunpack.c.h.b16 %v2323
    %v3610 = vunpack.c.l.b16 %v2324
    %v3611 = vunpack.c.h.b16 %v2324
    %v3612 = vunpack.c.l.b16 %v2325
    %v3613 = vunpack.c.h.b16 %v2325
    %v3614 = vunpack.c.l.b16 %v2326
    %v3615 = vunpack.c.h.b16 %v2326
    %v3616 = vunpack.c.l.b16 %v2327
    %v3617 = vunpack.c.h.b16 %v2327
    %v3618 = vunpack.c.l.b16 %v2328
    %v3619 = vunpack.c.h.b16 %v2328
    %v3620 = vunpack.c.l.b16 %v2329
    %v3621 = vunpack.c.h.b16 %v2329
    %v3622 = vunpack.c.l.b16 %v2330
    %v3623 = vunpack.c.h.b16 %v2330
    %v3624 = vunpack.c.l.b16 %v2331
    %v3625 = vunpack.c.h.b16 %v2331
    %v3626 = vunpack.c.l.b16 %v2332
    %v3627 = vunpack.c.h.b16 %v2332
    %v3628 = vunpack.c.l.b16 %v2333
    %v3629 = vunpack.c.h.b16 %v2333
    %v3630 = vunpack.c.l.b16 %v2334
    %v3631 = vunpack.c.h.b16 %v2334
    %v3632 = vunpack.c.l.b16 %v2335
    %v3633 = vunpack.c.h.b16 %v2335
    %v3634 = vunpack.c.l.b16 %v2336
    %v3635 = vunpack.c.h.b16 %v2336
    %v3636 = vunpack.c.l.b16 %v2337
    %v3637 = vunpack.c.h.b16 %v2337
    %v3638 = vunpack.c.l.b16 %v2338
    %v3639 = vunpack.c.h.b16 %v2338
    %v3640 = vunpack.c.l.b16 %v2339
    %v3641 = vunpack.c.h.b16 %v2339
    %v3642 = vunpack.c.l.b16 %v2340
    %v3643 = vunpack.c.h.b16 %v2340
    %v3644 = vunpack.c.l.b16 %v2341
    %v3645 = vunpack.c.h.b16 %v2341
    %v3646 = vunpack.c.l.b16 %v2342
    %v3647 = vunpack.c.h.b16 %v2342
    %v3648 = vunpack.c.l.b16 %v2343
    %v3649 = vunpack.c.h.b16 %v2343
    %v3650 = vunpack.c.l.b16 %v2344
    %v3651 = vunpack.c.h.b16 %v2344
    %v3652 = vunpack.c.l.b16 %v2345
    %v3653 = vunpack.c.h.b16 %v2345
    %v3654 = vunpack.c.l.b16 %v2346
    %v3655 = vunpack.c.h.b16 %v2346
    %v3656 = vunpack.c.l.b16 %v2347
    %v3657 = vunpack.c.h.b16 %v2347
    %v3658 = vunpack.c.l.b16 %v2348
    %v3659 = vunpack.c.h.b16 %v2348
    %v3660 = vunpack.c.l.b16 %v2349
    %v3661 = vunpack.c.h.b16 %v2349
    %v3662 = vunpack.c.l.b16 %v2350
    %v3663 = vunpack.c.h.b16 %v2350
    %v3664 = vunpack.c.l.b16 %v2351
    %v3665 = vunpack.c.h.b16 %v2351
    %v3666 = vunpack.c.l.b16 %v2352
    %v3667 = vunpack.c.h.b16 %v2352
    %v3668 = vunpack.c.l.b16 %v2353
    %v3669 = vunpack.c.h.b16 %v2353
    %v3670 = vunpack.c.l.b16 %v2354
    %v3671 = vunpack.c.h.b16 %v2354
    %v3672 = vunpack.c.l.b16 %v2355
    %v3673 = vunpack.c.h.b16 %v2355
    %v3674 = vunpack.c.l.b16 %v2356
    %v3675 = vunpack.c.h.b16 %v2356
    %v3676 = vunpack.c.l.b16 %v2357
    %v3677 = vunpack.c.h.b16 %v2357
    %v3678 = vunpack.c.l.b16 %v2358
    %v3679 = vunpack.c.h.b16 %v2358
    %v3680 = vunpack.c.l.b16 %v2359
    %v3681 = vunpack.c.h.b16 %v2359
    %v3682 = vunpack.c.l.b16 %v2360
    %v3683 = vunpack.c.h.b16 %v2360
    %v3684 = vunpack.c.l.b16 %v2361
    %v3685 = vunpack.c.h.b16 %v2361
    %v3686 = vunpack.c.l.b16 %v2362
    %v3687 = vunpack.c.h.b16 %v2362
    %v3688 = vunpack.c.l.b16 %v2363
    %v3689 = vunpack.c.h.b16 %v2363
    %v3690 = vunpack.c.l.b16 %v2364
    %v3691 = vunpack.c.h.b16 %v2364
    %v3692 = vunpack.c.l.b16 %v2365
    %v3693 = vunpack.c.h.b16 %v2365
    %v3694 = vunpack.c.l.b16 %v2366
    %v3695 = vunpack.c.h.b16 %v2366
    %v3696 = vunpack.c.l.b16 %v2367
    %v3697 = vunpack.c.h.b16 %v2367
    %v3698 = vunpack.c.l.b16 %v2368
    %v3699 = vunpack.c.h.b16 %v2368
    %v3700 = vunpack.c.l.b16 %v2369
    %v3701 = vunpack.c.h.b16 %v2369
    %v3702 = vunpack.c.l.b16 %v2370
    %v3703 = vunpack.c.h.b16 %v2370
    %v3704 = vunpack.c.l.b16 %v2371
    %v3705 = vunpack.c.h.b16 %v2371
    %v3706 = vunpack.c.l.b16 %v2372
    %v3707 = vunpack.c.h.b16 %v2372
    %v3708 = vunpack.c.l.b16 %v2373
    %v3709 = vunpack.c.h.b16 %v2373
    %v3710 = vunpack.c.l.b16 %v2374
    %v3711 = vunpack.c.h.b16 %v2374
    %v3712 = vunpack.c.l.b16 %v2375
    %v3713 = vunpack.c.h.b16 %v2375
    %v3714 = vunpack.c.l.b16 %v2376
    %v3715 = vunpack.c.h.b16 %v2376
    %v3716 = vunpack.c.l.b16 %v2377
    %v3717 = vunpack.c.h.b16 %v2377
    %v3718 = vunpack.c.l.b16 %v2378
    %v3719 = vunpack.c.h.b16 %v2378
    %v3720 = vunpack.c.l.b16 %v2379
    %v3721 = vunpack.c.h.b16 %v2379
    %v3722 = vunpack.c.l.b16 %v2380
    %v3723 = vunpack.c.h.b16 %v2380
    %v3724 = vunpack.c.l.b16 %v2381
    %v3725 = vunpack.c.h.b16 %v2381
    %v3726 = vunpack.c.l.b16 %v2382
    %v3727 = vunpack.c.h.b16 %v2382
    %v3728 = vunpack.c.l.b16 %v2383
    %v3729 = vunpack.c.h.b16 %v2383
    %v3730 = vunpack.c.l.b16 %v2384
    %v3731 = vunpack.c.h.b16 %v2384
    %v3732 = vunpack.c.l.b16 %v2385
    %v3733 = vunpack.c.h.b16 %v2385
    %v3734 = vunpack.c.l.b16 %v2386
    %v3735 = vunpack.c.h.b16 %v2386
    %v3736 = vunpack.c.l.b16 %v2387
    %v3737 = vunpack.c.h.b16 %v2387
    %v3738 = vunpack.c.l.b16 %v2388
    %v3739 = vunpack.c.h.b16 %v2388
    %v3740 = vunpack.c.l.b16 %v2389
    %v3741 = vunpack.c.h.b16 %v2389
    %v3742 = vunpack.c.l.b16 %v2390
    %v3743 = vunpack.c.h.b16 %v2390
    %v3744 = vunpack.c.l.b16 %v2391
    %v3745 = vunpack.c.h.b16 %v2391
    %v3746 = vunpack.c.l.b16 %v2392
    %v3747 = vunpack.c.h.b16 %v2392
    %v3748 = vunpack.c.l.b16 %v2393
    %v3749 = vunpack.c.h.b16 %v2393
    %v3750 = vunpack.c.l.b16 %v2394
    %v3751 = vunpack.c.h.b16 %v2394
    %v3752 = vunpack.c.l.b16 %v2395
    %v3753 = vunpack.c.h.b16 %v2395
    %v3754 = vunpack.c.l.b16 %v2396
    %v3755 = vunpack.c.h.b16 %v2396
    %v3756 = vunpack.c.l.b16 %v2397
    %v3757 = vunpack.c.h.b16 %v2397
    %v3758 = vunpack.c.l.b16 %v2398
    %v3759 = vunpack.c.h.b16 %v2398
    %v3760 = vunpack.c.l.b16 %v2399
    %v3761 = vunpack.c.h.b16 %v2399
    %v3762 = vunpack.c.l.b16 %v2400
    %v3763 = vunpack.c.h.b16 %v2400
    %v3764 = vunpack.c.l.b16 %v2401
    %v3765 = vunpack.c.h.b16 %v2401
    %v3766 = vunpack.c.l.b16 %v2402
    %v3767 = vunpack.c.h.b16 %v2402
    %v3768 = vunpack.c.l.b16 %v2403
    %v3769 = vunpack.c.h.b16 %v2403
    %v3770 = vunpack.c.l.b16 %v2404
    %v3771 = vunpack.c.h.b16 %v2404
    %v3772 = vunpack.c.l.b16 %v2405
    %v3773 = vunpack.c.h.b16 %v2405
    %v3774 = vunpack.c.l.b16 %v2406
    %v3775 = vunpack.c.h.b16 %v2406
    %v3776 = vunpack.c.l.b16 %v2407
    %v3777 = vunpack.c.h.b16 %v2407
    %v3778 = vunpack.c.l.b16 %v2408
    %v3779 = vunpack.c.h.b16 %v2408
    %v3780 = vunpack.c.l.b16 %v2409
    %v3781 = vunpack.c.h.b16 %v2409
    %v3782 = vunpack.c.l.b16 %v2410
    %v3783 = vunpack.c.h.b16 %v2410
    %v3784 = vunpack.c.l.b16 %v2411
    %v3785 = vunpack.c.h.b16 %v2411
    %v3786 = vunpack.c.l.b16 %v2412
    %v3787 = vunpack.c.h.b16 %v2412
    %v3788 = vunpack.c.l.b16 %v2413
    %v3789 = vunpack.c.h.b16 %v2413
    %v3790 = vunpack.c.l.b16 %v2414
    %v3791 = vunpack.c.h.b16 %v2414
    %v3792 = vunpack.c.l.b16 %v2415
    %v3793 = vunpack.c.h.b16 %v2415
    %v3794 = vunpack.c.l.b16 %v2416
    %v3795 = vunpack.c.h.b16 %v2416
    %v3796 = vunpack.c.l.b16 %v2417
    %v3797 = vunpack.c.h.b16 %v2417
    %v3798 = vunpack.c.l.b16 %v2418
    %v3799 = vunpack.c.h.b16 %v2418
    %v3800 = vunpack.c.l.b16 %v2419
    %v3801 = vunpack.c.h.b16 %v2419
    %v3802 = vunpack.c.l.b16 %v2420
    %v3803 = vunpack.c.h.b16 %v2420
    %v3804 = vunpack.c.l.b16 %v2421
    %v3805 = vunpack.c.h.b16 %v2421
    %v3806 = vunpack.c.l.b16 %v2422
    %v3807 = vunpack.c.h.b16 %v2422
    %v3808 = vunpack.c.l.b16 %v2423
    %v3809 = vunpack.c.h.b16 %v2423
    %v3810 = vunpack.c.l.b16 %v2424
    %v3811 = vunpack.c.h.b16 %v2424
    %v3812 = vunpack.c.l.b16 %v2425
    %v3813 = vunpack.c.h.b16 %v2425
    %v3814 = vunpack.c.l.b16 %v2426
    %v3815 = vunpack.c.h.b16 %v2426
    %v3816 = vunpack.c.l.b16 %v2427
    %v3817 = vunpack.c.h.b16 %v2427
    %v3818 = vunpack.c.l.b16 %v2428
    %v3819 = vunpack.c.h.b16 %v2428
    %v3820 = vunpack.c.l.b16 %v2429
    %v3821 = vunpack.c.h.b16 %v2429
    %v3822 = vunpack.c.l.b16 %v2430
    %v3823 = vunpack.c.h.b16 %v2430
    %v3824 = vunpack.c.l.b16 %v2431
    %v3825 = vunpack.c.h.b16 %v2431
    %v3826 = vunpack.c.l.b16 %v2432
    %v3827 = vunpack.c.h.b16 %v2432
    %v3828 = vunpack.c.l.b16 %v2433
    %v3829 = vunpack.c.h.b16 %v2433
    %v3830 = vunpack.c.l.b16 %v2434
    %v3831 = vunpack.c.h.b16 %v2434
    %v3832 = vunpack.c.l.b16 %v2435
    %v3833 = vunpack.c.h.b16 %v2435
    %v3834 = vunpack.c.l.b16 %v2436
    %v3835 = vunpack.c.h.b16 %v2436
    %v3836 = vunpack.c.l.b16 %v2437
    %v3837 = vunpack.c.h.b16 %v2437
    %v3838 = vunpack.c.l.b16 %v2438
    %v3839 = vunpack.c.h.b16 %v2438
    %v3840 = vunpack.c.l.b16 %v2439
    %v3841 = vunpack.c.h.b16 %v2439
    %v3842 = vunpack.c.l.b16 %v2440
    %v3843 = vunpack.c.h.b16 %v2440
    %v3844 = vunpack.c.l.b16 %v2441
    %v3845 = vunpack.c.h.b16 %v2441
    %v3846 = vunpack.c.l.b16 %v2442
    %v3847 = vunpack.c.h.b16 %v2442
    %v3848 = vunpack.c.l.b16 %v2443
    %v3849 = vunpack.c.h.b16 %v2443
    %v3850 = vunpack.c.l.b16 %v2444
    %v3851 = vunpack.c.h.b16 %v2444
    %v3852 = vunpack.c.l.b16 %v2445
    %v3853 = vunpack.c.h.b16 %v2445
    %v3854 = vunpack.c.l.b16 %v2446
    %v3855 = vunpack.c.h.b16 %v2446
    %v3856 = vunpack.c.l.b16 %v2447
    %v3857 = vunpack.c.h.b16 %v2447
    %v3858 = vunpack.c.l.b16 %v2448
    %v3859 = vunpack.c.h.b16 %v2448
    %v3860 = vunpack.c.l.b16 %v2449
    %v3861 = vunpack.c.h.b16 %v2449
    %v3862 = vunpack.c.l.b16 %v2450
    %v3863 = vunpack.c.h.b16 %v2450
    %v3864 = vunpack.c.l.b16 %v2451
    %v3865 = vunpack.c.h.b16 %v2451
    %v3866 = vunpack.c.l.b16 %v2452
    %v3867 = vunpack.c.h.b16 %v2452
    %v3868 = vunpack.c.l.b16 %v2453
    %v3869 = vunpack.c.h.b16 %v2453
    %v3870 = vunpack.c.l.b16 %v2454
    %v3871 = vunpack.c.h.b16 %v2454
    %v3872 = vunpack.c.l.b16 %v2455
    %v3873 = vunpack.c.h.b16 %v2455
    %v3874 = vunpack.c.l.b16 %v2456
    %v3875 = vunpack.c.h.b16 %v2456
    %v3876 = vunpack.c.l.b16 %v2457
    %v3877 = vunpack.c.h.b16 %v2457
    %v3878 = vunpack.c.l.b16 %v2458
    %v3879 = vunpack.c.h.b16 %v2458
    %v3880 = vunpack.c.l.b16 %v2459
    %v3881 = vunpack.c.h.b16 %v2459
    %v3882 = vunpack.c.l.b16 %v2460
    %v3883 = vunpack.c.h.b16 %v2460
    %v3884 = vunpack.c.l.b16 %v2461
    %v3885 = vunpack.c.h.b16 %v2461
    %v3886 = vunpack.c.l.b16 %v2462
    %v3887 = vunpack.c.h.b16 %v2462
    %v3888 = vunpack.c.l.b16 %v2463
    %v3889 = vunpack.c.h.b16 %v2463
    %v3890 = vunpack.c.l.b16 %v2464
    %v3891 = vunpack.c.h.b16 %v2464
    %v3892 = vunpack.c.l.b16 %v2465
    %v3893 = vunpack.c.h.b16 %v2465
    %v3894 = vunpack.c.l.b16 %v2466
    %v3895 = vunpack.c.h.b16 %v2466
    %v3896 = vunpack.c.l.b16 %v2467
    %v3897 = vunpack.c.h.b16 %v2467
    %v3898 = vunpack.c.l.b16 %v2468
    %v3899 = vunpack.c.h.b16 %v2468
    %v3900 = vunpack.c.l.b16 %v2469
    %v3901 = vunpack.c.h.b16 %v2469
    %v3902 = vunpack.c.l.b16 %v2470
    %v3903 = vunpack.c.h.b16 %v2470
    %v3904 = vunpack.c.l.b16 %v2471
    %v3905 = vunpack.c.h.b16 %v2471
    %v3906 = vunpack.c.l.b16 %v2472
    %v3907 = vunpack.c.h.b16 %v2472
    %v3908 = vunpack.c.l.b16 %v2473
    %v3909 = vunpack.c.h.b16 %v2473
    %v3910 = vunpack.c.l.b16 %v2474
    %v3911 = vunpack.c.h.b16 %v2474
    %v3912 = vunpack.c.l.b16 %v2475
    %v3913 = vunpack.c.h.b16 %v2475
    %v3914 = vunpack.c.l.b16 %v2476
    %v3915 = vunpack.c.h.b16 %v2476
    %v3916 = vunpack.c.l.b16 %v2477
    %v3917 = vunpack.c.h.b16 %v2477
    %v3918 = vunpack.c.l.b16 %v2478
    %v3919 = vunpack.c.h.b16 %v2478
    %v3920 = vunpack.c.l.b16 %v2479
    %v3921 = vunpack.c.h.b16 %v2479
    %v3922 = vunpack.c.l.b16 %v2480
    %v3923 = vunpack.c.h.b16 %v2480
    %v3924 = vunpack.c.l.b16 %v2481
    %v3925 = vunpack.c.h.b16 %v2481
    %v3926 = vunpack.c.l.b16 %v2482
    %v3927 = vunpack.c.h.b16 %v2482
    %v3928 = vunpack.c.l.b16 %v2483
    %v3929 = vunpack.c.h.b16 %v2483
    %v3930 = vunpack.c.l.b16 %v2484
    %v3931 = vunpack.c.h.b16 %v2484
    %v3932 = vunpack.c.l.b16 %v2485
    %v3933 = vunpack.c.h.b16 %v2485
    %v3934 = vunpack.c.l.b16 %v2486
    %v3935 = vunpack.c.h.b16 %v2486
    %v3936 = vunpack.c.l.b16 %v2487
    %v3937 = vunpack.c.h.b16 %v2487
    %v3938 = vunpack.c.l.b16 %v2488
    %v3939 = vunpack.c.h.b16 %v2488
    %v3940 = vunpack.c.l.b16 %v2489
    %v3941 = vunpack.c.h.b16 %v2489
    %v3942 = vunpack.c.l.b16 %v2490
    %v3943 = vunpack.c.h.b16 %v2490
    %v3944 = vunpack.c.l.b16 %v2491
    %v3945 = vunpack.c.h.b16 %v2491
    %v3946 = vunpack.c.l.b16 %v2492
    %v3947 = vunpack.c.h.b16 %v2492
    %v3948 = vunpack.c.l.b16 %v2493
    %v3949 = vunpack.c.h.b16 %v2493
    %v3950 = vunpack.c.l.b16 %v2494
    %v3951 = vunpack.c.h.b16 %v2494
    %v3952 = vunpack.c.l.b16 %v2495
    %v3953 = vunpack.c.h.b16 %v2495
    %v3954 = vunpack.c.l.b16 %v2496
    %v3955 = vunpack.c.h.b16 %v2496
    %v3956 = vunpack.c.l.b16 %v2497
    %v3957 = vunpack.c.h.b16 %v2497
    %v3958 = vunpack.c.l.b16 %v2498
    %v3959 = vunpack.c.h.b16 %v2498
    %v3960 = vunpack.c.l.b16 %v2499
    %v3961 = vunpack.c.h.b16 %v2499
    %v3962 = vunpack.c.l.b16 %v2500
    %v3963 = vunpack.c.h.b16 %v2500
    %v3964 = vunpack.c.l.b16 %v2501
    %v3965 = vunpack.c.h.b16 %v2501
    %v3966 = vunpack.c.l.b16 %v2502
    %v3967 = vunpack.c.h.b16 %v2502
    %v3968 = vunpack.c.l.b16 %v2503
    %v3969 = vunpack.c.h.b16 %v2503
    %v3970 = vunpack.c.l.b16 %v2504
    %v3971 = vunpack.c.h.b16 %v2504
    %v3972 = vunpack.c.l.b16 %v2505
    %v3973 = vunpack.c.h.b16 %v2505
    %v3974 = vunpack.c.l.b16 %v2506
    %v3975 = vunpack.c.h.b16 %v2506
    %v3976 = vunpack.c.l.b16 %v2507
    %v3977 = vunpack.c.h.b16 %v2507
    %v3978 = vunpack.c.l.b16 %v2508
    %v3979 = vunpack.c.h.b16 %v2508
    %v3980 = vunpack.c.l.b16 %v2509
    %v3981 = vunpack.c.h.b16 %v2509
    %v3982 = vunpack.c.l.b16 %v2510
    %v3983 = vunpack.c.h.b16 %v2510
    %v3984 = vunpack.c.l.b16 %v2511
    %v3985 = vunpack.c.h.b16 %v2511
    %v3986 = vunpack.c.l.b16 %v2512
    %v3987 = vunpack.c.h.b16 %v2512
    %v3988 = vunpack.c.l.b16 %v2513
    %v3989 = vunpack.c.h.b16 %v2513
    %v3990 = vunpack.c.l.b16 %v2514
    %v3991 = vunpack.c.h.b16 %v2514
    %v3992 = vunpack.c.l.b16 %v2515
    %v3993 = vunpack.c.h.b16 %v2515
    %v3994 = vunpack.c.l.b16 %v2516
    %v3995 = vunpack.c.h.b16 %v2516
    %v3996 = vunpack.c.l.b16 %v2517
    %v3997 = vunpack.c.h.b16 %v2517
    %v3998 = vunpack.c.l.b16 %v2518
    %v3999 = vunpack.c.h.b16 %v2518
    %v4000 = vunpack.c.l.b16 %v2519
    %v4001 = vunpack.c.h.b16 %v2519
    %v4002 = vunpack.c.l.b16 %v2520
    %v4003 = vunpack.c.h.b16 %v2520
    %v4004 = vunpack.c.l.b16 %v2521
    %v4005 = vunpack.c.h.b16 %v2521
    %v4006 = vunpack.c.l.b16 %v2522
    %v4007 = vunpack.c.h.b16 %v2522
    %v4008 = vunpack.c.l.b16 %v2523
    %v4009 = vunpack.c.h.b16 %v2523
    %v4010 = vunpack.c.l.b16 %v2524
    %v4011 = vunpack.c.h.b16 %v2524
    %v4012 = vunpack.c.l.b16 %v2525
    %v4013 = vunpack.c.h.b16 %v2525
    %v4014 = vunpack.c.l.b16 %v2526
    %v4015 = vunpack.c.h.b16 %v2526
    %v4016 = vunpack.c.l.b16 %v2527
    %v4017 = vunpack.c.h.b16 %v2527
    %v4018 = vunpack.c.l.b16 %v2528
    %v4019 = vunpack.c.h.b16 %v2528
    %v4020 = vunpack.c.l.b16 %v2529
    %v4021 = vunpack.c.h.b16 %v2529
    %v4022 = vunpack.c.l.b16 %v2530
    %v4023 = vunpack.c.h.b16 %v2530
    %v4024 = vunpack.c.l.b16 %v2531
    %v4025 = vunpack.c.h.b16 %v2531
    %v4026 = vunpack.c.l.b16 %v2532
    %v4027 = vunpack.c.h.b16 %v2532
    %v4028 = vunpack.c.l.b16 %v2533
    %v4029 = vunpack.c.h.b16 %v2533
    %v4030 = vunpack.c.l.b16 %v2534
    %v4031 = vunpack.c.h.b16 %v2534
    %v4032 = vunpack.c.l.b16 %v2535
    %v4033 = vunpack.c.h.b16 %v2535
    %v4034 = vunpack.c.l.b16 %v2536
    %v4035 = vunpack.c.h.b16 %v2536
    %v4036 = vunpack.c.l.b16 %v2537
    %v4037 = vunpack.c.h.b16 %v2537
    %v4038 = vunpack.c.l.b16 %v2538
    %v4039 = vunpack.c.h.b16 %v2538
    %v4040 = vunpack.c.l.b16 %v2539
    %v4041 = vunpack.c.h.b16 %v2539
    %v4042 = vunpack.c.l.b16 %v2540
    %v4043 = vunpack.c.h.b16 %v2540
    %v4044 = vunpack.c.l.b16 %v2541
    %v4045 = vunpack.c.h.b16 %v2541
    %v4046 = vunpack.c.l.b16 %v2542
    %v4047 = vunpack.c.h.b16 %v2542
    %v4048 = vunpack.c.l.b16 %v2543
    %v4049 = vunpack.c.h.b16 %v2543
    %v4050 = vunpack.c.l.b16 %v2544
    %v4051 = vunpack.c.h.b16 %v2544
    %v4052 = vunpack.c.l.b16 %v2545
    %v4053 = vunpack.c.h.b16 %v2545
    %v4054 = vunpack.c.l.b16 %v2546
    %v4055 = vunpack.c.h.b16 %v2546
    %v4056 = vunpack.c.l.b16 %v2547
    %v4057 = vunpack.c.h.b16 %v2547
    %v4058 = vunpack.c.l.b16 %v2548
    %v4059 = vunpack.c.h.b16 %v2548
    %v4060 = vunpack.c.l.b16 %v2549
    %v4061 = vunpack.c.h.b16 %v2549
    %v4062 = vunpack.c.l.b16 %v2550
    %v4063 = vunpack.c.h.b16 %v2550
    %v4064 = vunpack.c.l.b16 %v2551
    %v4065 = vunpack.c.h.b16 %v2551
    %v4066 = vunpack.c.l.b16 %v2552
    %v4067 = vunpack.c.h.b16 %v2552
    %v4068 = vunpack.c.l.b16 %v2553
    %v4069 = vunpack.c.h.b16 %v2553
    %v4070 = vunpack.c.l.b16 %v2554
    %v4071 = vunpack.c.h.b16 %v2554
    %v4072 = vunpack.c.l.b16 %v2555
    %v4073 = vunpack.c.h.b16 %v2555
    %v4074 = vunpack.c.l.b16 %v2556
    %v4075 = vunpack.c.h.b16 %v2556
    %v4076 = vunpack.c.l.b16 %v2557
    %v4077 = vunpack.c.h.b16 %v2557
    %v4078 = vunpack.c.l.b16 %v2558
    %v4079 = vunpack.c.h.b16 %v2558
    %v4080 = vunpack.c.l.b16 %v2559
    %v4081 = vunpack.c.h.b16 %v2559
    %v4082 = vunpack.c.l.b16 %v2560
    %v4083 = vunpack.c.h.b16 %v2560
    %v4084 = vunpack.c.l.b16 %v2561
    %v4085 = vunpack.c.h.b16 %v2561
    %v4086 = vunpack.c.l.b16 %v2562
    %v4087 = vunpack.c.h.b16 %v2562
    %v4088 = vunpack.c.l.b16 %v2563
    %v4089 = vunpack.c.h.b16 %v2563
    %v4090 = vunpack.c.l.b16 %v2564
    %v4091 = vunpack.c.h.b16 %v2564
    %v4092 = vunpack.c.l.b16 %v2565
    %v4093 = vunpack.c.h.b16 %v2565
    %v4094 = vunpack.c.l.b16 %v2566
    %v4095 = vunpack.c.h.b16 %v2566
    %v4096 = vunpack.c.l.b16 %v2567
    %v4097 = vunpack.c.h.b16 %v2567
    %v4098 = vunpack.c.l.b16 %v2568
    %v4099 = vunpack.c.h.b16 %v2568
    %v4100 = vunpack.c.l.b16 %v2569
    %v4101 = vunpack.c.h.b16 %v2569
    %v4102 = vunpack.c.l.b16 %v2570
    %v4103 = vunpack.c.h.b16 %v2570
    %v4104 = vunpack.c.l.b16 %v2571
    %v4105 = vunpack.c.h.b16 %v2571
    %v4106 = vunpack.c.l.b16 %v2572
    %v4107 = vunpack.c.h.b16 %v2572
    %v4108 = vunpack.c.l.b16 %v2573
    %v4109 = vunpack.c.h.b16 %v2573
    %v4110 = vunpack.c.l.b16 %v2574
    %v4111 = vunpack.c.h.b16 %v2574
    %v4112 = vunpack.c.l.b16 %v2575
    %v4113 = vunpack.c.h.b16 %v2575
    %v4114 = vunpack.c.l.b16 %v2576
    %v4115 = vunpack.c.h.b16 %v2576
    %v4116 = vunpack.c.l.b16 %v2577
    %v4117 = vunpack.c.h.b16 %v2577
    %v4118 = vunpack.c.l.b16 %v2578
    %v4119 = vunpack.c.h.b16 %v2578
    %v4120 = vunpack.c.l.b16 %v2579
    %v4121 = vunpack.c.h.b16 %v2579
    %v4122 = vunpack.c.l.b16 %v2580
    %v4123 = vunpack.c.h.b16 %v2580
    %v4124 = vunpack.c.l.b16 %v2581
    %v4125 = vunpack.c.h.b16 %v2581
    %v4126 = vunpack.c.l.b16 %v2582
    %v4127 = vunpack.c.h.b16 %v2582
    %v4128 = vunpack.c.l.b16 %v2583
    %v4129 = vunpack.c.h.b16 %v2583
    %v4130 = vunpack.c.l.b16 %v2584
    %v4131 = vunpack.c.h.b16 %v2584
    %v4132 = vunpack.c.l.b16 %v2585
    %v4133 = vunpack.c.h.b16 %v2585
    %v4134 = vunpack.c.l.b16 %v2586
    %v4135 = vunpack.c.h.b16 %v2586
    %v4136 = vunpack.c.l.b16 %v2587
    %v4137 = vunpack.c.h.b16 %v2587
    %v4138 = vunpack.c.l.b16 %v2588
    %v4139 = vunpack.c.h.b16 %v2588
    %v4140 = vunpack.c.l.b16 %v2589
    %v4141 = vunpack.c.h.b16 %v2589
    %v4142 = vunpack.c.l.b16 %v2590
    %v4143 = vunpack.c.h.b16 %v2590
    %v4144 = vunpack.c.l.b16 %v2591
    %v4145 = vunpack.c.h.b16 %v2591
    %v4146 = vunpack.c.l.b16 %v2592
    %v4147 = vunpack.c.h.b16 %v2592
    %v4148 = vunpack.c.l.b16 %v2593
    %v4149 = vunpack.c.h.b16 %v2593
    %v4150 = vunpack.c.l.b16 %v2594
    %v4151 = vunpack.c.h.b16 %v2594
    %v4152 = vunpack.c.l.b16 %v2595
    %v4153 = vunpack.c.h.b16 %v2595
    %v4154 = vunpack.c.l.b16 %v2596
    %v4155 = vunpack.c.h.b16 %v2596
    %v4156 = vunpack.c.l.b16 %v2597
    %v4157 = vunpack.c.h.b16 %v2597
    %v4158 = vunpack.c.l.b16 %v2598
    %v4159 = vunpack.c.h.b16 %v2598
    %v4160 = vunpack.c.l.b16 %v2599
    %v4161 = vunpack.c.h.b16 %v2599
    %v4162 = vunpack.c.l.b16 %v2600
    %v4163 = vunpack.c.h.b16 %v2600
    %v4164 = vunpack.c.l.b16 %v2601
    %v4165 = vunpack.c.h.b16 %v2601
    %v4166 = vunpack.c.l.b16 %v2602
    %v4167 = vunpack.c.h.b16 %v2602
    %v4168 = vunpack.c.l.b16 %v2603
    %v4169 = vunpack.c.h.b16 %v2603
    %v4170 = vunpack.c.l.b16 %v2604
    %v4171 = vunpack.c.h.b16 %v2604
    %v4172 = vunpack.c.l.b16 %v2605
    %v4173 = vunpack.c.h.b16 %v2605
    %v4174 = vunpack.c.l.b16 %v2606
    %v4175 = vunpack.c.h.b16 %v2606
    %v4176 = vunpack.c.l.b16 %v2607
    %v4177 = vunpack.c.h.b16 %v2607
    %v4178 = vunpack.c.l.b16 %v2608
    %v4179 = vunpack.c.h.b16 %v2608
    %v4180 = vunpack.c.l.b16 %v2609
    %v4181 = vunpack.c.h.b16 %v2609
    %v4182 = vunpack.c.l.b16 %v2610
    %v4183 = vunpack.c.h.b16 %v2610
    %v4184 = vunpack.c.l.b16 %v2611
    %v4185 = vunpack.c.h.b16 %v2611
    %v4186 = vunpack.c.l.b16 %v2612
    %v4187 = vunpack.c.h.b16 %v2612
    %v4188 = vunpack.c.l.b16 %v2613
    %v4189 = vunpack.c.h.b16 %v2613
    %v4190 = vunpack.c.l.b16 %v2614
    %v4191 = vunpack.c.h.b16 %v2614
    %v4192 = vunpack.c.l.b16 %v2615
    %v4193 = vunpack.c.h.b16 %v2615
    %v4194 = vpack.c.b16 %v3178, %v3170
    %v4195 = vpack.c.b16 %v3179, %v3171
    %v4196 = vpack.c.b16 %v3180, %v3172
    %v4197 = vpack.c.b16 %v3181, %v3173
    %v4198 = vpack.c.b16 %v3182, %v3174
    %v4199 = vpack.c.b16 %v3183, %v3175
    %v4200 = vpack.c.b16 %v3184, %v3176
    %v4201 = vpack.c.b16 %v3185, %v3177
    %v4202 = vpack.c.b16 %v3194, %v3186
    %v4203 = vpack.c.b16 %v3195, %v3187
    %v4204 = vpack.c.b16 %v3196, %v3188
    %v4205 = vpack.c.b16 %v3197, %v3189
    %v4206 = vpack.c.b16 %v3198, %v3190
    %v4207 = vpack.c.b16 %v3199, %v3191
    %v4208 = vpack.c.b16 %v3200, %v3192
    %v4209 = vpack.c.b16 %v3201, %v3193
    %v4210 = vpack.c.b16 %v3210, %v3202
    %v4211 = vpack.c.b16 %v3211, %v3203
    %v4212 = vpack.c.b16 %v3212, %v3204
    %v4213 = vpack.c.b16 %v3213, %v3205
    %v4214 = vpack.c.b16 %v3214, %v3206
    %v4215 = vpack.c.b16 %v3215, %v3207
    %v4216 = vpack.c.b16 %v3216, %v3208
    %v4217 = vpack.c.b16 %v3217, %v3209
    %v4218 = vpack.c.b16 %v3226, %v3218
    %v4219 = vpack.c.b16 %v3227, %v3219
    %v4220 = vpack.c.b16 %v3228, %v3220
    %v4221 = vpack.c.b16 %v3229, %v3221
    %v4222 = vpack.c.b16 %v3230, %v3222
    %v4223 = vpack.c.b16 %v3231, %v3223
    %v4224 = vpack.c.b16 %v3232, %v3224
    %v4225 = vpack.c.b16 %v3233, %v3225
    %v4226 = vpack.c.b16 %v3242, %v3234
    %v4227 = vpack.c.b16 %v3243, %v3235
    %v4228 = vpack.c.b16 %v3244, %v3236
    %v4229 = vpack.c.b16 %v3245, %v3237
    %v4230 = vpack.c.b16 %v3246, %v3238
    %v4231 = vpack.c.b16 %v3247, %v3239
    %v4232 = vpack.c.b16 %v3248, %v3240
    %v4233 = vpack.c.b16 %v3249, %v3241
    %v4234 = vpack.c.b16 %v3258, %v3250
    %v4235 = vpack.c.b16 %v3259, %v3251
    %v4236 = vpack.c.b16 %v3260, %v3252
    %v4237 = vpack.c.b16 %v3261, %v3253
    %v4238 = vpack.c.b16 %v3262, %v3254
    %v4239 = vpack.c.b16 %v3263, %v3255
    %v4240 = vpack.c.b16 %v3264, %v3256
    %v4241 = vpack.c.b16 %v3265, %v3257
    %v4242 = vpack.c.b16 %v3274, %v3266
    %v4243 = vpack.c.b16 %v3275, %v3267
    %v4244 = vpack.c.b16 %v3276, %v3268
    %v4245 = vpack.c.b16 %v3277, %v3269
    %v4246 = vpack.c.b16 %v3278, %v3270
    %v4247 = vpack.c.b16 %v3279, %v3271
    %v4248 = vpack.c.b16 %v3280, %v3272
    %v4249 = vpack.c.b16 %v3281, %v3273
    %v4250 = vpack.c.b16 %v3290, %v3282
    %v4251 = vpack.c.b16 %v3291, %v3283
    %v4252 = vpack.c.b16 %v3292, %v3284
    %v4253 = vpack.c.b16 %v3293, %v3285
    %v4254 = vpack.c.b16 %v3294, %v3286
    %v4255 = vpack.c.b16 %v3295, %v3287
    %v4256 = vpack.c.b16 %v3296, %v3288
    %v4257 = vpack.c.b16 %v3297, %v3289
    %v4258 = vpack.c.b16 %v3306, %v3298
    %v4259 = vpack.c.b16 %v3307, %v3299
    %v4260 = vpack.c.b16 %v3308, %v3300
    %v4261 = vpack.c.b16 %v3309, %v3301
    %v4262 = vpack.c.b16 %v3310, %v3302
    %v4263 = vpack.c.b16 %v3311, %v3303
    %v4264 = vpack.c.b16 %v3312, %v3304
    %v4265 = vpack.c.b16 %v3313, %v3305
    %v4266 = vpack.c.b16 %v3322, %v3314
    %v4267 = vpack.c.b16 %v3323, %v3315
    %v4268 = vpack.c.b16 %v3324, %v3316
    %v4269 = vpack.c.b16 %v3325, %v3317
    %v4270 = vpack.c.b16 %v3326, %v3318
    %v4271 = vpack.c.b16 %v3327, %v3319
    %v4272 = vpack.c.b16 %v3328, %v3320
    %v4273 = vpack.c.b16 %v3329, %v3321
    %v4274 = vpack.c.b16 %v3338, %v3330
    %v4275 = vpack.c.b16 %v3339, %v3331
    %v4276 = vpack.c.b16 %v3340, %v3332
    %v4277 = vpack.c.b16 %v3341, %v3333
    %v4278 = vpack.c.b16 %v3342, %v3334
    %v4279 = vpack.c.b16 %v3343, %v3335
    %v4280 = vpack.c.b16 %v3344, %v3336
    %v4281 = vpack.c.b16 %v3345, %v3337
    %v4282 = vpack.c.b16 %v3354, %v3346
    %v4283 = vpack.c.b16 %v3355, %v3347
    %v4284 = vpack.c.b16 %v3356, %v3348
    %v4285 = vpack.c.b16 %v3357, %v3349
    %v4286 = vpack.c.b16 %v3358, %v3350
    %v4287 = vpack.c.b16 %v3359, %v3351
    %v4288 = vpack.c.b16 %v3360, %v3352
    %v4289 = vpack.c.b16 %v3361, %v3353
    %v4290 = vpack.c.b16 %v3370, %v3362
    %v4291 = vpack.c.b16 %v3371, %v3363
    %v4292 = vpack.c.b16 %v3372, %v3364
    %v4293 = vpack.c.b16 %v3373, %v3365
    %v4294 = vpack.c.b16 %v3374, %v3366
    %v4295 = vpack.c.b16 %v3375, %v3367
    %v4296 = vpack.c.b16 %v3376, %v3368
    %v4297 = vpack.c.b16 %v3377, %v3369
    %v4298 = vpack.c.b16 %v3386, %v3378
    %v4299 = vpack.c.b16 %v3387, %v3379
    %v4300 = vpack.c.b16 %v3388, %v3380
    %v4301 = vpack.c.b16 %v3389, %v3381
    %v4302 = vpack.c.b16 %v3390, %v3382
    %v4303 = vpack.c.b16 %v3391, %v3383
    %v4304 = vpack.c.b16 %v3392, %v3384
    %v4305 = vpack.c.b16 %v3393, %v3385
    %v4306 = vpack.c.b16 %v3402, %v3394
    %v4307 = vpack.c.b16 %v3403, %v3395
    %v4308 = vpack.c.b16 %v3404, %v3396
    %v4309 = vpack.c.b16 %v3405, %v3397
    %v4310 = vpack.c.b16 %v3406, %v3398
    %v4311 = vpack.c.b16 %v3407, %v3399
    %v4312 = vpack.c.b16 %v3408, %v3400
    %v4313 = vpack.c.b16 %v3409, %v3401
    %v4314 = vpack.c.b16 %v3418, %v3410
    %v4315 = vpack.c.b16 %v3419, %v3411
    %v4316 = vpack.c.b16 %v3420, %v3412
    %v4317 = vpack.c.b16 %v3421, %v3413
    %v4318 = vpack.c.b16 %v3422, %v3414
    %v4319 = vpack.c.b16 %v3423, %v3415
    %v4320 = vpack.c.b16 %v3424, %v3416
    %v4321 = vpack.c.b16 %v3425, %v3417
    %v4322 = vpack.c.b16 %v3434, %v3426
    %v4323 = vpack.c.b16 %v3435, %v3427
    %v4324 = vpack.c.b16 %v3436, %v3428
    %v4325 = vpack.c.b16 %v3437, %v3429
    %v4326 = vpack.c.b16 %v3438, %v3430
    %v4327 = vpack.c.b16 %v3439, %v3431
    %v4328 = vpack.c.b16 %v3440, %v3432
    %v4329 = vpack.c.b16 %v3441, %v3433
    %v4330 = vpack.c.b16 %v3450, %v3442
    %v4331 = vpack.c.b16 %v3451, %v3443
    %v4332 = vpack.c.b16 %v3452, %v3444
    %v4333 = vpack.c.b16 %v3453, %v3445
    %v4334 = vpack.c.b16 %v3454, %v3446
    %v4335 = vpack.c.b16 %v3455, %v3447
    %v4336 = vpack.c.b16 %v3456, %v3448
    %v4337 = vpack.c.b16 %v3457, %v3449
    %v4338 = vpack.c.b16 %v3466, %v3458
    %v4339 = vpack.c.b16 %v3467, %v3459
    %v4340 = vpack.c.b16 %v3468, %v3460
    %v4341 = vpack.c.b16 %v3469, %v3461
    %v4342 = vpack.c.b16 %v3470, %v3462
    %v4343 = vpack.c.b16 %v3471, %v3463
    %v4344 = vpack.c.b16 %v3472, %v3464
    %v4345 = vpack.c.b16 %v3473, %v3465
    %v4346 = vpack.c.b16 %v3482, %v3474
    %v4347 = vpack.c.b16 %v3483, %v3475
    %v4348 = vpack.c.b16 %v3484, %v3476
    %v4349 = vpack.c.b16 %v3485, %v3477
    %v4350 = vpack.c.b16 %v3486, %v3478
    %v4351 = vpack.c.b16 %v3487, %v3479
    %v4352 = vpack.c.b16 %v3488, %v3480
    %v4353 = vpack.c.b16 %v3489, %v3481
    %v4354 = vpack.c.b16 %v3498, %v3490
    %v4355 = vpack.c.b16 %v3499, %v3491
    %v4356 = vpack.c.b16 %v3500, %v3492
    %v4357 = vpack.c.b16 %v3501, %v3493
    %v4358 = vpack.c.b16 %v3502, %v3494
    %v4359 = vpack.c.b16 %v3503, %v3495
    %v4360 = vpack.c.b16 %v3504, %v3496
    %v4361 = vpack.c.b16 %v3505, %v3497
    %v4362 = vpack.c.b16 %v3514, %v3506
    %v4363 = vpack.c.b16 %v3515, %v3507
    %v4364 = vpack.c.b16 %v3516, %v3508
    %v4365 = vpack.c.b16 %v3517, %v3509
    %v4366 = vpack.c.b16 %v3518, %v3510
    %v4367 = vpack.c.b16 %v3519, %v3511
    %v4368 = vpack.c.b16 %v3520, %v3512
    %v4369 = vpack.c.b16 %v3521, %v3513
    %v4370 = vpack.c.b16 %v3530, %v3522
    %v4371 = vpack.c.b16 %v3531, %v3523
    %v4372 = vpack.c.b16 %v3532, %v3524
    %v4373 = vpack.c.b16 %v3533, %v3525
    %v4374 = vpack.c.b16 %v3534, %v3526
    %v4375 = vpack.c.b16 %v3535, %v3527
    %v4376 = vpack.c.b16 %v3536, %v3528
    %v4377 = vpack.c.b16 %v3537, %v3529
    %v4378 = vpack.c.b16 %v3546, %v3538
    %v4379 = vpack.c.b16 %v3547, %v3539
    %v4380 = vpack.c.b16 %v3548, %v3540
    %v4381 = vpack.c.b16 %v3549, %v3541
    %v4382 = vpack.c.b16 %v3550, %v3542
    %v4383 = vpack.c.b16 %v3551, %v3543
    %v4384 = vpack.c.b16 %v3552, %v3544
    %v4385 = vpack.c.b16 %v3553, %v3545
    %v4386 = vpack.c.b16 %v3562, %v3554
    %v4387 = vpack.c.b16 %v3563, %v3555
    %v4388 = vpack.c.b16 %v3564, %v3556
    %v4389 = vpack.c.b16 %v3565, %v3557
    %v4390 = vpack.c.b16 %v3566, %v3558
    %v4391 = vpack.c.b16 %v3567, %v3559
    %v4392 = vpack.c.b16 %v3568, %v3560
    %v4393 = vpack.c.b16 %v3569, %v3561
    %v4394 = vpack.c.b16 %v3578, %v3570
    %v4395 = vpack.c.b16 %v3579, %v3571
    %v4396 = vpack.c.b16 %v3580, %v3572
    %v4397 = vpack.c.b16 %v3581, %v3573
    %v4398 = vpack.c.b16 %v3582, %v3574
    %v4399 = vpack.c.b16 %v3583, %v3575
    %v4400 = vpack.c.b16 %v3584, %v3576
    %v4401 = vpack.c.b16 %v3585, %v3577
    %v4402 = vpack.c.b16 %v3594, %v3586
    %v4403 = vpack.c.b16 %v3595, %v3587
    %v4404 = vpack.c.b16 %v3596, %v3588
    %v4405 = vpack.c.b16 %v3597, %v3589
    %v4406 = vpack.c.b16 %v3598, %v3590
    %v4407 = vpack.c.b16 %v3599, %v3591
    %v4408 = vpack.c.b16 %v3600, %v3592
    %v4409 = vpack.c.b16 %v3601, %v3593
    %v4410 = vpack.c.b16 %v3610, %v3602
    %v4411 = vpack.c.b16 %v3611, %v3603
    %v4412 = vpack.c.b16 %v3612, %v3604
    %v4413 = vpack.c.b16 %v3613, %v3605
    %v4414 = vpack.c.b16 %v3614, %v3606
    %v4415 = vpack.c.b16 %v3615, %v3607
    %v4416 = vpack.c.b16 %v3616, %v3608
    %v4417 = vpack.c.b16 %v3617, %v3609
    %v4418 = vpack.c.b16 %v3626, %v3618
    %v4419 = vpack.c.b16 %v3627, %v3619
    %v4420 = vpack.c.b16 %v3628, %v3620
    %v4421 = vpack.c.b16 %v3629, %v3621
    %v4422 = vpack.c.b16 %v3630, %v3622
    %v4423 = vpack.c.b16 %v3631, %v3623
    %v4424 = vpack.c.b16 %v3632, %v3624
    %v4425 = vpack.c.b16 %v3633, %v3625
    %v4426 = vpack.c.b16 %v3642, %v3634
    %v4427 = vpack.c.b16 %v3643, %v3635
    %v4428 = vpack.c.b16 %v3644, %v3636
    %v4429 = vpack.c.b16 %v3645, %v3637
    %v4430 = vpack.c.b16 %v3646, %v3638
    %v4431 = vpack.c.b16 %v3647, %v3639
    %v4432 = vpack.c.b16 %v3648, %v3640
    %v4433 = vpack.c.b16 %v3649, %v3641
    %v4434 = vpack.c.b16 %v3658, %v3650
    %v4435 = vpack.c.b16 %v3659, %v3651
    %v4436 = vpack.c.b16 %v3660, %v3652
    %v4437 = vpack.c.b16 %v3661, %v3653
    %v4438 = vpack.c.b16 %v3662, %v3654
    %v4439 = vpack.c.b16 %v3663, %v3655
    %v4440 = vpack.c.b16 %v3664, %v3656
    %v4441 = vpack.c.b16 %v3665, %v3657
    %v4442 = vpack.c.b16 %v3674, %v3666
    %v4443 = vpack.c.b16 %v3675, %v3667
    %v4444 = vpack.c.b16 %v3676, %v3668
    %v4445 = vpack.c.b16 %v3677, %v3669
    %v4446 = vpack.c.b16 %v3678, %v3670
    %v4447 = vpack.c.b16 %v3679, %v3671
    %v4448 = vpack.c.b16 %v3680, %v3672
    %v4449 = vpack.c.b16 %v3681, %v3673
    %v4450 = vpack.c.b16 %v3690, %v3682
    %v4451 = vpack.c.b16 %v3691, %v3683
    %v4452 = vpack.c.b16 %v3692, %v3684
    %v4453 = vpack.c.b16 %v3693, %v3685
    %v4454 = vpack.c.b16 %v3694, %v3686
    %v4455 = vpack.c.b16 %v3695, %v3687
    %v4456 = vpack.c.b16 %v3696, %v3688
    %v4457 = vpack.c.b16 %v3697, %v3689
    %v4458 = vpack.c.b16 %v3706, %v3698
    %v4459 = vpack.c.b16 %v3707, %v3699
    %v4460 = vpack.c.b16 %v3708, %v3700
    %v4461 = vpack.c.b16 %v3709, %v3701
    %v4462 = vpack.c.b16 %v3710, %v3702
    %v4463 = vpack.c.b16 %v3711, %v3703
    %v4464 = vpack.c.b16 %v3712, %v3704
    %v4465 = vpack.c.b16 %v3713, %v3705
    %v4466 = vpack.c.b16 %v3722, %v3714
    %v4467 = vpack.c.b16 %v3723, %v3715
    %v4468 = vpack.c.b16 %v3724, %v3716
    %v4469 = vpack.c.b16 %v3725, %v3717
    %v4470 = vpack.c.b16 %v3726, %v3718
    %v4471 = vpack.c.b16 %v3727, %v3719
    %v4472 = vpack.c.b16 %v3728, %v3720
    %v4473 = vpack.c.b16 %v3729, %v3721
    %v4474 = vpack.c.b16 %v3738, %v3730
    %v4475 = vpack.c.b16 %v3739, %v3731
    %v4476 = vpack.c.b16 %v3740, %v3732
    %v4477 = vpack.c.b16 %v3741, %v3733
    %v4478 = vpack.c.b16 %v3742, %v3734
    %v4479 = vpack.c.b16 %v3743, %v3735
    %v4480 = vpack.c.b16 %v3744, %v3736
    %v4481 = vpack.c.b16 %v3745, %v3737
    %v4482 = vpack.c.b16 %v3754, %v3746
    %v4483 = vpack.c.b16 %v3755, %v3747
    %v4484 = vpack.c.b16 %v3756, %v3748
    %v4485 = vpack.c.b16 %v3757, %v3749
    %v4486 = vpack.c.b16 %v3758, %v3750
    %v4487 = vpack.c.b16 %v3759, %v3751
    %v4488 = vpack.c.b16 %v3760, %v3752
    %v4489 = vpack.c.b16 %v3761, %v3753
    %v4490 = vpack.c.b16 %v3770, %v3762
    %v4491 = vpack.c.b16 %v3771, %v3763
    %v4492 = vpack.c.b16 %v3772, %v3764
    %v4493 = vpack.c.b16 %v3773, %v3765
    %v4494 = vpack.c.b16 %v3774, %v3766
    %v4495 = vpack.c.b16 %v3775, %v3767
    %v4496 = vpack.c.b16 %v3776, %v3768
    %v4497 = vpack.c.b16 %v3777, %v3769
    %v4498 = vpack.c.b16 %v3786, %v3778
    %v4499 = vpack.c.b16 %v3787, %v3779
    %v4500 = vpack.c.b16 %v3788, %v3780
    %v4501 = vpack.c.b16 %v3789, %v3781
    %v4502 = vpack.c.b16 %v3790, %v3782
    %v4503 = vpack.c.b16 %v3791, %v3783
    %v4504 = vpack.c.b16 %v3792, %v3784
    %v4505 = vpack.c.b16 %v3793, %v3785
    %v4506 = vpack.c.b16 %v3802, %v3794
    %v4507 = vpack.c.b16 %v3803, %v3795
    %v4508 = vpack.c.b16 %v3804, %v3796
    %v4509 = vpack.c.b16 %v3805, %v3797
    %v4510 = vpack.c.b16 %v3806, %v3798
    %v4511 = vpack.c.b16 %v3807, %v3799
    %v4512 = vpack.c.b16 %v3808, %v3800
    %v4513 = vpack.c.b16 %v3809, %v3801
    %v4514 = vpack.c.b16 %v3818, %v3810
    %v4515 = vpack.c.b16 %v3819, %v3811
    %v4516 = vpack.c.b16 %v3820, %v3812
    %v4517 = vpack.c.b16 %v3821, %v3813
    %v4518 = vpack.c.b16 %v3822, %v3814
    %v4519 = vpack.c.b16 %v3823, %v3815
    %v4520 = vpack.c.b16 %v3824, %v3816
    %v4521 = vpack.c.b16 %v3825, %v3817
    %v4522 = vpack.c.b16 %v3834, %v3826
    %v4523 = vpack.c.b16 %v3835, %v3827
    %v4524 = vpack.c.b16 %v3836, %v3828
    %v4525 = vpack.c.b16 %v3837, %v3829
    %v4526 = vpack.c.b16 %v3838, %v3830
    %v4527 = vpack.c.b16 %v3839, %v3831
    %v4528 = vpack.c.b16 %v3840, %v3832
    %v4529 = vpack.c.b16 %v3841, %v3833
    %v4530 = vpack.c.b16 %v3850, %v3842
    %v4531 = vpack.c.b16 %v3851, %v3843
    %v4532 = vpack.c.b16 %v3852, %v3844
    %v4533 = vpack.c.b16 %v3853, %v3845
    %v4534 = vpack.c.b16 %v3854, %v3846
    %v4535 = vpack.c.b16 %v3855, %v3847
    %v4536 = vpack.c.b16 %v3856, %v3848
    %v4537 = vpack.c.b16 %v3857, %v3849
    %v4538 = vpack.c.b16 %v3866, %v3858
    %v4539 = vpack.c.b16 %v3867, %v3859
    %v4540 = vpack.c.b16 %v3868, %v3860
    %v4541 = vpack.c.b16 %v3869, %v3861
    %v4542 = vpack.c.b16 %v3870, %v3862
    %v4543 = vpack.c.b16 %v3871, %v3863
    %v4544 = vpack.c.b16 %v3872, %v3864
    %v4545 = vpack.c.b16 %v3873, %v3865
    %v4546 = vpack.c.b16 %v3882, %v3874
    %v4547 = vpack.c.b16 %v3883, %v3875
    %v4548 = vpack.c.b16 %v3884, %v3876
    %v4549 = vpack.c.b16 %v3885, %v3877
    %v4550 = vpack.c.b16 %v3886, %v3878
    %v4551 = vpack.c.b16 %v3887, %v3879
    %v4552 = vpack.c.b16 %v3888, %v3880
    %v4553 = vpack.c.b16 %v3889, %v3881
    %v4554 = vpack.c.b16 %v3898, %v3890
    %v4555 = vpack.c.b16 %v3899, %v3891
    %v4556 = vpack.c.b16 %v3900, %v3892
    %v4557 = vpack.c.b16 %v3901, %v3893
    %v4558 = vpack.c.b16 %v3902, %v3894
    %v4559 = vpack.c.b16 %v3903, %v3895
    %v4560 = vpack.c.b16 %v3904, %v3896
    %v4561 = vpack.c.b16 %v3905, %v3897
    %v4562 = vpack.c.b16 %v3914, %v3906
    %v4563 = vpack.c.b16 %v3915, %v3907
    %v4564 = vpack.c.b16 %v3916, %v3908
    %v4565 = vpack.c.b16 %v3917, %v3909
    %v4566 = vpack.c.b16 %v3918, %v3910
    %v4567 = vpack.c.b16 %v3919, %v3911
    %v4568 = vpack.c.b16 %v3920, %v3912
    %v4569 = vpack.c.b16 %v3921, %v3913
    %v4570 = vpack.c.b16 %v3930, %v3922
    %v4571 = vpack.c.b16 %v3931, %v3923
    %v4572 = vpack.c.b16 %v3932, %v3924
    %v4573 = vpack.c.b16 %v3933, %v3925
    %v4574 = vpack.c.b16 %v3934, %v3926
    %v4575 = vpack.c.b16 %v3935, %v3927
    %v4576 = vpack.c.b16 %v3936, %v3928
    %v4577 = vpack.c.b16 %v3937, %v3929
    %v4578 = vpack.c.b16 %v3946, %v3938
    %v4579 = vpack.c.b16 %v3947, %v3939
    %v4580 = vpack.c.b16 %v3948, %v3940
    %v4581 = vpack.c.b16 %v3949, %v3941
    %v4582 = vpack.c.b16 %v3950, %v3942
    %v4583 = vpack.c.b16 %v3951, %v3943
    %v4584 = vpack.c.b16 %v3952, %v3944
    %v4585 = vpack.c.b16 %v3953, %v3945
    %v4586 = vpack.c.b16 %v3962, %v3954
    %v4587 = vpack.c.b16 %v3963, %v3955
    %v4588 = vpack.c.b16 %v3964, %v3956
    %v4589 = vpack.c.b16 %v3965, %v3957
    %v4590 = vpack.c.b16 %v3966, %v3958
    %v4591 = vpack.c.b16 %v3967, %v3959
    %v4592 = vpack.c.b16 %v3968, %v3960
    %v4593 = vpack.c.b16 %v3969, %v3961
    %v4594 = vpack.c.b16 %v3978, %v3970
    %v4595 = vpack.c.b16 %v3979, %v3971
    %v4596 = vpack.c.b16 %v3980, %v3972
    %v4597 = vpack.c.b16 %v3981, %v3973
    %v4598 = vpack.c.b16 %v3982, %v3974
    %v4599 = vpack.c.b16 %v3983, %v3975
    %v4600 = vpack.c.b16 %v3984, %v3976
    %v4601 = vpack.c.b16 %v3985, %v3977
    %v4602 = vpack.c.b16 %v3994, %v3986
    %v4603 = vpack.c.b16 %v3995, %v3987
    %v4604 = vpack.c.b16 %v3996, %v3988
    %v4605 = vpack.c.b16 %v3997, %v3989
    %v4606 = vpack.c.b16 %v3998, %v3990
    %v4607 = vpack.c.b16 %v3999, %v3991
    %v4608 = vpack.c.b16 %v4000, %v3992
    %v4609 = vpack.c.b16 %v4001, %v3993
    %v4610 = vpack.c.b16 %v4010, %v4002
    %v4611 = vpack.c.b16 %v4011, %v4003
    %v4612 = vpack.c.b16 %v4012, %v4004
    %v4613 = vpack.c.b16 %v4013, %v4005
    %v4614 = vpack.c.b16 %v4014, %v4006
    %v4615 = vpack.c.b16 %v4015, %v4007
    %v4616 = vpack.c.b16 %v4016, %v4008
    %v4617 = vpack.c.b16 %v4017, %v4009
    %v4618 = vpack.c.b16 %v4026, %v4018
    %v4619 = vpack.c.b16 %v4027, %v4019
    %v4620 = vpack.c.b16 %v4028, %v4020
    %v4621 = vpack.c.b16 %v4029, %v4021
    %v4622 = vpack.c.b16 %v4030, %v4022
    %v4623 = vpack.c.b16 %v4031, %v4023
    %v4624 = vpack.c.b16 %v4032, %v4024
    %v4625 = vpack.c.b16 %v4033, %v4025
    %v4626 = vpack.c.b16 %v4042, %v4034
    %v4627 = vpack.c.b16 %v4043, %v4035
    %v4628 = vpack.c.b16 %v4044, %v4036
    %v4629 = vpack.c.b16 %v4045, %v4037
    %v4630 = vpack.c.b16 %v4046, %v4038
    %v4631 = vpack.c.b16 %v4047, %v4039
    %v4632 = vpack.c.b16 %v4048, %v4040
    %v4633 = vpack.c.b16 %v4049, %v4041
    %v4634 = vpack.c.b16 %v4058, %v4050
    %v4635 = vpack.c.b16 %v4059, %v4051
    %v4636 = vpack.c.b16 %v4060, %v4052
    %v4637 = vpack.c.b16 %v4061, %v4053
    %v4638 = vpack.c.b16 %v4062, %v4054
    %v4639 = vpack.c.b16 %v4063, %v4055
    %v4640 = vpack.c.b16 %v4064, %v4056
    %v4641 = vpack.c.b16 %v4065, %v4057
    %v4642 = vpack.c.b16 %v4074, %v4066
    %v4643 = vpack.c.b16 %v4075, %v4067
    %v4644 = vpack.c.b16 %v4076, %v4068
    %v4645 = vpack.c.b16 %v4077, %v4069
    %v4646 = vpack.c.b16 %v4078, %v4070
    %v4647 = vpack.c.b16 %v4079, %v4071
    %v4648 = vpack.c.b16 %v4080, %v4072
    %v4649 = vpack.c.b16 %v4081, %v4073
    %v4650 = vpack.c.b16 %v4090, %v4082
    %v4651 = vpack.c.b16 %v4091, %v4083
    %v4652 = vpack.c.b16 %v4092, %v4084
    %v4653 = vpack.c.b16 %v4093, %v4085
    %v4654 = vpack.c.b16 %v4094, %v4086
    %v4655 = vpack.c.b16 %v4095, %v4087
    %v4656 = vpack.c.b16 %v4096, %v4088
    %v4657 = vpack.c.b16 %v4097, %v4089
    %v4658 = vpack.c.b16 %v4106, %v4098
    %v4659 = vpack.c.b16 %v4107, %v4099
    %v4660 = vpack.c.b16 %v4108, %v4100
    %v4661 = vpack.c.b16 %v4109, %v4101
    %v4662 = vpack.c.b16 %v4110, %v4102
    %v4663 = vpack.c.b16 %v4111, %v4103
    %v4664 = vpack.c.b16 %v4112, %v4104
    %v4665 = vpack.c.b16 %v4113, %v4105
    %v4666 = vpack.c.b16 %v4122, %v4114
    %v4667 = vpack.c.b16 %v4123, %v4115
    %v4668 = vpack.c.b16 %v4124, %v4116
    %v4669 = vpack.c.b16 %v4125, %v4117
    %v4670 = vpack.c.b16 %v4126, %v4118
    %v4671 = vpack.c.b16 %v4127, %v4119
    %v4672 = vpack.c.b16 %v4128, %v4120
    %v4673 = vpack.c.b16 %v4129, %v4121
    %v4674 = vpack.c.b16 %v4138, %v4130
    %v4675 = vpack.c.b16 %v4139, %v4131
    %v4676 = vpack.c.b16 %v4140, %v4132
    %v4677 = vpack.c.b16 %v4141, %v4133
    %v4678 = vpack.c.b16 %v4142, %v4134
    %v4679 = vpack.c.b16 %v4143, %v4135
    %v4680 = vpack.c.b16 %v4144, %v4136
    %v4681 = vpack.c.b16 %v4145, %v4137
    %v4682 = vpack.c.b16 %v4154, %v4146
    %v4683 = vpack.c.b16 %v4155, %v4147
    %v4684 = vpack.c.b16 %v4156, %v4148
    %v4685 = vpack.c.b16 %v4157, %v4149
    %v4686 = vpack.c.b16 %v4158, %v4150
    %v4687 = vpack.c.b16 %v4159, %v4151
    %v4688 = vpack.c.b16 %v4160, %v4152
    %v4689 = vpack.c.b16 %v4161, %v4153
    %v4690 = vpack.c.b16 %v4170, %v4162
    %v4691 = vpack.c.b16 %v4171, %v4163
    %v4692 = vpack.c.b16 %v4172, %v4164
    %v4693 = vpack.c.b16 %v4173, %v4165
    %v4694 = vpack.c.b16 %v4174, %v4166
    %v4695 = vpack.c.b16 %v4175, %v4167
    %v4696 = vpack.c.b16 %v4176, %v4168
    %v4697 = vpack.c.b16 %v4177, %v4169
    %v4698 = vpack.c.b16 %v4186, %v4178
    %v4699 = vpack.c.b16 %v4187, %v4179
    %v4700 = vpack.c.b16 %v4188, %v4180
    %v4701 = vpack.c.b16 %v4189, %v4181
    %v4702 = vpack.c.b16 %v4190, %v4182
    %v4703 = vpack.c.b16 %v4191, %v4183
    %v4704 = vpack.c.b16 %v4192, %v4184
    %v4705 = vpack.c.b16 %v4193, %v4185
    %5218 = vmatprep.subr.bf16.mxu0 %v4195
    %5219 = vmatpush1.bf16.msra.mxu0 %v4194
    %5220 = vmatprep.subr.bf16.mxu0 %v4203
    %5221 = vmatpush1.bf16.msra.mxu0 %v4202
    %5222 = vmatprep.subr.bf16.mxu0 %v4211
    %5223 = vmatpush1.bf16.msra.mxu0 %v4210
    %5224 = vmatprep.subr.bf16.mxu0 %v4219
    %5225 = vmatpush1.bf16.msra.mxu0 %v4218
    %5226 = vmatprep.subr.bf16.mxu0 %v4227
    %5227 = vmatpush1.bf16.msra.mxu0 %v4226
    %5228 = vmatprep.subr.bf16.mxu0 %v4235
    %5229 = vmatpush1.bf16.msra.mxu0 %v4234
    %5230 = vmatprep.subr.bf16.mxu0 %v4243
    %5231 = vmatpush1.bf16.msra.mxu0 %v4242
    %5232 = vmatprep.subr.bf16.mxu0 %v4251
    %5233 = vmatpush1.bf16.msra.mxu0 %v4250
    %5234 = vmatprep.subr.bf16.mxu0 %v4259
    %5235 = vmatpush1.bf16.msra.mxu0 %v4258
    %5236 = vmatprep.subr.bf16.mxu0 %v4267
    %5237 = vmatpush1.bf16.msra.mxu0 %v4266
    %5238 = vmatprep.subr.bf16.mxu0 %v4275
    %5239 = vmatpush1.bf16.msra.mxu0 %v4274
    %5240 = vmatprep.subr.bf16.mxu0 %v4283
    %5241 = vmatpush1.bf16.msra.mxu0 %v4282
    %5242 = vmatprep.subr.bf16.mxu0 %v4291
    %5243 = vmatpush1.bf16.msra.mxu0 %v4290
    %5244 = vmatprep.subr.bf16.mxu0 %v4299
    %5245 = vmatpush1.bf16.msra.mxu0 %v4298
    %5246 = vmatprep.subr.bf16.mxu0 %v4307
    %5247 = vmatpush1.bf16.msra.mxu0 %v4306
    %5248 = vmatprep.subr.bf16.mxu0 %v4315
    %5249 = vmatpush1.bf16.msra.mxu0 %v4314
    %5250 = vmatprep.mubr.bf16.mxu0 %v2097
    %5251 = vmatmul.mubr.bf16.gmra.mrb[0].mxu0 %v2096
    %v5252 = vpop.f32.mrb[0].mxu0
    %v5253 = vadd.f32 %v2621, %v5252
    %v5254 = vpop.f32.mrb[0].mxu0
    %v5255 = vadd.f32 %v2625, %v5254
    %v5256 = vpop.f32.mrb[0].mxu0
    %v5257 = vadd.f32 %v2621, %v5256
    %v5258 = vpop.f32.mrb[0].mxu0
    %v5259 = vadd.f32 %v2625, %v5258
    %5260 = vdwg.mxu0
    %5261 = vmatprep.subr.bf16.mxu0 %v4323
    %5262 = vmatpush1.bf16.msra.mxu0 %v4322
    %5263 = vmatprep.subr.bf16.mxu0 %v4331
    %5264 = vmatpush1.bf16.msra.mxu0 %v4330
    %5265 = vmatprep.subr.bf16.mxu0 %v4339
    %5266 = vmatpush1.bf16.msra.mxu0 %v4338
    %5267 = vmatprep.subr.bf16.mxu0 %v4347
    %5268 = vmatpush1.bf16.msra.mxu0 %v4346
    %5269 = vmatprep.subr.bf16.mxu0 %v4355
    %5270 = vmatpush1.bf16.msra.mxu0 %v4354
    %5271 = vmatprep.subr.bf16.mxu0 %v4363
    %5272 = vmatpush1.bf16.msra.mxu0 %v4362
    %5273 = vmatprep.subr.bf16.mxu0 %v4371
    %5274 = vmatpush1.bf16.msra.mxu0 %v4370
    %5275 = vmatprep.subr.bf16.mxu0 %v4379
    %5276 = vmatpush1.bf16.msra.mxu0 %v4378
    %5277 = vmatprep.subr.bf16.mxu0 %v4387
    %5278 = vmatpush1.bf16.msra.mxu0 %v4386
    %5279 = vmatprep.subr.bf16.mxu0 %v4395
    %5280 = vmatpush1.bf16.msra.mxu0 %v4394
    %5281 = vmatprep.subr.bf16.mxu0 %v4403
    %5282 = vmatpush1.bf16.msra.mxu0 %v4402
    %5283 = vmatprep.subr.bf16.mxu0 %v4411
    %5284 = vmatpush1.bf16.msra.mxu0 %v4410
    %5285 = vmatprep.subr.bf16.mxu0 %v4419
    %5286 = vmatpush1.bf16.msra.mxu0 %v4418
    %5287 = vmatprep.subr.bf16.mxu0 %v4427
    %5288 = vmatpush1.bf16.msra.mxu0 %v4426
    %5289 = vmatprep.subr.bf16.mxu0 %v4435
    %5290 = vmatpush1.bf16.msra.mxu0 %v4434
    %5291 = vmatprep.subr.bf16.mxu0 %v4443
    %5292 = vmatpush1.bf16.msra.mxu0 %v4442
    %5293 = vmatprep.mubr.bf16.mxu0 %v2099
    %5294 = vmatmul.mubr.bf16.gmra.mrb[0].mxu0 %v2098
    %v5295 = vpop.f32.mrb[0].mxu0
    %v5296 = vadd.f32 %v5253, %v5295
    %v5297 = vpop.f32.mrb[0].mxu0
    %v5298 = vadd.f32 %v5255, %v5297
    %v5299 = vpop.f32.mrb[0].mxu0
    %v5300 = vadd.f32 %v5257, %v5299
    %v5301 = vpop.f32.mrb[0].mxu0
    %v5302 = vadd.f32 %v5259, %v5301
    %5303 = vdwg.mxu0
    %5304 = vmatprep.subr.bf16.mxu0 %v4451
    %5305 = vmatpush1.bf16.msra.mxu0 %v4450
    %5306 = vmatprep.subr.bf16.mxu0 %v4459
    %5307 = vmatpush1.bf16.msra.mxu0 %v4458
    %5308 = vmatprep.subr.bf16.mxu0 %v4467
    %5309 = vmatpush1.bf16.msra.mxu0 %v4466
    %5310 = vmatprep.subr.bf16.mxu0 %v4475
    %5311 = vmatpush1.bf16.msra.mxu0 %v4474
    %5312 = vmatprep.subr.bf16.mxu0 %v4483
    %5313 = vmatpush1.bf16.msra.mxu0 %v4482
    %5314 = vmatprep.subr.bf16.mxu0 %v4491
    %5315 = vmatpush1.bf16.msra.mxu0 %v4490
    %5316 = vmatprep.subr.bf16.mxu0 %v4499
    %5317 = vmatpush1.bf16.msra.mxu0 %v4498
    %5318 = vmatprep.subr.bf16.mxu0 %v4507
    %5319 = vmatpush1.bf16.msra.mxu0 %v4506
    %5320 = vmatprep.subr.bf16.mxu0 %v4515
    %5321 = vmatpush1.bf16.msra.mxu0 %v4514
    %5322 = vmatprep.subr.bf16.mxu0 %v4523
    %5323 = vmatpush1.bf16.msra.mxu0 %v4522
    %5324 = vmatprep.subr.bf16.mxu0 %v4531
    %5325 = vmatpush1.bf16.msra.mxu0 %v4530
    %5326 = vmatprep.subr.bf16.mxu0 %v4539
    %5327 = vmatpush1.bf16.msra.mxu0 %v4538
    %5328 = vmatprep.subr.bf16.mxu0 %v4547
    %5329 = vmatpush1.bf16.msra.mxu0 %v4546
    %5330 = vmatprep.subr.bf16.mxu0 %v4555
    %5331 = vmatpush1.bf16.msra.mxu0 %v4554
    %5332 = vmatprep.subr.bf16.mxu0 %v4563
    %5333 = vmatpush1.bf16.msra.mxu0 %v4562
    %5334 = vmatprep.subr.bf16.mxu0 %v4571
    %5335 = vmatpush1.bf16.msra.mxu0 %v4570
    %5336 = vmatprep.mubr.bf16.mxu0 %v2101
    %5337 = vmatmul.mubr.bf16.gmra.mrb[0].mxu0 %v2100
    %v5338 = vpop.f32.mrb[0].mxu0
    %v5339 = vadd.f32 %v5296, %v5338
    %v5340 = vpop.f32.mrb[0].mxu0
    %v5341 = vadd.f32 %v5298, %v5340
    %v5342 = vpop.f32.mrb[0].mxu0
    %v5343 = vadd.f32 %v5300, %v5342
    %v5344 = vpop.f32.mrb[0].mxu0
    %v5345 = vadd.f32 %v5302, %v5344
    %5346 = vdwg.mxu0
    %5347 = vmatprep.subr.bf16.mxu0 %v4579
    %5348 = vmatpush1.bf16.msra.mxu0 %v4578
    %5349 = vmatprep.subr.bf16.mxu0 %v4587
    %5350 = vmatpush1.bf16.msra.mxu0 %v4586
    %5351 = vmatprep.subr.bf16.mxu0 %v4595
    %5352 = vmatpush1.bf16.msra.mxu0 %v4594
    %5353 = vmatprep.subr.bf16.mxu0 %v4603
    %5354 = vmatpush1.bf16.msra.mxu0 %v4602
    %5355 = vmatprep.subr.bf16.mxu0 %v4611
    %5356 = vmatpush1.bf16.msra.mxu0 %v4610
    %5357 = vmatprep.subr.bf16.mxu0 %v4619
    %5358 = vmatpush1.bf16.msra.mxu0 %v4618
    %5359 = vmatprep.subr.bf16.mxu0 %v4627
    %5360 = vmatpush1.bf16.msra.mxu0 %v4626
    %5361 = vmatprep.subr.bf16.mxu0 %v4635
    %5362 = vmatpush1.bf16.msra.mxu0 %v4634
    %5363 = vmatprep.subr.bf16.mxu0 %v4643
    %5364 = vmatpush1.bf16.msra.mxu0 %v4642
    %5365 = vmatprep.subr.bf16.mxu0 %v4651
    %5366 = vmatpush1.bf16.msra.mxu0 %v4650
    %5367 = vmatprep.subr.bf16.mxu0 %v4659
    %5368 = vmatpush1.bf16.msra.mxu0 %v4658
    %5369 = vmatprep.subr.bf16.mxu0 %v4667
    %5370 = vmatpush1.bf16.msra.mxu0 %v4666
    %5371 = vmatprep.subr.bf16.mxu0 %v4675
    %5372 = vmatpush1.bf16.msra.mxu0 %v4674
    %5373 = vmatprep.subr.bf16.mxu0 %v4683
    %5374 = vmatpush1.bf16.msra.mxu0 %v4682
    %5375 = vmatprep.subr.bf16.mxu0 %v4691
    %5376 = vmatpush1.bf16.msra.mxu0 %v4690
    %5377 = vmatprep.subr.bf16.mxu0 %v4699
    %5378 = vmatpush1.bf16.msra.mxu0 %v4698
    %5379 = vmatprep.mubr.bf16.mxu0 %v2103
    %5380 = vmatmul.mubr.bf16.gmra.mrb[0].mxu0 %v2102
    %v5381 = vpop.f32.mrb[0].mxu0
    %v5382 = vadd.f32 %v5339, %v5381
    %v5383 = vpop.f32.mrb[0].mxu0
    %v5384 = vadd.f32 %v5341, %v5383
    %v5385 = vpop.f32.mrb[0].mxu0
    %v5386 = vadd.f32 %v5343, %v5385
    %v5387 = vpop.f32.mrb[0].mxu0
    %v5388 = vadd.f32 %v5345, %v5387
    %5389 = vdwg.mxu0
    %5390 = vmatprep.subr.bf16.mxu0 %v4197
    %5391 = vmatpush1.bf16.msra.mxu0 %v4196
    %5392 = vmatprep.subr.bf16.mxu0 %v4205
    %5393 = vmatpush1.bf16.msra.mxu0 %v4204
    %5394 = vmatprep.subr.bf16.mxu0 %v4213
    %5395 = vmatpush1.bf16.msra.mxu0 %v4212
    %5396 = vmatprep.subr.bf16.mxu0 %v4221
    %5397 = vmatpush1.bf16.msra.mxu0 %v4220
    %5398 = vmatprep.subr.bf16.mxu0 %v4229
    %5399 = vmatpush1.bf16.msra.mxu0 %v4228
    %5400 = vmatprep.subr.bf16.mxu0 %v4237
    %5401 = vmatpush1.bf16.msra.mxu0 %v4236
    %5402 = vmatprep.subr.bf16.mxu0 %v4245
    %5403 = vmatpush1.bf16.msra.mxu0 %v4244
    %5404 = vmatprep.subr.bf16.mxu0 %v4253
    %5405 = vmatpush1.bf16.msra.mxu0 %v4252
    %5406 = vmatprep.subr.bf16.mxu0 %v4261
    %5407 = vmatpush1.bf16.msra.mxu0 %v4260
    %5408 = vmatprep.subr.bf16.mxu0 %v4269
    %5409 = vmatpush1.bf16.msra.mxu0 %v4268
    %5410 = vmatprep.subr.bf16.mxu0 %v4277
    %5411 = vmatpush1.bf16.msra.mxu0 %v4276
    %5412 = vmatprep.subr.bf16.mxu0 %v4285
    %5413 = vmatpush1.bf16.msra.mxu0 %v4284
    %5414 = vmatprep.subr.bf16.mxu0 %v4293
    %5415 = vmatpush1.bf16.msra.mxu0 %v4292
    %5416 = vmatprep.subr.bf16.mxu0 %v4301
    %5417 = vmatpush1.bf16.msra.mxu0 %v4300
    %5418 = vmatprep.subr.bf16.mxu0 %v4309
    %5419 = vmatpush1.bf16.msra.mxu0 %v4308
    %5420 = vmatprep.subr.bf16.mxu0 %v4317
    %5421 = vmatpush1.bf16.msra.mxu0 %v4316
    %5422 = vmatprep.mubr.bf16.mxu0 %v2097
    %5423 = vmatmul.mubr.bf16.gmra.mrb[0].mxu0 %v2096
    %v5424 = vpop.f32.mrb[0].mxu0
    %v5425 = vadd.f32 %v2629, %v5424
    %v5426 = vpop.f32.mrb[0].mxu0
    %v5427 = vadd.f32 %v2633, %v5426
    %v5428 = vpop.f32.mrb[0].mxu0
    %v5429 = vadd.f32 %v2629, %v5428
    %v5430 = vpop.f32.mrb[0].mxu0
    %v5431 = vadd.f32 %v2633, %v5430
    %5432 = vdwg.mxu0
    %5433 = vmatprep.subr.bf16.mxu0 %v4325
    %5434 = vmatpush1.bf16.msra.mxu0 %v4324
    %5435 = vmatprep.subr.bf16.mxu0 %v4333
    %5436 = vmatpush1.bf16.msra.mxu0 %v4332
    %5437 = vmatprep.subr.bf16.mxu0 %v4341
    %5438 = vmatpush1.bf16.msra.mxu0 %v4340
    %5439 = vmatprep.subr.bf16.mxu0 %v4349
    %5440 = vmatpush1.bf16.msra.mxu0 %v4348
    %5441 = vmatprep.subr.bf16.mxu0 %v4357
    %5442 = vmatpush1.bf16.msra.mxu0 %v4356
    %5443 = vmatprep.subr.bf16.mxu0 %v4365
    %5444 = vmatpush1.bf16.msra.mxu0 %v4364
    %5445 = vmatprep.subr.bf16.mxu0 %v4373
    %5446 = vmatpush1.bf16.msra.mxu0 %v4372
    %5447 = vmatprep.subr.bf16.mxu0 %v4381
    %5448 = vmatpush1.bf16.msra.mxu0 %v4380
    %5449 = vmatprep.subr.bf16.mxu0 %v4389
    %5450 = vmatpush1.bf16.msra.mxu0 %v4388
    %5451 = vmatprep.subr.bf16.mxu0 %v4397
    %5452 = vmatpush1.bf16.msra.mxu0 %v4396
    %5453 = vmatprep.subr.bf16.mxu0 %v4405
    %5454 = vmatpush1.bf16.msra.mxu0 %v4404
    %5455 = vmatprep.subr.bf16.mxu0 %v4413
    %5456 = vmatpush1.bf16.msra.mxu0 %v4412
    %5457 = vmatprep.subr.bf16.mxu0 %v4421
    %5458 = vmatpush1.bf16.msra.mxu0 %v4420
    %5459 = vmatprep.subr.bf16.mxu0 %v4429
    %5460 = vmatpush1.bf16.msra.mxu0 %v4428
    %5461 = vmatprep.subr.bf16.mxu0 %v4437
    %5462 = vmatpush1.bf16.msra.mxu0 %v4436
    %5463 = vmatprep.subr.bf16.mxu0 %v4445
    %5464 = vmatpush1.bf16.msra.mxu0 %v4444
    %5465 = vmatprep.mubr.bf16.mxu0 %v2099
    %5466 = vmatmul.mubr.bf16.gmra.mrb[0].mxu0 %v2098
    %v5467 = vpop.f32.mrb[0].mxu0
    %v5468 = vadd.f32 %v5425, %v5467
    %v5469 = vpop.f32.mrb[0].mxu0
    %v5470 = vadd.f32 %v5427, %v5469
    %v5471 = vpop.f32.mrb[0].mxu0
    %v5472 = vadd.f32 %v5429, %v5471
    %v5473 = vpop.f32.mrb[0].mxu0
    %v5474 = vadd.f32 %v5431, %v5473
    %5475 = vdwg.mxu0
    %5476 = vmatprep.subr.bf16.mxu0 %v4453
    %5477 = vmatpush1.bf16.msra.mxu0 %v4452
    %5478 = vmatprep.subr.bf16.mxu0 %v4461
    %5479 = vmatpush1.bf16.msra.mxu0 %v4460
    %5480 = vmatprep.subr.bf16.mxu0 %v4469
    %5481 = vmatpush1.bf16.msra.mxu0 %v4468
    %5482 = vmatprep.subr.bf16.mxu0 %v4477
    %5483 = vmatpush1.bf16.msra.mxu0 %v4476
    %5484 = vmatprep.subr.bf16.mxu0 %v4485
    %5485 = vmatpush1.bf16.msra.mxu0 %v4484
    %5486 = vmatprep.subr.bf16.mxu0 %v4493
    %5487 = vmatpush1.bf16.msra.mxu0 %v4492
    %5488 = vmatprep.subr.bf16.mxu0 %v4501
    %5489 = vmatpush1.bf16.msra.mxu0 %v4500
    %5490 = vmatprep.subr.bf16.mxu0 %v4509
    %5491 = vmatpush1.bf16.msra.mxu0 %v4508
    %5492 = vmatprep.subr.bf16.mxu0 %v4517
    %5493 = vmatpush1.bf16.msra.mxu0 %v4516
    %5494 = vmatprep.subr.bf16.mxu0 %v4525
    %5495 = vmatpush1.bf16.msra.mxu0 %v4524
    %5496 = vmatprep.subr.bf16.mxu0 %v4533
    %5497 = vmatpush1.bf16.msra.mxu0 %v4532
    %5498 = vmatprep.subr.bf16.mxu0 %v4541
    %5499 = vmatpush1.bf16.msra.mxu0 %v4540
    %5500 = vmatprep.subr.bf16.mxu0 %v4549
    %5501 = vmatpush1.bf16.msra.mxu0 %v4548
    %5502 = vmatprep.subr.bf16.mxu0 %v4557
    %5503 = vmatpush1.bf16.msra.mxu0 %v4556
    %5504 = vmatprep.subr.bf16.mxu0 %v4565
    %5505 = vmatpush1.bf16.msra.mxu0 %v4564
    %5506 = vmatprep.subr.bf16.mxu0 %v4573
    %5507 = vmatpush1.bf16.msra.mxu0 %v4572
    %5508 = vmatprep.mubr.bf16.mxu0 %v2101
    %5509 = vmatmul.mubr.bf16.gmra.mrb[0].mxu0 %v2100
    %v5510 = vpop.f32.mrb[0].mxu0
    %v5511 = vadd.f32 %v5468, %v5510
    %v5512 = vpop.f32.mrb[0].mxu0
    %v5513 = vadd.f32 %v5470, %v5512
    %v5514 = vpop.f32.mrb[0].mxu0
    %v5515 = vadd.f32 %v5472, %v5514
    %v5516 = vpop.f32.mrb[0].mxu0
    %v5517 = vadd.f32 %v5474, %v5516
    %5518 = vdwg.mxu0
    %5519 = vmatprep.subr.bf16.mxu0 %v4581
    %5520 = vmatpush1.bf16.msra.mxu0 %v4580
    %5521 = vmatprep.subr.bf16.mxu0 %v4589
    %5522 = vmatpush1.bf16.msra.mxu0 %v4588
    %5523 = vmatprep.subr.bf16.mxu0 %v4597
    %5524 = vmatpush1.bf16.msra.mxu0 %v4596
    %5525 = vmatprep.subr.bf16.mxu0 %v4605
    %5526 = vmatpush1.bf16.msra.mxu0 %v4604
    %5527 = vmatprep.subr.bf16.mxu0 %v4613
    %5528 = vmatpush1.bf16.msra.mxu0 %v4612
    %5529 = vmatprep.subr.bf16.mxu0 %v4621
    %5530 = vmatpush1.bf16.msra.mxu0 %v4620
    %5531 = vmatprep.subr.bf16.mxu0 %v4629
    %5532 = vmatpush1.bf16.msra.mxu0 %v4628
    %5533 = vmatprep.subr.bf16.mxu0 %v4637
    %5534 = vmatpush1.bf16.msra.mxu0 %v4636
    %5535 = vmatprep.subr.bf16.mxu0 %v4645
    %5536 = vmatpush1.bf16.msra.mxu0 %v4644
    %5537 = vmatprep.subr.bf16.mxu0 %v4653
    %5538 = vmatpush1.bf16.msra.mxu0 %v4652
    %5539 = vmatprep.subr.bf16.mxu0 %v4661
    %5540 = vmatpush1.bf16.msra.mxu0 %v4660
    %5541 = vmatprep.subr.bf16.mxu0 %v4669
    %5542 = vmatpush1.bf16.msra.mxu0 %v4668
    %5543 = vmatprep.subr.bf16.mxu0 %v4677
    %5544 = vmatpush1.bf16.msra.mxu0 %v4676
    %5545 = vmatprep.subr.bf16.mxu0 %v4685
    %5546 = vmatpush1.bf16.msra.mxu0 %v4684
    %5547 = vmatprep.subr.bf16.mxu0 %v4693
    %5548 = vmatpush1.bf16.msra.mxu0 %v4692
    %5549 = vmatprep.subr.bf16.mxu0 %v4701
    %5550 = vmatpush1.bf16.msra.mxu0 %v4700
    %5551 = vmatprep.mubr.bf16.mxu0 %v2103
    %5552 = vmatmul.mubr.bf16.gmra.mrb[0].mxu0 %v2102
    %v5553 = vpop.f32.mrb[0].mxu0
    %v5554 = vadd.f32 %v5511, %v5553
    %v5555 = vpop.f32.mrb[0].mxu0
    %v5556 = vadd.f32 %v5513, %v5555
    %v5557 = vpop.f32.mrb[0].mxu0
    %v5558 = vadd.f32 %v5515, %v5557
    %v5559 = vpop.f32.mrb[0].mxu0
    %v5560 = vadd.f32 %v5517, %v5559
    %5561 = vdwg.mxu0
    %5562 = vmatprep.subr.bf16.mxu0 %v4199
    %5563 = vmatpush1.bf16.msra.mxu0 %v4198
    %5564 = vmatprep.subr.bf16.mxu0 %v4207
    %5565 = vmatpush1.bf16.msra.mxu0 %v4206
    %5566 = vmatprep.subr.bf16.mxu0 %v4215
    %5567 = vmatpush1.bf16.msra.mxu0 %v4214
    %5568 = vmatprep.subr.bf16.mxu0 %v4223
    %5569 = vmatpush1.bf16.msra.mxu0 %v4222
    %5570 = vmatprep.subr.bf16.mxu0 %v4231
    %5571 = vmatpush1.bf16.msra.mxu0 %v4230
    %5572 = vmatprep.subr.bf16.mxu0 %v4239
    %5573 = vmatpush1.bf16.msra.mxu0 %v4238
    %5574 = vmatprep.subr.bf16.mxu0 %v4247
    %5575 = vmatpush1.bf16.msra.mxu0 %v4246
    %5576 = vmatprep.subr.bf16.mxu0 %v4255
    %5577 = vmatpush1.bf16.msra.mxu0 %v4254
    %5578 = vmatprep.subr.bf16.mxu0 %v4263
    %5579 = vmatpush1.bf16.msra.mxu0 %v4262
    %5580 = vmatprep.subr.bf16.mxu0 %v4271
    %5581 = vmatpush1.bf16.msra.mxu0 %v4270
    %5582 = vmatprep.subr.bf16.mxu0 %v4279
    %5583 = vmatpush1.bf16.msra.mxu0 %v4278
    %5584 = vmatprep.subr.bf16.mxu0 %v4287
    %5585 = vmatpush1.bf16.msra.mxu0 %v4286
    %5586 = vmatprep.subr.bf16.mxu0 %v4295
    %5587 = vmatpush1.bf16.msra.mxu0 %v4294
    %5588 = vmatprep.subr.bf16.mxu0 %v4303
    %5589 = vmatpush1.bf16.msra.mxu0 %v4302
    %5590 = vmatprep.subr.bf16.mxu0 %v4311
    %5591 = vmatpush1.bf16.msra.mxu0 %v4310
    %5592 = vmatprep.subr.bf16.mxu0 %v4319
    %5593 = vmatpush1.bf16.msra.mxu0 %v4318
    %5594 = vmatprep.mubr.bf16.mxu0 %v2097
    %5595 = vmatmul.mubr.bf16.gmra.mrb[0].mxu0 %v2096
    %v5596 = vpop.f32.mrb[0].mxu0
    %v5597 = vadd.f32 %v2637, %v5596
    %v5598 = vpop.f32.mrb[0].mxu0
    %v5599 = vadd.f32 %v2641, %v5598
    %v5600 = vpop.f32.mrb[0].mxu0
    %v5601 = vadd.f32 %v2637, %v5600
    %v5602 = vpop.f32.mrb[0].mxu0
    %v5603 = vadd.f32 %v2641, %v5602
    %5604 = vdwg.mxu0
    %5605 = vmatprep.subr.bf16.mxu0 %v4327
    %5606 = vmatpush1.bf16.msra.mxu0 %v4326
    %5607 = vmatprep.subr.bf16.mxu0 %v4335
    %5608 = vmatpush1.bf16.msra.mxu0 %v4334
    %5609 = vmatprep.subr.bf16.mxu0 %v4343
    %5610 = vmatpush1.bf16.msra.mxu0 %v4342
    %5611 = vmatprep.subr.bf16.mxu0 %v4351
    %5612 = vmatpush1.bf16.msra.mxu0 %v4350
    %5613 = vmatprep.subr.bf16.mxu0 %v4359
    %5614 = vmatpush1.bf16.msra.mxu0 %v4358
    %5615 = vmatprep.subr.bf16.mxu0 %v4367
    %5616 = vmatpush1.bf16.msra.mxu0 %v4366
    %5617 = vmatprep.subr.bf16.mxu0 %v4375
    %5618 = vmatpush1.bf16.msra.mxu0 %v4374
    %5619 = vmatprep.subr.bf16.mxu0 %v4383
    %5620 = vmatpush1.bf16.msra.mxu0 %v4382
    %5621 = vmatprep.subr.bf16.mxu0 %v4391
    %5622 = vmatpush1.bf16.msra.mxu0 %v4390
    %5623 = vmatprep.subr.bf16.mxu0 %v4399
    %5624 = vmatpush1.bf16.msra.mxu0 %v4398
    %5625 = vmatprep.subr.bf16.mxu0 %v4407
    %5626 = vmatpush1.bf16.msra.mxu0 %v4406
    %5627 = vmatprep.subr.bf16.mxu0 %v4415
    %5628 = vmatpush1.bf16.msra.mxu0 %v4414
    %5629 = vmatprep.subr.bf16.mxu0 %v4423
    %5630 = vmatpush1.bf16.msra.mxu0 %v4422
    %5631 = vmatprep.subr.bf16.mxu0 %v4431
    %5632 = vmatpush1.bf16.msra.mxu0 %v4430
    %5633 = vmatprep.subr.bf16.mxu0 %v4439
    %5634 = vmatpush1.bf16.msra.mxu0 %v4438
    %5635 = vmatprep.subr.bf16.mxu0 %v4447
    %5636 = vmatpush1.bf16.msra.mxu0 %v4446
    %5637 = vmatprep.mubr.bf16.mxu0 %v2099
    %5638 = vmatmul.mubr.bf16.gmra.mrb[0].mxu0 %v2098
    %v5639 = vpop.f32.mrb[0].mxu0
    %v5640 = vadd.f32 %v5597, %v5639
    %v5641 = vpop.f32.mrb[0].mxu0
    %v5642 = vadd.f32 %v5599, %v5641
    %v5643 = vpop.f32.mrb[0].mxu0
    %v5644 = vadd.f32 %v5601, %v5643
    %v5645 = vpop.f32.mrb[0].mxu0
    %v5646 = vadd.f32 %v5603, %v5645
    %5647 = vdwg.mxu0
    %5648 = vmatprep.subr.bf16.mxu0 %v4455
    %5649 = vmatpush1.bf16.msra.mxu0 %v4454
    %5650 = vmatprep.subr.bf16.mxu0 %v4463
    %5651 = vmatpush1.bf16.msra.mxu0 %v4462
    %5652 = vmatprep.subr.bf16.mxu0 %v4471
    %5653 = vmatpush1.bf16.msra.mxu0 %v4470
    %5654 = vmatprep.subr.bf16.mxu0 %v4479
    %5655 = vmatpush1.bf16.msra.mxu0 %v4478
    %5656 = vmatprep.subr.bf16.mxu0 %v4487
    %5657 = vmatpush1.bf16.msra.mxu0 %v4486
    %5658 = vmatprep.subr.bf16.mxu0 %v4495
    %5659 = vmatpush1.bf16.msra.mxu0 %v4494
    %5660 = vmatprep.subr.bf16.mxu0 %v4503
    %5661 = vmatpush1.bf16.msra.mxu0 %v4502
    %5662 = vmatprep.subr.bf16.mxu0 %v4511
    %5663 = vmatpush1.bf16.msra.mxu0 %v4510
    %5664 = vmatprep.subr.bf16.mxu0 %v4519
    %5665 = vmatpush1.bf16.msra.mxu0 %v4518
    %5666 = vmatprep.subr.bf16.mxu0 %v4527
    %5667 = vmatpush1.bf16.msra.mxu0 %v4526
    %5668 = vmatprep.subr.bf16.mxu0 %v4535
    %5669 = vmatpush1.bf16.msra.mxu0 %v4534
    %5670 = vmatprep.subr.bf16.mxu0 %v4543
    %5671 = vmatpush1.bf16.msra.mxu0 %v4542
    %5672 = vmatprep.subr.bf16.mxu0 %v4551
    %5673 = vmatpush1.bf16.msra.mxu0 %v4550
    %5674 = vmatprep.subr.bf16.mxu0 %v4559
    %5675 = vmatpush1.bf16.msra.mxu0 %v4558
    %5676 = vmatprep.subr.bf16.mxu0 %v4567
    %5677 = vmatpush1.bf16.msra.mxu0 %v4566
    %5678 = vmatprep.subr.bf16.mxu0 %v4575
    %5679 = vmatpush1.bf16.msra.mxu0 %v4574
    %5680 = vmatprep.mubr.bf16.mxu0 %v2101
    %5681 = vmatmul.mubr.bf16.gmra.mrb[0].mxu0 %v2100
    %v5682 = vpop.f32.mrb[0].mxu0
    %v5683 = vadd.f32 %v5640, %v5682
    %v5684 = vpop.f32.mrb[0].mxu0
    %v5685 = vadd.f32 %v5642, %v5684
    %v5686 = vpop.f32.mrb[0].mxu0
    %v5687 = vadd.f32 %v5644, %v5686
    %v5688 = vpop.f32.mrb[0].mxu0
    %v5689 = vadd.f32 %v5646, %v5688
    %5690 = vdwg.mxu0
    %5691 = vmatprep.subr.bf16.mxu0 %v4583
    %5692 = vmatpush1.bf16.msra.mxu0 %v4582
    %5693 = vmatprep.subr.bf16.mxu0 %v4591
    %5694 = vmatpush1.bf16.msra.mxu0 %v4590
    %5695 = vmatprep.subr.bf16.mxu0 %v4599
    %5696 = vmatpush1.bf16.msra.mxu0 %v4598
    %5697 = vmatprep.subr.bf16.mxu0 %v4607
    %5698 = vmatpush1.bf16.msra.mxu0 %v4606
    %5699 = vmatprep.subr.bf16.mxu0 %v4615
    %5700 = vmatpush1.bf16.msra.mxu0 %v4614
    %5701 = vmatprep.subr.bf16.mxu0 %v4623
    %5702 = vmatpush1.bf16.msra.mxu0 %v4622
    %5703 = vmatprep.subr.bf16.mxu0 %v4631
    %5704 = vmatpush1.bf16.msra.mxu0 %v4630
    %5705 = vmatprep.subr.bf16.mxu0 %v4639
    %5706 = vmatpush1.bf16.msra.mxu0 %v4638
    %5707 = vmatprep.subr.bf16.mxu0 %v4647
    %5708 = vmatpush1.bf16.msra.mxu0 %v4646
    %5709 = vmatprep.subr.bf16.mxu0 %v4655
    %5710 = vmatpush1.bf16.msra.mxu0 %v4654
    %5711 = vmatprep.subr.bf16.mxu0 %v4663
    %5712 = vmatpush1.bf16.msra.mxu0 %v4662
    %5713 = vmatprep.subr.bf16.mxu0 %v4671
    %5714 = vmatpush1.bf16.msra.mxu0 %v4670
    %5715 = vmatprep.subr.bf16.mxu0 %v4679
    %5716 = vmatpush1.bf16.msra.mxu0 %v4678
    %5717 = vmatprep.subr.bf16.mxu0 %v4687
    %5718 = vmatpush1.bf16.msra.mxu0 %v4686
    %5719 = vmatprep.subr.bf16.mxu0 %v4695
    %5720 = vmatpush1.bf16.msra.mxu0 %v4694
    %5721 = vmatprep.subr.bf16.mxu0 %v4703
    %5722 = vmatpush1.bf16.msra.mxu0 %v4702
    %5723 = vmatprep.mubr.bf16.mxu0 %v2103
    %5724 = vmatmul.mubr.bf16.gmra.mrb[0].mxu0 %v2102
    %v5725 = vpop.f32.mrb[0].mxu0
    %v5726 = vadd.f32 %v5683, %v5725
    %v5727 = vpop.f32.mrb[0].mxu0
    %v5728 = vadd.f32 %v5685, %v5727
    %v5729 = vpop.f32.mrb[0].mxu0
    %v5730 = vadd.f32 %v5687, %v5729
    %v5731 = vpop.f32.mrb[0].mxu0
    %v5732 = vadd.f32 %v5689, %v5731
    %5733 = vdwg.mxu0
    %5734 = vmatprep.subr.bf16.mxu0 %v4201
    %5735 = vmatpush1.bf16.msra.mxu0 %v4200
    %5736 = vmatprep.subr.bf16.mxu0 %v4209
    %5737 = vmatpush1.bf16.msra.mxu0 %v4208
    %5738 = vmatprep.subr.bf16.mxu0 %v4217
    %5739 = vmatpush1.bf16.msra.mxu0 %v4216
    %5740 = vmatprep.subr.bf16.mxu0 %v4225
    %5741 = vmatpush1.bf16.msra.mxu0 %v4224
    %5742 = vmatprep.subr.bf16.mxu0 %v4233
    %5743 = vmatpush1.bf16.msra.mxu0 %v4232
    %5744 = vmatprep.subr.bf16.mxu0 %v4241
    %5745 = vmatpush1.bf16.msra.mxu0 %v4240
    %5746 = vmatprep.subr.bf16.mxu0 %v4249
    %5747 = vmatpush1.bf16.msra.mxu0 %v4248
    %5748 = vmatprep.subr.bf16.mxu0 %v4257
    %5749 = vmatpush1.bf16.msra.mxu0 %v4256
    %5750 = vmatprep.subr.bf16.mxu0 %v4265
    %5751 = vmatpush1.bf16.msra.mxu0 %v4264
    %5752 = vmatprep.subr.bf16.mxu0 %v4273
    %5753 = vmatpush1.bf16.msra.mxu0 %v4272
    %5754 = vmatprep.subr.bf16.mxu0 %v4281
    %5755 = vmatpush1.bf16.msra.mxu0 %v4280
    %5756 = vmatprep.subr.bf16.mxu0 %v4289
    %5757 = vmatpush1.bf16.msra.mxu0 %v4288
    %5758 = vmatprep.subr.bf16.mxu0 %v4297
    %5759 = vmatpush1.bf16.msra.mxu0 %v4296
    %5760 = vmatprep.subr.bf16.mxu0 %v4305
    %5761 = vmatpush1.bf16.msra.mxu0 %v4304
    %5762 = vmatprep.subr.bf16.mxu0 %v4313
    %5763 = vmatpush1.bf16.msra.mxu0 %v4312
    %5764 = vmatprep.subr.bf16.mxu0 %v4321
    %5765 = vmatpush1.bf16.msra.mxu0 %v4320
    %5766 = vmatprep.mubr.bf16.mxu0 %v2097
    %5767 = vmatmul.mubr.bf16.gmra.mrb[0].mxu0 %v2096
    %v5768 = vpop.f32.mrb[0].mxu0
    %v5769 = vadd.f32 %v2645, %v5768
    %v5770 = vpop.f32.mrb[0].mxu0
    %v5771 = vadd.f32 %v2649, %v5770
    %v5772 = vpop.f32.mrb[0].mxu0
    %v5773 = vadd.f32 %v2645, %v5772
    %v5774 = vpop.f32.mrb[0].mxu0
    %v5775 = vadd.f32 %v2649, %v5774
    %5776 = vdwg.mxu0
    %5777 = vmatprep.subr.bf16.mxu0 %v4329
    %5778 = vmatpush1.bf16.msra.mxu0 %v4328
    %5779 = vmatprep.subr.bf16.mxu0 %v4337
    %5780 = vmatpush1.bf16.msra.mxu0 %v4336
    %5781 = vmatprep.subr.bf16.mxu0 %v4345
    %5782 = vmatpush1.bf16.msra.mxu0 %v4344
    %5783 = vmatprep.subr.bf16.mxu0 %v4353
    %5784 = vmatpush1.bf16.msra.mxu0 %v4352
    %5785 = vmatprep.subr.bf16.mxu0 %v4361
    %5786 = vmatpush1.bf16.msra.mxu0 %v4360
    %5787 = vmatprep.subr.bf16.mxu0 %v4369
    %5788 = vmatpush1.bf16.msra.mxu0 %v4368
    %5789 = vmatprep.subr.bf16.mxu0 %v4377
    %5790 = vmatpush1.bf16.msra.mxu0 %v4376
    %5791 = vmatprep.subr.bf16.mxu0 %v4385
    %5792 = vmatpush1.bf16.msra.mxu0 %v4384
    %5793 = vmatprep.subr.bf16.mxu0 %v4393
    %5794 = vmatpush1.bf16.msra.mxu0 %v4392
    %5795 = vmatprep.subr.bf16.mxu0 %v4401
    %5796 = vmatpush1.bf16.msra.mxu0 %v4400
    %5797 = vmatprep.subr.bf16.mxu0 %v4409
    %5798 = vmatpush1.bf16.msra.mxu0 %v4408
    %5799 = vmatprep.subr.bf16.mxu0 %v4417
    %5800 = vmatpush1.bf16.msra.mxu0 %v4416
    %5801 = vmatprep.subr.bf16.mxu0 %v4425
    %5802 = vmatpush1.bf16.msra.mxu0 %v4424
    %5803 = vmatprep.subr.bf16.mxu0 %v4433
    %5804 = vmatpush1.bf16.msra.mxu0 %v4432
    %5805 = vmatprep.subr.bf16.mxu0 %v4441
    %5806 = vmatpush1.bf16.msra.mxu0 %v4440
    %5807 = vmatprep.subr.bf16.mxu0 %v4449
    %5808 = vmatpush1.bf16.msra.mxu0 %v4448
    %5809 = vmatprep.mubr.bf16.mxu0 %v2099
    %5810 = vmatmul.mubr.bf16.gmra.mrb[0].mxu0 %v2098
    %v5811 = vpop.f32.mrb[0].mxu0
    %v5812 = vadd.f32 %v5769, %v5811
    %v5813 = vpop.f32.mrb[0].mxu0
    %v5814 = vadd.f32 %v5771, %v5813
    %v5815 = vpop.f32.mrb[0].mxu0
    %v5816 = vadd.f32 %v5773, %v5815
    %v5817 = vpop.f32.mrb[0].mxu0
    %v5818 = vadd.f32 %v5775, %v5817
    %5819 = vdwg.mxu0
    %5820 = vmatprep.subr.bf16.mxu0 %v4457
    %5821 = vmatpush1.bf16.msra.mxu0 %v4456
    %5822 = vmatprep.subr.bf16.mxu0 %v4465
    %5823 = vmatpush1.bf16.msra.mxu0 %v4464
    %5824 = vmatprep.subr.bf16.mxu0 %v4473
    %5825 = vmatpush1.bf16.msra.mxu0 %v4472
    %5826 = vmatprep.subr.bf16.mxu0 %v4481
    %5827 = vmatpush1.bf16.msra.mxu0 %v4480
    %5828 = vmatprep.subr.bf16.mxu0 %v4489
    %5829 = vmatpush1.bf16.msra.mxu0 %v4488
    %5830 = vmatprep.subr.bf16.mxu0 %v4497
    %5831 = vmatpush1.bf16.msra.mxu0 %v4496
    %5832 = vmatprep.subr.bf16.mxu0 %v4505
    %5833 = vmatpush1.bf16.msra.mxu0 %v4504
    %5834 = vmatprep.subr.bf16.mxu0 %v4513
    %5835 = vmatpush1.bf16.msra.mxu0 %v4512
    %5836 = vmatprep.subr.bf16.mxu0 %v4521
    %5837 = vmatpush1.bf16.msra.mxu0 %v4520
    %5838 = vmatprep.subr.bf16.mxu0 %v4529
    %5839 = vmatpush1.bf16.msra.mxu0 %v4528
    %5840 = vmatprep.subr.bf16.mxu0 %v4537
    %5841 = vmatpush1.bf16.msra.mxu0 %v4536
    %5842 = vmatprep.subr.bf16.mxu0 %v4545
    %5843 = vmatpush1.bf16.msra.mxu0 %v4544
    %5844 = vmatprep.subr.bf16.mxu0 %v4553
    %5845 = vmatpush1.bf16.msra.mxu0 %v4552
    %5846 = vmatprep.subr.bf16.mxu0 %v4561
    %5847 = vmatpush1.bf16.msra.mxu0 %v4560
    %5848 = vmatprep.subr.bf16.mxu0 %v4569
    %5849 = vmatpush1.bf16.msra.mxu0 %v4568
    %5850 = vmatprep.subr.bf16.mxu0 %v4577
    %5851 = vmatpush1.bf16.msra.mxu0 %v4576
    %5852 = vmatprep.mubr.bf16.mxu0 %v2101
    %5853 = vmatmul.mubr.bf16.gmra.mrb[0].mxu0 %v2100
    %v5854 = vpop.f32.mrb[0].mxu0
    %v5855 = vadd.f32 %v5812, %v5854
    %v5856 = vpop.f32.mrb[0].mxu0
    %v5857 = vadd.f32 %v5814, %v5856
    %v5858 = vpop.f32.mrb[0].mxu0
    %v5859 = vadd.f32 %v5816, %v5858
    %v5860 = vpop.f32.mrb[0].mxu0
    %v5861 = vadd.f32 %v5818, %v5860
    %5862 = vdwg.mxu0
    %5863 = vmatprep.subr.bf16.mxu0 %v4585
    %5864 = vmatpush1.bf16.msra.mxu0 %v4584
    %5865 = vmatprep.subr.bf16.mxu0 %v4593
    %5866 = vmatpush1.bf16.msra.mxu0 %v4592
    %5867 = vmatprep.subr.bf16.mxu0 %v4601
    %5868 = vmatpush1.bf16.msra.mxu0 %v4600
    %5869 = vmatprep.subr.bf16.mxu0 %v4609
    %5870 = vmatpush1.bf16.msra.mxu0 %v4608
    %5871 = vmatprep.subr.bf16.mxu0 %v4617
    %5872 = vmatpush1.bf16.msra.mxu0 %v4616
    %5873 = vmatprep.subr.bf16.mxu0 %v4625
    %5874 = vmatpush1.bf16.msra.mxu0 %v4624
    %5875 = vmatprep.subr.bf16.mxu0 %v4633
    %5876 = vmatpush1.bf16.msra.mxu0 %v4632
    %5877 = vmatprep.subr.bf16.mxu0 %v4641
    %5878 = vmatpush1.bf16.msra.mxu0 %v4640
    %5879 = vmatprep.subr.bf16.mxu0 %v4649
    %5880 = vmatpush1.bf16.msra.mxu0 %v4648
    %5881 = vmatprep.subr.bf16.mxu0 %v4657
    %5882 = vmatpush1.bf16.msra.mxu0 %v4656
    %5883 = vmatprep.subr.bf16.mxu0 %v4665
    %5884 = vmatpush1.bf16.msra.mxu0 %v4664
    %5885 = vmatprep.subr.bf16.mxu0 %v4673
    %5886 = vmatpush1.bf16.msra.mxu0 %v4672
    %5887 = vmatprep.subr.bf16.mxu0 %v4681
    %5888 = vmatpush1.bf16.msra.mxu0 %v4680
    %5889 = vmatprep.subr.bf16.mxu0 %v4689
    %5890 = vmatpush1.bf16.msra.mxu0 %v4688
    %5891 = vmatprep.subr.bf16.mxu0 %v4697
    %5892 = vmatpush1.bf16.msra.mxu0 %v4696
    %5893 = vmatprep.subr.bf16.mxu0 %v4705
    %5894 = vmatpush1.bf16.msra.mxu0 %v4704
    %5895 = vmatprep.mubr.bf16.mxu0 %v2103
    %5896 = vmatmul.mubr.bf16.gmra.mrb[0].mxu0 %v2102
    %v5897 = vpop.f32.mrb[0].mxu0
    %v5898 = vadd.f32 %v5855, %v5897
    %v5899 = vpop.f32.mrb[0].mxu0
    %v5900 = vadd.f32 %v5857, %v5899
    %v5901 = vpop.f32.mrb[0].mxu0
    %v5902 = vadd.f32 %v5859, %v5901
    %v5903 = vpop.f32.mrb[0].mxu0
    %v5904 = vadd.f32 %v5861, %v5903
    %5905 = vdwg.mxu0
    %v5906 = vmax.f32 %v5382, 0.0
    %v5907 = vmax.f32 %v5384, 0.0
    %v5908 = vmax.f32 %v5554, 0.0
    %v5909 = vmax.f32 %v5556, 0.0
    %v5910 = vmax.f32 %v5726, 0.0
    %v5911 = vmax.f32 %v5728, 0.0
    %v5912 = vmax.f32 %v5898, 0.0
    %v5913 = vmax.f32 %v5900, 0.0
    %v5914 = vmax.f32 %v5386, 0.0
    %v5915 = vmax.f32 %v5388, 0.0
    %v5916 = vmax.f32 %v5558, 0.0
    %v5917 = vmax.f32 %v5560, 0.0
    %v5918 = vmax.f32 %v5730, 0.0
    %v5919 = vmax.f32 %v5732, 0.0
    %v5920 = vmax.f32 %v5902, 0.0
    %v5921 = vmax.f32 %v5904, 0.0
    %v5922 = vpack.c.bf16 %v5914, %v5906
    %v5923 = vpack.c.bf16 %v5915, %v5907
    %v5924 = vpack.c.bf16 %v5916, %v5908
    %v5925 = vpack.c.bf16 %v5917, %v5909
    %v5926 = vpack.c.bf16 %v5918, %v5910
    %v5927 = vpack.c.bf16 %v5919, %v5911
    %v5928 = vpack.c.bf16 %v5920, %v5912
    %v5929 = vpack.c.bf16 %v5921, %v5913
    %v5930 = vld [vmem:[#allocation10] sm:$0xff]
    %v5931 = vld [vmem:[#allocation10 + $0x8] sm:$0xff]
    %v5932 = vld [vmem:[#allocation10 + $0x10] sm:$0xff]
    %v5933 = vld [vmem:[#allocation10 + $0x18] sm:$0xff]
    %v5934 = vld [vmem:[#allocation10 + $0x20] sm:$0xff]
    %v5935 = vld [vmem:[#allocation10 + $0x28] sm:$0xff]
    %v5936 = vld [vmem:[#allocation10 + $0x30] sm:$0xff]
    %v5937 = vld [vmem:[#allocation10 + $0x38] sm:$0xff]
    %v5938 = vld [vmem:[#allocation10 + $0x40] sm:$0xff]
    %v5939 = vld [vmem:[#allocation10 + $0x48] sm:$0xff]
    %v5940 = vld [vmem:[#allocation10 + $0x50] sm:$0xff]
    %v5941 = vld [vmem:[#allocation10 + $0x58] sm:$0xff]
    %v5942 = vld [vmem:[#allocation10 + $0x60] sm:$0xff]
    %v5943 = vld [vmem:[#allocation10 + $0x68] sm:$0xff]
    %v5944 = vld [vmem:[#allocation10 + $0x70] sm:$0xff]
    %v5945 = vld [vmem:[#allocation10 + $0x78] sm:$0xff]
    %v5946 = vld [vmem:[#allocation10 + $0x80] sm:$0xff]
    %v5947 = vld [vmem:[#allocation10 + $0x88] sm:$0xff]
    %v5948 = vld [vmem:[#allocation10 + $0x90] sm:$0xff]
    %v5949 = vld [vmem:[#allocation10 + $0x98] sm:$0xff]
    %v5950 = vld [vmem:[#allocation10 + $0xa0] sm:$0xff]
    %v5951 = vld [vmem:[#allocation10 + $0xa8] sm:$0xff]
    %v5952 = vld [vmem:[#allocation10 + $0xb0] sm:$0xff]
    %v5953 = vld [vmem:[#allocation10 + $0xb8] sm:$0xff]
    %v5954 = vld [vmem:[#allocation10 + $0xc0] sm:$0xff]
    %v5955 = vld [vmem:[#allocation10 + $0xc8] sm:$0xff]
    %v5956 = vld [vmem:[#allocation10 + $0xd0] sm:$0xff]
    %v5957 = vld [vmem:[#allocation10 + $0xd8] sm:$0xff]
    %v5958 = vld [vmem:[#allocation10 + $0xe0] sm:$0xff]
    %v5959 = vld [vmem:[#allocation10 + $0xe8] sm:$0xff]
    %v5960 = vld [vmem:[#allocation10 + $0xf0] sm:$0xff]
    %v5961 = vld [vmem:[#allocation10 + $0xf8] sm:$0xff]
    %v5962 = vld [vmem:[#allocation10 + $0x100] sm:$0xff]
    %v5963 = vld [vmem:[#allocation10 + $0x108] sm:$0xff]
    %v5964 = vld [vmem:[#allocation10 + $0x110] sm:$0xff]
    %v5965 = vld [vmem:[#allocation10 + $0x118] sm:$0xff]
    %v5966 = vld [vmem:[#allocation10 + $0x120] sm:$0xff]
    %v5967 = vld [vmem:[#allocation10 + $0x128] sm:$0xff]
    %v5968 = vld [vmem:[#allocation10 + $0x130] sm:$0xff]
    %v5969 = vld [vmem:[#allocation10 + $0x138] sm:$0xff]
    %v5970 = vld [vmem:[#allocation10 + $0x140] sm:$0xff]
    %v5971 = vld [vmem:[#allocation10 + $0x148] sm:$0xff]
    %v5972 = vld [vmem:[#allocation10 + $0x150] sm:$0xff]
    %v5973 = vld [vmem:[#allocation10 + $0x158] sm:$0xff]
    %v5974 = vld [vmem:[#allocation10 + $0x160] sm:$0xff]
    %v5975 = vld [vmem:[#allocation10 + $0x168] sm:$0xff]
    %v5976 = vld [vmem:[#allocation10 + $0x170] sm:$0xff]
    %v5977 = vld [vmem:[#allocation10 + $0x178] sm:$0xff]
    %v5978 = vld [vmem:[#allocation10 + $0x180] sm:$0xff]
    %v5979 = vld [vmem:[#allocation10 + $0x188] sm:$0xff]
    %v5980 = vld [vmem:[#allocation10 + $0x190] sm:$0xff]
    %v5981 = vld [vmem:[#allocation10 + $0x198] sm:$0xff]
    %v5982 = vld [vmem:[#allocation10 + $0x1a0] sm:$0xff]
    %v5983 = vld [vmem:[#allocation10 + $0x1a8] sm:$0xff]
    %v5984 = vld [vmem:[#allocation10 + $0x1b0] sm:$0xff]
    %v5985 = vld [vmem:[#allocation10 + $0x1b8] sm:$0xff]
    %v5986 = vld [vmem:[#allocation10 + $0x1c0] sm:$0xff]
    %v5987 = vld [vmem:[#allocation10 + $0x1c8] sm:$0xff]
    %v5988 = vld [vmem:[#allocation10 + $0x1d0] sm:$0xff]
    %v5989 = vld [vmem:[#allocation10 + $0x1d8] sm:$0xff]
    %v5990 = vld [vmem:[#allocation10 + $0x1e0] sm:$0xff]
    %v5991 = vld [vmem:[#allocation10 + $0x1e8] sm:$0xff]
    %v5992 = vld [vmem:[#allocation10 + $0x1f0] sm:$0xff]
    %v5993 = vld [vmem:[#allocation10 + $0x1f8] sm:$0xff]
    %v5994 = vld [vmem:[#allocation10 + $0x200] sm:$0xff]
    %v5995 = vld [vmem:[#allocation10 + $0x208] sm:$0xff]
    %v5996 = vld [vmem:[#allocation10 + $0x210] sm:$0xff]
    %v5997 = vld [vmem:[#allocation10 + $0x218] sm:$0xff]
    %v5998 = vld [vmem:[#allocation10 + $0x220] sm:$0xff]
    %v5999 = vld [vmem:[#allocation10 + $0x228] sm:$0xff]
    %v6000 = vld [vmem:[#allocation10 + $0x230] sm:$0xff]
    %v6001 = vld [vmem:[#allocation10 + $0x238] sm:$0xff]
    %v6002 = vld [vmem:[#allocation10 + $0x240] sm:$0xff]
    %v6003 = vld [vmem:[#allocation10 + $0x248] sm:$0xff]
    %v6004 = vld [vmem:[#allocation10 + $0x250] sm:$0xff]
    %v6005 = vld [vmem:[#allocation10 + $0x258] sm:$0xff]
    %v6006 = vld [vmem:[#allocation10 + $0x260] sm:$0xff]
    %v6007 = vld [vmem:[#allocation10 + $0x268] sm:$0xff]
    %v6008 = vld [vmem:[#allocation10 + $0x270] sm:$0xff]
    %v6009 = vld [vmem:[#allocation10 + $0x278] sm:$0xff]
    %v6010 = vld [vmem:[#allocation10 + $0x280] sm:$0xff]
    %v6011 = vld [vmem:[#allocation10 + $0x288] sm:$0xff]
    %v6012 = vld [vmem:[#allocation10 + $0x290] sm:$0xff]
    %v6013 = vld [vmem:[#allocation10 + $0x298] sm:$0xff]
    %v6014 = vld [vmem:[#allocation10 + $0x2a0] sm:$0xff]
    %v6015 = vld [vmem:[#allocation10 + $0x2a8] sm:$0xff]
    %v6016 = vld [vmem:[#allocation10 + $0x2b0] sm:$0xff]
    %v6017 = vld [vmem:[#allocation10 + $0x2b8] sm:$0xff]
    %v6018 = vld [vmem:[#allocation10 + $0x2c0] sm:$0xff]
    %v6019 = vld [vmem:[#allocation10 + $0x2c8] sm:$0xff]
    %v6020 = vld [vmem:[#allocation10 + $0x2d0] sm:$0xff]
    %v6021 = vld [vmem:[#allocation10 + $0x2d8] sm:$0xff]
    %v6022 = vld [vmem:[#allocation10 + $0x2e0] sm:$0xff]
    %v6023 = vld [vmem:[#allocation10 + $0x2e8] sm:$0xff]
    %v6024 = vld [vmem:[#allocation10 + $0x2f0] sm:$0xff]
    %v6025 = vld [vmem:[#allocation10 + $0x2f8] sm:$0xff]
    %v6026 = vld [vmem:[#allocation10 + $0x300] sm:$0xff]
    %v6027 = vld [vmem:[#allocation10 + $0x308] sm:$0xff]
    %v6028 = vld [vmem:[#allocation10 + $0x310] sm:$0xff]
    %v6029 = vld [vmem:[#allocation10 + $0x318] sm:$0xff]
    %v6030 = vld [vmem:[#allocation10 + $0x320] sm:$0xff]
    %v6031 = vld [vmem:[#allocation10 + $0x328] sm:$0xff]
    %v6032 = vld [vmem:[#allocation10 + $0x330] sm:$0xff]
    %v6033 = vld [vmem:[#allocation10 + $0x338] sm:$0xff]
    %v6034 = vld [vmem:[#allocation10 + $0x340] sm:$0xff]
    %v6035 = vld [vmem:[#allocation10 + $0x348] sm:$0xff]
    %v6036 = vld [vmem:[#allocation10 + $0x350] sm:$0xff]
    %v6037 = vld [vmem:[#allocation10 + $0x358] sm:$0xff]
    %v6038 = vld [vmem:[#allocation10 + $0x360] sm:$0xff]
    %v6039 = vld [vmem:[#allocation10 + $0x368] sm:$0xff]
    %v6040 = vld [vmem:[#allocation10 + $0x370] sm:$0xff]
    %v6041 = vld [vmem:[#allocation10 + $0x378] sm:$0xff]
    %v6042 = vld [vmem:[#allocation10 + $0x380] sm:$0xff]
    %v6043 = vld [vmem:[#allocation10 + $0x388] sm:$0xff]
    %v6044 = vld [vmem:[#allocation10 + $0x390] sm:$0xff]
    %v6045 = vld [vmem:[#allocation10 + $0x398] sm:$0xff]
    %v6046 = vld [vmem:[#allocation10 + $0x3a0] sm:$0xff]
    %v6047 = vld [vmem:[#allocation10 + $0x3a8] sm:$0xff]
    %v6048 = vld [vmem:[#allocation10 + $0x3b0] sm:$0xff]
    %v6049 = vld [vmem:[#allocation10 + $0x3b8] sm:$0xff]
    %v6050 = vld [vmem:[#allocation10 + $0x3c0] sm:$0xff]
    %v6051 = vld [vmem:[#allocation10 + $0x3c8] sm:$0xff]
    %v6052 = vld [vmem:[#allocation10 + $0x3d0] sm:$0xff]
    %v6053 = vld [vmem:[#allocation10 + $0x3d8] sm:$0xff]
    %v6054 = vld [vmem:[#allocation10 + $0x3e0] sm:$0xff]
    %v6055 = vld [vmem:[#allocation10 + $0x3e8] sm:$0xff]
    %v6056 = vld [vmem:[#allocation10 + $0x3f0] sm:$0xff]
    %v6057 = vld [vmem:[#allocation10 + $0x3f8] sm:$0xff]
    %v6058 = vld [vmem:[#allocation10 + $0x400] sm:$0xff]
    %v6059 = vld [vmem:[#allocation10 + $0x408] sm:$0xff]
    %v6060 = vld [vmem:[#allocation10 + $0x410] sm:$0xff]
    %v6061 = vld [vmem:[#allocation10 + $0x418] sm:$0xff]
    %v6062 = vld [vmem:[#allocation10 + $0x420] sm:$0xff]
    %v6063 = vld [vmem:[#allocation10 + $0x428] sm:$0xff]
    %v6064 = vld [vmem:[#allocation10 + $0x430] sm:$0xff]
    %v6065 = vld [vmem:[#allocation10 + $0x438] sm:$0xff]
    %v6066 = vld [vmem:[#allocation10 + $0x440] sm:$0xff]
    %v6067 = vld [vmem:[#allocation10 + $0x448] sm:$0xff]
    %v6068 = vld [vmem:[#allocation10 + $0x450] sm:$0xff]
    %v6069 = vld [vmem:[#allocation10 + $0x458] sm:$0xff]
    %v6070 = vld [vmem:[#allocation10 + $0x460] sm:$0xff]
    %v6071 = vld [vmem:[#allocation10 + $0x468] sm:$0xff]
    %v6072 = vld [vmem:[#allocation10 + $0x470] sm:$0xff]
    %v6073 = vld [vmem:[#allocation10 + $0x478] sm:$0xff]
    %v6074 = vld [vmem:[#allocation10 + $0x480] sm:$0xff]
    %v6075 = vld [vmem:[#allocation10 + $0x488] sm:$0xff]
    %v6076 = vld [vmem:[#allocation10 + $0x490] sm:$0xff]
    %v6077 = vld [vmem:[#allocation10 + $0x498] sm:$0xff]
    %v6078 = vld [vmem:[#allocation10 + $0x4a0] sm:$0xff]
    %v6079 = vld [vmem:[#allocation10 + $0x4a8] sm:$0xff]
    %v6080 = vld [vmem:[#allocation10 + $0x4b0] sm:$0xff]
    %v6081 = vld [vmem:[#allocation10 + $0x4b8] sm:$0xff]
    %v6082 = vld [vmem:[#allocation10 + $0x4c0] sm:$0xff]
    %v6083 = vld [vmem:[#allocation10 + $0x4c8] sm:$0xff]
    %v6084 = vld [vmem:[#allocation10 + $0x4d0] sm:$0xff]
    %v6085 = vld [vmem:[#allocation10 + $0x4d8] sm:$0xff]
    %v6086 = vld [vmem:[#allocation10 + $0x4e0] sm:$0xff]
    %v6087 = vld [vmem:[#allocation10 + $0x4e8] sm:$0xff]
    %v6088 = vld [vmem:[#allocation10 + $0x4f0] sm:$0xff]
    %v6089 = vld [vmem:[#allocation10 + $0x4f8] sm:$0xff]
    %v6090 = vld [vmem:[#allocation10 + $0x500] sm:$0xff]
    %v6091 = vld [vmem:[#allocation10 + $0x508] sm:$0xff]
    %v6092 = vld [vmem:[#allocation10 + $0x510] sm:$0xff]
    %v6093 = vld [vmem:[#allocation10 + $0x518] sm:$0xff]
    %v6094 = vld [vmem:[#allocation10 + $0x520] sm:$0xff]
    %v6095 = vld [vmem:[#allocation10 + $0x528] sm:$0xff]
    %v6096 = vld [vmem:[#allocation10 + $0x530] sm:$0xff]
    %v6097 = vld [vmem:[#allocation10 + $0x538] sm:$0xff]
    %v6098 = vld [vmem:[#allocation10 + $0x540] sm:$0xff]
    %v6099 = vld [vmem:[#allocation10 + $0x548] sm:$0xff]
    %v6100 = vld [vmem:[#allocation10 + $0x550] sm:$0xff]
    %v6101 = vld [vmem:[#allocation10 + $0x558] sm:$0xff]
    %v6102 = vld [vmem:[#allocation10 + $0x560] sm:$0xff]
    %v6103 = vld [vmem:[#allocation10 + $0x568] sm:$0xff]
    %v6104 = vld [vmem:[#allocation10 + $0x570] sm:$0xff]
    %v6105 = vld [vmem:[#allocation10 + $0x578] sm:$0xff]
    %v6106 = vld [vmem:[#allocation10 + $0x580] sm:$0xff]
    %v6107 = vld [vmem:[#allocation10 + $0x588] sm:$0xff]
    %v6108 = vld [vmem:[#allocation10 + $0x590] sm:$0xff]
    %v6109 = vld [vmem:[#allocation10 + $0x598] sm:$0xff]
    %v6110 = vld [vmem:[#allocation10 + $0x5a0] sm:$0xff]
    %v6111 = vld [vmem:[#allocation10 + $0x5a8] sm:$0xff]
    %v6112 = vld [vmem:[#allocation10 + $0x5b0] sm:$0xff]
    %v6113 = vld [vmem:[#allocation10 + $0x5b8] sm:$0xff]
    %v6114 = vld [vmem:[#allocation10 + $0x5c0] sm:$0xff]
    %v6115 = vld [vmem:[#allocation10 + $0x5c8] sm:$0xff]
    %v6116 = vld [vmem:[#allocation10 + $0x5d0] sm:$0xff]
    %v6117 = vld [vmem:[#allocation10 + $0x5d8] sm:$0xff]
    %v6118 = vld [vmem:[#allocation10 + $0x5e0] sm:$0xff]
    %v6119 = vld [vmem:[#allocation10 + $0x5e8] sm:$0xff]
    %v6120 = vld [vmem:[#allocation10 + $0x5f0] sm:$0xff]
    %v6121 = vld [vmem:[#allocation10 + $0x5f8] sm:$0xff]
    %v6122 = vld [vmem:[#allocation10 + $0x600] sm:$0xff]
    %v6123 = vld [vmem:[#allocation10 + $0x608] sm:$0xff]
    %v6124 = vld [vmem:[#allocation10 + $0x610] sm:$0xff]
    %v6125 = vld [vmem:[#allocation10 + $0x618] sm:$0xff]
    %v6126 = vld [vmem:[#allocation10 + $0x620] sm:$0xff]
    %v6127 = vld [vmem:[#allocation10 + $0x628] sm:$0xff]
    %v6128 = vld [vmem:[#allocation10 + $0x630] sm:$0xff]
    %v6129 = vld [vmem:[#allocation10 + $0x638] sm:$0xff]
    %v6130 = vld [vmem:[#allocation10 + $0x640] sm:$0xff]
    %v6131 = vld [vmem:[#allocation10 + $0x648] sm:$0xff]
    %v6132 = vld [vmem:[#allocation10 + $0x650] sm:$0xff]
    %v6133 = vld [vmem:[#allocation10 + $0x658] sm:$0xff]
    %v6134 = vld [vmem:[#allocation10 + $0x660] sm:$0xff]
    %v6135 = vld [vmem:[#allocation10 + $0x668] sm:$0xff]
    %v6136 = vld [vmem:[#allocation10 + $0x670] sm:$0xff]
    %v6137 = vld [vmem:[#allocation10 + $0x678] sm:$0xff]
    %v6138 = vld [vmem:[#allocation10 + $0x680] sm:$0xff]
    %v6139 = vld [vmem:[#allocation10 + $0x688] sm:$0xff]
    %v6140 = vld [vmem:[#allocation10 + $0x690] sm:$0xff]
    %v6141 = vld [vmem:[#allocation10 + $0x698] sm:$0xff]
    %v6142 = vld [vmem:[#allocation10 + $0x6a0] sm:$0xff]
    %v6143 = vld [vmem:[#allocation10 + $0x6a8] sm:$0xff]
    %v6144 = vld [vmem:[#allocation10 + $0x6b0] sm:$0xff]
    %v6145 = vld [vmem:[#allocation10 + $0x6b8] sm:$0xff]
    %v6146 = vld [vmem:[#allocation10 + $0x6c0] sm:$0xff]
    %v6147 = vld [vmem:[#allocation10 + $0x6c8] sm:$0xff]
    %v6148 = vld [vmem:[#allocation10 + $0x6d0] sm:$0xff]
    %v6149 = vld [vmem:[#allocation10 + $0x6d8] sm:$0xff]
    %v6150 = vld [vmem:[#allocation10 + $0x6e0] sm:$0xff]
    %v6151 = vld [vmem:[#allocation10 + $0x6e8] sm:$0xff]
    %v6152 = vld [vmem:[#allocation10 + $0x6f0] sm:$0xff]
    %v6153 = vld [vmem:[#allocation10 + $0x6f8] sm:$0xff]
    %v6154 = vld [vmem:[#allocation10 + $0x700] sm:$0xff]
    %v6155 = vld [vmem:[#allocation10 + $0x708] sm:$0xff]
    %v6156 = vld [vmem:[#allocation10 + $0x710] sm:$0xff]
    %v6157 = vld [vmem:[#allocation10 + $0x718] sm:$0xff]
    %v6158 = vld [vmem:[#allocation10 + $0x720] sm:$0xff]
    %v6159 = vld [vmem:[#allocation10 + $0x728] sm:$0xff]
    %v6160 = vld [vmem:[#allocation10 + $0x730] sm:$0xff]
    %v6161 = vld [vmem:[#allocation10 + $0x738] sm:$0xff]
    %v6162 = vld [vmem:[#allocation10 + $0x740] sm:$0xff]
    %v6163 = vld [vmem:[#allocation10 + $0x748] sm:$0xff]
    %v6164 = vld [vmem:[#allocation10 + $0x750] sm:$0xff]
    %v6165 = vld [vmem:[#allocation10 + $0x758] sm:$0xff]
    %v6166 = vld [vmem:[#allocation10 + $0x760] sm:$0xff]
    %v6167 = vld [vmem:[#allocation10 + $0x768] sm:$0xff]
    %v6168 = vld [vmem:[#allocation10 + $0x770] sm:$0xff]
    %v6169 = vld [vmem:[#allocation10 + $0x778] sm:$0xff]
    %v6170 = vld [vmem:[#allocation10 + $0x780] sm:$0xff]
    %v6171 = vld [vmem:[#allocation10 + $0x788] sm:$0xff]
    %v6172 = vld [vmem:[#allocation10 + $0x790] sm:$0xff]
    %v6173 = vld [vmem:[#allocation10 + $0x798] sm:$0xff]
    %v6174 = vld [vmem:[#allocation10 + $0x7a0] sm:$0xff]
    %v6175 = vld [vmem:[#allocation10 + $0x7a8] sm:$0xff]
    %v6176 = vld [vmem:[#allocation10 + $0x7b0] sm:$0xff]
    %v6177 = vld [vmem:[#allocation10 + $0x7b8] sm:$0xff]
    %v6178 = vld [vmem:[#allocation10 + $0x7c0] sm:$0xff]
    %v6179 = vld [vmem:[#allocation10 + $0x7c8] sm:$0xff]
    %v6180 = vld [vmem:[#allocation10 + $0x7d0] sm:$0xff]
    %v6181 = vld [vmem:[#allocation10 + $0x7d8] sm:$0xff]
    %v6182 = vld [vmem:[#allocation10 + $0x7e0] sm:$0xff]
    %v6183 = vld [vmem:[#allocation10 + $0x7e8] sm:$0xff]
    %v6184 = vld [vmem:[#allocation10 + $0x7f0] sm:$0xff]
    %v6185 = vld [vmem:[#allocation10 + $0x7f8] sm:$0xff]
    %v6186 = vld [vmem:[#allocation10 + $0x800] sm:$0xff]
    %v6187 = vld [vmem:[#allocation10 + $0x808] sm:$0xff]
    %v6188 = vld [vmem:[#allocation10 + $0x810] sm:$0xff]
    %v6189 = vld [vmem:[#allocation10 + $0x818] sm:$0xff]
    %v6190 = vld [vmem:[#allocation10 + $0x820] sm:$0xff]
    %v6191 = vld [vmem:[#allocation10 + $0x828] sm:$0xff]
    %v6192 = vld [vmem:[#allocation10 + $0x830] sm:$0xff]
    %v6193 = vld [vmem:[#allocation10 + $0x838] sm:$0xff]
    %v6194 = vld [vmem:[#allocation10 + $0x840] sm:$0xff]
    %v6195 = vld [vmem:[#allocation10 + $0x848] sm:$0xff]
    %v6196 = vld [vmem:[#allocation10 + $0x850] sm:$0xff]
    %v6197 = vld [vmem:[#allocation10 + $0x858] sm:$0xff]
    %v6198 = vld [vmem:[#allocation10 + $0x860] sm:$0xff]
    %v6199 = vld [vmem:[#allocation10 + $0x868] sm:$0xff]
    %v6200 = vld [vmem:[#allocation10 + $0x870] sm:$0xff]
    %v6201 = vld [vmem:[#allocation10 + $0x878] sm:$0xff]
    %v6202 = vld [vmem:[#allocation10 + $0x880] sm:$0xff]
    %v6203 = vld [vmem:[#allocation10 + $0x888] sm:$0xff]
    %v6204 = vld [vmem:[#allocation10 + $0x890] sm:$0xff]
    %v6205 = vld [vmem:[#allocation10 + $0x898] sm:$0xff]
    %v6206 = vld [vmem:[#allocation10 + $0x8a0] sm:$0xff]
    %v6207 = vld [vmem:[#allocation10 + $0x8a8] sm:$0xff]
    %v6208 = vld [vmem:[#allocation10 + $0x8b0] sm:$0xff]
    %v6209 = vld [vmem:[#allocation10 + $0x8b8] sm:$0xff]
    %v6210 = vld [vmem:[#allocation10 + $0x8c0] sm:$0xff]
    %v6211 = vld [vmem:[#allocation10 + $0x8c8] sm:$0xff]
    %v6212 = vld [vmem:[#allocation10 + $0x8d0] sm:$0xff]
    %v6213 = vld [vmem:[#allocation10 + $0x8d8] sm:$0xff]
    %v6214 = vld [vmem:[#allocation10 + $0x8e0] sm:$0xff]
    %v6215 = vld [vmem:[#allocation10 + $0x8e8] sm:$0xff]
    %v6216 = vld [vmem:[#allocation10 + $0x8f0] sm:$0xff]
    %v6217 = vld [vmem:[#allocation10 + $0x8f8] sm:$0xff]
    %v6218 = vld [vmem:[#allocation10 + $0x900] sm:$0xff]
    %v6219 = vld [vmem:[#allocation10 + $0x908] sm:$0xff]
    %v6220 = vld [vmem:[#allocation10 + $0x910] sm:$0xff]
    %v6221 = vld [vmem:[#allocation10 + $0x918] sm:$0xff]
    %v6222 = vld [vmem:[#allocation10 + $0x920] sm:$0xff]
    %v6223 = vld [vmem:[#allocation10 + $0x928] sm:$0xff]
    %v6224 = vld [vmem:[#allocation10 + $0x930] sm:$0xff]
    %v6225 = vld [vmem:[#allocation10 + $0x938] sm:$0xff]
    %v6226 = vld [vmem:[#allocation10 + $0x940] sm:$0xff]
    %v6227 = vld [vmem:[#allocation10 + $0x948] sm:$0xff]
    %v6228 = vld [vmem:[#allocation10 + $0x950] sm:$0xff]
    %v6229 = vld [vmem:[#allocation10 + $0x958] sm:$0xff]
    %v6230 = vld [vmem:[#allocation10 + $0x960] sm:$0xff]
    %v6231 = vld [vmem:[#allocation10 + $0x968] sm:$0xff]
    %v6232 = vld [vmem:[#allocation10 + $0x970] sm:$0xff]
    %v6233 = vld [vmem:[#allocation10 + $0x978] sm:$0xff]
    %v6234 = vld [vmem:[#allocation10 + $0x980] sm:$0xff]
    %v6235 = vld [vmem:[#allocation10 + $0x988] sm:$0xff]
    %v6236 = vld [vmem:[#allocation10 + $0x990] sm:$0xff]
    %v6237 = vld [vmem:[#allocation10 + $0x998] sm:$0xff]
    %v6238 = vld [vmem:[#allocation10 + $0x9a0] sm:$0xff]
    %v6239 = vld [vmem:[#allocation10 + $0x9a8] sm:$0xff]
    %v6240 = vld [vmem:[#allocation10 + $0x9b0] sm:$0xff]
    %v6241 = vld [vmem:[#allocation10 + $0x9b8] sm:$0xff]
    %v6242 = vld [vmem:[#allocation10 + $0x9c0] sm:$0xff]
    %v6243 = vld [vmem:[#allocation10 + $0x9c8] sm:$0xff]
    %v6244 = vld [vmem:[#allocation10 + $0x9d0] sm:$0xff]
    %v6245 = vld [vmem:[#allocation10 + $0x9d8] sm:$0xff]
    %v6246 = vld [vmem:[#allocation10 + $0x9e0] sm:$0xff]
    %v6247 = vld [vmem:[#allocation10 + $0x9e8] sm:$0xff]
    %v6248 = vld [vmem:[#allocation10 + $0x9f0] sm:$0xff]
    %v6249 = vld [vmem:[#allocation10 + $0x9f8] sm:$0xff]
    %v6250 = vld [vmem:[#allocation10 + $0xa00] sm:$0xff]
    %v6251 = vld [vmem:[#allocation10 + $0xa08] sm:$0xff]
    %v6252 = vld [vmem:[#allocation10 + $0xa10] sm:$0xff]
    %v6253 = vld [vmem:[#allocation10 + $0xa18] sm:$0xff]
    %v6254 = vld [vmem:[#allocation10 + $0xa20] sm:$0xff]
    %v6255 = vld [vmem:[#allocation10 + $0xa28] sm:$0xff]
    %v6256 = vld [vmem:[#allocation10 + $0xa30] sm:$0xff]
    %v6257 = vld [vmem:[#allocation10 + $0xa38] sm:$0xff]
    %v6258 = vld [vmem:[#allocation10 + $0xa40] sm:$0xff]
    %v6259 = vld [vmem:[#allocation10 + $0xa48] sm:$0xff]
    %v6260 = vld [vmem:[#allocation10 + $0xa50] sm:$0xff]
    %v6261 = vld [vmem:[#allocation10 + $0xa58] sm:$0xff]
    %v6262 = vld [vmem:[#allocation10 + $0xa60] sm:$0xff]
    %v6263 = vld [vmem:[#allocation10 + $0xa68] sm:$0xff]
    %v6264 = vld [vmem:[#allocation10 + $0xa70] sm:$0xff]
    %v6265 = vld [vmem:[#allocation10 + $0xa78] sm:$0xff]
    %v6266 = vld [vmem:[#allocation10 + $0xa80] sm:$0xff]
    %v6267 = vld [vmem:[#allocation10 + $0xa88] sm:$0xff]
    %v6268 = vld [vmem:[#allocation10 + $0xa90] sm:$0xff]
    %v6269 = vld [vmem:[#allocation10 + $0xa98] sm:$0xff]
    %v6270 = vld [vmem:[#allocation10 + $0xaa0] sm:$0xff]
    %v6271 = vld [vmem:[#allocation10 + $0xaa8] sm:$0xff]
    %v6272 = vld [vmem:[#allocation10 + $0xab0] sm:$0xff]
    %v6273 = vld [vmem:[#allocation10 + $0xab8] sm:$0xff]
    %v6274 = vld [vmem:[#allocation10 + $0xac0] sm:$0xff]
    %v6275 = vld [vmem:[#allocation10 + $0xac8] sm:$0xff]
    %v6276 = vld [vmem:[#allocation10 + $0xad0] sm:$0xff]
    %v6277 = vld [vmem:[#allocation10 + $0xad8] sm:$0xff]
    %v6278 = vld [vmem:[#allocation10 + $0xae0] sm:$0xff]
    %v6279 = vld [vmem:[#allocation10 + $0xae8] sm:$0xff]
    %v6280 = vld [vmem:[#allocation10 + $0xaf0] sm:$0xff]
    %v6281 = vld [vmem:[#allocation10 + $0xaf8] sm:$0xff]
    %v6282 = vld [vmem:[#allocation10 + $0xb00] sm:$0xff]
    %v6283 = vld [vmem:[#allocation10 + $0xb08] sm:$0xff]
    %v6284 = vld [vmem:[#allocation10 + $0xb10] sm:$0xff]
    %v6285 = vld [vmem:[#allocation10 + $0xb18] sm:$0xff]
    %v6286 = vld [vmem:[#allocation10 + $0xb20] sm:$0xff]
    %v6287 = vld [vmem:[#allocation10 + $0xb28] sm:$0xff]
    %v6288 = vld [vmem:[#allocation10 + $0xb30] sm:$0xff]
    %v6289 = vld [vmem:[#allocation10 + $0xb38] sm:$0xff]
    %v6290 = vld [vmem:[#allocation10 + $0xb40] sm:$0xff]
    %v6291 = vld [vmem:[#allocation10 + $0xb48] sm:$0xff]
    %v6292 = vld [vmem:[#allocation10 + $0xb50] sm:$0xff]
    %v6293 = vld [vmem:[#allocation10 + $0xb58] sm:$0xff]
    %v6294 = vld [vmem:[#allocation10 + $0xb60] sm:$0xff]
    %v6295 = vld [vmem:[#allocation10 + $0xb68] sm:$0xff]
    %v6296 = vld [vmem:[#allocation10 + $0xb70] sm:$0xff]
    %v6297 = vld [vmem:[#allocation10 + $0xb78] sm:$0xff]
    %v6298 = vld [vmem:[#allocation10 + $0xb80] sm:$0xff]
    %v6299 = vld [vmem:[#allocation10 + $0xb88] sm:$0xff]
    %v6300 = vld [vmem:[#allocation10 + $0xb90] sm:$0xff]
    %v6301 = vld [vmem:[#allocation10 + $0xb98] sm:$0xff]
    %v6302 = vld [vmem:[#allocation10 + $0xba0] sm:$0xff]
    %v6303 = vld [vmem:[#allocation10 + $0xba8] sm:$0xff]
    %v6304 = vld [vmem:[#allocation10 + $0xbb0] sm:$0xff]
    %v6305 = vld [vmem:[#allocation10 + $0xbb8] sm:$0xff]
    %v6306 = vld [vmem:[#allocation10 + $0xbc0] sm:$0xff]
    %v6307 = vld [vmem:[#allocation10 + $0xbc8] sm:$0xff]
    %v6308 = vld [vmem:[#allocation10 + $0xbd0] sm:$0xff]
    %v6309 = vld [vmem:[#allocation10 + $0xbd8] sm:$0xff]
    %v6310 = vld [vmem:[#allocation10 + $0xbe0] sm:$0xff]
    %v6311 = vld [vmem:[#allocation10 + $0xbe8] sm:$0xff]
    %v6312 = vld [vmem:[#allocation10 + $0xbf0] sm:$0xff]
    %v6313 = vld [vmem:[#allocation10 + $0xbf8] sm:$0xff]
    %v6314 = vld [vmem:[#allocation10 + $0xc00] sm:$0xff]
    %v6315 = vld [vmem:[#allocation10 + $0xc08] sm:$0xff]
    %v6316 = vld [vmem:[#allocation10 + $0xc10] sm:$0xff]
    %v6317 = vld [vmem:[#allocation10 + $0xc18] sm:$0xff]
    %v6318 = vld [vmem:[#allocation10 + $0xc20] sm:$0xff]
    %v6319 = vld [vmem:[#allocation10 + $0xc28] sm:$0xff]
    %v6320 = vld [vmem:[#allocation10 + $0xc30] sm:$0xff]
    %v6321 = vld [vmem:[#allocation10 + $0xc38] sm:$0xff]
    %v6322 = vld [vmem:[#allocation10 + $0xc40] sm:$0xff]
    %v6323 = vld [vmem:[#allocation10 + $0xc48] sm:$0xff]
    %v6324 = vld [vmem:[#allocation10 + $0xc50] sm:$0xff]
    %v6325 = vld [vmem:[#allocation10 + $0xc58] sm:$0xff]
    %v6326 = vld [vmem:[#allocation10 + $0xc60] sm:$0xff]
    %v6327 = vld [vmem:[#allocation10 + $0xc68] sm:$0xff]
    %v6328 = vld [vmem:[#allocation10 + $0xc70] sm:$0xff]
    %v6329 = vld [vmem:[#allocation10 + $0xc78] sm:$0xff]
    %v6330 = vld [vmem:[#allocation10 + $0xc80] sm:$0xff]
    %v6331 = vld [vmem:[#allocation10 + $0xc88] sm:$0xff]
    %v6332 = vld [vmem:[#allocation10 + $0xc90] sm:$0xff]
    %v6333 = vld [vmem:[#allocation10 + $0xc98] sm:$0xff]
    %v6334 = vld [vmem:[#allocation10 + $0xca0] sm:$0xff]
    %v6335 = vld [vmem:[#allocation10 + $0xca8] sm:$0xff]
    %v6336 = vld [vmem:[#allocation10 + $0xcb0] sm:$0xff]
    %v6337 = vld [vmem:[#allocation10 + $0xcb8] sm:$0xff]
    %v6338 = vld [vmem:[#allocation10 + $0xcc0] sm:$0xff]
    %v6339 = vld [vmem:[#allocation10 + $0xcc8] sm:$0xff]
    %v6340 = vld [vmem:[#allocation10 + $0xcd0] sm:$0xff]
    %v6341 = vld [vmem:[#allocation10 + $0xcd8] sm:$0xff]
    %v6342 = vld [vmem:[#allocation10 + $0xce0] sm:$0xff]
    %v6343 = vld [vmem:[#allocation10 + $0xce8] sm:$0xff]
    %v6344 = vld [vmem:[#allocation10 + $0xcf0] sm:$0xff]
    %v6345 = vld [vmem:[#allocation10 + $0xcf8] sm:$0xff]
    %v6346 = vld [vmem:[#allocation10 + $0xd00] sm:$0xff]
    %v6347 = vld [vmem:[#allocation10 + $0xd08] sm:$0xff]
    %v6348 = vld [vmem:[#allocation10 + $0xd10] sm:$0xff]
    %v6349 = vld [vmem:[#allocation10 + $0xd18] sm:$0xff]
    %v6350 = vld [vmem:[#allocation10 + $0xd20] sm:$0xff]
    %v6351 = vld [vmem:[#allocation10 + $0xd28] sm:$0xff]
    %v6352 = vld [vmem:[#allocation10 + $0xd30] sm:$0xff]
    %v6353 = vld [vmem:[#allocation10 + $0xd38] sm:$0xff]
    %v6354 = vld [vmem:[#allocation10 + $0xd40] sm:$0xff]
    %v6355 = vld [vmem:[#allocation10 + $0xd48] sm:$0xff]
    %v6356 = vld [vmem:[#allocation10 + $0xd50] sm:$0xff]
    %v6357 = vld [vmem:[#allocation10 + $0xd58] sm:$0xff]
    %v6358 = vld [vmem:[#allocation10 + $0xd60] sm:$0xff]
    %v6359 = vld [vmem:[#allocation10 + $0xd68] sm:$0xff]
    %v6360 = vld [vmem:[#allocation10 + $0xd70] sm:$0xff]
    %v6361 = vld [vmem:[#allocation10 + $0xd78] sm:$0xff]
    %v6362 = vld [vmem:[#allocation10 + $0xd80] sm:$0xff]
    %v6363 = vld [vmem:[#allocation10 + $0xd88] sm:$0xff]
    %v6364 = vld [vmem:[#allocation10 + $0xd90] sm:$0xff]
    %v6365 = vld [vmem:[#allocation10 + $0xd98] sm:$0xff]
    %v6366 = vld [vmem:[#allocation10 + $0xda0] sm:$0xff]
    %v6367 = vld [vmem:[#allocation10 + $0xda8] sm:$0xff]
    %v6368 = vld [vmem:[#allocation10 + $0xdb0] sm:$0xff]
    %v6369 = vld [vmem:[#allocation10 + $0xdb8] sm:$0xff]
    %v6370 = vld [vmem:[#allocation10 + $0xdc0] sm:$0xff]
    %v6371 = vld [vmem:[#allocation10 + $0xdc8] sm:$0xff]
    %v6372 = vld [vmem:[#allocation10 + $0xdd0] sm:$0xff]
    %v6373 = vld [vmem:[#allocation10 + $0xdd8] sm:$0xff]
    %v6374 = vld [vmem:[#allocation10 + $0xde0] sm:$0xff]
    %v6375 = vld [vmem:[#allocation10 + $0xde8] sm:$0xff]
    %v6376 = vld [vmem:[#allocation10 + $0xdf0] sm:$0xff]
    %v6377 = vld [vmem:[#allocation10 + $0xdf8] sm:$0xff]
    %v6378 = vld [vmem:[#allocation10 + $0xe00] sm:$0xff]
    %v6379 = vld [vmem:[#allocation10 + $0xe08] sm:$0xff]
    %v6380 = vld [vmem:[#allocation10 + $0xe10] sm:$0xff]
    %v6381 = vld [vmem:[#allocation10 + $0xe18] sm:$0xff]
    %v6382 = vld [vmem:[#allocation10 + $0xe20] sm:$0xff]
    %v6383 = vld [vmem:[#allocation10 + $0xe28] sm:$0xff]
    %v6384 = vld [vmem:[#allocation10 + $0xe30] sm:$0xff]
    %v6385 = vld [vmem:[#allocation10 + $0xe38] sm:$0xff]
    %v6386 = vld [vmem:[#allocation10 + $0xe40] sm:$0xff]
    %v6387 = vld [vmem:[#allocation10 + $0xe48] sm:$0xff]
    %v6388 = vld [vmem:[#allocation10 + $0xe50] sm:$0xff]
    %v6389 = vld [vmem:[#allocation10 + $0xe58] sm:$0xff]
    %v6390 = vld [vmem:[#allocation10 + $0xe60] sm:$0xff]
    %v6391 = vld [vmem:[#allocation10 + $0xe68] sm:$0xff]
    %v6392 = vld [vmem:[#allocation10 + $0xe70] sm:$0xff]
    %v6393 = vld [vmem:[#allocation10 + $0xe78] sm:$0xff]
    %v6394 = vld [vmem:[#allocation10 + $0xe80] sm:$0xff]
    %v6395 = vld [vmem:[#allocation10 + $0xe88] sm:$0xff]
    %v6396 = vld [vmem:[#allocation10 + $0xe90] sm:$0xff]
    %v6397 = vld [vmem:[#allocation10 + $0xe98] sm:$0xff]
    %v6398 = vld [vmem:[#allocation10 + $0xea0] sm:$0xff]
    %v6399 = vld [vmem:[#allocation10 + $0xea8] sm:$0xff]
    %v6400 = vld [vmem:[#allocation10 + $0xeb0] sm:$0xff]
    %v6401 = vld [vmem:[#allocation10 + $0xeb8] sm:$0xff]
    %v6402 = vld [vmem:[#allocation10 + $0xec0] sm:$0xff]
    %v6403 = vld [vmem:[#allocation10 + $0xec8] sm:$0xff]
    %v6404 = vld [vmem:[#allocation10 + $0xed0] sm:$0xff]
    %v6405 = vld [vmem:[#allocation10 + $0xed8] sm:$0xff]
    %v6406 = vld [vmem:[#allocation10 + $0xee0] sm:$0xff]
    %v6407 = vld [vmem:[#allocation10 + $0xee8] sm:$0xff]
    %v6408 = vld [vmem:[#allocation10 + $0xef0] sm:$0xff]
    %v6409 = vld [vmem:[#allocation10 + $0xef8] sm:$0xff]
    %v6410 = vld [vmem:[#allocation10 + $0xf00] sm:$0xff]
    %v6411 = vld [vmem:[#allocation10 + $0xf08] sm:$0xff]
    %v6412 = vld [vmem:[#allocation10 + $0xf10] sm:$0xff]
    %v6413 = vld [vmem:[#allocation10 + $0xf18] sm:$0xff]
    %v6414 = vld [vmem:[#allocation10 + $0xf20] sm:$0xff]
    %v6415 = vld [vmem:[#allocation10 + $0xf28] sm:$0xff]
    %v6416 = vld [vmem:[#allocation10 + $0xf30] sm:$0xff]
    %v6417 = vld [vmem:[#allocation10 + $0xf38] sm:$0xff]
    %v6418 = vld [vmem:[#allocation10 + $0xf40] sm:$0xff]
    %v6419 = vld [vmem:[#allocation10 + $0xf48] sm:$0xff]
    %v6420 = vld [vmem:[#allocation10 + $0xf50] sm:$0xff]
    %v6421 = vld [vmem:[#allocation10 + $0xf58] sm:$0xff]
    %v6422 = vld [vmem:[#allocation10 + $0xf60] sm:$0xff]
    %v6423 = vld [vmem:[#allocation10 + $0xf68] sm:$0xff]
    %v6424 = vld [vmem:[#allocation10 + $0xf70] sm:$0xff]
    %v6425 = vld [vmem:[#allocation10 + $0xf78] sm:$0xff]
    %v6426 = vld [vmem:[#allocation10 + $0xf80] sm:$0xff]
    %v6427 = vld [vmem:[#allocation10 + $0xf88] sm:$0xff]
    %v6428 = vld [vmem:[#allocation10 + $0xf90] sm:$0xff]
    %v6429 = vld [vmem:[#allocation10 + $0xf98] sm:$0xff]
    %v6430 = vld [vmem:[#allocation10 + $0xfa0] sm:$0xff]
    %v6431 = vld [vmem:[#allocation10 + $0xfa8] sm:$0xff]
    %v6432 = vld [vmem:[#allocation10 + $0xfb0] sm:$0xff]
    %v6433 = vld [vmem:[#allocation10 + $0xfb8] sm:$0xff]
    %v6434 = vld [vmem:[#allocation10 + $0xfc0] sm:$0xff]
    %v6435 = vld [vmem:[#allocation10 + $0xfc8] sm:$0xff]
    %v6436 = vld [vmem:[#allocation10 + $0xfd0] sm:$0xff]
    %v6437 = vld [vmem:[#allocation10 + $0xfd8] sm:$0xff]
    %v6438 = vld [vmem:[#allocation10 + $0xfe0] sm:$0xff]
    %v6439 = vld [vmem:[#allocation10 + $0xfe8] sm:$0xff]
    %v6440 = vld [vmem:[#allocation10 + $0xff0] sm:$0xff]
    %v6441 = vld [vmem:[#allocation10 + $0xff8] sm:$0xff]
    %v6442 = vld [vmem:[#allocation12] sm:$0xff]
    %v6444 = vlaneseq
    %v6445 = vshrl.u32 %v6444, 7
    %v6446 = vsub.s32 0, %v6445
    %v6447 = vrot.slane %v6442, %v6446
    %v6448 = vlaneseq
    %v6449 = vshrl.u32 %v6448, 7
    %v6450 = vsub.s32 1, %v6449
    %v6451 = vrot.slane %v6442, %v6450
    %v6452 = vlaneseq
    %v6453 = vshrl.u32 %v6452, 7
    %v6454 = vsub.s32 2, %v6453
    %v6455 = vrot.slane %v6442, %v6454
    %v6456 = vlaneseq
    %v6457 = vshrl.u32 %v6456, 7
    %v6458 = vsub.s32 3, %v6457
    %v6459 = vrot.slane %v6442, %v6458
    %v6460 = vlaneseq
    %v6461 = vshrl.u32 %v6460, 7
    %v6462 = vsub.s32 4, %v6461
    %v6463 = vrot.slane %v6442, %v6462
    %v6464 = vlaneseq
    %v6465 = vshrl.u32 %v6464, 7
    %v6466 = vsub.s32 5, %v6465
    %v6467 = vrot.slane %v6442, %v6466
    %v6468 = vlaneseq
    %v6469 = vshrl.u32 %v6468, 7
    %v6470 = vsub.s32 6, %v6469
    %v6471 = vrot.slane %v6442, %v6470
    %v6472 = vlaneseq
    %v6473 = vshrl.u32 %v6472, 7
    %v6474 = vsub.s32 7, %v6473
    %v6475 = vrot.slane %v6442, %v6474
    %v6996 = vunpack.c.l.b16 %v5930
    %v6997 = vunpack.c.h.b16 %v5930
    %v6998 = vunpack.c.l.b16 %v5931
    %v6999 = vunpack.c.h.b16 %v5931
    %v7000 = vunpack.c.l.b16 %v5932
    %v7001 = vunpack.c.h.b16 %v5932
    %v7002 = vunpack.c.l.b16 %v5933
    %v7003 = vunpack.c.h.b16 %v5933
    %v7004 = vunpack.c.l.b16 %v5934
    %v7005 = vunpack.c.h.b16 %v5934
    %v7006 = vunpack.c.l.b16 %v5935
    %v7007 = vunpack.c.h.b16 %v5935
    %v7008 = vunpack.c.l.b16 %v5936
    %v7009 = vunpack.c.h.b16 %v5936
    %v7010 = vunpack.c.l.b16 %v5937
    %v7011 = vunpack.c.h.b16 %v5937
    %v7012 = vunpack.c.l.b16 %v5938
    %v7013 = vunpack.c.h.b16 %v5938
    %v7014 = vunpack.c.l.b16 %v5939
    %v7015 = vunpack.c.h.b16 %v5939
    %v7016 = vunpack.c.l.b16 %v5940
    %v7017 = vunpack.c.h.b16 %v5940
    %v7018 = vunpack.c.l.b16 %v5941
    %v7019 = vunpack.c.h.b16 %v5941
    %v7020 = vunpack.c.l.b16 %v5942
    %v7021 = vunpack.c.h.b16 %v5942
    %v7022 = vunpack.c.l.b16 %v5943
    %v7023 = vunpack.c.h.b16 %v5943
    %v7024 = vunpack.c.l.b16 %v5944
    %v7025 = vunpack.c.h.b16 %v5944
    %v7026 = vunpack.c.l.b16 %v5945
    %v7027 = vunpack.c.h.b16 %v5945
    %v7028 = vunpack.c.l.b16 %v5946
    %v7029 = vunpack.c.h.b16 %v5946
    %v7030 = vunpack.c.l.b16 %v5947
    %v7031 = vunpack.c.h.b16 %v5947
    %v7032 = vunpack.c.l.b16 %v5948
    %v7033 = vunpack.c.h.b16 %v5948
    %v7034 = vunpack.c.l.b16 %v5949
    %v7035 = vunpack.c.h.b16 %v5949
    %v7036 = vunpack.c.l.b16 %v5950
    %v7037 = vunpack.c.h.b16 %v5950
    %v7038 = vunpack.c.l.b16 %v5951
    %v7039 = vunpack.c.h.b16 %v5951
    %v7040 = vunpack.c.l.b16 %v5952
    %v7041 = vunpack.c.h.b16 %v5952
    %v7042 = vunpack.c.l.b16 %v5953
    %v7043 = vunpack.c.h.b16 %v5953
    %v7044 = vunpack.c.l.b16 %v5954
    %v7045 = vunpack.c.h.b16 %v5954
    %v7046 = vunpack.c.l.b16 %v5955
    %v7047 = vunpack.c.h.b16 %v5955
    %v7048 = vunpack.c.l.b16 %v5956
    %v7049 = vunpack.c.h.b16 %v5956
    %v7050 = vunpack.c.l.b16 %v5957
    %v7051 = vunpack.c.h.b16 %v5957
    %v7052 = vunpack.c.l.b16 %v5958
    %v7053 = vunpack.c.h.b16 %v5958
    %v7054 = vunpack.c.l.b16 %v5959
    %v7055 = vunpack.c.h.b16 %v5959
    %v7056 = vunpack.c.l.b16 %v5960
    %v7057 = vunpack.c.h.b16 %v5960
    %v7058 = vunpack.c.l.b16 %v5961
    %v7059 = vunpack.c.h.b16 %v5961
    %v7060 = vunpack.c.l.b16 %v5962
    %v7061 = vunpack.c.h.b16 %v5962
    %v7062 = vunpack.c.l.b16 %v5963
    %v7063 = vunpack.c.h.b16 %v5963
    %v7064 = vunpack.c.l.b16 %v5964
    %v7065 = vunpack.c.h.b16 %v5964
    %v7066 = vunpack.c.l.b16 %v5965
    %v7067 = vunpack.c.h.b16 %v5965
    %v7068 = vunpack.c.l.b16 %v5966
    %v7069 = vunpack.c.h.b16 %v5966
    %v7070 = vunpack.c.l.b16 %v5967
    %v7071 = vunpack.c.h.b16 %v5967
    %v7072 = vunpack.c.l.b16 %v5968
    %v7073 = vunpack.c.h.b16 %v5968
    %v7074 = vunpack.c.l.b16 %v5969
    %v7075 = vunpack.c.h.b16 %v5969
    %v7076 = vunpack.c.l.b16 %v5970
    %v7077 = vunpack.c.h.b16 %v5970
    %v7078 = vunpack.c.l.b16 %v5971
    %v7079 = vunpack.c.h.b16 %v5971
    %v7080 = vunpack.c.l.b16 %v5972
    %v7081 = vunpack.c.h.b16 %v5972
    %v7082 = vunpack.c.l.b16 %v5973
    %v7083 = vunpack.c.h.b16 %v5973
    %v7084 = vunpack.c.l.b16 %v5974
    %v7085 = vunpack.c.h.b16 %v5974
    %v7086 = vunpack.c.l.b16 %v5975
    %v7087 = vunpack.c.h.b16 %v5975
    %v7088 = vunpack.c.l.b16 %v5976
    %v7089 = vunpack.c.h.b16 %v5976
    %v7090 = vunpack.c.l.b16 %v5977
    %v7091 = vunpack.c.h.b16 %v5977
    %v7092 = vunpack.c.l.b16 %v5978
    %v7093 = vunpack.c.h.b16 %v5978
    %v7094 = vunpack.c.l.b16 %v5979
    %v7095 = vunpack.c.h.b16 %v5979
    %v7096 = vunpack.c.l.b16 %v5980
    %v7097 = vunpack.c.h.b16 %v5980
    %v7098 = vunpack.c.l.b16 %v5981
    %v7099 = vunpack.c.h.b16 %v5981
    %v7100 = vunpack.c.l.b16 %v5982
    %v7101 = vunpack.c.h.b16 %v5982
    %v7102 = vunpack.c.l.b16 %v5983
    %v7103 = vunpack.c.h.b16 %v5983
    %v7104 = vunpack.c.l.b16 %v5984
    %v7105 = vunpack.c.h.b16 %v5984
    %v7106 = vunpack.c.l.b16 %v5985
    %v7107 = vunpack.c.h.b16 %v5985
    %v7108 = vunpack.c.l.b16 %v5986
    %v7109 = vunpack.c.h.b16 %v5986
    %v7110 = vunpack.c.l.b16 %v5987
    %v7111 = vunpack.c.h.b16 %v5987
    %v7112 = vunpack.c.l.b16 %v5988
    %v7113 = vunpack.c.h.b16 %v5988
    %v7114 = vunpack.c.l.b16 %v5989
    %v7115 = vunpack.c.h.b16 %v5989
    %v7116 = vunpack.c.l.b16 %v5990
    %v7117 = vunpack.c.h.b16 %v5990
    %v7118 = vunpack.c.l.b16 %v5991
    %v7119 = vunpack.c.h.b16 %v5991
    %v7120 = vunpack.c.l.b16 %v5992
    %v7121 = vunpack.c.h.b16 %v5992
    %v7122 = vunpack.c.l.b16 %v5993
    %v7123 = vunpack.c.h.b16 %v5993
    %v7124 = vunpack.c.l.b16 %v5994
    %v7125 = vunpack.c.h.b16 %v5994
    %v7126 = vunpack.c.l.b16 %v5995
    %v7127 = vunpack.c.h.b16 %v5995
    %v7128 = vunpack.c.l.b16 %v5996
    %v7129 = vunpack.c.h.b16 %v5996
    %v7130 = vunpack.c.l.b16 %v5997
    %v7131 = vunpack.c.h.b16 %v5997
    %v7132 = vunpack.c.l.b16 %v5998
    %v7133 = vunpack.c.h.b16 %v5998
    %v7134 = vunpack.c.l.b16 %v5999
    %v7135 = vunpack.c.h.b16 %v5999
    %v7136 = vunpack.c.l.b16 %v6000
    %v7137 = vunpack.c.h.b16 %v6000
    %v7138 = vunpack.c.l.b16 %v6001
    %v7139 = vunpack.c.h.b16 %v6001
    %v7140 = vunpack.c.l.b16 %v6002
    %v7141 = vunpack.c.h.b16 %v6002
    %v7142 = vunpack.c.l.b16 %v6003
    %v7143 = vunpack.c.h.b16 %v6003
    %v7144 = vunpack.c.l.b16 %v6004
    %v7145 = vunpack.c.h.b16 %v6004
    %v7146 = vunpack.c.l.b16 %v6005
    %v7147 = vunpack.c.h.b16 %v6005
    %v7148 = vunpack.c.l.b16 %v6006
    %v7149 = vunpack.c.h.b16 %v6006
    %v7150 = vunpack.c.l.b16 %v6007
    %v7151 = vunpack.c.h.b16 %v6007
    %v7152 = vunpack.c.l.b16 %v6008
    %v7153 = vunpack.c.h.b16 %v6008
    %v7154 = vunpack.c.l.b16 %v6009
    %v7155 = vunpack.c.h.b16 %v6009
    %v7156 = vunpack.c.l.b16 %v6010
    %v7157 = vunpack.c.h.b16 %v6010
    %v7158 = vunpack.c.l.b16 %v6011
    %v7159 = vunpack.c.h.b16 %v6011
    %v7160 = vunpack.c.l.b16 %v6012
    %v7161 = vunpack.c.h.b16 %v6012
    %v7162 = vunpack.c.l.b16 %v6013
    %v7163 = vunpack.c.h.b16 %v6013
    %v7164 = vunpack.c.l.b16 %v6014
    %v7165 = vunpack.c.h.b16 %v6014
    %v7166 = vunpack.c.l.b16 %v6015
    %v7167 = vunpack.c.h.b16 %v6015
    %v7168 = vunpack.c.l.b16 %v6016
    %v7169 = vunpack.c.h.b16 %v6016
    %v7170 = vunpack.c.l.b16 %v6017
    %v7171 = vunpack.c.h.b16 %v6017
    %v7172 = vunpack.c.l.b16 %v6018
    %v7173 = vunpack.c.h.b16 %v6018
    %v7174 = vunpack.c.l.b16 %v6019
    %v7175 = vunpack.c.h.b16 %v6019
    %v7176 = vunpack.c.l.b16 %v6020
    %v7177 = vunpack.c.h.b16 %v6020
    %v7178 = vunpack.c.l.b16 %v6021
    %v7179 = vunpack.c.h.b16 %v6021
    %v7180 = vunpack.c.l.b16 %v6022
    %v7181 = vunpack.c.h.b16 %v6022
    %v7182 = vunpack.c.l.b16 %v6023
    %v7183 = vunpack.c.h.b16 %v6023
    %v7184 = vunpack.c.l.b16 %v6024
    %v7185 = vunpack.c.h.b16 %v6024
    %v7186 = vunpack.c.l.b16 %v6025
    %v7187 = vunpack.c.h.b16 %v6025
    %v7188 = vunpack.c.l.b16 %v6026
    %v7189 = vunpack.c.h.b16 %v6026
    %v7190 = vunpack.c.l.b16 %v6027
    %v7191 = vunpack.c.h.b16 %v6027
    %v7192 = vunpack.c.l.b16 %v6028
    %v7193 = vunpack.c.h.b16 %v6028
    %v7194 = vunpack.c.l.b16 %v6029
    %v7195 = vunpack.c.h.b16 %v6029
    %v7196 = vunpack.c.l.b16 %v6030
    %v7197 = vunpack.c.h.b16 %v6030
    %v7198 = vunpack.c.l.b16 %v6031
    %v7199 = vunpack.c.h.b16 %v6031
    %v7200 = vunpack.c.l.b16 %v6032
    %v7201 = vunpack.c.h.b16 %v6032
    %v7202 = vunpack.c.l.b16 %v6033
    %v7203 = vunpack.c.h.b16 %v6033
    %v7204 = vunpack.c.l.b16 %v6034
    %v7205 = vunpack.c.h.b16 %v6034
    %v7206 = vunpack.c.l.b16 %v6035
    %v7207 = vunpack.c.h.b16 %v6035
    %v7208 = vunpack.c.l.b16 %v6036
    %v7209 = vunpack.c.h.b16 %v6036
    %v7210 = vunpack.c.l.b16 %v6037
    %v7211 = vunpack.c.h.b16 %v6037
    %v7212 = vunpack.c.l.b16 %v6038
    %v7213 = vunpack.c.h.b16 %v6038
    %v7214 = vunpack.c.l.b16 %v6039
    %v7215 = vunpack.c.h.b16 %v6039
    %v7216 = vunpack.c.l.b16 %v6040
    %v7217 = vunpack.c.h.b16 %v6040
    %v7218 = vunpack.c.l.b16 %v6041
    %v7219 = vunpack.c.h.b16 %v6041
    %v7220 = vunpack.c.l.b16 %v6042
    %v7221 = vunpack.c.h.b16 %v6042
    %v7222 = vunpack.c.l.b16 %v6043
    %v7223 = vunpack.c.h.b16 %v6043
    %v7224 = vunpack.c.l.b16 %v6044
    %v7225 = vunpack.c.h.b16 %v6044
    %v7226 = vunpack.c.l.b16 %v6045
    %v7227 = vunpack.c.h.b16 %v6045
    %v7228 = vunpack.c.l.b16 %v6046
    %v7229 = vunpack.c.h.b16 %v6046
    %v7230 = vunpack.c.l.b16 %v6047
    %v7231 = vunpack.c.h.b16 %v6047
    %v7232 = vunpack.c.l.b16 %v6048
    %v7233 = vunpack.c.h.b16 %v6048
    %v7234 = vunpack.c.l.b16 %v6049
    %v7235 = vunpack.c.h.b16 %v6049
    %v7236 = vunpack.c.l.b16 %v6050
    %v7237 = vunpack.c.h.b16 %v6050
    %v7238 = vunpack.c.l.b16 %v6051
    %v7239 = vunpack.c.h.b16 %v6051
    %v7240 = vunpack.c.l.b16 %v6052
    %v7241 = vunpack.c.h.b16 %v6052
    %v7242 = vunpack.c.l.b16 %v6053
    %v7243 = vunpack.c.h.b16 %v6053
    %v7244 = vunpack.c.l.b16 %v6054
    %v7245 = vunpack.c.h.b16 %v6054
    %v7246 = vunpack.c.l.b16 %v6055
    %v7247 = vunpack.c.h.b16 %v6055
    %v7248 = vunpack.c.l.b16 %v6056
    %v7249 = vunpack.c.h.b16 %v6056
    %v7250 = vunpack.c.l.b16 %v6057
    %v7251 = vunpack.c.h.b16 %v6057
    %v7252 = vunpack.c.l.b16 %v6058
    %v7253 = vunpack.c.h.b16 %v6058
    %v7254 = vunpack.c.l.b16 %v6059
    %v7255 = vunpack.c.h.b16 %v6059
    %v7256 = vunpack.c.l.b16 %v6060
    %v7257 = vunpack.c.h.b16 %v6060
    %v7258 = vunpack.c.l.b16 %v6061
    %v7259 = vunpack.c.h.b16 %v6061
    %v7260 = vunpack.c.l.b16 %v6062
    %v7261 = vunpack.c.h.b16 %v6062
    %v7262 = vunpack.c.l.b16 %v6063
    %v7263 = vunpack.c.h.b16 %v6063
    %v7264 = vunpack.c.l.b16 %v6064
    %v7265 = vunpack.c.h.b16 %v6064
    %v7266 = vunpack.c.l.b16 %v6065
    %v7267 = vunpack.c.h.b16 %v6065
    %v7268 = vunpack.c.l.b16 %v6066
    %v7269 = vunpack.c.h.b16 %v6066
    %v7270 = vunpack.c.l.b16 %v6067
    %v7271 = vunpack.c.h.b16 %v6067
    %v7272 = vunpack.c.l.b16 %v6068
    %v7273 = vunpack.c.h.b16 %v6068
    %v7274 = vunpack.c.l.b16 %v6069
    %v7275 = vunpack.c.h.b16 %v6069
    %v7276 = vunpack.c.l.b16 %v6070
    %v7277 = vunpack.c.h.b16 %v6070
    %v7278 = vunpack.c.l.b16 %v6071
    %v7279 = vunpack.c.h.b16 %v6071
    %v7280 = vunpack.c.l.b16 %v6072
    %v7281 = vunpack.c.h.b16 %v6072
    %v7282 = vunpack.c.l.b16 %v6073
    %v7283 = vunpack.c.h.b16 %v6073
    %v7284 = vunpack.c.l.b16 %v6074
    %v7285 = vunpack.c.h.b16 %v6074
    %v7286 = vunpack.c.l.b16 %v6075
    %v7287 = vunpack.c.h.b16 %v6075
    %v7288 = vunpack.c.l.b16 %v6076
    %v7289 = vunpack.c.h.b16 %v6076
    %v7290 = vunpack.c.l.b16 %v6077
    %v7291 = vunpack.c.h.b16 %v6077
    %v7292 = vunpack.c.l.b16 %v6078
    %v7293 = vunpack.c.h.b16 %v6078
    %v7294 = vunpack.c.l.b16 %v6079
    %v7295 = vunpack.c.h.b16 %v6079
    %v7296 = vunpack.c.l.b16 %v6080
    %v7297 = vunpack.c.h.b16 %v6080
    %v7298 = vunpack.c.l.b16 %v6081
    %v7299 = vunpack.c.h.b16 %v6081
    %v7300 = vunpack.c.l.b16 %v6082
    %v7301 = vunpack.c.h.b16 %v6082
    %v7302 = vunpack.c.l.b16 %v6083
    %v7303 = vunpack.c.h.b16 %v6083
    %v7304 = vunpack.c.l.b16 %v6084
    %v7305 = vunpack.c.h.b16 %v6084
    %v7306 = vunpack.c.l.b16 %v6085
    %v7307 = vunpack.c.h.b16 %v6085
    %v7308 = vunpack.c.l.b16 %v6086
    %v7309 = vunpack.c.h.b16 %v6086
    %v7310 = vunpack.c.l.b16 %v6087
    %v7311 = vunpack.c.h.b16 %v6087
    %v7312 = vunpack.c.l.b16 %v6088
    %v7313 = vunpack.c.h.b16 %v6088
    %v7314 = vunpack.c.l.b16 %v6089
    %v7315 = vunpack.c.h.b16 %v6089
    %v7316 = vunpack.c.l.b16 %v6090
    %v7317 = vunpack.c.h.b16 %v6090
    %v7318 = vunpack.c.l.b16 %v6091
    %v7319 = vunpack.c.h.b16 %v6091
    %v7320 = vunpack.c.l.b16 %v6092
    %v7321 = vunpack.c.h.b16 %v6092
    %v7322 = vunpack.c.l.b16 %v6093
    %v7323 = vunpack.c.h.b16 %v6093
    %v7324 = vunpack.c.l.b16 %v6094
    %v7325 = vunpack.c.h.b16 %v6094
    %v7326 = vunpack.c.l.b16 %v6095
    %v7327 = vunpack.c.h.b16 %v6095
    %v7328 = vunpack.c.l.b16 %v6096
    %v7329 = vunpack.c.h.b16 %v6096
    %v7330 = vunpack.c.l.b16 %v6097
    %v7331 = vunpack.c.h.b16 %v6097
    %v7332 = vunpack.c.l.b16 %v6098
    %v7333 = vunpack.c.h.b16 %v6098
    %v7334 = vunpack.c.l.b16 %v6099
    %v7335 = vunpack.c.h.b16 %v6099
    %v7336 = vunpack.c.l.b16 %v6100
    %v7337 = vunpack.c.h.b16 %v6100
    %v7338 = vunpack.c.l.b16 %v6101
    %v7339 = vunpack.c.h.b16 %v6101
    %v7340 = vunpack.c.l.b16 %v6102
    %v7341 = vunpack.c.h.b16 %v6102
    %v7342 = vunpack.c.l.b16 %v6103
    %v7343 = vunpack.c.h.b16 %v6103
    %v7344 = vunpack.c.l.b16 %v6104
    %v7345 = vunpack.c.h.b16 %v6104
    %v7346 = vunpack.c.l.b16 %v6105
    %v7347 = vunpack.c.h.b16 %v6105
    %v7348 = vunpack.c.l.b16 %v6106
    %v7349 = vunpack.c.h.b16 %v6106
    %v7350 = vunpack.c.l.b16 %v6107
    %v7351 = vunpack.c.h.b16 %v6107
    %v7352 = vunpack.c.l.b16 %v6108
    %v7353 = vunpack.c.h.b16 %v6108
    %v7354 = vunpack.c.l.b16 %v6109
    %v7355 = vunpack.c.h.b16 %v6109
    %v7356 = vunpack.c.l.b16 %v6110
    %v7357 = vunpack.c.h.b16 %v6110
    %v7358 = vunpack.c.l.b16 %v6111
    %v7359 = vunpack.c.h.b16 %v6111
    %v7360 = vunpack.c.l.b16 %v6112
    %v7361 = vunpack.c.h.b16 %v6112
    %v7362 = vunpack.c.l.b16 %v6113
    %v7363 = vunpack.c.h.b16 %v6113
    %v7364 = vunpack.c.l.b16 %v6114
    %v7365 = vunpack.c.h.b16 %v6114
    %v7366 = vunpack.c.l.b16 %v6115
    %v7367 = vunpack.c.h.b16 %v6115
    %v7368 = vunpack.c.l.b16 %v6116
    %v7369 = vunpack.c.h.b16 %v6116
    %v7370 = vunpack.c.l.b16 %v6117
    %v7371 = vunpack.c.h.b16 %v6117
    %v7372 = vunpack.c.l.b16 %v6118
    %v7373 = vunpack.c.h.b16 %v6118
    %v7374 = vunpack.c.l.b16 %v6119
    %v7375 = vunpack.c.h.b16 %v6119
    %v7376 = vunpack.c.l.b16 %v6120
    %v7377 = vunpack.c.h.b16 %v6120
    %v7378 = vunpack.c.l.b16 %v6121
    %v7379 = vunpack.c.h.b16 %v6121
    %v7380 = vunpack.c.l.b16 %v6122
    %v7381 = vunpack.c.h.b16 %v6122
    %v7382 = vunpack.c.l.b16 %v6123
    %v7383 = vunpack.c.h.b16 %v6123
    %v7384 = vunpack.c.l.b16 %v6124
    %v7385 = vunpack.c.h.b16 %v6124
    %v7386 = vunpack.c.l.b16 %v6125
    %v7387 = vunpack.c.h.b16 %v6125
    %v7388 = vunpack.c.l.b16 %v6126
    %v7389 = vunpack.c.h.b16 %v6126
    %v7390 = vunpack.c.l.b16 %v6127
    %v7391 = vunpack.c.h.b16 %v6127
    %v7392 = vunpack.c.l.b16 %v6128
    %v7393 = vunpack.c.h.b16 %v6128
    %v7394 = vunpack.c.l.b16 %v6129
    %v7395 = vunpack.c.h.b16 %v6129
    %v7396 = vunpack.c.l.b16 %v6130
    %v7397 = vunpack.c.h.b16 %v6130
    %v7398 = vunpack.c.l.b16 %v6131
    %v7399 = vunpack.c.h.b16 %v6131
    %v7400 = vunpack.c.l.b16 %v6132
    %v7401 = vunpack.c.h.b16 %v6132
    %v7402 = vunpack.c.l.b16 %v6133
    %v7403 = vunpack.c.h.b16 %v6133
    %v7404 = vunpack.c.l.b16 %v6134
    %v7405 = vunpack.c.h.b16 %v6134
    %v7406 = vunpack.c.l.b16 %v6135
    %v7407 = vunpack.c.h.b16 %v6135
    %v7408 = vunpack.c.l.b16 %v6136
    %v7409 = vunpack.c.h.b16 %v6136
    %v7410 = vunpack.c.l.b16 %v6137
    %v7411 = vunpack.c.h.b16 %v6137
    %v7412 = vunpack.c.l.b16 %v6138
    %v7413 = vunpack.c.h.b16 %v6138
    %v7414 = vunpack.c.l.b16 %v6139
    %v7415 = vunpack.c.h.b16 %v6139
    %v7416 = vunpack.c.l.b16 %v6140
    %v7417 = vunpack.c.h.b16 %v6140
    %v7418 = vunpack.c.l.b16 %v6141
    %v7419 = vunpack.c.h.b16 %v6141
    %v7420 = vunpack.c.l.b16 %v6142
    %v7421 = vunpack.c.h.b16 %v6142
    %v7422 = vunpack.c.l.b16 %v6143
    %v7423 = vunpack.c.h.b16 %v6143
    %v7424 = vunpack.c.l.b16 %v6144
    %v7425 = vunpack.c.h.b16 %v6144
    %v7426 = vunpack.c.l.b16 %v6145
    %v7427 = vunpack.c.h.b16 %v6145
    %v7428 = vunpack.c.l.b16 %v6146
    %v7429 = vunpack.c.h.b16 %v6146
    %v7430 = vunpack.c.l.b16 %v6147
    %v7431 = vunpack.c.h.b16 %v6147
    %v7432 = vunpack.c.l.b16 %v6148
    %v7433 = vunpack.c.h.b16 %v6148
    %v7434 = vunpack.c.l.b16 %v6149
    %v7435 = vunpack.c.h.b16 %v6149
    %v7436 = vunpack.c.l.b16 %v6150
    %v7437 = vunpack.c.h.b16 %v6150
    %v7438 = vunpack.c.l.b16 %v6151
    %v7439 = vunpack.c.h.b16 %v6151
    %v7440 = vunpack.c.l.b16 %v6152
    %v7441 = vunpack.c.h.b16 %v6152
    %v7442 = vunpack.c.l.b16 %v6153
    %v7443 = vunpack.c.h.b16 %v6153
    %v7444 = vunpack.c.l.b16 %v6154
    %v7445 = vunpack.c.h.b16 %v6154
    %v7446 = vunpack.c.l.b16 %v6155
    %v7447 = vunpack.c.h.b16 %v6155
    %v7448 = vunpack.c.l.b16 %v6156
    %v7449 = vunpack.c.h.b16 %v6156
    %v7450 = vunpack.c.l.b16 %v6157
    %v7451 = vunpack.c.h.b16 %v6157
    %v7452 = vunpack.c.l.b16 %v6158
    %v7453 = vunpack.c.h.b16 %v6158
    %v7454 = vunpack.c.l.b16 %v6159
    %v7455 = vunpack.c.h.b16 %v6159
    %v7456 = vunpack.c.l.b16 %v6160
    %v7457 = vunpack.c.h.b16 %v6160
    %v7458 = vunpack.c.l.b16 %v6161
    %v7459 = vunpack.c.h.b16 %v6161
    %v7460 = vunpack.c.l.b16 %v6162
    %v7461 = vunpack.c.h.b16 %v6162
    %v7462 = vunpack.c.l.b16 %v6163
    %v7463 = vunpack.c.h.b16 %v6163
    %v7464 = vunpack.c.l.b16 %v6164
    %v7465 = vunpack.c.h.b16 %v6164
    %v7466 = vunpack.c.l.b16 %v6165
    %v7467 = vunpack.c.h.b16 %v6165
    %v7468 = vunpack.c.l.b16 %v6166
    %v7469 = vunpack.c.h.b16 %v6166
    %v7470 = vunpack.c.l.b16 %v6167
    %v7471 = vunpack.c.h.b16 %v6167
    %v7472 = vunpack.c.l.b16 %v6168
    %v7473 = vunpack.c.h.b16 %v6168
    %v7474 = vunpack.c.l.b16 %v6169
    %v7475 = vunpack.c.h.b16 %v6169
    %v7476 = vunpack.c.l.b16 %v6170
    %v7477 = vunpack.c.h.b16 %v6170
    %v7478 = vunpack.c.l.b16 %v6171
    %v7479 = vunpack.c.h.b16 %v6171
    %v7480 = vunpack.c.l.b16 %v6172
    %v7481 = vunpack.c.h.b16 %v6172
    %v7482 = vunpack.c.l.b16 %v6173
    %v7483 = vunpack.c.h.b16 %v6173
    %v7484 = vunpack.c.l.b16 %v6174
    %v7485 = vunpack.c.h.b16 %v6174
    %v7486 = vunpack.c.l.b16 %v6175
    %v7487 = vunpack.c.h.b16 %v6175
    %v7488 = vunpack.c.l.b16 %v6176
    %v7489 = vunpack.c.h.b16 %v6176
    %v7490 = vunpack.c.l.b16 %v6177
    %v7491 = vunpack.c.h.b16 %v6177
    %v7492 = vunpack.c.l.b16 %v6178
    %v7493 = vunpack.c.h.b16 %v6178
    %v7494 = vunpack.c.l.b16 %v6179
    %v7495 = vunpack.c.h.b16 %v6179
    %v7496 = vunpack.c.l.b16 %v6180
    %v7497 = vunpack.c.h.b16 %v6180
    %v7498 = vunpack.c.l.b16 %v6181
    %v7499 = vunpack.c.h.b16 %v6181
    %v7500 = vunpack.c.l.b16 %v6182
    %v7501 = vunpack.c.h.b16 %v6182
    %v7502 = vunpack.c.l.b16 %v6183
    %v7503 = vunpack.c.h.b16 %v6183
    %v7504 = vunpack.c.l.b16 %v6184
    %v7505 = vunpack.c.h.b16 %v6184
    %v7506 = vunpack.c.l.b16 %v6185
    %v7507 = vunpack.c.h.b16 %v6185
    %v7508 = vunpack.c.l.b16 %v6186
    %v7509 = vunpack.c.h.b16 %v6186
    %v7510 = vunpack.c.l.b16 %v6187
    %v7511 = vunpack.c.h.b16 %v6187
    %v7512 = vunpack.c.l.b16 %v6188
    %v7513 = vunpack.c.h.b16 %v6188
    %v7514 = vunpack.c.l.b16 %v6189
    %v7515 = vunpack.c.h.b16 %v6189
    %v7516 = vunpack.c.l.b16 %v6190
    %v7517 = vunpack.c.h.b16 %v6190
    %v7518 = vunpack.c.l.b16 %v6191
    %v7519 = vunpack.c.h.b16 %v6191
    %v7520 = vunpack.c.l.b16 %v6192
    %v7521 = vunpack.c.h.b16 %v6192
    %v7522 = vunpack.c.l.b16 %v6193
    %v7523 = vunpack.c.h.b16 %v6193
    %v7524 = vunpack.c.l.b16 %v6194
    %v7525 = vunpack.c.h.b16 %v6194
    %v7526 = vunpack.c.l.b16 %v6195
    %v7527 = vunpack.c.h.b16 %v6195
    %v7528 = vunpack.c.l.b16 %v6196
    %v7529 = vunpack.c.h.b16 %v6196
    %v7530 = vunpack.c.l.b16 %v6197
    %v7531 = vunpack.c.h.b16 %v6197
    %v7532 = vunpack.c.l.b16 %v6198
    %v7533 = vunpack.c.h.b16 %v6198
    %v7534 = vunpack.c.l.b16 %v6199
    %v7535 = vunpack.c.h.b16 %v6199
    %v7536 = vunpack.c.l.b16 %v6200
    %v7537 = vunpack.c.h.b16 %v6200
    %v7538 = vunpack.c.l.b16 %v6201
    %v7539 = vunpack.c.h.b16 %v6201
    %v7540 = vunpack.c.l.b16 %v6202
    %v7541 = vunpack.c.h.b16 %v6202
    %v7542 = vunpack.c.l.b16 %v6203
    %v7543 = vunpack.c.h.b16 %v6203
    %v7544 = vunpack.c.l.b16 %v6204
    %v7545 = vunpack.c.h.b16 %v6204
    %v7546 = vunpack.c.l.b16 %v6205
    %v7547 = vunpack.c.h.b16 %v6205
    %v7548 = vunpack.c.l.b16 %v6206
    %v7549 = vunpack.c.h.b16 %v6206
    %v7550 = vunpack.c.l.b16 %v6207
    %v7551 = vunpack.c.h.b16 %v6207
    %v7552 = vunpack.c.l.b16 %v6208
    %v7553 = vunpack.c.h.b16 %v6208
    %v7554 = vunpack.c.l.b16 %v6209
    %v7555 = vunpack.c.h.b16 %v6209
    %v7556 = vunpack.c.l.b16 %v6210
    %v7557 = vunpack.c.h.b16 %v6210
    %v7558 = vunpack.c.l.b16 %v6211
    %v7559 = vunpack.c.h.b16 %v6211
    %v7560 = vunpack.c.l.b16 %v6212
    %v7561 = vunpack.c.h.b16 %v6212
    %v7562 = vunpack.c.l.b16 %v6213
    %v7563 = vunpack.c.h.b16 %v6213
    %v7564 = vunpack.c.l.b16 %v6214
    %v7565 = vunpack.c.h.b16 %v6214
    %v7566 = vunpack.c.l.b16 %v6215
    %v7567 = vunpack.c.h.b16 %v6215
    %v7568 = vunpack.c.l.b16 %v6216
    %v7569 = vunpack.c.h.b16 %v6216
    %v7570 = vunpack.c.l.b16 %v6217
    %v7571 = vunpack.c.h.b16 %v6217
    %v7572 = vunpack.c.l.b16 %v6218
    %v7573 = vunpack.c.h.b16 %v6218
    %v7574 = vunpack.c.l.b16 %v6219
    %v7575 = vunpack.c.h.b16 %v6219
    %v7576 = vunpack.c.l.b16 %v6220
    %v7577 = vunpack.c.h.b16 %v6220
    %v7578 = vunpack.c.l.b16 %v6221
    %v7579 = vunpack.c.h.b16 %v6221
    %v7580 = vunpack.c.l.b16 %v6222
    %v7581 = vunpack.c.h.b16 %v6222
    %v7582 = vunpack.c.l.b16 %v6223
    %v7583 = vunpack.c.h.b16 %v6223
    %v7584 = vunpack.c.l.b16 %v6224
    %v7585 = vunpack.c.h.b16 %v6224
    %v7586 = vunpack.c.l.b16 %v6225
    %v7587 = vunpack.c.h.b16 %v6225
    %v7588 = vunpack.c.l.b16 %v6226
    %v7589 = vunpack.c.h.b16 %v6226
    %v7590 = vunpack.c.l.b16 %v6227
    %v7591 = vunpack.c.h.b16 %v6227
    %v7592 = vunpack.c.l.b16 %v6228
    %v7593 = vunpack.c.h.b16 %v6228
    %v7594 = vunpack.c.l.b16 %v6229
    %v7595 = vunpack.c.h.b16 %v6229
    %v7596 = vunpack.c.l.b16 %v6230
    %v7597 = vunpack.c.h.b16 %v6230
    %v7598 = vunpack.c.l.b16 %v6231
    %v7599 = vunpack.c.h.b16 %v6231
    %v7600 = vunpack.c.l.b16 %v6232
    %v7601 = vunpack.c.h.b16 %v6232
    %v7602 = vunpack.c.l.b16 %v6233
    %v7603 = vunpack.c.h.b16 %v6233
    %v7604 = vunpack.c.l.b16 %v6234
    %v7605 = vunpack.c.h.b16 %v6234
    %v7606 = vunpack.c.l.b16 %v6235
    %v7607 = vunpack.c.h.b16 %v6235
    %v7608 = vunpack.c.l.b16 %v6236
    %v7609 = vunpack.c.h.b16 %v6236
    %v7610 = vunpack.c.l.b16 %v6237
    %v7611 = vunpack.c.h.b16 %v6237
    %v7612 = vunpack.c.l.b16 %v6238
    %v7613 = vunpack.c.h.b16 %v6238
    %v7614 = vunpack.c.l.b16 %v6239
    %v7615 = vunpack.c.h.b16 %v6239
    %v7616 = vunpack.c.l.b16 %v6240
    %v7617 = vunpack.c.h.b16 %v6240
    %v7618 = vunpack.c.l.b16 %v6241
    %v7619 = vunpack.c.h.b16 %v6241
    %v7620 = vunpack.c.l.b16 %v6242
    %v7621 = vunpack.c.h.b16 %v6242
    %v7622 = vunpack.c.l.b16 %v6243
    %v7623 = vunpack.c.h.b16 %v6243
    %v7624 = vunpack.c.l.b16 %v6244
    %v7625 = vunpack.c.h.b16 %v6244
    %v7626 = vunpack.c.l.b16 %v6245
    %v7627 = vunpack.c.h.b16 %v6245
    %v7628 = vunpack.c.l.b16 %v6246
    %v7629 = vunpack.c.h.b16 %v6246
    %v7630 = vunpack.c.l.b16 %v6247
    %v7631 = vunpack.c.h.b16 %v6247
    %v7632 = vunpack.c.l.b16 %v6248
    %v7633 = vunpack.c.h.b16 %v6248
    %v7634 = vunpack.c.l.b16 %v6249
    %v7635 = vunpack.c.h.b16 %v6249
    %v7636 = vunpack.c.l.b16 %v6250
    %v7637 = vunpack.c.h.b16 %v6250
    %v7638 = vunpack.c.l.b16 %v6251
    %v7639 = vunpack.c.h.b16 %v6251
    %v7640 = vunpack.c.l.b16 %v6252
    %v7641 = vunpack.c.h.b16 %v6252
    %v7642 = vunpack.c.l.b16 %v6253
    %v7643 = vunpack.c.h.b16 %v6253
    %v7644 = vunpack.c.l.b16 %v6254
    %v7645 = vunpack.c.h.b16 %v6254
    %v7646 = vunpack.c.l.b16 %v6255
    %v7647 = vunpack.c.h.b16 %v6255
    %v7648 = vunpack.c.l.b16 %v6256
    %v7649 = vunpack.c.h.b16 %v6256
    %v7650 = vunpack.c.l.b16 %v6257
    %v7651 = vunpack.c.h.b16 %v6257
    %v7652 = vunpack.c.l.b16 %v6258
    %v7653 = vunpack.c.h.b16 %v6258
    %v7654 = vunpack.c.l.b16 %v6259
    %v7655 = vunpack.c.h.b16 %v6259
    %v7656 = vunpack.c.l.b16 %v6260
    %v7657 = vunpack.c.h.b16 %v6260
    %v7658 = vunpack.c.l.b16 %v6261
    %v7659 = vunpack.c.h.b16 %v6261
    %v7660 = vunpack.c.l.b16 %v6262
    %v7661 = vunpack.c.h.b16 %v6262
    %v7662 = vunpack.c.l.b16 %v6263
    %v7663 = vunpack.c.h.b16 %v6263
    %v7664 = vunpack.c.l.b16 %v6264
    %v7665 = vunpack.c.h.b16 %v6264
    %v7666 = vunpack.c.l.b16 %v6265
    %v7667 = vunpack.c.h.b16 %v6265
    %v7668 = vunpack.c.l.b16 %v6266
    %v7669 = vunpack.c.h.b16 %v6266
    %v7670 = vunpack.c.l.b16 %v6267
    %v7671 = vunpack.c.h.b16 %v6267
    %v7672 = vunpack.c.l.b16 %v6268
    %v7673 = vunpack.c.h.b16 %v6268
    %v7674 = vunpack.c.l.b16 %v6269
    %v7675 = vunpack.c.h.b16 %v6269
    %v7676 = vunpack.c.l.b16 %v6270
    %v7677 = vunpack.c.h.b16 %v6270
    %v7678 = vunpack.c.l.b16 %v6271
    %v7679 = vunpack.c.h.b16 %v6271
    %v7680 = vunpack.c.l.b16 %v6272
    %v7681 = vunpack.c.h.b16 %v6272
    %v7682 = vunpack.c.l.b16 %v6273
    %v7683 = vunpack.c.h.b16 %v6273
    %v7684 = vunpack.c.l.b16 %v6274
    %v7685 = vunpack.c.h.b16 %v6274
    %v7686 = vunpack.c.l.b16 %v6275
    %v7687 = vunpack.c.h.b16 %v6275
    %v7688 = vunpack.c.l.b16 %v6276
    %v7689 = vunpack.c.h.b16 %v6276
    %v7690 = vunpack.c.l.b16 %v6277
    %v7691 = vunpack.c.h.b16 %v6277
    %v7692 = vunpack.c.l.b16 %v6278
    %v7693 = vunpack.c.h.b16 %v6278
    %v7694 = vunpack.c.l.b16 %v6279
    %v7695 = vunpack.c.h.b16 %v6279
    %v7696 = vunpack.c.l.b16 %v6280
    %v7697 = vunpack.c.h.b16 %v6280
    %v7698 = vunpack.c.l.b16 %v6281
    %v7699 = vunpack.c.h.b16 %v6281
    %v7700 = vunpack.c.l.b16 %v6282
    %v7701 = vunpack.c.h.b16 %v6282
    %v7702 = vunpack.c.l.b16 %v6283
    %v7703 = vunpack.c.h.b16 %v6283
    %v7704 = vunpack.c.l.b16 %v6284
    %v7705 = vunpack.c.h.b16 %v6284
    %v7706 = vunpack.c.l.b16 %v6285
    %v7707 = vunpack.c.h.b16 %v6285
    %v7708 = vunpack.c.l.b16 %v6286
    %v7709 = vunpack.c.h.b16 %v6286
    %v7710 = vunpack.c.l.b16 %v6287
    %v7711 = vunpack.c.h.b16 %v6287
    %v7712 = vunpack.c.l.b16 %v6288
    %v7713 = vunpack.c.h.b16 %v6288
    %v7714 = vunpack.c.l.b16 %v6289
    %v7715 = vunpack.c.h.b16 %v6289
    %v7716 = vunpack.c.l.b16 %v6290
    %v7717 = vunpack.c.h.b16 %v6290
    %v7718 = vunpack.c.l.b16 %v6291
    %v7719 = vunpack.c.h.b16 %v6291
    %v7720 = vunpack.c.l.b16 %v6292
    %v7721 = vunpack.c.h.b16 %v6292
    %v7722 = vunpack.c.l.b16 %v6293
    %v7723 = vunpack.c.h.b16 %v6293
    %v7724 = vunpack.c.l.b16 %v6294
    %v7725 = vunpack.c.h.b16 %v6294
    %v7726 = vunpack.c.l.b16 %v6295
    %v7727 = vunpack.c.h.b16 %v6295
    %v7728 = vunpack.c.l.b16 %v6296
    %v7729 = vunpack.c.h.b16 %v6296
    %v7730 = vunpack.c.l.b16 %v6297
    %v7731 = vunpack.c.h.b16 %v6297
    %v7732 = vunpack.c.l.b16 %v6298
    %v7733 = vunpack.c.h.b16 %v6298
    %v7734 = vunpack.c.l.b16 %v6299
    %v7735 = vunpack.c.h.b16 %v6299
    %v7736 = vunpack.c.l.b16 %v6300
    %v7737 = vunpack.c.h.b16 %v6300
    %v7738 = vunpack.c.l.b16 %v6301
    %v7739 = vunpack.c.h.b16 %v6301
    %v7740 = vunpack.c.l.b16 %v6302
    %v7741 = vunpack.c.h.b16 %v6302
    %v7742 = vunpack.c.l.b16 %v6303
    %v7743 = vunpack.c.h.b16 %v6303
    %v7744 = vunpack.c.l.b16 %v6304
    %v7745 = vunpack.c.h.b16 %v6304
    %v7746 = vunpack.c.l.b16 %v6305
    %v7747 = vunpack.c.h.b16 %v6305
    %v7748 = vunpack.c.l.b16 %v6306
    %v7749 = vunpack.c.h.b16 %v6306
    %v7750 = vunpack.c.l.b16 %v6307
    %v7751 = vunpack.c.h.b16 %v6307
    %v7752 = vunpack.c.l.b16 %v6308
    %v7753 = vunpack.c.h.b16 %v6308
    %v7754 = vunpack.c.l.b16 %v6309
    %v7755 = vunpack.c.h.b16 %v6309
    %v7756 = vunpack.c.l.b16 %v6310
    %v7757 = vunpack.c.h.b16 %v6310
    %v7758 = vunpack.c.l.b16 %v6311
    %v7759 = vunpack.c.h.b16 %v6311
    %v7760 = vunpack.c.l.b16 %v6312
    %v7761 = vunpack.c.h.b16 %v6312
    %v7762 = vunpack.c.l.b16 %v6313
    %v7763 = vunpack.c.h.b16 %v6313
    %v7764 = vunpack.c.l.b16 %v6314
    %v7765 = vunpack.c.h.b16 %v6314
    %v7766 = vunpack.c.l.b16 %v6315
    %v7767 = vunpack.c.h.b16 %v6315
    %v7768 = vunpack.c.l.b16 %v6316
    %v7769 = vunpack.c.h.b16 %v6316
    %v7770 = vunpack.c.l.b16 %v6317
    %v7771 = vunpack.c.h.b16 %v6317
    %v7772 = vunpack.c.l.b16 %v6318
    %v7773 = vunpack.c.h.b16 %v6318
    %v7774 = vunpack.c.l.b16 %v6319
    %v7775 = vunpack.c.h.b16 %v6319
    %v7776 = vunpack.c.l.b16 %v6320
    %v7777 = vunpack.c.h.b16 %v6320
    %v7778 = vunpack.c.l.b16 %v6321
    %v7779 = vunpack.c.h.b16 %v6321
    %v7780 = vunpack.c.l.b16 %v6322
    %v7781 = vunpack.c.h.b16 %v6322
    %v7782 = vunpack.c.l.b16 %v6323
    %v7783 = vunpack.c.h.b16 %v6323
    %v7784 = vunpack.c.l.b16 %v6324
    %v7785 = vunpack.c.h.b16 %v6324
    %v7786 = vunpack.c.l.b16 %v6325
    %v7787 = vunpack.c.h.b16 %v6325
    %v7788 = vunpack.c.l.b16 %v6326
    %v7789 = vunpack.c.h.b16 %v6326
    %v7790 = vunpack.c.l.b16 %v6327
    %v7791 = vunpack.c.h.b16 %v6327
    %v7792 = vunpack.c.l.b16 %v6328
    %v7793 = vunpack.c.h.b16 %v6328
    %v7794 = vunpack.c.l.b16 %v6329
    %v7795 = vunpack.c.h.b16 %v6329
    %v7796 = vunpack.c.l.b16 %v6330
    %v7797 = vunpack.c.h.b16 %v6330
    %v7798 = vunpack.c.l.b16 %v6331
    %v7799 = vunpack.c.h.b16 %v6331
    %v7800 = vunpack.c.l.b16 %v6332
    %v7801 = vunpack.c.h.b16 %v6332
    %v7802 = vunpack.c.l.b16 %v6333
    %v7803 = vunpack.c.h.b16 %v6333
    %v7804 = vunpack.c.l.b16 %v6334
    %v7805 = vunpack.c.h.b16 %v6334
    %v7806 = vunpack.c.l.b16 %v6335
    %v7807 = vunpack.c.h.b16 %v6335
    %v7808 = vunpack.c.l.b16 %v6336
    %v7809 = vunpack.c.h.b16 %v6336
    %v7810 = vunpack.c.l.b16 %v6337
    %v7811 = vunpack.c.h.b16 %v6337
    %v7812 = vunpack.c.l.b16 %v6338
    %v7813 = vunpack.c.h.b16 %v6338
    %v7814 = vunpack.c.l.b16 %v6339
    %v7815 = vunpack.c.h.b16 %v6339
    %v7816 = vunpack.c.l.b16 %v6340
    %v7817 = vunpack.c.h.b16 %v6340
    %v7818 = vunpack.c.l.b16 %v6341
    %v7819 = vunpack.c.h.b16 %v6341
    %v7820 = vunpack.c.l.b16 %v6342
    %v7821 = vunpack.c.h.b16 %v6342
    %v7822 = vunpack.c.l.b16 %v6343
    %v7823 = vunpack.c.h.b16 %v6343
    %v7824 = vunpack.c.l.b16 %v6344
    %v7825 = vunpack.c.h.b16 %v6344
    %v7826 = vunpack.c.l.b16 %v6345
    %v7827 = vunpack.c.h.b16 %v6345
    %v7828 = vunpack.c.l.b16 %v6346
    %v7829 = vunpack.c.h.b16 %v6346
    %v7830 = vunpack.c.l.b16 %v6347
    %v7831 = vunpack.c.h.b16 %v6347
    %v7832 = vunpack.c.l.b16 %v6348
    %v7833 = vunpack.c.h.b16 %v6348
    %v7834 = vunpack.c.l.b16 %v6349
    %v7835 = vunpack.c.h.b16 %v6349
    %v7836 = vunpack.c.l.b16 %v6350
    %v7837 = vunpack.c.h.b16 %v6350
    %v7838 = vunpack.c.l.b16 %v6351
    %v7839 = vunpack.c.h.b16 %v6351
    %v7840 = vunpack.c.l.b16 %v6352
    %v7841 = vunpack.c.h.b16 %v6352
    %v7842 = vunpack.c.l.b16 %v6353
    %v7843 = vunpack.c.h.b16 %v6353
    %v7844 = vunpack.c.l.b16 %v6354
    %v7845 = vunpack.c.h.b16 %v6354
    %v7846 = vunpack.c.l.b16 %v6355
    %v7847 = vunpack.c.h.b16 %v6355
    %v7848 = vunpack.c.l.b16 %v6356
    %v7849 = vunpack.c.h.b16 %v6356
    %v7850 = vunpack.c.l.b16 %v6357
    %v7851 = vunpack.c.h.b16 %v6357
    %v7852 = vunpack.c.l.b16 %v6358
    %v7853 = vunpack.c.h.b16 %v6358
    %v7854 = vunpack.c.l.b16 %v6359
    %v7855 = vunpack.c.h.b16 %v6359
    %v7856 = vunpack.c.l.b16 %v6360
    %v7857 = vunpack.c.h.b16 %v6360
    %v7858 = vunpack.c.l.b16 %v6361
    %v7859 = vunpack.c.h.b16 %v6361
    %v7860 = vunpack.c.l.b16 %v6362
    %v7861 = vunpack.c.h.b16 %v6362
    %v7862 = vunpack.c.l.b16 %v6363
    %v7863 = vunpack.c.h.b16 %v6363
    %v7864 = vunpack.c.l.b16 %v6364
    %v7865 = vunpack.c.h.b16 %v6364
    %v7866 = vunpack.c.l.b16 %v6365
    %v7867 = vunpack.c.h.b16 %v6365
    %v7868 = vunpack.c.l.b16 %v6366
    %v7869 = vunpack.c.h.b16 %v6366
    %v7870 = vunpack.c.l.b16 %v6367
    %v7871 = vunpack.c.h.b16 %v6367
    %v7872 = vunpack.c.l.b16 %v6368
    %v7873 = vunpack.c.h.b16 %v6368
    %v7874 = vunpack.c.l.b16 %v6369
    %v7875 = vunpack.c.h.b16 %v6369
    %v7876 = vunpack.c.l.b16 %v6370
    %v7877 = vunpack.c.h.b16 %v6370
    %v7878 = vunpack.c.l.b16 %v6371
    %v7879 = vunpack.c.h.b16 %v6371
    %v7880 = vunpack.c.l.b16 %v6372
    %v7881 = vunpack.c.h.b16 %v6372
    %v7882 = vunpack.c.l.b16 %v6373
    %v7883 = vunpack.c.h.b16 %v6373
    %v7884 = vunpack.c.l.b16 %v6374
    %v7885 = vunpack.c.h.b16 %v6374
    %v7886 = vunpack.c.l.b16 %v6375
    %v7887 = vunpack.c.h.b16 %v6375
    %v7888 = vunpack.c.l.b16 %v6376
    %v7889 = vunpack.c.h.b16 %v6376
    %v7890 = vunpack.c.l.b16 %v6377
    %v7891 = vunpack.c.h.b16 %v6377
    %v7892 = vunpack.c.l.b16 %v6378
    %v7893 = vunpack.c.h.b16 %v6378
    %v7894 = vunpack.c.l.b16 %v6379
    %v7895 = vunpack.c.h.b16 %v6379
    %v7896 = vunpack.c.l.b16 %v6380
    %v7897 = vunpack.c.h.b16 %v6380
    %v7898 = vunpack.c.l.b16 %v6381
    %v7899 = vunpack.c.h.b16 %v6381
    %v7900 = vunpack.c.l.b16 %v6382
    %v7901 = vunpack.c.h.b16 %v6382
    %v7902 = vunpack.c.l.b16 %v6383
    %v7903 = vunpack.c.h.b16 %v6383
    %v7904 = vunpack.c.l.b16 %v6384
    %v7905 = vunpack.c.h.b16 %v6384
    %v7906 = vunpack.c.l.b16 %v6385
    %v7907 = vunpack.c.h.b16 %v6385
    %v7908 = vunpack.c.l.b16 %v6386
    %v7909 = vunpack.c.h.b16 %v6386
    %v7910 = vunpack.c.l.b16 %v6387
    %v7911 = vunpack.c.h.b16 %v6387
    %v7912 = vunpack.c.l.b16 %v6388
    %v7913 = vunpack.c.h.b16 %v6388
    %v7914 = vunpack.c.l.b16 %v6389
    %v7915 = vunpack.c.h.b16 %v6389
    %v7916 = vunpack.c.l.b16 %v6390
    %v7917 = vunpack.c.h.b16 %v6390
    %v7918 = vunpack.c.l.b16 %v6391
    %v7919 = vunpack.c.h.b16 %v6391
    %v7920 = vunpack.c.l.b16 %v6392
    %v7921 = vunpack.c.h.b16 %v6392
    %v7922 = vunpack.c.l.b16 %v6393
    %v7923 = vunpack.c.h.b16 %v6393
    %v7924 = vunpack.c.l.b16 %v6394
    %v7925 = vunpack.c.h.b16 %v6394
    %v7926 = vunpack.c.l.b16 %v6395
    %v7927 = vunpack.c.h.b16 %v6395
    %v7928 = vunpack.c.l.b16 %v6396
    %v7929 = vunpack.c.h.b16 %v6396
    %v7930 = vunpack.c.l.b16 %v6397
    %v7931 = vunpack.c.h.b16 %v6397
    %v7932 = vunpack.c.l.b16 %v6398
    %v7933 = vunpack.c.h.b16 %v6398
    %v7934 = vunpack.c.l.b16 %v6399
    %v7935 = vunpack.c.h.b16 %v6399
    %v7936 = vunpack.c.l.b16 %v6400
    %v7937 = vunpack.c.h.b16 %v6400
    %v7938 = vunpack.c.l.b16 %v6401
    %v7939 = vunpack.c.h.b16 %v6401
    %v7940 = vunpack.c.l.b16 %v6402
    %v7941 = vunpack.c.h.b16 %v6402
    %v7942 = vunpack.c.l.b16 %v6403
    %v7943 = vunpack.c.h.b16 %v6403
    %v7944 = vunpack.c.l.b16 %v6404
    %v7945 = vunpack.c.h.b16 %v6404
    %v7946 = vunpack.c.l.b16 %v6405
    %v7947 = vunpack.c.h.b16 %v6405
    %v7948 = vunpack.c.l.b16 %v6406
    %v7949 = vunpack.c.h.b16 %v6406
    %v7950 = vunpack.c.l.b16 %v6407
    %v7951 = vunpack.c.h.b16 %v6407
    %v7952 = vunpack.c.l.b16 %v6408
    %v7953 = vunpack.c.h.b16 %v6408
    %v7954 = vunpack.c.l.b16 %v6409
    %v7955 = vunpack.c.h.b16 %v6409
    %v7956 = vunpack.c.l.b16 %v6410
    %v7957 = vunpack.c.h.b16 %v6410
    %v7958 = vunpack.c.l.b16 %v6411
    %v7959 = vunpack.c.h.b16 %v6411
    %v7960 = vunpack.c.l.b16 %v6412
    %v7961 = vunpack.c.h.b16 %v6412
    %v7962 = vunpack.c.l.b16 %v6413
    %v7963 = vunpack.c.h.b16 %v6413
    %v7964 = vunpack.c.l.b16 %v6414
    %v7965 = vunpack.c.h.b16 %v6414
    %v7966 = vunpack.c.l.b16 %v6415
    %v7967 = vunpack.c.h.b16 %v6415
    %v7968 = vunpack.c.l.b16 %v6416
    %v7969 = vunpack.c.h.b16 %v6416
    %v7970 = vunpack.c.l.b16 %v6417
    %v7971 = vunpack.c.h.b16 %v6417
    %v7972 = vunpack.c.l.b16 %v6418
    %v7973 = vunpack.c.h.b16 %v6418
    %v7974 = vunpack.c.l.b16 %v6419
    %v7975 = vunpack.c.h.b16 %v6419
    %v7976 = vunpack.c.l.b16 %v6420
    %v7977 = vunpack.c.h.b16 %v6420
    %v7978 = vunpack.c.l.b16 %v6421
    %v7979 = vunpack.c.h.b16 %v6421
    %v7980 = vunpack.c.l.b16 %v6422
    %v7981 = vunpack.c.h.b16 %v6422
    %v7982 = vunpack.c.l.b16 %v6423
    %v7983 = vunpack.c.h.b16 %v6423
    %v7984 = vunpack.c.l.b16 %v6424
    %v7985 = vunpack.c.h.b16 %v6424
    %v7986 = vunpack.c.l.b16 %v6425
    %v7987 = vunpack.c.h.b16 %v6425
    %v7988 = vunpack.c.l.b16 %v6426
    %v7989 = vunpack.c.h.b16 %v6426
    %v7990 = vunpack.c.l.b16 %v6427
    %v7991 = vunpack.c.h.b16 %v6427
    %v7992 = vunpack.c.l.b16 %v6428
    %v7993 = vunpack.c.h.b16 %v6428
    %v7994 = vunpack.c.l.b16 %v6429
    %v7995 = vunpack.c.h.b16 %v6429
    %v7996 = vunpack.c.l.b16 %v6430
    %v7997 = vunpack.c.h.b16 %v6430
    %v7998 = vunpack.c.l.b16 %v6431
    %v7999 = vunpack.c.h.b16 %v6431
    %v8000 = vunpack.c.l.b16 %v6432
    %v8001 = vunpack.c.h.b16 %v6432
    %v8002 = vunpack.c.l.b16 %v6433
    %v8003 = vunpack.c.h.b16 %v6433
    %v8004 = vunpack.c.l.b16 %v6434
    %v8005 = vunpack.c.h.b16 %v6434
    %v8006 = vunpack.c.l.b16 %v6435
    %v8007 = vunpack.c.h.b16 %v6435
    %v8008 = vunpack.c.l.b16 %v6436
    %v8009 = vunpack.c.h.b16 %v6436
    %v8010 = vunpack.c.l.b16 %v6437
    %v8011 = vunpack.c.h.b16 %v6437
    %v8012 = vunpack.c.l.b16 %v6438
    %v8013 = vunpack.c.h.b16 %v6438
    %v8014 = vunpack.c.l.b16 %v6439
    %v8015 = vunpack.c.h.b16 %v6439
    %v8016 = vunpack.c.l.b16 %v6440
    %v8017 = vunpack.c.h.b16 %v6440
    %v8018 = vunpack.c.l.b16 %v6441
    %v8019 = vunpack.c.h.b16 %v6441
    %v8020 = vpack.c.b16 %v7004, %v6996
    %v8021 = vpack.c.b16 %v7005, %v6997
    %v8022 = vpack.c.b16 %v7006, %v6998
    %v8023 = vpack.c.b16 %v7007, %v6999
    %v8024 = vpack.c.b16 %v7008, %v7000
    %v8025 = vpack.c.b16 %v7009, %v7001
    %v8026 = vpack.c.b16 %v7010, %v7002
    %v8027 = vpack.c.b16 %v7011, %v7003
    %v8028 = vpack.c.b16 %v7020, %v7012
    %v8029 = vpack.c.b16 %v7021, %v7013
    %v8030 = vpack.c.b16 %v7022, %v7014
    %v8031 = vpack.c.b16 %v7023, %v7015
    %v8032 = vpack.c.b16 %v7024, %v7016
    %v8033 = vpack.c.b16 %v7025, %v7017
    %v8034 = vpack.c.b16 %v7026, %v7018
    %v8035 = vpack.c.b16 %v7027, %v7019
    %v8036 = vpack.c.b16 %v7036, %v7028
    %v8037 = vpack.c.b16 %v7037, %v7029
    %v8038 = vpack.c.b16 %v7038, %v7030
    %v8039 = vpack.c.b16 %v7039, %v7031
    %v8040 = vpack.c.b16 %v7040, %v7032
    %v8041 = vpack.c.b16 %v7041, %v7033
    %v8042 = vpack.c.b16 %v7042, %v7034
    %v8043 = vpack.c.b16 %v7043, %v7035
    %v8044 = vpack.c.b16 %v7052, %v7044
    %v8045 = vpack.c.b16 %v7053, %v7045
    %v8046 = vpack.c.b16 %v7054, %v7046
    %v8047 = vpack.c.b16 %v7055, %v7047
    %v8048 = vpack.c.b16 %v7056, %v7048
    %v8049 = vpack.c.b16 %v7057, %v7049
    %v8050 = vpack.c.b16 %v7058, %v7050
    %v8051 = vpack.c.b16 %v7059, %v7051
    %v8052 = vpack.c.b16 %v7068, %v7060
    %v8053 = vpack.c.b16 %v7069, %v7061
    %v8054 = vpack.c.b16 %v7070, %v7062
    %v8055 = vpack.c.b16 %v7071, %v7063
    %v8056 = vpack.c.b16 %v7072, %v7064
    %v8057 = vpack.c.b16 %v7073, %v7065
    %v8058 = vpack.c.b16 %v7074, %v7066
    %v8059 = vpack.c.b16 %v7075, %v7067
    %v8060 = vpack.c.b16 %v7084, %v7076
    %v8061 = vpack.c.b16 %v7085, %v7077
    %v8062 = vpack.c.b16 %v7086, %v7078
    %v8063 = vpack.c.b16 %v7087, %v7079
    %v8064 = vpack.c.b16 %v7088, %v7080
    %v8065 = vpack.c.b16 %v7089, %v7081
    %v8066 = vpack.c.b16 %v7090, %v7082
    %v8067 = vpack.c.b16 %v7091, %v7083
    %v8068 = vpack.c.b16 %v7100, %v7092
    %v8069 = vpack.c.b16 %v7101, %v7093
    %v8070 = vpack.c.b16 %v7102, %v7094
    %v8071 = vpack.c.b16 %v7103, %v7095
    %v8072 = vpack.c.b16 %v7104, %v7096
    %v8073 = vpack.c.b16 %v7105, %v7097
    %v8074 = vpack.c.b16 %v7106, %v7098
    %v8075 = vpack.c.b16 %v7107, %v7099
    %v8076 = vpack.c.b16 %v7116, %v7108
    %v8077 = vpack.c.b16 %v7117, %v7109
    %v8078 = vpack.c.b16 %v7118, %v7110
    %v8079 = vpack.c.b16 %v7119, %v7111
    %v8080 = vpack.c.b16 %v7120, %v7112
    %v8081 = vpack.c.b16 %v7121, %v7113
    %v8082 = vpack.c.b16 %v7122, %v7114
    %v8083 = vpack.c.b16 %v7123, %v7115
    %v8084 = vpack.c.b16 %v7132, %v7124
    %v8085 = vpack.c.b16 %v7133, %v7125
    %v8086 = vpack.c.b16 %v7134, %v7126
    %v8087 = vpack.c.b16 %v7135, %v7127
    %v8088 = vpack.c.b16 %v7136, %v7128
    %v8089 = vpack.c.b16 %v7137, %v7129
    %v8090 = vpack.c.b16 %v7138, %v7130
    %v8091 = vpack.c.b16 %v7139, %v7131
    %v8092 = vpack.c.b16 %v7148, %v7140
    %v8093 = vpack.c.b16 %v7149, %v7141
    %v8094 = vpack.c.b16 %v7150, %v7142
    %v8095 = vpack.c.b16 %v7151, %v7143
    %v8096 = vpack.c.b16 %v7152, %v7144
    %v8097 = vpack.c.b16 %v7153, %v7145
    %v8098 = vpack.c.b16 %v7154, %v7146
    %v8099 = vpack.c.b16 %v7155, %v7147
    %v8100 = vpack.c.b16 %v7164, %v7156
    %v8101 = vpack.c.b16 %v7165, %v7157
    %v8102 = vpack.c.b16 %v7166, %v7158
    %v8103 = vpack.c.b16 %v7167, %v7159
    %v8104 = vpack.c.b16 %v7168, %v7160
    %v8105 = vpack.c.b16 %v7169, %v7161
    %v8106 = vpack.c.b16 %v7170, %v7162
    %v8107 = vpack.c.b16 %v7171, %v7163
    %v8108 = vpack.c.b16 %v7180, %v7172
    %v8109 = vpack.c.b16 %v7181, %v7173
    %v8110 = vpack.c.b16 %v7182, %v7174
    %v8111 = vpack.c.b16 %v7183, %v7175
    %v8112 = vpack.c.b16 %v7184, %v7176
    %v8113 = vpack.c.b16 %v7185, %v7177
    %v8114 = vpack.c.b16 %v7186, %v7178
    %v8115 = vpack.c.b16 %v7187, %v7179
    %v8116 = vpack.c.b16 %v7196, %v7188
    %v8117 = vpack.c.b16 %v7197, %v7189
    %v8118 = vpack.c.b16 %v7198, %v7190
    %v8119 = vpack.c.b16 %v7199, %v7191
    %v8120 = vpack.c.b16 %v7200, %v7192
    %v8121 = vpack.c.b16 %v7201, %v7193
    %v8122 = vpack.c.b16 %v7202, %v7194
    %v8123 = vpack.c.b16 %v7203, %v7195
    %v8124 = vpack.c.b16 %v7212, %v7204
    %v8125 = vpack.c.b16 %v7213, %v7205
    %v8126 = vpack.c.b16 %v7214, %v7206
    %v8127 = vpack.c.b16 %v7215, %v7207
    %v8128 = vpack.c.b16 %v7216, %v7208
    %v8129 = vpack.c.b16 %v7217, %v7209
    %v8130 = vpack.c.b16 %v7218, %v7210
    %v8131 = vpack.c.b16 %v7219, %v7211
    %v8132 = vpack.c.b16 %v7228, %v7220
    %v8133 = vpack.c.b16 %v7229, %v7221
    %v8134 = vpack.c.b16 %v7230, %v7222
    %v8135 = vpack.c.b16 %v7231, %v7223
    %v8136 = vpack.c.b16 %v7232, %v7224
    %v8137 = vpack.c.b16 %v7233, %v7225
    %v8138 = vpack.c.b16 %v7234, %v7226
    %v8139 = vpack.c.b16 %v7235, %v7227
    %v8140 = vpack.c.b16 %v7244, %v7236
    %v8141 = vpack.c.b16 %v7245, %v7237
    %v8142 = vpack.c.b16 %v7246, %v7238
    %v8143 = vpack.c.b16 %v7247, %v7239
    %v8144 = vpack.c.b16 %v7248, %v7240
    %v8145 = vpack.c.b16 %v7249, %v7241
    %v8146 = vpack.c.b16 %v7250, %v7242
    %v8147 = vpack.c.b16 %v7251, %v7243
    %v8148 = vpack.c.b16 %v7260, %v7252
    %v8149 = vpack.c.b16 %v7261, %v7253
    %v8150 = vpack.c.b16 %v7262, %v7254
    %v8151 = vpack.c.b16 %v7263, %v7255
    %v8152 = vpack.c.b16 %v7264, %v7256
    %v8153 = vpack.c.b16 %v7265, %v7257
    %v8154 = vpack.c.b16 %v7266, %v7258
    %v8155 = vpack.c.b16 %v7267, %v7259
    %v8156 = vpack.c.b16 %v7276, %v7268
    %v8157 = vpack.c.b16 %v7277, %v7269
    %v8158 = vpack.c.b16 %v7278, %v7270
    %v8159 = vpack.c.b16 %v7279, %v7271
    %v8160 = vpack.c.b16 %v7280, %v7272
    %v8161 = vpack.c.b16 %v7281, %v7273
    %v8162 = vpack.c.b16 %v7282, %v7274
    %v8163 = vpack.c.b16 %v7283, %v7275
    %v8164 = vpack.c.b16 %v7292, %v7284
    %v8165 = vpack.c.b16 %v7293, %v7285
    %v8166 = vpack.c.b16 %v7294, %v7286
    %v8167 = vpack.c.b16 %v7295, %v7287
    %v8168 = vpack.c.b16 %v7296, %v7288
    %v8169 = vpack.c.b16 %v7297, %v7289
    %v8170 = vpack.c.b16 %v7298, %v7290
    %v8171 = vpack.c.b16 %v7299, %v7291
    %v8172 = vpack.c.b16 %v7308, %v7300
    %v8173 = vpack.c.b16 %v7309, %v7301
    %v8174 = vpack.c.b16 %v7310, %v7302
    %v8175 = vpack.c.b16 %v7311, %v7303
    %v8176 = vpack.c.b16 %v7312, %v7304
    %v8177 = vpack.c.b16 %v7313, %v7305
    %v8178 = vpack.c.b16 %v7314, %v7306
    %v8179 = vpack.c.b16 %v7315, %v7307
    %v8180 = vpack.c.b16 %v7324, %v7316
    %v8181 = vpack.c.b16 %v7325, %v7317
    %v8182 = vpack.c.b16 %v7326, %v7318
    %v8183 = vpack.c.b16 %v7327, %v7319
    %v8184 = vpack.c.b16 %v7328, %v7320
    %v8185 = vpack.c.b16 %v7329, %v7321
    %v8186 = vpack.c.b16 %v7330, %v7322
    %v8187 = vpack.c.b16 %v7331, %v7323
    %v8188 = vpack.c.b16 %v7340, %v7332
    %v8189 = vpack.c.b16 %v7341, %v7333
    %v8190 = vpack.c.b16 %v7342, %v7334
    %v8191 = vpack.c.b16 %v7343, %v7335
    %v8192 = vpack.c.b16 %v7344, %v7336
    %v8193 = vpack.c.b16 %v7345, %v7337
    %v8194 = vpack.c.b16 %v7346, %v7338
    %v8195 = vpack.c.b16 %v7347, %v7339
    %v8196 = vpack.c.b16 %v7356, %v7348
    %v8197 = vpack.c.b16 %v7357, %v7349
    %v8198 = vpack.c.b16 %v7358, %v7350
    %v8199 = vpack.c.b16 %v7359, %v7351
    %v8200 = vpack.c.b16 %v7360, %v7352
    %v8201 = vpack.c.b16 %v7361, %v7353
    %v8202 = vpack.c.b16 %v7362, %v7354
    %v8203 = vpack.c.b16 %v7363, %v7355
    %v8204 = vpack.c.b16 %v7372, %v7364
    %v8205 = vpack.c.b16 %v7373, %v7365
    %v8206 = vpack.c.b16 %v7374, %v7366
    %v8207 = vpack.c.b16 %v7375, %v7367
    %v8208 = vpack.c.b16 %v7376, %v7368
    %v8209 = vpack.c.b16 %v7377, %v7369
    %v8210 = vpack.c.b16 %v7378, %v7370
    %v8211 = vpack.c.b16 %v7379, %v7371
    %v8212 = vpack.c.b16 %v7388, %v7380
    %v8213 = vpack.c.b16 %v7389, %v7381
    %v8214 = vpack.c.b16 %v7390, %v7382
    %v8215 = vpack.c.b16 %v7391, %v7383
    %v8216 = vpack.c.b16 %v7392, %v7384
    %v8217 = vpack.c.b16 %v7393, %v7385
    %v8218 = vpack.c.b16 %v7394, %v7386
    %v8219 = vpack.c.b16 %v7395, %v7387
    %v8220 = vpack.c.b16 %v7404, %v7396
    %v8221 = vpack.c.b16 %v7405, %v7397
    %v8222 = vpack.c.b16 %v7406, %v7398
    %v8223 = vpack.c.b16 %v7407, %v7399
    %v8224 = vpack.c.b16 %v7408, %v7400
    %v8225 = vpack.c.b16 %v7409, %v7401
    %v8226 = vpack.c.b16 %v7410, %v7402
    %v8227 = vpack.c.b16 %v7411, %v7403
    %v8228 = vpack.c.b16 %v7420, %v7412
    %v8229 = vpack.c.b16 %v7421, %v7413
    %v8230 = vpack.c.b16 %v7422, %v7414
    %v8231 = vpack.c.b16 %v7423, %v7415
    %v8232 = vpack.c.b16 %v7424, %v7416
    %v8233 = vpack.c.b16 %v7425, %v7417
    %v8234 = vpack.c.b16 %v7426, %v7418
    %v8235 = vpack.c.b16 %v7427, %v7419
    %v8236 = vpack.c.b16 %v7436, %v7428
    %v8237 = vpack.c.b16 %v7437, %v7429
    %v8238 = vpack.c.b16 %v7438, %v7430
    %v8239 = vpack.c.b16 %v7439, %v7431
    %v8240 = vpack.c.b16 %v7440, %v7432
    %v8241 = vpack.c.b16 %v7441, %v7433
    %v8242 = vpack.c.b16 %v7442, %v7434
    %v8243 = vpack.c.b16 %v7443, %v7435
    %v8244 = vpack.c.b16 %v7452, %v7444
    %v8245 = vpack.c.b16 %v7453, %v7445
    %v8246 = vpack.c.b16 %v7454, %v7446
    %v8247 = vpack.c.b16 %v7455, %v7447
    %v8248 = vpack.c.b16 %v7456, %v7448
    %v8249 = vpack.c.b16 %v7457, %v7449
    %v8250 = vpack.c.b16 %v7458, %v7450
    %v8251 = vpack.c.b16 %v7459, %v7451
    %v8252 = vpack.c.b16 %v7468, %v7460
    %v8253 = vpack.c.b16 %v7469, %v7461
    %v8254 = vpack.c.b16 %v7470, %v7462
    %v8255 = vpack.c.b16 %v7471, %v7463
    %v8256 = vpack.c.b16 %v7472, %v7464
    %v8257 = vpack.c.b16 %v7473, %v7465
    %v8258 = vpack.c.b16 %v7474, %v7466
    %v8259 = vpack.c.b16 %v7475, %v7467
    %v8260 = vpack.c.b16 %v7484, %v7476
    %v8261 = vpack.c.b16 %v7485, %v7477
    %v8262 = vpack.c.b16 %v7486, %v7478
    %v8263 = vpack.c.b16 %v7487, %v7479
    %v8264 = vpack.c.b16 %v7488, %v7480
    %v8265 = vpack.c.b16 %v7489, %v7481
    %v8266 = vpack.c.b16 %v7490, %v7482
    %v8267 = vpack.c.b16 %v7491, %v7483
    %v8268 = vpack.c.b16 %v7500, %v7492
    %v8269 = vpack.c.b16 %v7501, %v7493
    %v8270 = vpack.c.b16 %v7502, %v7494
    %v8271 = vpack.c.b16 %v7503, %v7495
    %v8272 = vpack.c.b16 %v7504, %v7496
    %v8273 = vpack.c.b16 %v7505, %v7497
    %v8274 = vpack.c.b16 %v7506, %v7498
    %v8275 = vpack.c.b16 %v7507, %v7499
    %v8276 = vpack.c.b16 %v7516, %v7508
    %v8277 = vpack.c.b16 %v7517, %v7509
    %v8278 = vpack.c.b16 %v7518, %v7510
    %v8279 = vpack.c.b16 %v7519, %v7511
    %v8280 = vpack.c.b16 %v7520, %v7512
    %v8281 = vpack.c.b16 %v7521, %v7513
    %v8282 = vpack.c.b16 %v7522, %v7514
    %v8283 = vpack.c.b16 %v7523, %v7515
    %v8284 = vpack.c.b16 %v7532, %v7524
    %v8285 = vpack.c.b16 %v7533, %v7525
    %v8286 = vpack.c.b16 %v7534, %v7526
    %v8287 = vpack.c.b16 %v7535, %v7527
    %v8288 = vpack.c.b16 %v7536, %v7528
    %v8289 = vpack.c.b16 %v7537, %v7529
    %v8290 = vpack.c.b16 %v7538, %v7530
    %v8291 = vpack.c.b16 %v7539, %v7531
    %v8292 = vpack.c.b16 %v7548, %v7540
    %v8293 = vpack.c.b16 %v7549, %v7541
    %v8294 = vpack.c.b16 %v7550, %v7542
    %v8295 = vpack.c.b16 %v7551, %v7543
    %v8296 = vpack.c.b16 %v7552, %v7544
    %v8297 = vpack.c.b16 %v7553, %v7545
    %v8298 = vpack.c.b16 %v7554, %v7546
    %v8299 = vpack.c.b16 %v7555, %v7547
    %v8300 = vpack.c.b16 %v7564, %v7556
    %v8301 = vpack.c.b16 %v7565, %v7557
    %v8302 = vpack.c.b16 %v7566, %v7558
    %v8303 = vpack.c.b16 %v7567, %v7559
    %v8304 = vpack.c.b16 %v7568, %v7560
    %v8305 = vpack.c.b16 %v7569, %v7561
    %v8306 = vpack.c.b16 %v7570, %v7562
    %v8307 = vpack.c.b16 %v7571, %v7563
    %v8308 = vpack.c.b16 %v7580, %v7572
    %v8309 = vpack.c.b16 %v7581, %v7573
    %v8310 = vpack.c.b16 %v7582, %v7574
    %v8311 = vpack.c.b16 %v7583, %v7575
    %v8312 = vpack.c.b16 %v7584, %v7576
    %v8313 = vpack.c.b16 %v7585, %v7577
    %v8314 = vpack.c.b16 %v7586, %v7578
    %v8315 = vpack.c.b16 %v7587, %v7579
    %v8316 = vpack.c.b16 %v7596, %v7588
    %v8317 = vpack.c.b16 %v7597, %v7589
    %v8318 = vpack.c.b16 %v7598, %v7590
    %v8319 = vpack.c.b16 %v7599, %v7591
    %v8320 = vpack.c.b16 %v7600, %v7592
    %v8321 = vpack.c.b16 %v7601, %v7593
    %v8322 = vpack.c.b16 %v7602, %v7594
    %v8323 = vpack.c.b16 %v7603, %v7595
    %v8324 = vpack.c.b16 %v7612, %v7604
    %v8325 = vpack.c.b16 %v7613, %v7605
    %v8326 = vpack.c.b16 %v7614, %v7606
    %v8327 = vpack.c.b16 %v7615, %v7607
    %v8328 = vpack.c.b16 %v7616, %v7608
    %v8329 = vpack.c.b16 %v7617, %v7609
    %v8330 = vpack.c.b16 %v7618, %v7610
    %v8331 = vpack.c.b16 %v7619, %v7611
    %v8332 = vpack.c.b16 %v7628, %v7620
    %v8333 = vpack.c.b16 %v7629, %v7621
    %v8334 = vpack.c.b16 %v7630, %v7622
    %v8335 = vpack.c.b16 %v7631, %v7623
    %v8336 = vpack.c.b16 %v7632, %v7624
    %v8337 = vpack.c.b16 %v7633, %v7625
    %v8338 = vpack.c.b16 %v7634, %v7626
    %v8339 = vpack.c.b16 %v7635, %v7627
    %v8340 = vpack.c.b16 %v7644, %v7636
    %v8341 = vpack.c.b16 %v7645, %v7637
    %v8342 = vpack.c.b16 %v7646, %v7638
    %v8343 = vpack.c.b16 %v7647, %v7639
    %v8344 = vpack.c.b16 %v7648, %v7640
    %v8345 = vpack.c.b16 %v7649, %v7641
    %v8346 = vpack.c.b16 %v7650, %v7642
    %v8347 = vpack.c.b16 %v7651, %v7643
    %v8348 = vpack.c.b16 %v7660, %v7652
    %v8349 = vpack.c.b16 %v7661, %v7653
    %v8350 = vpack.c.b16 %v7662, %v7654
    %v8351 = vpack.c.b16 %v7663, %v7655
    %v8352 = vpack.c.b16 %v7664, %v7656
    %v8353 = vpack.c.b16 %v7665, %v7657
    %v8354 = vpack.c.b16 %v7666, %v7658
    %v8355 = vpack.c.b16 %v7667, %v7659
    %v8356 = vpack.c.b16 %v7676, %v7668
    %v8357 = vpack.c.b16 %v7677, %v7669
    %v8358 = vpack.c.b16 %v7678, %v7670
    %v8359 = vpack.c.b16 %v7679, %v7671
    %v8360 = vpack.c.b16 %v7680, %v7672
    %v8361 = vpack.c.b16 %v7681, %v7673
    %v8362 = vpack.c.b16 %v7682, %v7674
    %v8363 = vpack.c.b16 %v7683, %v7675
    %v8364 = vpack.c.b16 %v7692, %v7684
    %v8365 = vpack.c.b16 %v7693, %v7685
    %v8366 = vpack.c.b16 %v7694, %v7686
    %v8367 = vpack.c.b16 %v7695, %v7687
    %v8368 = vpack.c.b16 %v7696, %v7688
    %v8369 = vpack.c.b16 %v7697, %v7689
    %v8370 = vpack.c.b16 %v7698, %v7690
    %v8371 = vpack.c.b16 %v7699, %v7691
    %v8372 = vpack.c.b16 %v7708, %v7700
    %v8373 = vpack.c.b16 %v7709, %v7701
    %v8374 = vpack.c.b16 %v7710, %v7702
    %v8375 = vpack.c.b16 %v7711, %v7703
    %v8376 = vpack.c.b16 %v7712, %v7704
    %v8377 = vpack.c.b16 %v7713, %v7705
    %v8378 = vpack.c.b16 %v7714, %v7706
    %v8379 = vpack.c.b16 %v7715, %v7707
    %v8380 = vpack.c.b16 %v7724, %v7716
    %v8381 = vpack.c.b16 %v7725, %v7717
    %v8382 = vpack.c.b16 %v7726, %v7718
    %v8383 = vpack.c.b16 %v7727, %v7719
    %v8384 = vpack.c.b16 %v7728, %v7720
    %v8385 = vpack.c.b16 %v7729, %v7721
    %v8386 = vpack.c.b16 %v7730, %v7722
    %v8387 = vpack.c.b16 %v7731, %v7723
    %v8388 = vpack.c.b16 %v7740, %v7732
    %v8389 = vpack.c.b16 %v7741, %v7733
    %v8390 = vpack.c.b16 %v7742, %v7734
    %v8391 = vpack.c.b16 %v7743, %v7735
    %v8392 = vpack.c.b16 %v7744, %v7736
    %v8393 = vpack.c.b16 %v7745, %v7737
    %v8394 = vpack.c.b16 %v7746, %v7738
    %v8395 = vpack.c.b16 %v7747, %v7739
    %v8396 = vpack.c.b16 %v7756, %v7748
    %v8397 = vpack.c.b16 %v7757, %v7749
    %v8398 = vpack.c.b16 %v7758, %v7750
    %v8399 = vpack.c.b16 %v7759, %v7751
    %v8400 = vpack.c.b16 %v7760, %v7752
    %v8401 = vpack.c.b16 %v7761, %v7753
    %v8402 = vpack.c.b16 %v7762, %v7754
    %v8403 = vpack.c.b16 %v7763, %v7755
    %v8404 = vpack.c.b16 %v7772, %v7764
    %v8405 = vpack.c.b16 %v7773, %v7765
    %v8406 = vpack.c.b16 %v7774, %v7766
    %v8407 = vpack.c.b16 %v7775, %v7767
    %v8408 = vpack.c.b16 %v7776, %v7768
    %v8409 = vpack.c.b16 %v7777, %v7769
    %v8410 = vpack.c.b16 %v7778, %v7770
    %v8411 = vpack.c.b16 %v7779, %v7771
    %v8412 = vpack.c.b16 %v7788, %v7780
    %v8413 = vpack.c.b16 %v7789, %v7781
    %v8414 = vpack.c.b16 %v7790, %v7782
    %v8415 = vpack.c.b16 %v7791, %v7783
    %v8416 = vpack.c.b16 %v7792, %v7784
    %v8417 = vpack.c.b16 %v7793, %v7785
    %v8418 = vpack.c.b16 %v7794, %v7786
    %v8419 = vpack.c.b16 %v7795, %v7787
    %v8420 = vpack.c.b16 %v7804, %v7796
    %v8421 = vpack.c.b16 %v7805, %v7797
    %v8422 = vpack.c.b16 %v7806, %v7798
    %v8423 = vpack.c.b16 %v7807, %v7799
    %v8424 = vpack.c.b16 %v7808, %v7800
    %v8425 = vpack.c.b16 %v7809, %v7801
    %v8426 = vpack.c.b16 %v7810, %v7802
    %v8427 = vpack.c.b16 %v7811, %v7803
    %v8428 = vpack.c.b16 %v7820, %v7812
    %v8429 = vpack.c.b16 %v7821, %v7813
    %v8430 = vpack.c.b16 %v7822, %v7814
    %v8431 = vpack.c.b16 %v7823, %v7815
    %v8432 = vpack.c.b16 %v7824, %v7816
    %v8433 = vpack.c.b16 %v7825, %v7817
    %v8434 = vpack.c.b16 %v7826, %v7818
    %v8435 = vpack.c.b16 %v7827, %v7819
    %v8436 = vpack.c.b16 %v7836, %v7828
    %v8437 = vpack.c.b16 %v7837, %v7829
    %v8438 = vpack.c.b16 %v7838, %v7830
    %v8439 = vpack.c.b16 %v7839, %v7831
    %v8440 = vpack.c.b16 %v7840, %v7832
    %v8441 = vpack.c.b16 %v7841, %v7833
    %v8442 = vpack.c.b16 %v7842, %v7834
    %v8443 = vpack.c.b16 %v7843, %v7835
    %v8444 = vpack.c.b16 %v7852, %v7844
    %v8445 = vpack.c.b16 %v7853, %v7845
    %v8446 = vpack.c.b16 %v7854, %v7846
    %v8447 = vpack.c.b16 %v7855, %v7847
    %v8448 = vpack.c.b16 %v7856, %v7848
    %v8449 = vpack.c.b16 %v7857, %v7849
    %v8450 = vpack.c.b16 %v7858, %v7850
    %v8451 = vpack.c.b16 %v7859, %v7851
    %v8452 = vpack.c.b16 %v7868, %v7860
    %v8453 = vpack.c.b16 %v7869, %v7861
    %v8454 = vpack.c.b16 %v7870, %v7862
    %v8455 = vpack.c.b16 %v7871, %v7863
    %v8456 = vpack.c.b16 %v7872, %v7864
    %v8457 = vpack.c.b16 %v7873, %v7865
    %v8458 = vpack.c.b16 %v7874, %v7866
    %v8459 = vpack.c.b16 %v7875, %v7867
    %v8460 = vpack.c.b16 %v7884, %v7876
    %v8461 = vpack.c.b16 %v7885, %v7877
    %v8462 = vpack.c.b16 %v7886, %v7878
    %v8463 = vpack.c.b16 %v7887, %v7879
    %v8464 = vpack.c.b16 %v7888, %v7880
    %v8465 = vpack.c.b16 %v7889, %v7881
    %v8466 = vpack.c.b16 %v7890, %v7882
    %v8467 = vpack.c.b16 %v7891, %v7883
    %v8468 = vpack.c.b16 %v7900, %v7892
    %v8469 = vpack.c.b16 %v7901, %v7893
    %v8470 = vpack.c.b16 %v7902, %v7894
    %v8471 = vpack.c.b16 %v7903, %v7895
    %v8472 = vpack.c.b16 %v7904, %v7896
    %v8473 = vpack.c.b16 %v7905, %v7897
    %v8474 = vpack.c.b16 %v7906, %v7898
    %v8475 = vpack.c.b16 %v7907, %v7899
    %v8476 = vpack.c.b16 %v7916, %v7908
    %v8477 = vpack.c.b16 %v7917, %v7909
    %v8478 = vpack.c.b16 %v7918, %v7910
    %v8479 = vpack.c.b16 %v7919, %v7911
    %v8480 = vpack.c.b16 %v7920, %v7912
    %v8481 = vpack.c.b16 %v7921, %v7913
    %v8482 = vpack.c.b16 %v7922, %v7914
    %v8483 = vpack.c.b16 %v7923, %v7915
    %v8484 = vpack.c.b16 %v7932, %v7924
    %v8485 = vpack.c.b16 %v7933, %v7925
    %v8486 = vpack.c.b16 %v7934, %v7926
    %v8487 = vpack.c.b16 %v7935, %v7927
    %v8488 = vpack.c.b16 %v7936, %v7928
    %v8489 = vpack.c.b16 %v7937, %v7929
    %v8490 = vpack.c.b16 %v7938, %v7930
    %v8491 = vpack.c.b16 %v7939, %v7931
    %v8492 = vpack.c.b16 %v7948, %v7940
    %v8493 = vpack.c.b16 %v7949, %v7941
    %v8494 = vpack.c.b16 %v7950, %v7942
    %v8495 = vpack.c.b16 %v7951, %v7943
    %v8496 = vpack.c.b16 %v7952, %v7944
    %v8497 = vpack.c.b16 %v7953, %v7945
    %v8498 = vpack.c.b16 %v7954, %v7946
    %v8499 = vpack.c.b16 %v7955, %v7947
    %v8500 = vpack.c.b16 %v7964, %v7956
    %v8501 = vpack.c.b16 %v7965, %v7957
    %v8502 = vpack.c.b16 %v7966, %v7958
    %v8503 = vpack.c.b16 %v7967, %v7959
    %v8504 = vpack.c.b16 %v7968, %v7960
    %v8505 = vpack.c.b16 %v7969, %v7961
    %v8506 = vpack.c.b16 %v7970, %v7962
    %v8507 = vpack.c.b16 %v7971, %v7963
    %v8508 = vpack.c.b16 %v7980, %v7972
    %v8509 = vpack.c.b16 %v7981, %v7973
    %v8510 = vpack.c.b16 %v7982, %v7974
    %v8511 = vpack.c.b16 %v7983, %v7975
    %v8512 = vpack.c.b16 %v7984, %v7976
    %v8513 = vpack.c.b16 %v7985, %v7977
    %v8514 = vpack.c.b16 %v7986, %v7978
    %v8515 = vpack.c.b16 %v7987, %v7979
    %v8516 = vpack.c.b16 %v7996, %v7988
    %v8517 = vpack.c.b16 %v7997, %v7989
    %v8518 = vpack.c.b16 %v7998, %v7990
    %v8519 = vpack.c.b16 %v7999, %v7991
    %v8520 = vpack.c.b16 %v8000, %v7992
    %v8521 = vpack.c.b16 %v8001, %v7993
    %v8522 = vpack.c.b16 %v8002, %v7994
    %v8523 = vpack.c.b16 %v8003, %v7995
    %v8524 = vpack.c.b16 %v8012, %v8004
    %v8525 = vpack.c.b16 %v8013, %v8005
    %v8526 = vpack.c.b16 %v8014, %v8006
    %v8527 = vpack.c.b16 %v8015, %v8007
    %v8528 = vpack.c.b16 %v8016, %v8008
    %v8529 = vpack.c.b16 %v8017, %v8009
    %v8530 = vpack.c.b16 %v8018, %v8010
    %v8531 = vpack.c.b16 %v8019, %v8011
    %9044 = vmatprep.subr.bf16.mxu0 %v8021
    %9045 = vmatpush1.bf16.msra.mxu0 %v8020
    %9046 = vmatprep.subr.bf16.mxu0 %v8029
    %9047 = vmatpush1.bf16.msra.mxu0 %v8028
    %9048 = vmatprep.subr.bf16.mxu0 %v8037
    %9049 = vmatpush1.bf16.msra.mxu0 %v8036
    %9050 = vmatprep.subr.bf16.mxu0 %v8045
    %9051 = vmatpush1.bf16.msra.mxu0 %v8044
    %9052 = vmatprep.subr.bf16.mxu0 %v8053
    %9053 = vmatpush1.bf16.msra.mxu0 %v8052
    %9054 = vmatprep.subr.bf16.mxu0 %v8061
    %9055 = vmatpush1.bf16.msra.mxu0 %v8060
    %9056 = vmatprep.subr.bf16.mxu0 %v8069
    %9057 = vmatpush1.bf16.msra.mxu0 %v8068
    %9058 = vmatprep.subr.bf16.mxu0 %v8077
    %9059 = vmatpush1.bf16.msra.mxu0 %v8076
    %9060 = vmatprep.subr.bf16.mxu0 %v8085
    %9061 = vmatpush1.bf16.msra.mxu0 %v8084
    %9062 = vmatprep.subr.bf16.mxu0 %v8093
    %9063 = vmatpush1.bf16.msra.mxu0 %v8092
    %9064 = vmatprep.subr.bf16.mxu0 %v8101
    %9065 = vmatpush1.bf16.msra.mxu0 %v8100
    %9066 = vmatprep.subr.bf16.mxu0 %v8109
    %9067 = vmatpush1.bf16.msra.mxu0 %v8108
    %9068 = vmatprep.subr.bf16.mxu0 %v8117
    %9069 = vmatpush1.bf16.msra.mxu0 %v8116
    %9070 = vmatprep.subr.bf16.mxu0 %v8125
    %9071 = vmatpush1.bf16.msra.mxu0 %v8124
    %9072 = vmatprep.subr.bf16.mxu0 %v8133
    %9073 = vmatpush1.bf16.msra.mxu0 %v8132
    %9074 = vmatprep.subr.bf16.mxu0 %v8141
    %9075 = vmatpush1.bf16.msra.mxu0 %v8140
    %9076 = vmatprep.mubr.bf16.mxu0 %v5923
    %9077 = vmatmul.mubr.bf16.gmra.mrb[0].mxu0 %v5922
    %v9078 = vpop.f32.mrb[0].mxu0
    %v9079 = vadd.f32 %v6447, %v9078
    %v9080 = vpop.f32.mrb[0].mxu0
    %v9081 = vadd.f32 %v6451, %v9080
    %v9082 = vpop.f32.mrb[0].mxu0
    %v9083 = vadd.f32 %v6447, %v9082
    %v9084 = vpop.f32.mrb[0].mxu0
    %v9085 = vadd.f32 %v6451, %v9084
    %9086 = vdwg.mxu0
    %9087 = vmatprep.subr.bf16.mxu0 %v8149
    %9088 = vmatpush1.bf16.msra.mxu0 %v8148
    %9089 = vmatprep.subr.bf16.mxu0 %v8157
    %9090 = vmatpush1.bf16.msra.mxu0 %v8156
    %9091 = vmatprep.subr.bf16.mxu0 %v8165
    %9092 = vmatpush1.bf16.msra.mxu0 %v8164
    %9093 = vmatprep.subr.bf16.mxu0 %v8173
    %9094 = vmatpush1.bf16.msra.mxu0 %v8172
    %9095 = vmatprep.subr.bf16.mxu0 %v8181
    %9096 = vmatpush1.bf16.msra.mxu0 %v8180
    %9097 = vmatprep.subr.bf16.mxu0 %v8189
    %9098 = vmatpush1.bf16.msra.mxu0 %v8188
    %9099 = vmatprep.subr.bf16.mxu0 %v8197
    %9100 = vmatpush1.bf16.msra.mxu0 %v8196
    %9101 = vmatprep.subr.bf16.mxu0 %v8205
    %9102 = vmatpush1.bf16.msra.mxu0 %v8204
    %9103 = vmatprep.subr.bf16.mxu0 %v8213
    %9104 = vmatpush1.bf16.msra.mxu0 %v8212
    %9105 = vmatprep.subr.bf16.mxu0 %v8221
    %9106 = vmatpush1.bf16.msra.mxu0 %v8220
    %9107 = vmatprep.subr.bf16.mxu0 %v8229
    %9108 = vmatpush1.bf16.msra.mxu0 %v8228
    %9109 = vmatprep.subr.bf16.mxu0 %v8237
    %9110 = vmatpush1.bf16.msra.mxu0 %v8236
    %9111 = vmatprep.subr.bf16.mxu0 %v8245
    %9112 = vmatpush1.bf16.msra.mxu0 %v8244
    %9113 = vmatprep.subr.bf16.mxu0 %v8253
    %9114 = vmatpush1.bf16.msra.mxu0 %v8252
    %9115 = vmatprep.subr.bf16.mxu0 %v8261
    %9116 = vmatpush1.bf16.msra.mxu0 %v8260
    %9117 = vmatprep.subr.bf16.mxu0 %v8269
    %9118 = vmatpush1.bf16.msra.mxu0 %v8268
    %9119 = vmatprep.mubr.bf16.mxu0 %v5925
    %9120 = vmatmul.mubr.bf16.gmra.mrb[0].mxu0 %v5924
    %v9121 = vpop.f32.mrb[0].mxu0
    %v9122 = vadd.f32 %v9079, %v9121
    %v9123 = vpop.f32.mrb[0].mxu0
    %v9124 = vadd.f32 %v9081, %v9123
    %v9125 = vpop.f32.mrb[0].mxu0
    %v9126 = vadd.f32 %v9083, %v9125
    %v9127 = vpop.f32.mrb[0].mxu0
    %v9128 = vadd.f32 %v9085, %v9127
    %9129 = vdwg.mxu0
    %9130 = vmatprep.subr.bf16.mxu0 %v8277
    %9131 = vmatpush1.bf16.msra.mxu0 %v8276
    %9132 = vmatprep.subr.bf16.mxu0 %v8285
    %9133 = vmatpush1.bf16.msra.mxu0 %v8284
    %9134 = vmatprep.subr.bf16.mxu0 %v8293
    %9135 = vmatpush1.bf16.msra.mxu0 %v8292
    %9136 = vmatprep.subr.bf16.mxu0 %v8301
    %9137 = vmatpush1.bf16.msra.mxu0 %v8300
    %9138 = vmatprep.subr.bf16.mxu0 %v8309
    %9139 = vmatpush1.bf16.msra.mxu0 %v8308
    %9140 = vmatprep.subr.bf16.mxu0 %v8317
    %9141 = vmatpush1.bf16.msra.mxu0 %v8316
    %9142 = vmatprep.subr.bf16.mxu0 %v8325
    %9143 = vmatpush1.bf16.msra.mxu0 %v8324
    %9144 = vmatprep.subr.bf16.mxu0 %v8333
    %9145 = vmatpush1.bf16.msra.mxu0 %v8332
    %9146 = vmatprep.subr.bf16.mxu0 %v8341
    %9147 = vmatpush1.bf16.msra.mxu0 %v8340
    %9148 = vmatprep.subr.bf16.mxu0 %v8349
    %9149 = vmatpush1.bf16.msra.mxu0 %v8348
    %9150 = vmatprep.subr.bf16.mxu0 %v8357
    %9151 = vmatpush1.bf16.msra.mxu0 %v8356
    %9152 = vmatprep.subr.bf16.mxu0 %v8365
    %9153 = vmatpush1.bf16.msra.mxu0 %v8364
    %9154 = vmatprep.subr.bf16.mxu0 %v8373
    %9155 = vmatpush1.bf16.msra.mxu0 %v8372
    %9156 = vmatprep.subr.bf16.mxu0 %v8381
    %9157 = vmatpush1.bf16.msra.mxu0 %v8380
    %9158 = vmatprep.subr.bf16.mxu0 %v8389
    %9159 = vmatpush1.bf16.msra.mxu0 %v8388
    %9160 = vmatprep.subr.bf16.mxu0 %v8397
    %9161 = vmatpush1.bf16.msra.mxu0 %v8396
    %9162 = vmatprep.mubr.bf16.mxu0 %v5927
    %9163 = vmatmul.mubr.bf16.gmra.mrb[0].mxu0 %v5926
    %v9164 = vpop.f32.mrb[0].mxu0
    %v9165 = vadd.f32 %v9122, %v9164
    %v9166 = vpop.f32.mrb[0].mxu0
    %v9167 = vadd.f32 %v9124, %v9166
    %v9168 = vpop.f32.mrb[0].mxu0
    %v9169 = vadd.f32 %v9126, %v9168
    %v9170 = vpop.f32.mrb[0].mxu0
    %v9171 = vadd.f32 %v9128, %v9170
    %9172 = vdwg.mxu0
    %9173 = vmatprep.subr.bf16.mxu0 %v8405
    %9174 = vmatpush1.bf16.msra.mxu0 %v8404
    %9175 = vmatprep.subr.bf16.mxu0 %v8413
    %9176 = vmatpush1.bf16.msra.mxu0 %v8412
    %9177 = vmatprep.subr.bf16.mxu0 %v8421
    %9178 = vmatpush1.bf16.msra.mxu0 %v8420
    %9179 = vmatprep.subr.bf16.mxu0 %v8429
    %9180 = vmatpush1.bf16.msra.mxu0 %v8428
    %9181 = vmatprep.subr.bf16.mxu0 %v8437
    %9182 = vmatpush1.bf16.msra.mxu0 %v8436
    %9183 = vmatprep.subr.bf16.mxu0 %v8445
    %9184 = vmatpush1.bf16.msra.mxu0 %v8444
    %9185 = vmatprep.subr.bf16.mxu0 %v8453
    %9186 = vmatpush1.bf16.msra.mxu0 %v8452
    %9187 = vmatprep.subr.bf16.mxu0 %v8461
    %9188 = vmatpush1.bf16.msra.mxu0 %v8460
    %9189 = vmatprep.subr.bf16.mxu0 %v8469
    %9190 = vmatpush1.bf16.msra.mxu0 %v8468
    %9191 = vmatprep.subr.bf16.mxu0 %v8477
    %9192 = vmatpush1.bf16.msra.mxu0 %v8476
    %9193 = vmatprep.subr.bf16.mxu0 %v8485
    %9194 = vmatpush1.bf16.msra.mxu0 %v8484
    %9195 = vmatprep.subr.bf16.mxu0 %v8493
    %9196 = vmatpush1.bf16.msra.mxu0 %v8492
    %9197 = vmatprep.subr.bf16.mxu0 %v8501
    %9198 = vmatpush1.bf16.msra.mxu0 %v8500
    %9199 = vmatprep.subr.bf16.mxu0 %v8509
    %9200 = vmatpush1.bf16.msra.mxu0 %v8508
    %9201 = vmatprep.subr.bf16.mxu0 %v8517
    %9202 = vmatpush1.bf16.msra.mxu0 %v8516
    %9203 = vmatprep.subr.bf16.mxu0 %v8525
    %9204 = vmatpush1.bf16.msra.mxu0 %v8524
    %9205 = vmatprep.mubr.bf16.mxu0 %v5929
    %9206 = vmatmul.mubr.bf16.gmra.mrb[0].mxu0 %v5928
    %v9207 = vpop.f32.mrb[0].mxu0
    %v9208 = vadd.f32 %v9165, %v9207
    %v9209 = vpop.f32.mrb[0].mxu0
    %v9210 = vadd.f32 %v9167, %v9209
    %v9211 = vpop.f32.mrb[0].mxu0
    %v9212 = vadd.f32 %v9169, %v9211
    %v9213 = vpop.f32.mrb[0].mxu0
    %v9214 = vadd.f32 %v9171, %v9213
    %9215 = vdwg.mxu0
    %9216 = vmatprep.subr.bf16.mxu0 %v8023
    %9217 = vmatpush1.bf16.msra.mxu0 %v8022
    %9218 = vmatprep.subr.bf16.mxu0 %v8031
    %9219 = vmatpush1.bf16.msra.mxu0 %v8030
    %9220 = vmatprep.subr.bf16.mxu0 %v8039
    %9221 = vmatpush1.bf16.msra.mxu0 %v8038
    %9222 = vmatprep.subr.bf16.mxu0 %v8047
    %9223 = vmatpush1.bf16.msra.mxu0 %v8046
    %9224 = vmatprep.subr.bf16.mxu0 %v8055
    %9225 = vmatpush1.bf16.msra.mxu0 %v8054
    %9226 = vmatprep.subr.bf16.mxu0 %v8063
    %9227 = vmatpush1.bf16.msra.mxu0 %v8062
    %9228 = vmatprep.subr.bf16.mxu0 %v8071
    %9229 = vmatpush1.bf16.msra.mxu0 %v8070
    %9230 = vmatprep.subr.bf16.mxu0 %v8079
    %9231 = vmatpush1.bf16.msra.mxu0 %v8078
    %9232 = vmatprep.subr.bf16.mxu0 %v8087
    %9233 = vmatpush1.bf16.msra.mxu0 %v8086
    %9234 = vmatprep.subr.bf16.mxu0 %v8095
    %9235 = vmatpush1.bf16.msra.mxu0 %v8094
    %9236 = vmatprep.subr.bf16.mxu0 %v8103
    %9237 = vmatpush1.bf16.msra.mxu0 %v8102
    %9238 = vmatprep.subr.bf16.mxu0 %v8111
    %9239 = vmatpush1.bf16.msra.mxu0 %v8110
    %9240 = vmatprep.subr.bf16.mxu0 %v8119
    %9241 = vmatpush1.bf16.msra.mxu0 %v8118
    %9242 = vmatprep.subr.bf16.mxu0 %v8127
    %9243 = vmatpush1.bf16.msra.mxu0 %v8126
    %9244 = vmatprep.subr.bf16.mxu0 %v8135
    %9245 = vmatpush1.bf16.msra.mxu0 %v8134
    %9246 = vmatprep.subr.bf16.mxu0 %v8143
    %9247 = vmatpush1.bf16.msra.mxu0 %v8142
    %9248 = vmatprep.mubr.bf16.mxu0 %v5923
    %9249 = vmatmul.mubr.bf16.gmra.mrb[0].mxu0 %v5922
    %v9250 = vpop.f32.mrb[0].mxu0
    %v9251 = vadd.f32 %v6455, %v9250
    %v9252 = vpop.f32.mrb[0].mxu0
    %v9253 = vadd.f32 %v6459, %v9252
    %v9254 = vpop.f32.mrb[0].mxu0
    %v9255 = vadd.f32 %v6455, %v9254
    %v9256 = vpop.f32.mrb[0].mxu0
    %v9257 = vadd.f32 %v6459, %v9256
    %9258 = vdwg.mxu0
    %9259 = vmatprep.subr.bf16.mxu0 %v8151
    %9260 = vmatpush1.bf16.msra.mxu0 %v8150
    %9261 = vmatprep.subr.bf16.mxu0 %v8159
    %9262 = vmatpush1.bf16.msra.mxu0 %v8158
    %9263 = vmatprep.subr.bf16.mxu0 %v8167
    %9264 = vmatpush1.bf16.msra.mxu0 %v8166
    %9265 = vmatprep.subr.bf16.mxu0 %v8175
    %9266 = vmatpush1.bf16.msra.mxu0 %v8174
    %9267 = vmatprep.subr.bf16.mxu0 %v8183
    %9268 = vmatpush1.bf16.msra.mxu0 %v8182
    %9269 = vmatprep.subr.bf16.mxu0 %v8191
    %9270 = vmatpush1.bf16.msra.mxu0 %v8190
    %9271 = vmatprep.subr.bf16.mxu0 %v8199
    %9272 = vmatpush1.bf16.msra.mxu0 %v8198
    %9273 = vmatprep.subr.bf16.mxu0 %v8207
    %9274 = vmatpush1.bf16.msra.mxu0 %v8206
    %9275 = vmatprep.subr.bf16.mxu0 %v8215
    %9276 = vmatpush1.bf16.msra.mxu0 %v8214
    %9277 = vmatprep.subr.bf16.mxu0 %v8223
    %9278 = vmatpush1.bf16.msra.mxu0 %v8222
    %9279 = vmatprep.subr.bf16.mxu0 %v8231
    %9280 = vmatpush1.bf16.msra.mxu0 %v8230
    %9281 = vmatprep.subr.bf16.mxu0 %v8239
    %9282 = vmatpush1.bf16.msra.mxu0 %v8238
    %9283 = vmatprep.subr.bf16.mxu0 %v8247
    %9284 = vmatpush1.bf16.msra.mxu0 %v8246
    %9285 = vmatprep.subr.bf16.mxu0 %v8255
    %9286 = vmatpush1.bf16.msra.mxu0 %v8254
    %9287 = vmatprep.subr.bf16.mxu0 %v8263
    %9288 = vmatpush1.bf16.msra.mxu0 %v8262
    %9289 = vmatprep.subr.bf16.mxu0 %v8271
    %9290 = vmatpush1.bf16.msra.mxu0 %v8270
    %9291 = vmatprep.mubr.bf16.mxu0 %v5925
    %9292 = vmatmul.mubr.bf16.gmra.mrb[0].mxu0 %v5924
    %v9293 = vpop.f32.mrb[0].mxu0
    %v9294 = vadd.f32 %v9251, %v9293
    %v9295 = vpop.f32.mrb[0].mxu0
    %v9296 = vadd.f32 %v9253, %v9295
    %v9297 = vpop.f32.mrb[0].mxu0
    %v9298 = vadd.f32 %v9255, %v9297
    %v9299 = vpop.f32.mrb[0].mxu0
    %v9300 = vadd.f32 %v9257, %v9299
    %9301 = vdwg.mxu0
    %9302 = vmatprep.subr.bf16.mxu0 %v8279
    %9303 = vmatpush1.bf16.msra.mxu0 %v8278
    %9304 = vmatprep.subr.bf16.mxu0 %v8287
    %9305 = vmatpush1.bf16.msra.mxu0 %v8286
    %9306 = vmatprep.subr.bf16.mxu0 %v8295
    %9307 = vmatpush1.bf16.msra.mxu0 %v8294
    %9308 = vmatprep.subr.bf16.mxu0 %v8303
    %9309 = vmatpush1.bf16.msra.mxu0 %v8302
    %9310 = vmatprep.subr.bf16.mxu0 %v8311
    %9311 = vmatpush1.bf16.msra.mxu0 %v8310
    %9312 = vmatprep.subr.bf16.mxu0 %v8319
    %9313 = vmatpush1.bf16.msra.mxu0 %v8318
    %9314 = vmatprep.subr.bf16.mxu0 %v8327
    %9315 = vmatpush1.bf16.msra.mxu0 %v8326
    %9316 = vmatprep.subr.bf16.mxu0 %v8335
    %9317 = vmatpush1.bf16.msra.mxu0 %v8334
    %9318 = vmatprep.subr.bf16.mxu0 %v8343
    %9319 = vmatpush1.bf16.msra.mxu0 %v8342
    %9320 = vmatprep.subr.bf16.mxu0 %v8351
    %9321 = vmatpush1.bf16.msra.mxu0 %v8350
    %9322 = vmatprep.subr.bf16.mxu0 %v8359
    %9323 = vmatpush1.bf16.msra.mxu0 %v8358
    %9324 = vmatprep.subr.bf16.mxu0 %v8367
    %9325 = vmatpush1.bf16.msra.mxu0 %v8366
    %9326 = vmatprep.subr.bf16.mxu0 %v8375
    %9327 = vmatpush1.bf16.msra.mxu0 %v8374
    %9328 = vmatprep.subr.bf16.mxu0 %v8383
    %9329 = vmatpush1.bf16.msra.mxu0 %v8382
    %9330 = vmatprep.subr.bf16.mxu0 %v8391
    %9331 = vmatpush1.bf16.msra.mxu0 %v8390
    %9332 = vmatprep.subr.bf16.mxu0 %v8399
    %9333 = vmatpush1.bf16.msra.mxu0 %v8398
    %9334 = vmatprep.mubr.bf16.mxu0 %v5927
    %9335 = vmatmul.mubr.bf16.gmra.mrb[0].mxu0 %v5926
    %v9336 = vpop.f32.mrb[0].mxu0
    %v9337 = vadd.f32 %v9294, %v9336
    %v9338 = vpop.f32.mrb[0].mxu0
    %v9339 = vadd.f32 %v9296, %v9338
    %v9340 = vpop.f32.mrb[0].mxu0
    %v9341 = vadd.f32 %v9298, %v9340
    %v9342 = vpop.f32.mrb[0].mxu0
    %v9343 = vadd.f32 %v9300, %v9342
    %9344 = vdwg.mxu0
    %9345 = vmatprep.subr.bf16.mxu0 %v8407
    %9346 = vmatpush1.bf16.msra.mxu0 %v8406
    %9347 = vmatprep.subr.bf16.mxu0 %v8415
    %9348 = vmatpush1.bf16.msra.mxu0 %v8414
    %9349 = vmatprep.subr.bf16.mxu0 %v8423
    %9350 = vmatpush1.bf16.msra.mxu0 %v8422
    %9351 = vmatprep.subr.bf16.mxu0 %v8431
    %9352 = vmatpush1.bf16.msra.mxu0 %v8430
    %9353 = vmatprep.subr.bf16.mxu0 %v8439
    %9354 = vmatpush1.bf16.msra.mxu0 %v8438
    %9355 = vmatprep.subr.bf16.mxu0 %v8447
    %9356 = vmatpush1.bf16.msra.mxu0 %v8446
    %9357 = vmatprep.subr.bf16.mxu0 %v8455
    %9358 = vmatpush1.bf16.msra.mxu0 %v8454
    %9359 = vmatprep.subr.bf16.mxu0 %v8463
    %9360 = vmatpush1.bf16.msra.mxu0 %v8462
    %9361 = vmatprep.subr.bf16.mxu0 %v8471
    %9362 = vmatpush1.bf16.msra.mxu0 %v8470
    %9363 = vmatprep.subr.bf16.mxu0 %v8479
    %9364 = vmatpush1.bf16.msra.mxu0 %v8478
    %9365 = vmatprep.subr.bf16.mxu0 %v8487
    %9366 = vmatpush1.bf16.msra.mxu0 %v8486
    %9367 = vmatprep.subr.bf16.mxu0 %v8495
    %9368 = vmatpush1.bf16.msra.mxu0 %v8494
    %9369 = vmatprep.subr.bf16.mxu0 %v8503
    %9370 = vmatpush1.bf16.msra.mxu0 %v8502
    %9371 = vmatprep.subr.bf16.mxu0 %v8511
    %9372 = vmatpush1.bf16.msra.mxu0 %v8510
    %9373 = vmatprep.subr.bf16.mxu0 %v8519
    %9374 = vmatpush1.bf16.msra.mxu0 %v8518
    %9375 = vmatprep.subr.bf16.mxu0 %v8527
    %9376 = vmatpush1.bf16.msra.mxu0 %v8526
    %9377 = vmatprep.mubr.bf16.mxu0 %v5929
    %9378 = vmatmul.mubr.bf16.gmra.mrb[0].mxu0 %v5928
    %v9379 = vpop.f32.mrb[0].mxu0
    %v9380 = vadd.f32 %v9337, %v9379
    %v9381 = vpop.f32.mrb[0].mxu0
    %v9382 = vadd.f32 %v9339, %v9381
    %v9383 = vpop.f32.mrb[0].mxu0
    %v9384 = vadd.f32 %v9341, %v9383
    %v9385 = vpop.f32.mrb[0].mxu0
    %v9386 = vadd.f32 %v9343, %v9385
    %9387 = vdwg.mxu0
    %9388 = vmatprep.subr.bf16.mxu0 %v8025
    %9389 = vmatpush1.bf16.msra.mxu0 %v8024
    %9390 = vmatprep.subr.bf16.mxu0 %v8033
    %9391 = vmatpush1.bf16.msra.mxu0 %v8032
    %9392 = vmatprep.subr.bf16.mxu0 %v8041
    %9393 = vmatpush1.bf16.msra.mxu0 %v8040
    %9394 = vmatprep.subr.bf16.mxu0 %v8049
    %9395 = vmatpush1.bf16.msra.mxu0 %v8048
    %9396 = vmatprep.subr.bf16.mxu0 %v8057
    %9397 = vmatpush1.bf16.msra.mxu0 %v8056
    %9398 = vmatprep.subr.bf16.mxu0 %v8065
    %9399 = vmatpush1.bf16.msra.mxu0 %v8064
    %9400 = vmatprep.subr.bf16.mxu0 %v8073
    %9401 = vmatpush1.bf16.msra.mxu0 %v8072
    %9402 = vmatprep.subr.bf16.mxu0 %v8081
    %9403 = vmatpush1.bf16.msra.mxu0 %v8080
    %9404 = vmatprep.subr.bf16.mxu0 %v8089
    %9405 = vmatpush1.bf16.msra.mxu0 %v8088
    %9406 = vmatprep.subr.bf16.mxu0 %v8097
    %9407 = vmatpush1.bf16.msra.mxu0 %v8096
    %9408 = vmatprep.subr.bf16.mxu0 %v8105
    %9409 = vmatpush1.bf16.msra.mxu0 %v8104
    %9410 = vmatprep.subr.bf16.mxu0 %v8113
    %9411 = vmatpush1.bf16.msra.mxu0 %v8112
    %9412 = vmatprep.subr.bf16.mxu0 %v8121
    %9413 = vmatpush1.bf16.msra.mxu0 %v8120
    %9414 = vmatprep.subr.bf16.mxu0 %v8129
    %9415 = vmatpush1.bf16.msra.mxu0 %v8128
    %9416 = vmatprep.subr.bf16.mxu0 %v8137
    %9417 = vmatpush1.bf16.msra.mxu0 %v8136
    %9418 = vmatprep.subr.bf16.mxu0 %v8145
    %9419 = vmatpush1.bf16.msra.mxu0 %v8144
    %9420 = vmatprep.mubr.bf16.mxu0 %v5923
    %9421 = vmatmul.mubr.bf16.gmra.mrb[0].mxu0 %v5922
    %v9422 = vpop.f32.mrb[0].mxu0
    %v9423 = vadd.f32 %v6463, %v9422
    %v9424 = vpop.f32.mrb[0].mxu0
    %v9425 = vadd.f32 %v6467, %v9424
    %v9426 = vpop.f32.mrb[0].mxu0
    %v9427 = vadd.f32 %v6463, %v9426
    %v9428 = vpop.f32.mrb[0].mxu0
    %v9429 = vadd.f32 %v6467, %v9428
    %9430 = vdwg.mxu0
    %9431 = vmatprep.subr.bf16.mxu0 %v8153
    %9432 = vmatpush1.bf16.msra.mxu0 %v8152
    %9433 = vmatprep.subr.bf16.mxu0 %v8161
    %9434 = vmatpush1.bf16.msra.mxu0 %v8160
    %9435 = vmatprep.subr.bf16.mxu0 %v8169
    %9436 = vmatpush1.bf16.msra.mxu0 %v8168
    %9437 = vmatprep.subr.bf16.mxu0 %v8177
    %9438 = vmatpush1.bf16.msra.mxu0 %v8176
    %9439 = vmatprep.subr.bf16.mxu0 %v8185
    %9440 = vmatpush1.bf16.msra.mxu0 %v8184
    %9441 = vmatprep.subr.bf16.mxu0 %v8193
    %9442 = vmatpush1.bf16.msra.mxu0 %v8192
    %9443 = vmatprep.subr.bf16.mxu0 %v8201
    %9444 = vmatpush1.bf16.msra.mxu0 %v8200
    %9445 = vmatprep.subr.bf16.mxu0 %v8209
    %9446 = vmatpush1.bf16.msra.mxu0 %v8208
    %9447 = vmatprep.subr.bf16.mxu0 %v8217
    %9448 = vmatpush1.bf16.msra.mxu0 %v8216
    %9449 = vmatprep.subr.bf16.mxu0 %v8225
    %9450 = vmatpush1.bf16.msra.mxu0 %v8224
    %9451 = vmatprep.subr.bf16.mxu0 %v8233
    %9452 = vmatpush1.bf16.msra.mxu0 %v8232
    %9453 = vmatprep.subr.bf16.mxu0 %v8241
    %9454 = vmatpush1.bf16.msra.mxu0 %v8240
    %9455 = vmatprep.subr.bf16.mxu0 %v8249
    %9456 = vmatpush1.bf16.msra.mxu0 %v8248
    %9457 = vmatprep.subr.bf16.mxu0 %v8257
    %9458 = vmatpush1.bf16.msra.mxu0 %v8256
    %9459 = vmatprep.subr.bf16.mxu0 %v8265
    %9460 = vmatpush1.bf16.msra.mxu0 %v8264
    %9461 = vmatprep.subr.bf16.mxu0 %v8273
    %9462 = vmatpush1.bf16.msra.mxu0 %v8272
    %9463 = vmatprep.mubr.bf16.mxu0 %v5925
    %9464 = vmatmul.mubr.bf16.gmra.mrb[0].mxu0 %v5924
    %v9465 = vpop.f32.mrb[0].mxu0
    %v9466 = vadd.f32 %v9423, %v9465
    %v9467 = vpop.f32.mrb[0].mxu0
    %v9468 = vadd.f32 %v9425, %v9467
    %v9469 = vpop.f32.mrb[0].mxu0
    %v9470 = vadd.f32 %v9427, %v9469
    %v9471 = vpop.f32.mrb[0].mxu0
    %v9472 = vadd.f32 %v9429, %v9471
    %9473 = vdwg.mxu0
    %9474 = vmatprep.subr.bf16.mxu0 %v8281
    %9475 = vmatpush1.bf16.msra.mxu0 %v8280
    %9476 = vmatprep.subr.bf16.mxu0 %v8289
    %9477 = vmatpush1.bf16.msra.mxu0 %v8288
    %9478 = vmatprep.subr.bf16.mxu0 %v8297
    %9479 = vmatpush1.bf16.msra.mxu0 %v8296
    %9480 = vmatprep.subr.bf16.mxu0 %v8305
    %9481 = vmatpush1.bf16.msra.mxu0 %v8304
    %9482 = vmatprep.subr.bf16.mxu0 %v8313
    %9483 = vmatpush1.bf16.msra.mxu0 %v8312
    %9484 = vmatprep.subr.bf16.mxu0 %v8321
    %9485 = vmatpush1.bf16.msra.mxu0 %v8320
    %9486 = vmatprep.subr.bf16.mxu0 %v8329
    %9487 = vmatpush1.bf16.msra.mxu0 %v8328
    %9488 = vmatprep.subr.bf16.mxu0 %v8337
    %9489 = vmatpush1.bf16.msra.mxu0 %v8336
    %9490 = vmatprep.subr.bf16.mxu0 %v8345
    %9491 = vmatpush1.bf16.msra.mxu0 %v8344
    %9492 = vmatprep.subr.bf16.mxu0 %v8353
    %9493 = vmatpush1.bf16.msra.mxu0 %v8352
    %9494 = vmatprep.subr.bf16.mxu0 %v8361
    %9495 = vmatpush1.bf16.msra.mxu0 %v8360
    %9496 = vmatprep.subr.bf16.mxu0 %v8369
    %9497 = vmatpush1.bf16.msra.mxu0 %v8368
    %9498 = vmatprep.subr.bf16.mxu0 %v8377
    %9499 = vmatpush1.bf16.msra.mxu0 %v8376
    %9500 = vmatprep.subr.bf16.mxu0 %v8385
    %9501 = vmatpush1.bf16.msra.mxu0 %v8384
    %9502 = vmatprep.subr.bf16.mxu0 %v8393
    %9503 = vmatpush1.bf16.msra.mxu0 %v8392
    %9504 = vmatprep.subr.bf16.mxu0 %v8401
    %9505 = vmatpush1.bf16.msra.mxu0 %v8400
    %9506 = vmatprep.mubr.bf16.mxu0 %v5927
    %9507 = vmatmul.mubr.bf16.gmra.mrb[0].mxu0 %v5926
    %v9508 = vpop.f32.mrb[0].mxu0
    %v9509 = vadd.f32 %v9466, %v9508
    %v9510 = vpop.f32.mrb[0].mxu0
    %v9511 = vadd.f32 %v9468, %v9510
    %v9512 = vpop.f32.mrb[0].mxu0
    %v9513 = vadd.f32 %v9470, %v9512
    %v9514 = vpop.f32.mrb[0].mxu0
    %v9515 = vadd.f32 %v9472, %v9514
    %9516 = vdwg.mxu0
    %9517 = vmatprep.subr.bf16.mxu0 %v8409
    %9518 = vmatpush1.bf16.msra.mxu0 %v8408
    %9519 = vmatprep.subr.bf16.mxu0 %v8417
    %9520 = vmatpush1.bf16.msra.mxu0 %v8416
    %9521 = vmatprep.subr.bf16.mxu0 %v8425
    %9522 = vmatpush1.bf16.msra.mxu0 %v8424
    %9523 = vmatprep.subr.bf16.mxu0 %v8433
    %9524 = vmatpush1.bf16.msra.mxu0 %v8432
    %9525 = vmatprep.subr.bf16.mxu0 %v8441
    %9526 = vmatpush1.bf16.msra.mxu0 %v8440
    %9527 = vmatprep.subr.bf16.mxu0 %v8449
    %9528 = vmatpush1.bf16.msra.mxu0 %v8448
    %9529 = vmatprep.subr.bf16.mxu0 %v8457
    %9530 = vmatpush1.bf16.msra.mxu0 %v8456
    %9531 = vmatprep.subr.bf16.mxu0 %v8465
    %9532 = vmatpush1.bf16.msra.mxu0 %v8464
    %9533 = vmatprep.subr.bf16.mxu0 %v8473
    %9534 = vmatpush1.bf16.msra.mxu0 %v8472
    %9535 = vmatprep.subr.bf16.mxu0 %v8481
    %9536 = vmatpush1.bf16.msra.mxu0 %v8480
    %9537 = vmatprep.subr.bf16.mxu0 %v8489
    %9538 = vmatpush1.bf16.msra.mxu0 %v8488
    %9539 = vmatprep.subr.bf16.mxu0 %v8497
    %9540 = vmatpush1.bf16.msra.mxu0 %v8496
    %9541 = vmatprep.subr.bf16.mxu0 %v8505
    %9542 = vmatpush1.bf16.msra.mxu0 %v8504
    %9543 = vmatprep.subr.bf16.mxu0 %v8513
    %9544 = vmatpush1.bf16.msra.mxu0 %v8512
    %9545 = vmatprep.subr.bf16.mxu0 %v8521
    %9546 = vmatpush1.bf16.msra.mxu0 %v8520
    %9547 = vmatprep.subr.bf16.mxu0 %v8529
    %9548 = vmatpush1.bf16.msra.mxu0 %v8528
    %9549 = vmatprep.mubr.bf16.mxu0 %v5929
    %9550 = vmatmul.mubr.bf16.gmra.mrb[0].mxu0 %v5928
    %v9551 = vpop.f32.mrb[0].mxu0
    %v9552 = vadd.f32 %v9509, %v9551
    %v9553 = vpop.f32.mrb[0].mxu0
    %v9554 = vadd.f32 %v9511, %v9553
    %v9555 = vpop.f32.mrb[0].mxu0
    %v9556 = vadd.f32 %v9513, %v9555
    %v9557 = vpop.f32.mrb[0].mxu0
    %v9558 = vadd.f32 %v9515, %v9557
    %9559 = vdwg.mxu0
    %9560 = vmatprep.subr.bf16.mxu0 %v8027
    %9561 = vmatpush1.bf16.msra.mxu0 %v8026
    %9562 = vmatprep.subr.bf16.mxu0 %v8035
    %9563 = vmatpush1.bf16.msra.mxu0 %v8034
    %9564 = vmatprep.subr.bf16.mxu0 %v8043
    %9565 = vmatpush1.bf16.msra.mxu0 %v8042
    %9566 = vmatprep.subr.bf16.mxu0 %v8051
    %9567 = vmatpush1.bf16.msra.mxu0 %v8050
    %9568 = vmatprep.subr.bf16.mxu0 %v8059
    %9569 = vmatpush1.bf16.msra.mxu0 %v8058
    %9570 = vmatprep.subr.bf16.mxu0 %v8067
    %9571 = vmatpush1.bf16.msra.mxu0 %v8066
    %9572 = vmatprep.subr.bf16.mxu0 %v8075
    %9573 = vmatpush1.bf16.msra.mxu0 %v8074
    %9574 = vmatprep.subr.bf16.mxu0 %v8083
    %9575 = vmatpush1.bf16.msra.mxu0 %v8082
    %9576 = vmatprep.subr.bf16.mxu0 %v8091
    %9577 = vmatpush1.bf16.msra.mxu0 %v8090
    %9578 = vmatprep.subr.bf16.mxu0 %v8099
    %9579 = vmatpush1.bf16.msra.mxu0 %v8098
    %9580 = vmatprep.subr.bf16.mxu0 %v8107
    %9581 = vmatpush1.bf16.msra.mxu0 %v8106
    %9582 = vmatprep.subr.bf16.mxu0 %v8115
    %9583 = vmatpush1.bf16.msra.mxu0 %v8114
    %9584 = vmatprep.subr.bf16.mxu0 %v8123
    %9585 = vmatpush1.bf16.msra.mxu0 %v8122
    %9586 = vmatprep.subr.bf16.mxu0 %v8131
    %9587 = vmatpush1.bf16.msra.mxu0 %v8130
    %9588 = vmatprep.subr.bf16.mxu0 %v8139
    %9589 = vmatpush1.bf16.msra.mxu0 %v8138
    %9590 = vmatprep.subr.bf16.mxu0 %v8147
    %9591 = vmatpush1.bf16.msra.mxu0 %v8146
    %9592 = vmatprep.mubr.bf16.mxu0 %v5923
    %9593 = vmatmul.mubr.bf16.gmra.mrb[0].mxu0 %v5922
    %v9594 = vpop.f32.mrb[0].mxu0
    %v9595 = vadd.f32 %v6471, %v9594
    %v9596 = vpop.f32.mrb[0].mxu0
    %v9597 = vadd.f32 %v6475, %v9596
    %v9598 = vpop.f32.mrb[0].mxu0
    %v9599 = vadd.f32 %v6471, %v9598
    %v9600 = vpop.f32.mrb[0].mxu0
    %v9601 = vadd.f32 %v6475, %v9600
    %9602 = vdwg.mxu0
    %9603 = vmatprep.subr.bf16.mxu0 %v8155
    %9604 = vmatpush1.bf16.msra.mxu0 %v8154
    %9605 = vmatprep.subr.bf16.mxu0 %v8163
    %9606 = vmatpush1.bf16.msra.mxu0 %v8162
    %9607 = vmatprep.subr.bf16.mxu0 %v8171
    %9608 = vmatpush1.bf16.msra.mxu0 %v8170
    %9609 = vmatprep.subr.bf16.mxu0 %v8179
    %9610 = vmatpush1.bf16.msra.mxu0 %v8178
    %9611 = vmatprep.subr.bf16.mxu0 %v8187
    %9612 = vmatpush1.bf16.msra.mxu0 %v8186
    %9613 = vmatprep.subr.bf16.mxu0 %v8195
    %9614 = vmatpush1.bf16.msra.mxu0 %v8194
    %9615 = vmatprep.subr.bf16.mxu0 %v8203
    %9616 = vmatpush1.bf16.msra.mxu0 %v8202
    %9617 = vmatprep.subr.bf16.mxu0 %v8211
    %9618 = vmatpush1.bf16.msra.mxu0 %v8210
    %9619 = vmatprep.subr.bf16.mxu0 %v8219
    %9620 = vmatpush1.bf16.msra.mxu0 %v8218
    %9621 = vmatprep.subr.bf16.mxu0 %v8227
    %9622 = vmatpush1.bf16.msra.mxu0 %v8226
    %9623 = vmatprep.subr.bf16.mxu0 %v8235
    %9624 = vmatpush1.bf16.msra.mxu0 %v8234
    %9625 = vmatprep.subr.bf16.mxu0 %v8243
    %9626 = vmatpush1.bf16.msra.mxu0 %v8242
    %9627 = vmatprep.subr.bf16.mxu0 %v8251
    %9628 = vmatpush1.bf16.msra.mxu0 %v8250
    %9629 = vmatprep.subr.bf16.mxu0 %v8259
    %9630 = vmatpush1.bf16.msra.mxu0 %v8258
    %9631 = vmatprep.subr.bf16.mxu0 %v8267
    %9632 = vmatpush1.bf16.msra.mxu0 %v8266
    %9633 = vmatprep.subr.bf16.mxu0 %v8275
    %9634 = vmatpush1.bf16.msra.mxu0 %v8274
    %9635 = vmatprep.mubr.bf16.mxu0 %v5925
    %9636 = vmatmul.mubr.bf16.gmra.mrb[0].mxu0 %v5924
    %v9637 = vpop.f32.mrb[0].mxu0
    %v9638 = vadd.f32 %v9595, %v9637
    %v9639 = vpop.f32.mrb[0].mxu0
    %v9640 = vadd.f32 %v9597, %v9639
    %v9641 = vpop.f32.mrb[0].mxu0
    %v9642 = vadd.f32 %v9599, %v9641
    %v9643 = vpop.f32.mrb[0].mxu0
    %v9644 = vadd.f32 %v9601, %v9643
    %9645 = vdwg.mxu0
    %9646 = vmatprep.subr.bf16.mxu0 %v8283
    %9647 = vmatpush1.bf16.msra.mxu0 %v8282
    %9648 = vmatprep.subr.bf16.mxu0 %v8291
    %9649 = vmatpush1.bf16.msra.mxu0 %v8290
    %9650 = vmatprep.subr.bf16.mxu0 %v8299
    %9651 = vmatpush1.bf16.msra.mxu0 %v8298
    %9652 = vmatprep.subr.bf16.mxu0 %v8307
    %9653 = vmatpush1.bf16.msra.mxu0 %v8306
    %9654 = vmatprep.subr.bf16.mxu0 %v8315
    %9655 = vmatpush1.bf16.msra.mxu0 %v8314
    %9656 = vmatprep.subr.bf16.mxu0 %v8323
    %9657 = vmatpush1.bf16.msra.mxu0 %v8322
    %9658 = vmatprep.subr.bf16.mxu0 %v8331
    %9659 = vmatpush1.bf16.msra.mxu0 %v8330
    %9660 = vmatprep.subr.bf16.mxu0 %v8339
    %9661 = vmatpush1.bf16.msra.mxu0 %v8338
    %9662 = vmatprep.subr.bf16.mxu0 %v8347
    %9663 = vmatpush1.bf16.msra.mxu0 %v8346
    %9664 = vmatprep.subr.bf16.mxu0 %v8355
    %9665 = vmatpush1.bf16.msra.mxu0 %v8354
    %9666 = vmatprep.subr.bf16.mxu0 %v8363
    %9667 = vmatpush1.bf16.msra.mxu0 %v8362
    %9668 = vmatprep.subr.bf16.mxu0 %v8371
    %9669 = vmatpush1.bf16.msra.mxu0 %v8370
    %9670 = vmatprep.subr.bf16.mxu0 %v8379
    %9671 = vmatpush1.bf16.msra.mxu0 %v8378
    %9672 = vmatprep.subr.bf16.mxu0 %v8387
    %9673 = vmatpush1.bf16.msra.mxu0 %v8386
    %9674 = vmatprep.subr.bf16.mxu0 %v8395
    %9675 = vmatpush1.bf16.msra.mxu0 %v8394
    %9676 = vmatprep.subr.bf16.mxu0 %v8403
    %9677 = vmatpush1.bf16.msra.mxu0 %v8402
    %9678 = vmatprep.mubr.bf16.mxu0 %v5927
    %9679 = vmatmul.mubr.bf16.gmra.mrb[0].mxu0 %v5926
    %v9680 = vpop.f32.mrb[0].mxu0
    %v9681 = vadd.f32 %v9638, %v9680
    %v9682 = vpop.f32.mrb[0].mxu0
    %v9683 = vadd.f32 %v9640, %v9682
    %v9684 = vpop.f32.mrb[0].mxu0
    %v9685 = vadd.f32 %v9642, %v9684
    %v9686 = vpop.f32.mrb[0].mxu0
    %v9687 = vadd.f32 %v9644, %v9686
    %9688 = vdwg.mxu0
    %9689 = vmatprep.subr.bf16.mxu0 %v8411
    %9690 = vmatpush1.bf16.msra.mxu0 %v8410
    %9691 = vmatprep.subr.bf16.mxu0 %v8419
    %9692 = vmatpush1.bf16.msra.mxu0 %v8418
    %9693 = vmatprep.subr.bf16.mxu0 %v8427
    %9694 = vmatpush1.bf16.msra.mxu0 %v8426
    %9695 = vmatprep.subr.bf16.mxu0 %v8435
    %9696 = vmatpush1.bf16.msra.mxu0 %v8434
    %9697 = vmatprep.subr.bf16.mxu0 %v8443
    %9698 = vmatpush1.bf16.msra.mxu0 %v8442
    %9699 = vmatprep.subr.bf16.mxu0 %v8451
    %9700 = vmatpush1.bf16.msra.mxu0 %v8450
    %9701 = vmatprep.subr.bf16.mxu0 %v8459
    %9702 = vmatpush1.bf16.msra.mxu0 %v8458
    %9703 = vmatprep.subr.bf16.mxu0 %v8467
    %9704 = vmatpush1.bf16.msra.mxu0 %v8466
    %9705 = vmatprep.subr.bf16.mxu0 %v8475
    %9706 = vmatpush1.bf16.msra.mxu0 %v8474
    %9707 = vmatprep.subr.bf16.mxu0 %v8483
    %9708 = vmatpush1.bf16.msra.mxu0 %v8482
    %9709 = vmatprep.subr.bf16.mxu0 %v8491
    %9710 = vmatpush1.bf16.msra.mxu0 %v8490
    %9711 = vmatprep.subr.bf16.mxu0 %v8499
    %9712 = vmatpush1.bf16.msra.mxu0 %v8498
    %9713 = vmatprep.subr.bf16.mxu0 %v8507
    %9714 = vmatpush1.bf16.msra.mxu0 %v8506
    %9715 = vmatprep.subr.bf16.mxu0 %v8515
    %9716 = vmatpush1.bf16.msra.mxu0 %v8514
    %9717 = vmatprep.subr.bf16.mxu0 %v8523
    %9718 = vmatpush1.bf16.msra.mxu0 %v8522
    %9719 = vmatprep.subr.bf16.mxu0 %v8531
    %9720 = vmatpush1.bf16.msra.mxu0 %v8530
    %9721 = vmatprep.mubr.bf16.mxu0 %v5929
    %9722 = vmatmul.mubr.bf16.gmra.mrb[0].mxu0 %v5928
    %v9723 = vpop.f32.mrb[0].mxu0
    %v9724 = vadd.f32 %v9681, %v9723
    %v9725 = vpop.f32.mrb[0].mxu0
    %v9726 = vadd.f32 %v9683, %v9725
    %v9727 = vpop.f32.mrb[0].mxu0
    %v9728 = vadd.f32 %v9685, %v9727
    %v9729 = vpop.f32.mrb[0].mxu0
    %v9730 = vadd.f32 %v9687, %v9729
    %9731 = vdwg.mxu0
    %v9732 = vmax.f32 %v9208, 0.0
    %v9733 = vmax.f32 %v9210, 0.0
    %v9734 = vmax.f32 %v9380, 0.0
    %v9735 = vmax.f32 %v9382, 0.0
    %v9736 = vmax.f32 %v9552, 0.0
    %v9737 = vmax.f32 %v9554, 0.0
    %v9738 = vmax.f32 %v9724, 0.0
    %v9739 = vmax.f32 %v9726, 0.0
    %v9740 = vmax.f32 %v9212, 0.0
    %v9741 = vmax.f32 %v9214, 0.0
    %v9742 = vmax.f32 %v9384, 0.0
    %v9743 = vmax.f32 %v9386, 0.0
    %v9744 = vmax.f32 %v9556, 0.0
    %v9745 = vmax.f32 %v9558, 0.0
    %v9746 = vmax.f32 %v9728, 0.0
    %v9747 = vmax.f32 %v9730, 0.0
    %v9748 = vpack.c.bf16 %v9740, %v9732
    %v9749 = vpack.c.bf16 %v9741, %v9733
    %v9750 = vpack.c.bf16 %v9742, %v9734
    %v9751 = vpack.c.bf16 %v9743, %v9735
    %v9752 = vpack.c.bf16 %v9744, %v9736
    %v9753 = vpack.c.bf16 %v9745, %v9737
    %v9754 = vpack.c.bf16 %v9746, %v9738
    %v9755 = vpack.c.bf16 %v9747, %v9739
    %v9756 = vld [vmem:[%s7] sm:$0xf]
    %v9757 = vld [vmem:[%s7 + $0x4] sm:$0xf]
    %v9758 = vld [vmem:[%s7 + $0x8] sm:$0xf]
    %v9759 = vld [vmem:[%s7 + $0xc] sm:$0xf]
    %v9760 = vld [vmem:[%s7 + $0x10] sm:$0xf]
    %v9761 = vld [vmem:[%s7 + $0x14] sm:$0xf]
    %v9762 = vld [vmem:[%s7 + $0x18] sm:$0xf]
    %v9763 = vld [vmem:[%s7 + $0x1c] sm:$0xf]
    %v9764 = vld [vmem:[%s7 + $0x20] sm:$0xf]
    %v9765 = vld [vmem:[%s7 + $0x24] sm:$0xf]
    %v9766 = vld [vmem:[%s7 + $0x28] sm:$0xf]
    %v9767 = vld [vmem:[%s7 + $0x2c] sm:$0xf]
    %v9768 = vld [vmem:[%s7 + $0x30] sm:$0xf]
    %v9769 = vld [vmem:[%s7 + $0x34] sm:$0xf]
    %v9770 = vld [vmem:[%s7 + $0x38] sm:$0xf]
    %v9771 = vld [vmem:[%s7 + $0x3c] sm:$0xf]
    %v9772 = vld [vmem:[%s7 + $0x40] sm:$0xf]
    %v9773 = vld [vmem:[%s7 + $0x44] sm:$0xf]
    %v9774 = vld [vmem:[%s7 + $0x48] sm:$0xf]
    %v9775 = vld [vmem:[%s7 + $0x4c] sm:$0xf]
    %v9776 = vld [vmem:[%s7 + $0x50] sm:$0xf]
    %v9777 = vld [vmem:[%s7 + $0x54] sm:$0xf]
    %v9778 = vld [vmem:[%s7 + $0x58] sm:$0xf]
    %v9779 = vld [vmem:[%s7 + $0x5c] sm:$0xf]
    %v9780 = vld [vmem:[%s7 + $0x60] sm:$0xf]
    %v9781 = vld [vmem:[%s7 + $0x64] sm:$0xf]
    %v9782 = vld [vmem:[%s7 + $0x68] sm:$0xf]
    %v9783 = vld [vmem:[%s7 + $0x6c] sm:$0xf]
    %v9784 = vld [vmem:[%s7 + $0x70] sm:$0xf]
    %v9785 = vld [vmem:[%s7 + $0x74] sm:$0xf]
    %v9786 = vld [vmem:[%s7 + $0x78] sm:$0xf]
    %v9787 = vld [vmem:[%s7 + $0x7c] sm:$0xf]
    %v9788 = vld [vmem:[%s7 + $0x80] sm:$0xf]
    %v9789 = vld [vmem:[%s7 + $0x84] sm:$0xf]
    %v9790 = vld [vmem:[%s7 + $0x88] sm:$0xf]
    %v9791 = vld [vmem:[%s7 + $0x8c] sm:$0xf]
    %v9792 = vld [vmem:[%s7 + $0x90] sm:$0xf]
    %v9793 = vld [vmem:[%s7 + $0x94] sm:$0xf]
    %v9794 = vld [vmem:[%s7 + $0x98] sm:$0xf]
    %v9795 = vld [vmem:[%s7 + $0x9c] sm:$0xf]
    %v9796 = vld [vmem:[%s7 + $0xa0] sm:$0xf]
    %v9797 = vld [vmem:[%s7 + $0xa4] sm:$0xf]
    %v9798 = vld [vmem:[%s7 + $0xa8] sm:$0xf]
    %v9799 = vld [vmem:[%s7 + $0xac] sm:$0xf]
    %v9800 = vld [vmem:[%s7 + $0xb0] sm:$0xf]
    %v9801 = vld [vmem:[%s7 + $0xb4] sm:$0xf]
    %v9802 = vld [vmem:[%s7 + $0xb8] sm:$0xf]
    %v9803 = vld [vmem:[%s7 + $0xbc] sm:$0xf]
    %v9804 = vld [vmem:[%s7 + $0xc0] sm:$0xf]
    %v9805 = vld [vmem:[%s7 + $0xc4] sm:$0xf]
    %v9806 = vld [vmem:[%s7 + $0xc8] sm:$0xf]
    %v9807 = vld [vmem:[%s7 + $0xcc] sm:$0xf]
    %v9808 = vld [vmem:[%s7 + $0xd0] sm:$0xf]
    %v9809 = vld [vmem:[%s7 + $0xd4] sm:$0xf]
    %v9810 = vld [vmem:[%s7 + $0xd8] sm:$0xf]
    %v9811 = vld [vmem:[%s7 + $0xdc] sm:$0xf]
    %v9812 = vld [vmem:[%s7 + $0xe0] sm:$0xf]
    %v9813 = vld [vmem:[%s7 + $0xe4] sm:$0xf]
    %v9814 = vld [vmem:[%s7 + $0xe8] sm:$0xf]
    %v9815 = vld [vmem:[%s7 + $0xec] sm:$0xf]
    %v9816 = vld [vmem:[%s7 + $0xf0] sm:$0xf]
    %v9817 = vld [vmem:[%s7 + $0xf4] sm:$0xf]
    %v9818 = vld [vmem:[%s7 + $0xf8] sm:$0xf]
    %v9819 = vld [vmem:[%s7 + $0xfc] sm:$0xf]
    %v9820 = vld [vmem:[%s7 + $0x100] sm:$0xf]
    %v9821 = vld [vmem:[%s7 + $0x104] sm:$0xf]
    %v9822 = vld [vmem:[%s7 + $0x108] sm:$0xf]
    %v9823 = vld [vmem:[%s7 + $0x10c] sm:$0xf]
    %v9824 = vld [vmem:[%s7 + $0x110] sm:$0xf]
    %v9825 = vld [vmem:[%s7 + $0x114] sm:$0xf]
    %v9826 = vld [vmem:[%s7 + $0x118] sm:$0xf]
    %v9827 = vld [vmem:[%s7 + $0x11c] sm:$0xf]
    %v9828 = vld [vmem:[%s7 + $0x120] sm:$0xf]
    %v9829 = vld [vmem:[%s7 + $0x124] sm:$0xf]
    %v9830 = vld [vmem:[%s7 + $0x128] sm:$0xf]
    %v9831 = vld [vmem:[%s7 + $0x12c] sm:$0xf]
    %v9832 = vld [vmem:[%s7 + $0x130] sm:$0xf]
    %v9833 = vld [vmem:[%s7 + $0x134] sm:$0xf]
    %v9834 = vld [vmem:[%s7 + $0x138] sm:$0xf]
    %v9835 = vld [vmem:[%s7 + $0x13c] sm:$0xf]
    %v9836 = vld [vmem:[%s7 + $0x140] sm:$0xf]
    %v9837 = vld [vmem:[%s7 + $0x144] sm:$0xf]
    %v9838 = vld [vmem:[%s7 + $0x148] sm:$0xf]
    %v9839 = vld [vmem:[%s7 + $0x14c] sm:$0xf]
    %v9840 = vld [vmem:[%s7 + $0x150] sm:$0xf]
    %v9841 = vld [vmem:[%s7 + $0x154] sm:$0xf]
    %v9842 = vld [vmem:[%s7 + $0x158] sm:$0xf]
    %v9843 = vld [vmem:[%s7 + $0x15c] sm:$0xf]
    %v9844 = vld [vmem:[%s7 + $0x160] sm:$0xf]
    %v9845 = vld [vmem:[%s7 + $0x164] sm:$0xf]
    %v9846 = vld [vmem:[%s7 + $0x168] sm:$0xf]
    %v9847 = vld [vmem:[%s7 + $0x16c] sm:$0xf]
    %v9848 = vld [vmem:[%s7 + $0x170] sm:$0xf]
    %v9849 = vld [vmem:[%s7 + $0x174] sm:$0xf]
    %v9850 = vld [vmem:[%s7 + $0x178] sm:$0xf]
    %v9851 = vld [vmem:[%s7 + $0x17c] sm:$0xf]
    %v9852 = vld [vmem:[%s7 + $0x180] sm:$0xf]
    %v9853 = vld [vmem:[%s7 + $0x184] sm:$0xf]
    %v9854 = vld [vmem:[%s7 + $0x188] sm:$0xf]
    %v9855 = vld [vmem:[%s7 + $0x18c] sm:$0xf]
    %v9856 = vld [vmem:[%s7 + $0x190] sm:$0xf]
    %v9857 = vld [vmem:[%s7 + $0x194] sm:$0xf]
    %v9858 = vld [vmem:[%s7 + $0x198] sm:$0xf]
    %v9859 = vld [vmem:[%s7 + $0x19c] sm:$0xf]
    %v9860 = vld [vmem:[%s7 + $0x1a0] sm:$0xf]
    %v9861 = vld [vmem:[%s7 + $0x1a4] sm:$0xf]
    %v9862 = vld [vmem:[%s7 + $0x1a8] sm:$0xf]
    %v9863 = vld [vmem:[%s7 + $0x1ac] sm:$0xf]
    %v9864 = vld [vmem:[%s7 + $0x1b0] sm:$0xf]
    %v9865 = vld [vmem:[%s7 + $0x1b4] sm:$0xf]
    %v9866 = vld [vmem:[%s7 + $0x1b8] sm:$0xf]
    %v9867 = vld [vmem:[%s7 + $0x1bc] sm:$0xf]
    %v9868 = vld [vmem:[%s7 + $0x1c0] sm:$0xf]
    %v9869 = vld [vmem:[%s7 + $0x1c4] sm:$0xf]
    %v9870 = vld [vmem:[%s7 + $0x1c8] sm:$0xf]
    %v9871 = vld [vmem:[%s7 + $0x1cc] sm:$0xf]
    %v9872 = vld [vmem:[%s7 + $0x1d0] sm:$0xf]
    %v9873 = vld [vmem:[%s7 + $0x1d4] sm:$0xf]
    %v9874 = vld [vmem:[%s7 + $0x1d8] sm:$0xf]
    %v9875 = vld [vmem:[%s7 + $0x1dc] sm:$0xf]
    %v9876 = vld [vmem:[%s7 + $0x1e0] sm:$0xf]
    %v9877 = vld [vmem:[%s7 + $0x1e4] sm:$0xf]
    %v9878 = vld [vmem:[%s7 + $0x1e8] sm:$0xf]
    %v9879 = vld [vmem:[%s7 + $0x1ec] sm:$0xf]
    %v9880 = vld [vmem:[%s7 + $0x1f0] sm:$0xf]
    %v9881 = vld [vmem:[%s7 + $0x1f4] sm:$0xf]
    %v9882 = vld [vmem:[%s7 + $0x1f8] sm:$0xf]
    %v9883 = vld [vmem:[%s7 + $0x1fc] sm:$0xf]
    %v9884 = vld [vmem:[#allocation13] sm:$0x1]
    %v9886 = vlaneseq
    %v9887 = vshrl.u32 %v9886, 7
    %v9888 = vsub.s32 0, %v9887
    %v9889 = vrot.slane %v9884, %v9888
    %v10019 = vunpack.c.l.b16 %v9756
    %v10020 = vunpack.c.l.b16 %v9757
    %v10021 = vunpack.c.l.b16 %v9758
    %v10022 = vunpack.c.l.b16 %v9759
    %v10023 = vunpack.c.l.b16 %v9760
    %v10024 = vunpack.c.l.b16 %v9761
    %v10025 = vunpack.c.l.b16 %v9762
    %v10026 = vunpack.c.l.b16 %v9763
    %v10027 = vunpack.c.l.b16 %v9764
    %v10028 = vunpack.c.l.b16 %v9765
    %v10029 = vunpack.c.l.b16 %v9766
    %v10030 = vunpack.c.l.b16 %v9767
    %v10031 = vunpack.c.l.b16 %v9768
    %v10032 = vunpack.c.l.b16 %v9769
    %v10033 = vunpack.c.l.b16 %v9770
    %v10034 = vunpack.c.l.b16 %v9771
    %v10035 = vunpack.c.l.b16 %v9772
    %v10036 = vunpack.c.l.b16 %v9773
    %v10037 = vunpack.c.l.b16 %v9774
    %v10038 = vunpack.c.l.b16 %v9775
    %v10039 = vunpack.c.l.b16 %v9776
    %v10040 = vunpack.c.l.b16 %v9777
    %v10041 = vunpack.c.l.b16 %v9778
    %v10042 = vunpack.c.l.b16 %v9779
    %v10043 = vunpack.c.l.b16 %v9780
    %v10044 = vunpack.c.l.b16 %v9781
    %v10045 = vunpack.c.l.b16 %v9782
    %v10046 = vunpack.c.l.b16 %v9783
    %v10047 = vunpack.c.l.b16 %v9784
    %v10048 = vunpack.c.l.b16 %v9785
    %v10049 = vunpack.c.l.b16 %v9786
    %v10050 = vunpack.c.l.b16 %v9787
    %v10051 = vunpack.c.l.b16 %v9788
    %v10052 = vunpack.c.l.b16 %v9789
    %v10053 = vunpack.c.l.b16 %v9790
    %v10054 = vunpack.c.l.b16 %v9791
    %v10055 = vunpack.c.l.b16 %v9792
    %v10056 = vunpack.c.l.b16 %v9793
    %v10057 = vunpack.c.l.b16 %v9794
    %v10058 = vunpack.c.l.b16 %v9795
    %v10059 = vunpack.c.l.b16 %v9796
    %v10060 = vunpack.c.l.b16 %v9797
    %v10061 = vunpack.c.l.b16 %v9798
    %v10062 = vunpack.c.l.b16 %v9799
    %v10063 = vunpack.c.l.b16 %v9800
    %v10064 = vunpack.c.l.b16 %v9801
    %v10065 = vunpack.c.l.b16 %v9802
    %v10066 = vunpack.c.l.b16 %v9803
    %v10067 = vunpack.c.l.b16 %v9804
    %v10068 = vunpack.c.l.b16 %v9805
    %v10069 = vunpack.c.l.b16 %v9806
    %v10070 = vunpack.c.l.b16 %v9807
    %v10071 = vunpack.c.l.b16 %v9808
    %v10072 = vunpack.c.l.b16 %v9809
    %v10073 = vunpack.c.l.b16 %v9810
    %v10074 = vunpack.c.l.b16 %v9811
    %v10075 = vunpack.c.l.b16 %v9812
    %v10076 = vunpack.c.l.b16 %v9813
    %v10077 = vunpack.c.l.b16 %v9814
    %v10078 = vunpack.c.l.b16 %v9815
    %v10079 = vunpack.c.l.b16 %v9816
    %v10080 = vunpack.c.l.b16 %v9817
    %v10081 = vunpack.c.l.b16 %v9818
    %v10082 = vunpack.c.l.b16 %v9819
    %v10083 = vunpack.c.l.b16 %v9820
    %v10084 = vunpack.c.l.b16 %v9821
    %v10085 = vunpack.c.l.b16 %v9822
    %v10086 = vunpack.c.l.b16 %v9823
    %v10087 = vunpack.c.l.b16 %v9824
    %v10088 = vunpack.c.l.b16 %v9825
    %v10089 = vunpack.c.l.b16 %v9826
    %v10090 = vunpack.c.l.b16 %v9827
    %v10091 = vunpack.c.l.b16 %v9828
    %v10092 = vunpack.c.l.b16 %v9829
    %v10093 = vunpack.c.l.b16 %v9830
    %v10094 = vunpack.c.l.b16 %v9831
    %v10095 = vunpack.c.l.b16 %v9832
    %v10096 = vunpack.c.l.b16 %v9833
    %v10097 = vunpack.c.l.b16 %v9834
    %v10098 = vunpack.c.l.b16 %v9835
    %v10099 = vunpack.c.l.b16 %v9836
    %v10100 = vunpack.c.l.b16 %v9837
    %v10101 = vunpack.c.l.b16 %v9838
    %v10102 = vunpack.c.l.b16 %v9839
    %v10103 = vunpack.c.l.b16 %v9840
    %v10104 = vunpack.c.l.b16 %v9841
    %v10105 = vunpack.c.l.b16 %v9842
    %v10106 = vunpack.c.l.b16 %v9843
    %v10107 = vunpack.c.l.b16 %v9844
    %v10108 = vunpack.c.l.b16 %v9845
    %v10109 = vunpack.c.l.b16 %v9846
    %v10110 = vunpack.c.l.b16 %v9847
    %v10111 = vunpack.c.l.b16 %v9848
    %v10112 = vunpack.c.l.b16 %v9849
    %v10113 = vunpack.c.l.b16 %v9850
    %v10114 = vunpack.c.l.b16 %v9851
    %v10115 = vunpack.c.l.b16 %v9852
    %v10116 = vunpack.c.l.b16 %v9853
    %v10117 = vunpack.c.l.b16 %v9854
    %v10118 = vunpack.c.l.b16 %v9855
    %v10119 = vunpack.c.l.b16 %v9856
    %v10120 = vunpack.c.l.b16 %v9857
    %v10121 = vunpack.c.l.b16 %v9858
    %v10122 = vunpack.c.l.b16 %v9859
    %v10123 = vunpack.c.l.b16 %v9860
    %v10124 = vunpack.c.l.b16 %v9861
    %v10125 = vunpack.c.l.b16 %v9862
    %v10126 = vunpack.c.l.b16 %v9863
    %v10127 = vunpack.c.l.b16 %v9864
    %v10128 = vunpack.c.l.b16 %v9865
    %v10129 = vunpack.c.l.b16 %v9866
    %v10130 = vunpack.c.l.b16 %v9867
    %v10131 = vunpack.c.l.b16 %v9868
    %v10132 = vunpack.c.l.b16 %v9869
    %v10133 = vunpack.c.l.b16 %v9870
    %v10134 = vunpack.c.l.b16 %v9871
    %v10135 = vunpack.c.l.b16 %v9872
    %v10136 = vunpack.c.l.b16 %v9873
    %v10137 = vunpack.c.l.b16 %v9874
    %v10138 = vunpack.c.l.b16 %v9875
    %v10139 = vunpack.c.l.b16 %v9876
    %v10140 = vunpack.c.l.b16 %v9877
    %v10141 = vunpack.c.l.b16 %v9878
    %v10142 = vunpack.c.l.b16 %v9879
    %v10143 = vunpack.c.l.b16 %v9880
    %v10144 = vunpack.c.l.b16 %v9881
    %v10145 = vunpack.c.l.b16 %v9882
    %v10146 = vunpack.c.l.b16 %v9883
    %v10147 = vpack.c.b16 %v10020, %v10019
    %v10148 = vpack.c.b16 %v10022, %v10021
    %v10149 = vpack.c.b16 %v10024, %v10023
    %v10150 = vpack.c.b16 %v10026, %v10025
    %v10151 = vpack.c.b16 %v10028, %v10027
    %v10152 = vpack.c.b16 %v10030, %v10029
    %v10153 = vpack.c.b16 %v10032, %v10031
    %v10154 = vpack.c.b16 %v10034, %v10033
    %v10155 = vpack.c.b16 %v10036, %v10035
    %v10156 = vpack.c.b16 %v10038, %v10037
    %v10157 = vpack.c.b16 %v10040, %v10039
    %v10158 = vpack.c.b16 %v10042, %v10041
    %v10159 = vpack.c.b16 %v10044, %v10043
    %v10160 = vpack.c.b16 %v10046, %v10045
    %v10161 = vpack.c.b16 %v10048, %v10047
    %v10162 = vpack.c.b16 %v10050, %v10049
    %v10163 = vpack.c.b16 %v10052, %v10051
    %v10164 = vpack.c.b16 %v10054, %v10053
    %v10165 = vpack.c.b16 %v10056, %v10055
    %v10166 = vpack.c.b16 %v10058, %v10057
    %v10167 = vpack.c.b16 %v10060, %v10059
    %v10168 = vpack.c.b16 %v10062, %v10061
    %v10169 = vpack.c.b16 %v10064, %v10063
    %v10170 = vpack.c.b16 %v10066, %v10065
    %v10171 = vpack.c.b16 %v10068, %v10067
    %v10172 = vpack.c.b16 %v10070, %v10069
    %v10173 = vpack.c.b16 %v10072, %v10071
    %v10174 = vpack.c.b16 %v10074, %v10073
    %v10175 = vpack.c.b16 %v10076, %v10075
    %v10176 = vpack.c.b16 %v10078, %v10077
    %v10177 = vpack.c.b16 %v10080, %v10079
    %v10178 = vpack.c.b16 %v10082, %v10081
    %v10179 = vpack.c.b16 %v10084, %v10083
    %v10180 = vpack.c.b16 %v10086, %v10085
    %v10181 = vpack.c.b16 %v10088, %v10087
    %v10182 = vpack.c.b16 %v10090, %v10089
    %v10183 = vpack.c.b16 %v10092, %v10091
    %v10184 = vpack.c.b16 %v10094, %v10093
    %v10185 = vpack.c.b16 %v10096, %v10095
    %v10186 = vpack.c.b16 %v10098, %v10097
    %v10187 = vpack.c.b16 %v10100, %v10099
    %v10188 = vpack.c.b16 %v10102, %v10101
    %v10189 = vpack.c.b16 %v10104, %v10103
    %v10190 = vpack.c.b16 %v10106, %v10105
    %v10191 = vpack.c.b16 %v10108, %v10107
    %v10192 = vpack.c.b16 %v10110, %v10109
    %v10193 = vpack.c.b16 %v10112, %v10111
    %v10194 = vpack.c.b16 %v10114, %v10113
    %v10195 = vpack.c.b16 %v10116, %v10115
    %v10196 = vpack.c.b16 %v10118, %v10117
    %v10197 = vpack.c.b16 %v10120, %v10119
    %v10198 = vpack.c.b16 %v10122, %v10121
    %v10199 = vpack.c.b16 %v10124, %v10123
    %v10200 = vpack.c.b16 %v10126, %v10125
    %v10201 = vpack.c.b16 %v10128, %v10127
    %v10202 = vpack.c.b16 %v10130, %v10129
    %v10203 = vpack.c.b16 %v10132, %v10131
    %v10204 = vpack.c.b16 %v10134, %v10133
    %v10205 = vpack.c.b16 %v10136, %v10135
    %v10206 = vpack.c.b16 %v10138, %v10137
    %v10207 = vpack.c.b16 %v10140, %v10139
    %v10208 = vpack.c.b16 %v10142, %v10141
    %v10209 = vpack.c.b16 %v10144, %v10143
    %v10210 = vpack.c.b16 %v10146, %v10145
    %10275 = vmatprep.subr.bf16.mxu0 0
    %10276 = vmatpush1.bf16.msra.mxu0 %v10147
    %10277 = vmatprep.subr.bf16.mxu0 0
    %10278 = vmatpush1.bf16.msra.mxu0 %v10148
    %10279 = vmatprep.subr.bf16.mxu0 0
    %10280 = vmatpush1.bf16.msra.mxu0 %v10149
    %10281 = vmatprep.subr.bf16.mxu0 0
    %10282 = vmatpush1.bf16.msra.mxu0 %v10150
    %10283 = vmatprep.subr.bf16.mxu0 0
    %10284 = vmatpush1.bf16.msra.mxu0 %v10151
    %10285 = vmatprep.subr.bf16.mxu0 0
    %10286 = vmatpush1.bf16.msra.mxu0 %v10152
    %10287 = vmatprep.subr.bf16.mxu0 0
    %10288 = vmatpush1.bf16.msra.mxu0 %v10153
    %10289 = vmatprep.subr.bf16.mxu0 0
    %10290 = vmatpush1.bf16.msra.mxu0 %v10154
    %10291 = vmatprep.subr.bf16.mxu0 0
    %10292 = vmatpush1.bf16.msra.mxu0 %v10155
    %10293 = vmatprep.subr.bf16.mxu0 0
    %10294 = vmatpush1.bf16.msra.mxu0 %v10156
    %10295 = vmatprep.subr.bf16.mxu0 0
    %10296 = vmatpush1.bf16.msra.mxu0 %v10157
    %10297 = vmatprep.subr.bf16.mxu0 0
    %10298 = vmatpush1.bf16.msra.mxu0 %v10158
    %10299 = vmatprep.subr.bf16.mxu0 0
    %10300 = vmatpush1.bf16.msra.mxu0 %v10159
    %10301 = vmatprep.subr.bf16.mxu0 0
    %10302 = vmatpush1.bf16.msra.mxu0 %v10160
    %10303 = vmatprep.subr.bf16.mxu0 0
    %10304 = vmatpush1.bf16.msra.mxu0 %v10161
    %10305 = vmatprep.subr.bf16.mxu0 0
    %10306 = vmatpush1.bf16.msra.mxu0 %v10162
    %10307 = vmatprep.mubr.bf16.mxu0 %v9749
    %10308 = vmatmul.mubr.bf16.gmra.mrb[0].mxu0 %v9748
    %v10309 = vpop.f32.mrb[0].mxu0
    %v10310 = vadd.f32 %v9889, %v10309
    %v10311 = vpop.f32.mrb[0].mxu0
    %v10312 = vpop.f32.mrb[0].mxu0
    %v10313 = vadd.f32 %v9889, %v10312
    %v10314 = vpop.f32.mrb[0].mxu0
    %10315 = vdwg.mxu0
    %10316 = vmatprep.subr.bf16.mxu0 0
    %10317 = vmatpush1.bf16.msra.mxu0 %v10163
    %10318 = vmatprep.subr.bf16.mxu0 0
    %10319 = vmatpush1.bf16.msra.mxu0 %v10164
    %10320 = vmatprep.subr.bf16.mxu0 0
    %10321 = vmatpush1.bf16.msra.mxu0 %v10165
    %10322 = vmatprep.subr.bf16.mxu0 0
    %10323 = vmatpush1.bf16.msra.mxu0 %v10166
    %10324 = vmatprep.subr.bf16.mxu0 0
    %10325 = vmatpush1.bf16.msra.mxu0 %v10167
    %10326 = vmatprep.subr.bf16.mxu0 0
    %10327 = vmatpush1.bf16.msra.mxu0 %v10168
    %10328 = vmatprep.subr.bf16.mxu0 0
    %10329 = vmatpush1.bf16.msra.mxu0 %v10169
    %10330 = vmatprep.subr.bf16.mxu0 0
    %10331 = vmatpush1.bf16.msra.mxu0 %v10170
    %10332 = vmatprep.subr.bf16.mxu0 0
    %10333 = vmatpush1.bf16.msra.mxu0 %v10171
    %10334 = vmatprep.subr.bf16.mxu0 0
    %10335 = vmatpush1.bf16.msra.mxu0 %v10172
    %10336 = vmatprep.subr.bf16.mxu0 0
    %10337 = vmatpush1.bf16.msra.mxu0 %v10173
    %10338 = vmatprep.subr.bf16.mxu0 0
    %10339 = vmatpush1.bf16.msra.mxu0 %v10174
    %10340 = vmatprep.subr.bf16.mxu0 0
    %10341 = vmatpush1.bf16.msra.mxu0 %v10175
    %10342 = vmatprep.subr.bf16.mxu0 0
    %10343 = vmatpush1.bf16.msra.mxu0 %v10176
    %10344 = vmatprep.subr.bf16.mxu0 0
    %10345 = vmatpush1.bf16.msra.mxu0 %v10177
    %10346 = vmatprep.subr.bf16.mxu0 0
    %10347 = vmatpush1.bf16.msra.mxu0 %v10178
    %10348 = vmatprep.mubr.bf16.mxu0 %v9751
    %10349 = vmatmul.mubr.bf16.gmra.mrb[0].mxu0 %v9750
    %v10350 = vpop.f32.mrb[0].mxu0
    %v10351 = vadd.f32 %v10310, %v10350
    %v10352 = vpop.f32.mrb[0].mxu0
    %v10353 = vpop.f32.mrb[0].mxu0
    %v10354 = vadd.f32 %v10313, %v10353
    %v10355 = vpop.f32.mrb[0].mxu0
    %10356 = vdwg.mxu0
    %10357 = vmatprep.subr.bf16.mxu0 0
    %10358 = vmatpush1.bf16.msra.mxu0 %v10179
    %10359 = vmatprep.subr.bf16.mxu0 0
    %10360 = vmatpush1.bf16.msra.mxu0 %v10180
    %10361 = vmatprep.subr.bf16.mxu0 0
    %10362 = vmatpush1.bf16.msra.mxu0 %v10181
    %10363 = vmatprep.subr.bf16.mxu0 0
    %10364 = vmatpush1.bf16.msra.mxu0 %v10182
    %10365 = vmatprep.subr.bf16.mxu0 0
    %10366 = vmatpush1.bf16.msra.mxu0 %v10183
    %10367 = vmatprep.subr.bf16.mxu0 0
    %10368 = vmatpush1.bf16.msra.mxu0 %v10184
    %10369 = vmatprep.subr.bf16.mxu0 0
    %10370 = vmatpush1.bf16.msra.mxu0 %v10185
    %10371 = vmatprep.subr.bf16.mxu0 0
    %10372 = vmatpush1.bf16.msra.mxu0 %v10186
    %10373 = vmatprep.subr.bf16.mxu0 0
    %10374 = vmatpush1.bf16.msra.mxu0 %v10187
    %10375 = vmatprep.subr.bf16.mxu0 0
    %10376 = vmatpush1.bf16.msra.mxu0 %v10188
    %10377 = vmatprep.subr.bf16.mxu0 0
    %10378 = vmatpush1.bf16.msra.mxu0 %v10189
    %10379 = vmatprep.subr.bf16.mxu0 0
    %10380 = vmatpush1.bf16.msra.mxu0 %v10190
    %10381 = vmatprep.subr.bf16.mxu0 0
    %10382 = vmatpush1.bf16.msra.mxu0 %v10191
    %10383 = vmatprep.subr.bf16.mxu0 0
    %10384 = vmatpush1.bf16.msra.mxu0 %v10192
    %10385 = vmatprep.subr.bf16.mxu0 0
    %10386 = vmatpush1.bf16.msra.mxu0 %v10193
    %10387 = vmatprep.subr.bf16.mxu0 0
    %10388 = vmatpush1.bf16.msra.mxu0 %v10194
    %10389 = vmatprep.mubr.bf16.mxu0 %v9753
    %10390 = vmatmul.mubr.bf16.gmra.mrb[0].mxu0 %v9752
    %v10391 = vpop.f32.mrb[0].mxu0
    %v10392 = vadd.f32 %v10351, %v10391
    %v10393 = vpop.f32.mrb[0].mxu0
    %v10394 = vpop.f32.mrb[0].mxu0
    %v10395 = vadd.f32 %v10354, %v10394
    %v10396 = vpop.f32.mrb[0].mxu0
    %10397 = vdwg.mxu0
    %10398 = vmatprep.subr.bf16.mxu0 0
    %10399 = vmatpush1.bf16.msra.mxu0 %v10195
    %10400 = vmatprep.subr.bf16.mxu0 0
    %10401 = vmatpush1.bf16.msra.mxu0 %v10196
    %10402 = vmatprep.subr.bf16.mxu0 0
    %10403 = vmatpush1.bf16.msra.mxu0 %v10197
    %10404 = vmatprep.subr.bf16.mxu0 0
    %10405 = vmatpush1.bf16.msra.mxu0 %v10198
    %10406 = vmatprep.subr.bf16.mxu0 0
    %10407 = vmatpush1.bf16.msra.mxu0 %v10199
    %10408 = vmatprep.subr.bf16.mxu0 0
    %10409 = vmatpush1.bf16.msra.mxu0 %v10200
    %10410 = vmatprep.subr.bf16.mxu0 0
    %10411 = vmatpush1.bf16.msra.mxu0 %v10201
    %10412 = vmatprep.subr.bf16.mxu0 0
    %10413 = vmatpush1.bf16.msra.mxu0 %v10202
    %10414 = vmatprep.subr.bf16.mxu0 0
    %10415 = vmatpush1.bf16.msra.mxu0 %v10203
    %10416 = vmatprep.subr.bf16.mxu0 0
    %10417 = vmatpush1.bf16.msra.mxu0 %v10204
    %10418 = vmatprep.subr.bf16.mxu0 0
    %10419 = vmatpush1.bf16.msra.mxu0 %v10205
    %10420 = vmatprep.subr.bf16.mxu0 0
    %10421 = vmatpush1.bf16.msra.mxu0 %v10206
    %10422 = vmatprep.subr.bf16.mxu0 0
    %10423 = vmatpush1.bf16.msra.mxu0 %v10207
    %10424 = vmatprep.subr.bf16.mxu0 0
    %10425 = vmatpush1.bf16.msra.mxu0 %v10208
    %10426 = vmatprep.subr.bf16.mxu0 0
    %10427 = vmatpush1.bf16.msra.mxu0 %v10209
    %10428 = vmatprep.subr.bf16.mxu0 0
    %10429 = vmatpush1.bf16.msra.mxu0 %v10210
    %10430 = vmatprep.mubr.bf16.mxu0 %v9755
    %10431 = vmatmul.mubr.bf16.gmra.mrb[0].mxu0 %v9754
    %v10432 = vpop.f32.mrb[0].mxu0
    %v10433 = vadd.f32 %v10392, %v10432
    %v10434 = vpop.f32.mrb[0].mxu0
    %v10435 = vpop.f32.mrb[0].mxu0
    %v10436 = vadd.f32 %v10395, %v10435
    %v10437 = vpop.f32.mrb[0].mxu0
    %10438 = vdwg.mxu0
    %vm10439 = vcmask 31744
    %10440 = vst.msk [vmem:[%s9] sm:$0xff] %vm10439, %v10433
    %10441 = vst.msk [vmem:[%s9 + $0x8] sm:$0xff] %vm10439, %v10436
    // Predicated region
    $region70: #{tpu_custom_call.1} parent=1 // pred_check
      _
    $region71: #{tpu_custom_call.1} parent=1 // pred_check_branch
      %10443 = sbr.rel (0) target = $region73
    $region72: #{tpu_custom_call.1} parent=1 // pred_region
      _
    $region73: #{tpu_custom_call.1} parent=1 // pred_fallthru
      _
    // Predicated region
    $region74: #{tpu_custom_call.1} parent=1 // pred_check
      _
    $region75: #{tpu_custom_call.1} parent=1 // pred_check_branch
      %10445 = sbr.rel (0) target = $region77
    $region76: #{tpu_custom_call.1} parent=1 // pred_region
      _
    $region77: #{tpu_custom_call.1} parent=1 // pred_fallthru
      _
    %10446 = vsyncpa [#allocation3], 1
    %10447 = vsyncpa [#allocation5], 1
    %10448 = vsyncpa [#allocation8], 1
    %10449 = vsyncpa [#allocation11], 1
    %10450 = vsyncpa [#allocation14], 1

</llo_original>
